<compile_context>
chip_gen: v7x
topology: tpu7x:2x2x1
jax: 0.10.0
libtpu: 0.0.40
codegen_flags: <defaults>
</compile_context>

<pallas_src>
import functools
import math

import jax
import jax.numpy as jnp
import numpy as np
from jax.experimental import pallas as pl
from jax.experimental.pallas import tpu as pltpu

_BN_EPS = 1e-5
_LANE = 128


def _round_up(n, m):
    return ((n + m - 1) // m) * m


# ---------------------------------------------------------------------------
# Pallas kernel: fused 3x3 conv (stride 1, pad 1) + BN(folded) + ReLU
# ---------------------------------------------------------------------------
def _conv3x3_bn_relu_kernel(x_ref, w_ref, shift_ref, o_ref, *, row_stride):
    """Per-image fused conv on a row-flattened, halo-padded activation.

    x_ref:     (H*Wp + 2*(Wp+1), Cin)  bf16  flattened NHWC rows (Wp = W+1,
               one zero column per row) with a zero halo of Wp+1 rows each side.
    w_ref:     (9, Cin, Coutp)          bf16  BN scale folded in, (dy,dx)-major.
    shift_ref: (1, Coutp)               f32   BN shift (beta - mean*scale).
    o_ref:     (H*Wp, Coutp)            bf16  conv+BN+ReLU output (pre-pool;
               the dummy column is sliced off outside the kernel).
    """
    n_rows = o_ref.shape[0]
    coutp = o_ref.shape[-1]
    base = row_stride + 1

    acc = jnp.zeros((n_rows, coutp), jnp.float32)
    for k in range(9):
        di = k // 3 - 1
        dj = k % 3 - 1
        start = base + di * row_stride + dj          # static offset
        patch = x_ref[pl.ds(start, n_rows), :]       # (n_rows, Cin) bf16
        acc = acc + jnp.dot(patch, w_ref[k], preferred_element_type=jnp.float32)

    y = jnp.maximum(acc + shift_ref[...], 0.0)       # shift + ReLU in f32
    o_ref[...] = y.astype(o_ref.dtype)


def conv_bn_relu_pool(h, w, scale, shift):
    """h: (B,H,W,Cin_carried) NHWC, w: (3,3,Cin,Cout) f32.

    Returns pooled NHWC activation with Cout padded to a multiple of 128
    lanes (padded channels are exactly zero)."""
    B, H, W, cin_carried = h.shape
    _, _, cin, cout = w.shape
    coutp = _round_up(cout, _LANE)

    # Fold BN scale into the weights; zero-pad Cin to the carried channel count
    # and Cout to a lane-dense width (padded channels: zero weight + zero shift).
    wf = w * scale.reshape(1, 1, 1, cout)
    wf = jnp.pad(wf, ((0, 0), (0, 0), (0, cin_carried - cin), (0, coutp - cout)))
    wf = wf.reshape(9, cin_carried, coutp).astype(jnp.bfloat16)
    sh = jnp.pad(shift, (0, coutp - cout)).reshape(1, coutp).astype(jnp.float32)

    # Row-flatten with one extra zero column per row (so dx=+/-1 taps that
    # cross a row boundary read zeros instead of wrapping) plus a zero halo of
    # Wp+1 rows (so dy=+/-1 taps at the top/bottom edge read zeros).
    Wp = W + 1
    halo = Wp + 1
    n_rows = H * Wp
    xf = jnp.pad(h.astype(jnp.bfloat16), ((0, 0), (0, 0), (0, 1), (0, 0)))
    xf = xf.reshape(B, n_rows, cin_carried)
    xf = jnp.pad(xf, ((0, 0), (halo, halo), (0, 0)))

    y = pl.pallas_call(
        functools.partial(_conv3x3_bn_relu_kernel, row_stride=Wp),
        out_shape=jax.ShapeDtypeStruct((B, n_rows, coutp), jnp.bfloat16),
        grid=(B,),
        in_specs=[
            pl.BlockSpec((None, n_rows + 2 * halo, cin_carried),
                         lambda b: (b, 0, 0)),
            pl.BlockSpec((9, cin_carried, coutp), lambda b: (0, 0, 0)),
            pl.BlockSpec((1, coutp), lambda b: (0, 0)),
        ],
        out_specs=pl.BlockSpec((None, n_rows, coutp), lambda b: (b, 0, 0)),
        compiler_params=pltpu.CompilerParams(dimension_semantics=("parallel",)),
    )(xf, wf, sh)

    y = y.reshape(B, H, Wp, coutp)[:, :, :W, :]   # drop the dummy column
    # TODO(synk): fuse the 2x2 maxpool into the kernel epilogue to avoid this
    # pre-pool HBM round-trip.
    return maxpool2x2(y)


# ---------------------------------------------------------------------------
# Pallas kernel: classifier  logits = X @ W + b  (lane-padded N)
# ---------------------------------------------------------------------------
def _linear_bias_kernel(x_ref, w_ref, b_ref, o_ref):
    acc = jnp.dot(x_ref[...], w_ref[...], preferred_element_type=jnp.float32)
    o_ref[...] = (acc + b_ref[...]).astype(o_ref.dtype)


def linear_classifier(x, w, b):
    B, F = x.shape
    n = w.shape[1]
    npad = _round_up(n, _LANE)
    wp = jnp.pad(w, ((0, 0), (0, npad - n))).astype(jnp.bfloat16)
    bp = jnp.pad(b, (0, npad - n)).reshape(1, npad).astype(jnp.float32)
    xb = x.astype(jnp.bfloat16)
    out = pl.pallas_call(
        _linear_bias_kernel,
        out_shape=jax.ShapeDtypeStruct((B, npad), jnp.float32),
        grid=(1,),
        in_specs=[
            pl.BlockSpec((B, F), lambda i: (0, 0)),
            pl.BlockSpec((F, npad), lambda i: (0, 0)),
            pl.BlockSpec((1, npad), lambda i: (0, 0)),
        ],
        out_specs=pl.BlockSpec((B, npad), lambda i: (0, 0)),
    )(xb, wp, bp)
    return out[:, :n]


# ---------------------------------------------------------------------------
# Plain-JAX glue: 2x2 max pool (torch floor mode)
# ---------------------------------------------------------------------------
def maxpool2x2(x):
    B, H, W, C = x.shape
    Hc, Wc = (H // 2) * 2, (W // 2) * 2
    x = x[:, :Hc, :Wc, :]
    x = x.reshape(B, Hc // 2, 2, Wc // 2, 2, C)
    return jnp.max(x, axis=(2, 4))


# ---------------------------------------------------------------------------
# Parameter construction (matches the module's shapes / init)
# ---------------------------------------------------------------------------
def init_params(key, input_channels, n_classes, feat_dim):
    keys = jax.random.split(key, 6)

    def conv_w(k, cin, cout):
        # ConvEtAl init: N(0, sqrt(2 / (k*k*out_channels)))
        std = math.sqrt(2.0 / (9 * cout))
        return std * jax.random.normal(k, (3, 3, cin, cout), jnp.float32)

    channels = [(input_channels, 64), (64, 128), (128, 256)]
    convs = []
    for k, (cin, cout) in zip(keys[:3], channels):
        w = conv_w(k, cin, cout)
        # BatchNorm (eval): gamma=1, beta=0, running_mean=0, running_var=1
        # (if real trained stats are loaded: scale = gamma/sqrt(var+eps),
        #  shift = beta - mean*scale)
        scale = jnp.full((cout,), 1.0 / math.sqrt(1.0 + _BN_EPS), jnp.float32)
        shift = jnp.zeros((cout,), jnp.float32)
        convs.append((w, scale, shift))

    # nn.Linear default init: U(-1/sqrt(fan_in), 1/sqrt(fan_in))
    bound = 1.0 / math.sqrt(feat_dim)
    lin_w = jax.random.uniform(keys[3], (feat_dim, n_classes), jnp.float32,
                               -bound, bound)
    lin_b = jax.random.uniform(keys[4], (n_classes,), jnp.float32, -bound, bound)
    return {"convs": convs, "lin_w": lin_w, "lin_b": lin_b}


# ---------------------------------------------------------------------------
# Forward pass
# ---------------------------------------------------------------------------
def test_et_al_forward(x_nchw, params):
    x = jnp.squeeze(x_nchw)             # mirrors torch x.squeeze()
    B = x.shape[0]
    h = jnp.transpose(x, (0, 2, 3, 1))  # NCHW -> NHWC

    cout_true = None
    for (w, scale, shift) in params["convs"]:
        h = conv_bn_relu_pool(h, w, scale, shift)
        cout_true = w.shape[-1]
    h = h[..., :cout_true]              # drop lane padding (no-op when C%128==0)

    # torch nn.Flatten on NCHW flattens in (C, H, W) order.
    feat = jnp.transpose(h, (0, 3, 1, 2)).reshape(B, -1)
    return linear_classifier(feat, params["lin_w"], params["lin_b"])


# Pure-XLA f32 reference for a correctness check (same math, no Pallas).
def _reference_forward(x_nchw, params):
    x = jnp.squeeze(x_nchw)
    B = x.shape[0]
    h = jnp.transpose(x, (0, 2, 3, 1)).astype(jnp.float32)
    for (w, scale, shift) in params["convs"]:
        y = jax.lax.conv_general_dilated(
            h, w, window_strides=(1, 1), padding=((1, 1), (1, 1)),
            dimension_numbers=("NHWC", "HWIO", "NHWC"))
        y = jnp.maximum(y * scale + shift, 0.0)
        h = maxpool2x2(y)
    feat = jnp.transpose(h, (0, 3, 1, 2)).reshape(B, -1)
    return feat @ params["lin_w"] + params["lin_b"]


if __name__ == "__main__":
    # patch_size=16 -> 16 -> 8 -> 4 -> 2 after the three maxpools,
    # feature dim = 256 * 2 * 2 = 1024.
    batch, input_channels, patch_size, n_classes = 2, 4, 16, 8
    feat_dim = 256 * (patch_size // 8) * (patch_size // 8)

    key = jax.random.PRNGKey(0)
    k_x, k_p = jax.random.split(key)
    x = jax.random.normal(k_x, (batch, input_channels, patch_size, patch_size),
                          jnp.float32)
    params = init_params(k_p, input_channels, n_classes, feat_dim)

    logits = jax.jit(test_et_al_forward)(x, params)
    logits = jax.block_until_ready(logits)
    assert logits.shape == (batch, n_classes), logits.shape
    assert bool(jnp.all(jnp.isfinite(logits)))

    ref = jax.block_until_ready(jax.jit(_reference_forward)(x, params))
    np.testing.assert_allclose(np.asarray(logits), np.asarray(ref),
                               rtol=0.1, atol=0.15)

    print("KERNEL_OK")
</pallas_src>

<mosaic_0001>
module attributes {stable_mosaic.version = 11 : i64} {
  func.func @_conv3x3_bn_relu_kernel(%arg0: i32, %arg1: memref<1x308x4xbf16, #tpu.memory_space<vmem>>, %arg2: memref<9x4x128xbf16, #tpu.memory_space<vmem>>, %arg3: memref<1x128xf32, #tpu.memory_space<vmem>>, %arg4: memref<1x272x128xbf16, #tpu.memory_space<vmem>>) attributes {dimension_semantics = [#tpu.dimension_semantics<parallel>], iteration_bounds = array<i64: 2>, scalar_prefetch = 0 : i64, scratch_operands = 0 : i64, tpu.core_type = #tpu.core_type<tc>, window_params = [{transform_indices = @transform_0, window_bounds = array<i64: 1, 308, 4>}, {pipeline_mode = #tpu.pipeline_mode<synchronous>, transform_indices = @transform_1, window_bounds = array<i64: 9, 4, 128>}, {pipeline_mode = #tpu.pipeline_mode<synchronous>, transform_indices = @transform_2, window_bounds = array<i64: 1, 128>}, {transform_indices = @transform_3, window_bounds = array<i64: 1, 272, 128>}]} {
    %cst = arith.constant 0.000000e+00 : f32
    %0 = vector.broadcast %cst : f32 to vector<272x128xf32>
    %c0 = arith.constant 0 : index
    %c0_0 = arith.constant 0 : index
    %c0_1 = arith.constant 0 : index
    %1 = vector.load %arg1[%c0, %c0_0, %c0_1] : memref<1x308x4xbf16, #tpu.memory_space<vmem>>, vector<1x272x4xbf16>
    %2 = vector.shape_cast %1 : vector<1x272x4xbf16> to vector<272x4xbf16>
    %c0_2 = arith.constant 0 : index
    %c0_3 = arith.constant 0 : index
    %c0_4 = arith.constant 0 : index
    %3 = vector.load %arg2[%c0_2, %c0_3, %c0_4] : memref<9x4x128xbf16, #tpu.memory_space<vmem>>, vector<1x4x128xbf16>
    %4 = vector.shape_cast %3 : vector<1x4x128xbf16> to vector<4x128xbf16>
    %cst_5 = arith.constant dense<0.000000e+00> : vector<272x128xf32>
    %5 = tpu.matmul %2, %4, %cst_5 {dimension_numbers = #tpu.dot_dimension_numbers<[1], [0], [0], [1], [0, 0, 1, 1], [], []>} : vector<272x4xbf16>, vector<4x128xbf16>, vector<272x128xf32> -> vector<272x128xf32>
    %6 = arith.addf %0, %5 : vector<272x128xf32>
    %c0_6 = arith.constant 0 : index
    %c1 = arith.constant 1 : index
    %c0_7 = arith.constant 0 : index
    %7 = vector.load %arg1[%c0_6, %c1, %c0_7] : memref<1x308x4xbf16, #tpu.memory_space<vmem>>, vector<1x272x4xbf16>
    %8 = vector.shape_cast %7 : vector<1x272x4xbf16> to vector<272x4xbf16>
    %c1_8 = arith.constant 1 : index
    %c0_9 = arith.constant 0 : index
    %c0_10 = arith.constant 0 : index
    %9 = vector.load %arg2[%c1_8, %c0_9, %c0_10] : memref<9x4x128xbf16, #tpu.memory_space<vmem>>, vector<1x4x128xbf16>
    %10 = vector.shape_cast %9 : vector<1x4x128xbf16> to vector<4x128xbf16>
    %cst_11 = arith.constant dense<0.000000e+00> : vector<272x128xf32>
    %11 = tpu.matmul %8, %10, %cst_11 {dimension_numbers = #tpu.dot_dimension_numbers<[1], [0], [0], [1], [0, 0, 1, 1], [], []>} : vector<272x4xbf16>, vector<4x128xbf16>, vector<272x128xf32> -> vector<272x128xf32>
    %12 = arith.addf %6, %11 : vector<272x128xf32>
    %c0_12 = arith.constant 0 : index
    %c2 = arith.constant 2 : index
    %c0_13 = arith.constant 0 : index
    %13 = vector.load %arg1[%c0_12, %c2, %c0_13] : memref<1x308x4xbf16, #tpu.memory_space<vmem>>, vector<1x272x4xbf16>
    %14 = vector.shape_cast %13 : vector<1x272x4xbf16> to vector<272x4xbf16>
    %c2_14 = arith.constant 2 : index
    %c0_15 = arith.constant 0 : index
    %c0_16 = arith.constant 0 : index
    %15 = vector.load %arg2[%c2_14, %c0_15, %c0_16] : memref<9x4x128xbf16, #tpu.memory_space<vmem>>, vector<1x4x128xbf16>
    %16 = vector.shape_cast %15 : vector<1x4x128xbf16> to vector<4x128xbf16>
    %cst_17 = arith.constant dense<0.000000e+00> : vector<272x128xf32>
    %17 = tpu.matmul %14, %16, %cst_17 {dimension_numbers = #tpu.dot_dimension_numbers<[1], [0], [0], [1], [0, 0, 1, 1], [], []>} : vector<272x4xbf16>, vector<4x128xbf16>, vector<272x128xf32> -> vector<272x128xf32>
    %18 = arith.addf %12, %17 : vector<272x128xf32>
    %c0_18 = arith.constant 0 : index
    %c17 = arith.constant 17 : index
    %c0_19 = arith.constant 0 : index
    %19 = vector.load %arg1[%c0_18, %c17, %c0_19] : memref<1x308x4xbf16, #tpu.memory_space<vmem>>, vector<1x272x4xbf16>
    %20 = vector.shape_cast %19 : vector<1x272x4xbf16> to vector<272x4xbf16>
    %c3 = arith.constant 3 : index
    %c0_20 = arith.constant 0 : index
    %c0_21 = arith.constant 0 : index
    %21 = vector.load %arg2[%c3, %c0_20, %c0_21] : memref<9x4x128xbf16, #tpu.memory_space<vmem>>, vector<1x4x128xbf16>
    %22 = vector.shape_cast %21 : vector<1x4x128xbf16> to vector<4x128xbf16>
    %cst_22 = arith.constant dense<0.000000e+00> : vector<272x128xf32>
    %23 = tpu.matmul %20, %22, %cst_22 {dimension_numbers = #tpu.dot_dimension_numbers<[1], [0], [0], [1], [0, 0, 1, 1], [], []>} : vector<272x4xbf16>, vector<4x128xbf16>, vector<272x128xf32> -> vector<272x128xf32>
    %24 = arith.addf %18, %23 : vector<272x128xf32>
    %c0_23 = arith.constant 0 : index
    %c18 = arith.constant 18 : index
    %c0_24 = arith.constant 0 : index
    %25 = vector.load %arg1[%c0_23, %c18, %c0_24] : memref<1x308x4xbf16, #tpu.memory_space<vmem>>, vector<1x272x4xbf16>
    %26 = vector.shape_cast %25 : vector<1x272x4xbf16> to vector<272x4xbf16>
    %c4 = arith.constant 4 : index
    %c0_25 = arith.constant 0 : index
    %c0_26 = arith.constant 0 : index
    %27 = vector.load %arg2[%c4, %c0_25, %c0_26] : memref<9x4x128xbf16, #tpu.memory_space<vmem>>, vector<1x4x128xbf16>
    %28 = vector.shape_cast %27 : vector<1x4x128xbf16> to vector<4x128xbf16>
    %cst_27 = arith.constant dense<0.000000e+00> : vector<272x128xf32>
    %29 = tpu.matmul %26, %28, %cst_27 {dimension_numbers = #tpu.dot_dimension_numbers<[1], [0], [0], [1], [0, 0, 1, 1], [], []>} : vector<272x4xbf16>, vector<4x128xbf16>, vector<272x128xf32> -> vector<272x128xf32>
    %30 = arith.addf %24, %29 : vector<272x128xf32>
    %c0_28 = arith.constant 0 : index
    %c19 = arith.constant 19 : index
    %c0_29 = arith.constant 0 : index
    %31 = vector.load %arg1[%c0_28, %c19, %c0_29] : memref<1x308x4xbf16, #tpu.memory_space<vmem>>, vector<1x272x4xbf16>
    %32 = vector.shape_cast %31 : vector<1x272x4xbf16> to vector<272x4xbf16>
    %c5 = arith.constant 5 : index
    %c0_30 = arith.constant 0 : index
    %c0_31 = arith.constant 0 : index
    %33 = vector.load %arg2[%c5, %c0_30, %c0_31] : memref<9x4x128xbf16, #tpu.memory_space<vmem>>, vector<1x4x128xbf16>
    %34 = vector.shape_cast %33 : vector<1x4x128xbf16> to vector<4x128xbf16>
    %cst_32 = arith.constant dense<0.000000e+00> : vector<272x128xf32>
    %35 = tpu.matmul %32, %34, %cst_32 {dimension_numbers = #tpu.dot_dimension_numbers<[1], [0], [0], [1], [0, 0, 1, 1], [], []>} : vector<272x4xbf16>, vector<4x128xbf16>, vector<272x128xf32> -> vector<272x128xf32>
    %36 = arith.addf %30, %35 : vector<272x128xf32>
    %c0_33 = arith.constant 0 : index
    %c34 = arith.constant 34 : index
    %c0_34 = arith.constant 0 : index
    %37 = vector.load %arg1[%c0_33, %c34, %c0_34] : memref<1x308x4xbf16, #tpu.memory_space<vmem>>, vector<1x272x4xbf16>
    %38 = vector.shape_cast %37 : vector<1x272x4xbf16> to vector<272x4xbf16>
    %c6 = arith.constant 6 : index
    %c0_35 = arith.constant 0 : index
    %c0_36 = arith.constant 0 : index
    %39 = vector.load %arg2[%c6, %c0_35, %c0_36] : memref<9x4x128xbf16, #tpu.memory_space<vmem>>, vector<1x4x128xbf16>
    %40 = vector.shape_cast %39 : vector<1x4x128xbf16> to vector<4x128xbf16>
    %cst_37 = arith.constant dense<0.000000e+00> : vector<272x128xf32>
    %41 = tpu.matmul %38, %40, %cst_37 {dimension_numbers = #tpu.dot_dimension_numbers<[1], [0], [0], [1], [0, 0, 1, 1], [], []>} : vector<272x4xbf16>, vector<4x128xbf16>, vector<272x128xf32> -> vector<272x128xf32>
    %42 = arith.addf %36, %41 : vector<272x128xf32>
    %c0_38 = arith.constant 0 : index
    %c35 = arith.constant 35 : index
    %c0_39 = arith.constant 0 : index
    %43 = vector.load %arg1[%c0_38, %c35, %c0_39] : memref<1x308x4xbf16, #tpu.memory_space<vmem>>, vector<1x272x4xbf16>
    %44 = vector.shape_cast %43 : vector<1x272x4xbf16> to vector<272x4xbf16>
    %c7 = arith.constant 7 : index
    %c0_40 = arith.constant 0 : index
    %c0_41 = arith.constant 0 : index
    %45 = vector.load %arg2[%c7, %c0_40, %c0_41] : memref<9x4x128xbf16, #tpu.memory_space<vmem>>, vector<1x4x128xbf16>
    %46 = vector.shape_cast %45 : vector<1x4x128xbf16> to vector<4x128xbf16>
    %cst_42 = arith.constant dense<0.000000e+00> : vector<272x128xf32>
    %47 = tpu.matmul %44, %46, %cst_42 {dimension_numbers = #tpu.dot_dimension_numbers<[1], [0], [0], [1], [0, 0, 1, 1], [], []>} : vector<272x4xbf16>, vector<4x128xbf16>, vector<272x128xf32> -> vector<272x128xf32>
    %48 = arith.addf %42, %47 : vector<272x128xf32>
    %c0_43 = arith.constant 0 : index
    %c36 = arith.constant 36 : index
    %c0_44 = arith.constant 0 : index
    %49 = vector.load %arg1[%c0_43, %c36, %c0_44] : memref<1x308x4xbf16, #tpu.memory_space<vmem>>, vector<1x272x4xbf16>
    %50 = vector.shape_cast %49 : vector<1x272x4xbf16> to vector<272x4xbf16>
    %c8 = arith.constant 8 : index
    %c0_45 = arith.constant 0 : index
    %c0_46 = arith.constant 0 : index
    %51 = vector.load %arg2[%c8, %c0_45, %c0_46] : memref<9x4x128xbf16, #tpu.memory_space<vmem>>, vector<1x4x128xbf16>
    %52 = vector.shape_cast %51 : vector<1x4x128xbf16> to vector<4x128xbf16>
    %cst_47 = arith.constant dense<0.000000e+00> : vector<272x128xf32>
    %53 = tpu.matmul %50, %52, %cst_47 {dimension_numbers = #tpu.dot_dimension_numbers<[1], [0], [0], [1], [0, 0, 1, 1], [], []>} : vector<272x4xbf16>, vector<4x128xbf16>, vector<272x128xf32> -> vector<272x128xf32>
    %54 = arith.addf %48, %53 : vector<272x128xf32>
    %c0_48 = arith.constant 0 : index
    %c0_49 = arith.constant 0 : index
    %55 = vector.load %arg3[%c0_48, %c0_49] : memref<1x128xf32, #tpu.memory_space<vmem>>, vector<1x128xf32>
    %56 = vector.broadcast %55 : vector<1x128xf32> to vector<272x128xf32>
    %57 = arith.addf %54, %56 : vector<272x128xf32>
    %cst_50 = arith.constant 0.000000e+00 : f32
    %58 = vector.broadcast %cst_50 : f32 to vector<272x128xf32>
    %59 = arith.maximumf %57, %58 : vector<272x128xf32>
    %60 = arith.truncf %59 : vector<272x128xf32> to vector<272x128xbf16>
    %c0_51 = arith.constant 0 : index
    %c0_52 = arith.constant 0 : index
    %c0_53 = arith.constant 0 : index
    %61 = vector.load %arg4[%c0_51, %c0_52, %c0_53] : memref<1x272x128xbf16, #tpu.memory_space<vmem>>, vector<1x272x128xbf16>
    %62 = vector.shape_cast %61 : vector<1x272x128xbf16> to vector<272x128xbf16>
    %63 = vector.shape_cast %60 : vector<272x128xbf16> to vector<1x272x128xbf16>
    tpu.vector_store %arg4[%c0_51, %c0_52, %c0_53], %63 {strides = array<i32>} : memref<1x272x128xbf16, #tpu.memory_space<vmem>>, vector<1x272x128xbf16>,
    return
  }
  func.func @transform_0(%arg0: i32) -> (i32, i32, i32) {
    %c0_i32 = arith.constant 0 : i32
    %c0_i32_0 = arith.constant 0 : i32
    %c0_i32_1 = arith.constant 0 : i32
    return %arg0, %c0_i32, %c0_i32_0 : i32, i32, i32
  }
  func.func @transform_1(%arg0: i32) -> (i32, i32, i32) {
    %c0_i32 = arith.constant 0 : i32
    %c0_i32_0 = arith.constant 0 : i32
    %c0_i32_1 = arith.constant 0 : i32
    %c0_i32_2 = arith.constant 0 : i32
    return %c0_i32, %c0_i32_0, %c0_i32_1 : i32, i32, i32
  }
  func.func @transform_2(%arg0: i32) -> (i32, i32) {
    %c0_i32 = arith.constant 0 : i32
    %c0_i32_0 = arith.constant 0 : i32
    %c0_i32_1 = arith.constant 0 : i32
    return %c0_i32, %c0_i32_0 : i32, i32
  }
  func.func @transform_3(%arg0: i32) -> (i32, i32, i32) {
    %c0_i32 = arith.constant 0 : i32
    %c0_i32_0 = arith.constant 0 : i32
    %c0_i32_1 = arith.constant 0 : i32
    return %arg0, %c0_i32, %c0_i32_0 : i32, i32, i32
  }
}

module attributes {stable_mosaic.version = 11 : i64} {
  func.func @_conv3x3_bn_relu_kernel(%arg0: i32, %arg1: memref<1x92x128xbf16, #tpu.memory_space<vmem>>, %arg2: memref<9x128x128xbf16, #tpu.memory_space<vmem>>, %arg3: memref<1x128xf32, #tpu.memory_space<vmem>>, %arg4: memref<1x72x128xbf16, #tpu.memory_space<vmem>>) attributes {dimension_semantics = [#tpu.dimension_semantics<parallel>], iteration_bounds = array<i64: 2>, scalar_prefetch = 0 : i64, scratch_operands = 0 : i64, tpu.core_type = #tpu.core_type<tc>, window_params = [{transform_indices = @transform_0, window_bounds = array<i64: 1, 92, 128>}, {pipeline_mode = #tpu.pipeline_mode<synchronous>, transform_indices = @transform_1, window_bounds = array<i64: 9, 128, 128>}, {pipeline_mode = #tpu.pipeline_mode<synchronous>, transform_indices = @transform_2, window_bounds = array<i64: 1, 128>}, {transform_indices = @transform_3, window_bounds = array<i64: 1, 72, 128>}]} {
    %cst = arith.constant 0.000000e+00 : f32
    %0 = vector.broadcast %cst : f32 to vector<72x128xf32>
    %c0 = arith.constant 0 : index
    %c0_0 = arith.constant 0 : index
    %c0_1 = arith.constant 0 : index
    %1 = vector.load %arg1[%c0, %c0_0, %c0_1] : memref<1x92x128xbf16, #tpu.memory_space<vmem>>, vector<1x72x128xbf16>
    %2 = vector.shape_cast %1 : vector<1x72x128xbf16> to vector<72x128xbf16>
    %c0_2 = arith.constant 0 : index
    %c0_3 = arith.constant 0 : index
    %c0_4 = arith.constant 0 : index
    %3 = vector.load %arg2[%c0_2, %c0_3, %c0_4] : memref<9x128x128xbf16, #tpu.memory_space<vmem>>, vector<1x128x128xbf16>
    %4 = vector.shape_cast %3 : vector<1x128x128xbf16> to vector<128x128xbf16>
    %cst_5 = arith.constant dense<0.000000e+00> : vector<72x128xf32>
    %5 = tpu.matmul %2, %4, %cst_5 {dimension_numbers = #tpu.dot_dimension_numbers<[1], [0], [0], [1], [0, 0, 1, 1], [], []>} : vector<72x128xbf16>, vector<128x128xbf16>, vector<72x128xf32> -> vector<72x128xf32>
    %6 = arith.addf %0, %5 : vector<72x128xf32>
    %c0_6 = arith.constant 0 : index
    %c1 = arith.constant 1 : index
    %c0_7 = arith.constant 0 : index
    %7 = vector.load %arg1[%c0_6, %c1, %c0_7] : memref<1x92x128xbf16, #tpu.memory_space<vmem>>, vector<1x72x128xbf16>
    %8 = vector.shape_cast %7 : vector<1x72x128xbf16> to vector<72x128xbf16>
    %c1_8 = arith.constant 1 : index
    %c0_9 = arith.constant 0 : index
    %c0_10 = arith.constant 0 : index
    %9 = vector.load %arg2[%c1_8, %c0_9, %c0_10] : memref<9x128x128xbf16, #tpu.memory_space<vmem>>, vector<1x128x128xbf16>
    %10 = vector.shape_cast %9 : vector<1x128x128xbf16> to vector<128x128xbf16>
    %cst_11 = arith.constant dense<0.000000e+00> : vector<72x128xf32>
    %11 = tpu.matmul %8, %10, %cst_11 {dimension_numbers = #tpu.dot_dimension_numbers<[1], [0], [0], [1], [0, 0, 1, 1], [], []>} : vector<72x128xbf16>, vector<128x128xbf16>, vector<72x128xf32> -> vector<72x128xf32>
    %12 = arith.addf %6, %11 : vector<72x128xf32>
    %c0_12 = arith.constant 0 : index
    %c2 = arith.constant 2 : index
    %c0_13 = arith.constant 0 : index
    %13 = vector.load %arg1[%c0_12, %c2, %c0_13] : memref<1x92x128xbf16, #tpu.memory_space<vmem>>, vector<1x72x128xbf16>
    %14 = vector.shape_cast %13 : vector<1x72x128xbf16> to vector<72x128xbf16>
    %c2_14 = arith.constant 2 : index
    %c0_15 = arith.constant 0 : index
    %c0_16 = arith.constant 0 : index
    %15 = vector.load %arg2[%c2_14, %c0_15, %c0_16] : memref<9x128x128xbf16, #tpu.memory_space<vmem>>, vector<1x128x128xbf16>
    %16 = vector.shape_cast %15 : vector<1x128x128xbf16> to vector<128x128xbf16>
    %cst_17 = arith.constant dense<0.000000e+00> : vector<72x128xf32>
    %17 = tpu.matmul %14, %16, %cst_17 {dimension_numbers = #tpu.dot_dimension_numbers<[1], [0], [0], [1], [0, 0, 1, 1], [], []>} : vector<72x128xbf16>, vector<128x128xbf16>, vector<72x128xf32> -> vector<72x128xf32>
    %18 = arith.addf %12, %17 : vector<72x128xf32>
    %c0_18 = arith.constant 0 : index
    %c9 = arith.constant 9 : index
    %c0_19 = arith.constant 0 : index
    %19 = vector.load %arg1[%c0_18, %c9, %c0_19] : memref<1x92x128xbf16, #tpu.memory_space<vmem>>, vector<1x72x128xbf16>
    %20 = vector.shape_cast %19 : vector<1x72x128xbf16> to vector<72x128xbf16>
    %c3 = arith.constant 3 : index
    %c0_20 = arith.constant 0 : index
    %c0_21 = arith.constant 0 : index
    %21 = vector.load %arg2[%c3, %c0_20, %c0_21] : memref<9x128x128xbf16, #tpu.memory_space<vmem>>, vector<1x128x128xbf16>
    %22 = vector.shape_cast %21 : vector<1x128x128xbf16> to vector<128x128xbf16>
    %cst_22 = arith.constant dense<0.000000e+00> : vector<72x128xf32>
    %23 = tpu.matmul %20, %22, %cst_22 {dimension_numbers = #tpu.dot_dimension_numbers<[1], [0], [0], [1], [0, 0, 1, 1], [], []>} : vector<72x128xbf16>, vector<128x128xbf16>, vector<72x128xf32> -> vector<72x128xf32>
    %24 = arith.addf %18, %23 : vector<72x128xf32>
    %c0_23 = arith.constant 0 : index
    %c10 = arith.constant 10 : index
    %c0_24 = arith.constant 0 : index
    %25 = vector.load %arg1[%c0_23, %c10, %c0_24] : memref<1x92x128xbf16, #tpu.memory_space<vmem>>, vector<1x72x128xbf16>
    %26 = vector.shape_cast %25 : vector<1x72x128xbf16> to vector<72x128xbf16>
    %c4 = arith.constant 4 : index
    %c0_25 = arith.constant 0 : index
    %c0_26 = arith.constant 0 : index
    %27 = vector.load %arg2[%c4, %c0_25, %c0_26] : memref<9x128x128xbf16, #tpu.memory_space<vmem>>, vector<1x128x128xbf16>
    %28 = vector.shape_cast %27 : vector<1x128x128xbf16> to vector<128x128xbf16>
    %cst_27 = arith.constant dense<0.000000e+00> : vector<72x128xf32>
    %29 = tpu.matmul %26, %28, %cst_27 {dimension_numbers = #tpu.dot_dimension_numbers<[1], [0], [0], [1], [0, 0, 1, 1], [], []>} : vector<72x128xbf16>, vector<128x128xbf16>, vector<72x128xf32> -> vector<72x128xf32>
    %30 = arith.addf %24, %29 : vector<72x128xf32>
    %c0_28 = arith.constant 0 : index
    %c11 = arith.constant 11 : index
    %c0_29 = arith.constant 0 : index
    %31 = vector.load %arg1[%c0_28, %c11, %c0_29] : memref<1x92x128xbf16, #tpu.memory_space<vmem>>, vector<1x72x128xbf16>
    %32 = vector.shape_cast %31 : vector<1x72x128xbf16> to vector<72x128xbf16>
    %c5 = arith.constant 5 : index
    %c0_30 = arith.constant 0 : index
    %c0_31 = arith.constant 0 : index
    %33 = vector.load %arg2[%c5, %c0_30, %c0_31] : memref<9x128x128xbf16, #tpu.memory_space<vmem>>, vector<1x128x128xbf16>
    %34 = vector.shape_cast %33 : vector<1x128x128xbf16> to vector<128x128xbf16>
    %cst_32 = arith.constant dense<0.000000e+00> : vector<72x128xf32>
    %35 = tpu.matmul %32, %34, %cst_32 {dimension_numbers = #tpu.dot_dimension_numbers<[1], [0], [0], [1], [0, 0, 1, 1], [], []>} : vector<72x128xbf16>, vector<128x128xbf16>, vector<72x128xf32> -> vector<72x128xf32>
    %36 = arith.addf %30, %35 : vector<72x128xf32>
    %c0_33 = arith.constant 0 : index
    %c18 = arith.constant 18 : index
    %c0_34 = arith.constant 0 : index
    %37 = vector.load %arg1[%c0_33, %c18, %c0_34] : memref<1x92x128xbf16, #tpu.memory_space<vmem>>, vector<1x72x128xbf16>
    %38 = vector.shape_cast %37 : vector<1x72x128xbf16> to vector<72x128xbf16>
    %c6 = arith.constant 6 : index
    %c0_35 = arith.constant 0 : index
    %c0_36 = arith.constant 0 : index
    %39 = vector.load %arg2[%c6, %c0_35, %c0_36] : memref<9x128x128xbf16, #tpu.memory_space<vmem>>, vector<1x128x128xbf16>
    %40 = vector.shape_cast %39 : vector<1x128x128xbf16> to vector<128x128xbf16>
    %cst_37 = arith.constant dense<0.000000e+00> : vector<72x128xf32>
    %41 = tpu.matmul %38, %40, %cst_37 {dimension_numbers = #tpu.dot_dimension_numbers<[1], [0], [0], [1], [0, 0, 1, 1], [], []>} : vector<72x128xbf16>, vector<128x128xbf16>, vector<72x128xf32> -> vector<72x128xf32>
    %42 = arith.addf %36, %41 : vector<72x128xf32>
    %c0_38 = arith.constant 0 : index
    %c19 = arith.constant 19 : index
    %c0_39 = arith.constant 0 : index
    %43 = vector.load %arg1[%c0_38, %c19, %c0_39] : memref<1x92x128xbf16, #tpu.memory_space<vmem>>, vector<1x72x128xbf16>
    %44 = vector.shape_cast %43 : vector<1x72x128xbf16> to vector<72x128xbf16>
    %c7 = arith.constant 7 : index
    %c0_40 = arith.constant 0 : index
    %c0_41 = arith.constant 0 : index
    %45 = vector.load %arg2[%c7, %c0_40, %c0_41] : memref<9x128x128xbf16, #tpu.memory_space<vmem>>, vector<1x128x128xbf16>
    %46 = vector.shape_cast %45 : vector<1x128x128xbf16> to vector<128x128xbf16>
    %cst_42 = arith.constant dense<0.000000e+00> : vector<72x128xf32>
    %47 = tpu.matmul %44, %46, %cst_42 {dimension_numbers = #tpu.dot_dimension_numbers<[1], [0], [0], [1], [0, 0, 1, 1], [], []>} : vector<72x128xbf16>, vector<128x128xbf16>, vector<72x128xf32> -> vector<72x128xf32>
    %48 = arith.addf %42, %47 : vector<72x128xf32>
    %c0_43 = arith.constant 0 : index
    %c20 = arith.constant 20 : index
    %c0_44 = arith.constant 0 : index
    %49 = vector.load %arg1[%c0_43, %c20, %c0_44] : memref<1x92x128xbf16, #tpu.memory_space<vmem>>, vector<1x72x128xbf16>
    %50 = vector.shape_cast %49 : vector<1x72x128xbf16> to vector<72x128xbf16>
    %c8 = arith.constant 8 : index
    %c0_45 = arith.constant 0 : index
    %c0_46 = arith.constant 0 : index
    %51 = vector.load %arg2[%c8, %c0_45, %c0_46] : memref<9x128x128xbf16, #tpu.memory_space<vmem>>, vector<1x128x128xbf16>
    %52 = vector.shape_cast %51 : vector<1x128x128xbf16> to vector<128x128xbf16>
    %cst_47 = arith.constant dense<0.000000e+00> : vector<72x128xf32>
    %53 = tpu.matmul %50, %52, %cst_47 {dimension_numbers = #tpu.dot_dimension_numbers<[1], [0], [0], [1], [0, 0, 1, 1], [], []>} : vector<72x128xbf16>, vector<128x128xbf16>, vector<72x128xf32> -> vector<72x128xf32>
    %54 = arith.addf %48, %53 : vector<72x128xf32>
    %c0_48 = arith.constant 0 : index
    %c0_49 = arith.constant 0 : index
    %55 = vector.load %arg3[%c0_48, %c0_49] : memref<1x128xf32, #tpu.memory_space<vmem>>, vector<1x128xf32>
    %56 = vector.broadcast %55 : vector<1x128xf32> to vector<72x128xf32>
    %57 = arith.addf %54, %56 : vector<72x128xf32>
    %cst_50 = arith.constant 0.000000e+00 : f32
    %58 = vector.broadcast %cst_50 : f32 to vector<72x128xf32>
    %59 = arith.maximumf %57, %58 : vector<72x128xf32>
    %60 = arith.truncf %59 : vector<72x128xf32> to vector<72x128xbf16>
    %c0_51 = arith.constant 0 : index
    %c0_52 = arith.constant 0 : index
    %c0_53 = arith.constant 0 : index
    %61 = vector.load %arg4[%c0_51, %c0_52, %c0_53] : memref<1x72x128xbf16, #tpu.memory_space<vmem>>, vector<1x72x128xbf16>
    %62 = vector.shape_cast %61 : vector<1x72x128xbf16> to vector<72x128xbf16>
    %63 = vector.shape_cast %60 : vector<72x128xbf16> to vector<1x72x128xbf16>
    tpu.vector_store %arg4[%c0_51, %c0_52, %c0_53], %63 {strides = array<i32>} : memref<1x72x128xbf16, #tpu.memory_space<vmem>>, vector<1x72x128xbf16>,
    return
  }
  func.func @transform_0(%arg0: i32) -> (i32, i32, i32) {
    %c0_i32 = arith.constant 0 : i32
    %c0_i32_0 = arith.constant 0 : i32
    %c0_i32_1 = arith.constant 0 : i32
    return %arg0, %c0_i32, %c0_i32_0 : i32, i32, i32
  }
  func.func @transform_1(%arg0: i32) -> (i32, i32, i32) {
    %c0_i32 = arith.constant 0 : i32
    %c0_i32_0 = arith.constant 0 : i32
    %c0_i32_1 = arith.constant 0 : i32
    %c0_i32_2 = arith.constant 0 : i32
    return %c0_i32, %c0_i32_0, %c0_i32_1 : i32, i32, i32
  }
  func.func @transform_2(%arg0: i32) -> (i32, i32) {
    %c0_i32 = arith.constant 0 : i32
    %c0_i32_0 = arith.constant 0 : i32
    %c0_i32_1 = arith.constant 0 : i32
    return %c0_i32, %c0_i32_0 : i32, i32
  }
  func.func @transform_3(%arg0: i32) -> (i32, i32, i32) {
    %c0_i32 = arith.constant 0 : i32
    %c0_i32_0 = arith.constant 0 : i32
    %c0_i32_1 = arith.constant 0 : i32
    return %arg0, %c0_i32, %c0_i32_0 : i32, i32, i32
  }
}

module attributes {stable_mosaic.version = 11 : i64} {
  func.func @_conv3x3_bn_relu_kernel(%arg0: i32, %arg1: memref<1x32x128xbf16, #tpu.memory_space<vmem>>, %arg2: memref<9x128x256xbf16, #tpu.memory_space<vmem>>, %arg3: memref<1x256xf32, #tpu.memory_space<vmem>>, %arg4: memref<1x20x256xbf16, #tpu.memory_space<vmem>>) attributes {dimension_semantics = [#tpu.dimension_semantics<parallel>], iteration_bounds = array<i64: 2>, scalar_prefetch = 0 : i64, scratch_operands = 0 : i64, tpu.core_type = #tpu.core_type<tc>, window_params = [{transform_indices = @transform_0, window_bounds = array<i64: 1, 32, 128>}, {pipeline_mode = #tpu.pipeline_mode<synchronous>, transform_indices = @transform_1, window_bounds = array<i64: 9, 128, 256>}, {pipeline_mode = #tpu.pipeline_mode<synchronous>, transform_indices = @transform_2, window_bounds = array<i64: 1, 256>}, {transform_indices = @transform_3, window_bounds = array<i64: 1, 20, 256>}]} {
    %cst = arith.constant 0.000000e+00 : f32
    %0 = vector.broadcast %cst : f32 to vector<20x256xf32>
    %c0 = arith.constant 0 : index
    %c0_0 = arith.constant 0 : index
    %c0_1 = arith.constant 0 : index
    %1 = vector.load %arg1[%c0, %c0_0, %c0_1] : memref<1x32x128xbf16, #tpu.memory_space<vmem>>, vector<1x20x128xbf16>
    %2 = vector.shape_cast %1 : vector<1x20x128xbf16> to vector<20x128xbf16>
    %c0_2 = arith.constant 0 : index
    %c0_3 = arith.constant 0 : index
    %c0_4 = arith.constant 0 : index
    %3 = vector.load %arg2[%c0_2, %c0_3, %c0_4] : memref<9x128x256xbf16, #tpu.memory_space<vmem>>, vector<1x128x256xbf16>
    %4 = vector.shape_cast %3 : vector<1x128x256xbf16> to vector<128x256xbf16>
    %cst_5 = arith.constant dense<0.000000e+00> : vector<20x256xf32>
    %5 = tpu.matmul %2, %4, %cst_5 {dimension_numbers = #tpu.dot_dimension_numbers<[1], [0], [0], [1], [0, 0, 1, 1], [], []>} : vector<20x128xbf16>, vector<128x256xbf16>, vector<20x256xf32> -> vector<20x256xf32>
    %6 = arith.addf %0, %5 : vector<20x256xf32>
    %c0_6 = arith.constant 0 : index
    %c1 = arith.constant 1 : index
    %c0_7 = arith.constant 0 : index
    %7 = vector.load %arg1[%c0_6, %c1, %c0_7] : memref<1x32x128xbf16, #tpu.memory_space<vmem>>, vector<1x20x128xbf16>
    %8 = vector.shape_cast %7 : vector<1x20x128xbf16> to vector<20x128xbf16>
    %c1_8 = arith.constant 1 : index
    %c0_9 = arith.constant 0 : index
    %c0_10 = arith.constant 0 : index
    %9 = vector.load %arg2[%c1_8, %c0_9, %c0_10] : memref<9x128x256xbf16, #tpu.memory_space<vmem>>, vector<1x128x256xbf16>
    %10 = vector.shape_cast %9 : vector<1x128x256xbf16> to vector<128x256xbf16>
    %cst_11 = arith.constant dense<0.000000e+00> : vector<20x256xf32>
    %11 = tpu.matmul %8, %10, %cst_11 {dimension_numbers = #tpu.dot_dimension_numbers<[1], [0], [0], [1], [0, 0, 1, 1], [], []>} : vector<20x128xbf16>, vector<128x256xbf16>, vector<20x256xf32> -> vector<20x256xf32>
    %12 = arith.addf %6, %11 : vector<20x256xf32>
    %c0_12 = arith.constant 0 : index
    %c2 = arith.constant 2 : index
    %c0_13 = arith.constant 0 : index
    %13 = vector.load %arg1[%c0_12, %c2, %c0_13] : memref<1x32x128xbf16, #tpu.memory_space<vmem>>, vector<1x20x128xbf16>
    %14 = vector.shape_cast %13 : vector<1x20x128xbf16> to vector<20x128xbf16>
    %c2_14 = arith.constant 2 : index
    %c0_15 = arith.constant 0 : index
    %c0_16 = arith.constant 0 : index
    %15 = vector.load %arg2[%c2_14, %c0_15, %c0_16] : memref<9x128x256xbf16, #tpu.memory_space<vmem>>, vector<1x128x256xbf16>
    %16 = vector.shape_cast %15 : vector<1x128x256xbf16> to vector<128x256xbf16>
    %cst_17 = arith.constant dense<0.000000e+00> : vector<20x256xf32>
    %17 = tpu.matmul %14, %16, %cst_17 {dimension_numbers = #tpu.dot_dimension_numbers<[1], [0], [0], [1], [0, 0, 1, 1], [], []>} : vector<20x128xbf16>, vector<128x256xbf16>, vector<20x256xf32> -> vector<20x256xf32>
    %18 = arith.addf %12, %17 : vector<20x256xf32>
    %c0_18 = arith.constant 0 : index
    %c5 = arith.constant 5 : index
    %c0_19 = arith.constant 0 : index
    %19 = vector.load %arg1[%c0_18, %c5, %c0_19] : memref<1x32x128xbf16, #tpu.memory_space<vmem>>, vector<1x20x128xbf16>
    %20 = vector.shape_cast %19 : vector<1x20x128xbf16> to vector<20x128xbf16>
    %c3 = arith.constant 3 : index
    %c0_20 = arith.constant 0 : index
    %c0_21 = arith.constant 0 : index
    %21 = vector.load %arg2[%c3, %c0_20, %c0_21] : memref<9x128x256xbf16, #tpu.memory_space<vmem>>, vector<1x128x256xbf16>
    %22 = vector.shape_cast %21 : vector<1x128x256xbf16> to vector<128x256xbf16>
    %cst_22 = arith.constant dense<0.000000e+00> : vector<20x256xf32>
    %23 = tpu.matmul %20, %22, %cst_22 {dimension_numbers = #tpu.dot_dimension_numbers<[1], [0], [0], [1], [0, 0, 1, 1], [], []>} : vector<20x128xbf16>, vector<128x256xbf16>, vector<20x256xf32> -> vector<20x256xf32>
    %24 = arith.addf %18, %23 : vector<20x256xf32>
    %c0_23 = arith.constant 0 : index
    %c6 = arith.constant 6 : index
    %c0_24 = arith.constant 0 : index
    %25 = vector.load %arg1[%c0_23, %c6, %c0_24] : memref<1x32x128xbf16, #tpu.memory_space<vmem>>, vector<1x20x128xbf16>
    %26 = vector.shape_cast %25 : vector<1x20x128xbf16> to vector<20x128xbf16>
    %c4 = arith.constant 4 : index
    %c0_25 = arith.constant 0 : index
    %c0_26 = arith.constant 0 : index
    %27 = vector.load %arg2[%c4, %c0_25, %c0_26] : memref<9x128x256xbf16, #tpu.memory_space<vmem>>, vector<1x128x256xbf16>
    %28 = vector.shape_cast %27 : vector<1x128x256xbf16> to vector<128x256xbf16>
    %cst_27 = arith.constant dense<0.000000e+00> : vector<20x256xf32>
    %29 = tpu.matmul %26, %28, %cst_27 {dimension_numbers = #tpu.dot_dimension_numbers<[1], [0], [0], [1], [0, 0, 1, 1], [], []>} : vector<20x128xbf16>, vector<128x256xbf16>, vector<20x256xf32> -> vector<20x256xf32>
    %30 = arith.addf %24, %29 : vector<20x256xf32>
    %c0_28 = arith.constant 0 : index
    %c7 = arith.constant 7 : index
    %c0_29 = arith.constant 0 : index
    %31 = vector.load %arg1[%c0_28, %c7, %c0_29] : memref<1x32x128xbf16, #tpu.memory_space<vmem>>, vector<1x20x128xbf16>
    %32 = vector.shape_cast %31 : vector<1x20x128xbf16> to vector<20x128xbf16>
    %c5_30 = arith.constant 5 : index
    %c0_31 = arith.constant 0 : index
    %c0_32 = arith.constant 0 : index
    %33 = vector.load %arg2[%c5_30, %c0_31, %c0_32] : memref<9x128x256xbf16, #tpu.memory_space<vmem>>, vector<1x128x256xbf16>
    %34 = vector.shape_cast %33 : vector<1x128x256xbf16> to vector<128x256xbf16>
    %cst_33 = arith.constant dense<0.000000e+00> : vector<20x256xf32>
    %35 = tpu.matmul %32, %34, %cst_33 {dimension_numbers = #tpu.dot_dimension_numbers<[1], [0], [0], [1], [0, 0, 1, 1], [], []>} : vector<20x128xbf16>, vector<128x256xbf16>, vector<20x256xf32> -> vector<20x256xf32>
    %36 = arith.addf %30, %35 : vector<20x256xf32>
    %c0_34 = arith.constant 0 : index
    %c10 = arith.constant 10 : index
    %c0_35 = arith.constant 0 : index
    %37 = vector.load %arg1[%c0_34, %c10, %c0_35] : memref<1x32x128xbf16, #tpu.memory_space<vmem>>, vector<1x20x128xbf16>
    %38 = vector.shape_cast %37 : vector<1x20x128xbf16> to vector<20x128xbf16>
    %c6_36 = arith.constant 6 : index
    %c0_37 = arith.constant 0 : index
    %c0_38 = arith.constant 0 : index
    %39 = vector.load %arg2[%c6_36, %c0_37, %c0_38] : memref<9x128x256xbf16, #tpu.memory_space<vmem>>, vector<1x128x256xbf16>
    %40 = vector.shape_cast %39 : vector<1x128x256xbf16> to vector<128x256xbf16>
    %cst_39 = arith.constant dense<0.000000e+00> : vector<20x256xf32>
    %41 = tpu.matmul %38, %40, %cst_39 {dimension_numbers = #tpu.dot_dimension_numbers<[1], [0], [0], [1], [0, 0, 1, 1], [], []>} : vector<20x128xbf16>, vector<128x256xbf16>, vector<20x256xf32> -> vector<20x256xf32>
    %42 = arith.addf %36, %41 : vector<20x256xf32>
    %c0_40 = arith.constant 0 : index
    %c11 = arith.constant 11 : index
    %c0_41 = arith.constant 0 : index
    %43 = vector.load %arg1[%c0_40, %c11, %c0_41] : memref<1x32x128xbf16, #tpu.memory_space<vmem>>, vector<1x20x128xbf16>
    %44 = vector.shape_cast %43 : vector<1x20x128xbf16> to vector<20x128xbf16>
    %c7_42 = arith.constant 7 : index
    %c0_43 = arith.constant 0 : index
    %c0_44 = arith.constant 0 : index
    %45 = vector.load %arg2[%c7_42, %c0_43, %c0_44] : memref<9x128x256xbf16, #tpu.memory_space<vmem>>, vector<1x128x256xbf16>
    %46 = vector.shape_cast %45 : vector<1x128x256xbf16> to vector<128x256xbf16>
    %cst_45 = arith.constant dense<0.000000e+00> : vector<20x256xf32>
    %47 = tpu.matmul %44, %46, %cst_45 {dimension_numbers = #tpu.dot_dimension_numbers<[1], [0], [0], [1], [0, 0, 1, 1], [], []>} : vector<20x128xbf16>, vector<128x256xbf16>, vector<20x256xf32> -> vector<20x256xf32>
    %48 = arith.addf %42, %47 : vector<20x256xf32>
    %c0_46 = arith.constant 0 : index
    %c12 = arith.constant 12 : index
    %c0_47 = arith.constant 0 : index
    %49 = vector.load %arg1[%c0_46, %c12, %c0_47] : memref<1x32x128xbf16, #tpu.memory_space<vmem>>, vector<1x20x128xbf16>
    %50 = vector.shape_cast %49 : vector<1x20x128xbf16> to vector<20x128xbf16>
    %c8 = arith.constant 8 : index
    %c0_48 = arith.constant 0 : index
    %c0_49 = arith.constant 0 : index
    %51 = vector.load %arg2[%c8, %c0_48, %c0_49] : memref<9x128x256xbf16, #tpu.memory_space<vmem>>, vector<1x128x256xbf16>
    %52 = vector.shape_cast %51 : vector<1x128x256xbf16> to vector<128x256xbf16>
    %cst_50 = arith.constant dense<0.000000e+00> : vector<20x256xf32>
    %53 = tpu.matmul %50, %52, %cst_50 {dimension_numbers = #tpu.dot_dimension_numbers<[1], [0], [0], [1], [0, 0, 1, 1], [], []>} : vector<20x128xbf16>, vector<128x256xbf16>, vector<20x256xf32> -> vector<20x256xf32>
    %54 = arith.addf %48, %53 : vector<20x256xf32>
    %c0_51 = arith.constant 0 : index
    %c0_52 = arith.constant 0 : index
    %55 = vector.load %arg3[%c0_51, %c0_52] : memref<1x256xf32, #tpu.memory_space<vmem>>, vector<1x256xf32>
    %56 = vector.broadcast %55 : vector<1x256xf32> to vector<20x256xf32>
    %57 = arith.addf %54, %56 : vector<20x256xf32>
    %cst_53 = arith.constant 0.000000e+00 : f32
    %58 = vector.broadcast %cst_53 : f32 to vector<20x256xf32>
    %59 = arith.maximumf %57, %58 : vector<20x256xf32>
    %60 = arith.truncf %59 : vector<20x256xf32> to vector<20x256xbf16>
    %c0_54 = arith.constant 0 : index
    %c0_55 = arith.constant 0 : index
    %c0_56 = arith.constant 0 : index
    %61 = vector.load %arg4[%c0_54, %c0_55, %c0_56] : memref<1x20x256xbf16, #tpu.memory_space<vmem>>, vector<1x20x256xbf16>
    %62 = vector.shape_cast %61 : vector<1x20x256xbf16> to vector<20x256xbf16>
    %63 = vector.shape_cast %60 : vector<20x256xbf16> to vector<1x20x256xbf16>
    tpu.vector_store %arg4[%c0_54, %c0_55, %c0_56], %63 {strides = array<i32>} : memref<1x20x256xbf16, #tpu.memory_space<vmem>>, vector<1x20x256xbf16>,
    return
  }
  func.func @transform_0(%arg0: i32) -> (i32, i32, i32) {
    %c0_i32 = arith.constant 0 : i32
    %c0_i32_0 = arith.constant 0 : i32
    %c0_i32_1 = arith.constant 0 : i32
    return %arg0, %c0_i32, %c0_i32_0 : i32, i32, i32
  }
  func.func @transform_1(%arg0: i32) -> (i32, i32, i32) {
    %c0_i32 = arith.constant 0 : i32
    %c0_i32_0 = arith.constant 0 : i32
    %c0_i32_1 = arith.constant 0 : i32
    %c0_i32_2 = arith.constant 0 : i32
    return %c0_i32, %c0_i32_0, %c0_i32_1 : i32, i32, i32
  }
  func.func @transform_2(%arg0: i32) -> (i32, i32) {
    %c0_i32 = arith.constant 0 : i32
    %c0_i32_0 = arith.constant 0 : i32
    %c0_i32_1 = arith.constant 0 : i32
    return %c0_i32, %c0_i32_0 : i32, i32
  }
  func.func @transform_3(%arg0: i32) -> (i32, i32, i32) {
    %c0_i32 = arith.constant 0 : i32
    %c0_i32_0 = arith.constant 0 : i32
    %c0_i32_1 = arith.constant 0 : i32
    return %arg0, %c0_i32, %c0_i32_0 : i32, i32, i32
  }
}

module attributes {stable_mosaic.version = 11 : i64} {
  func.func @_linear_bias_kernel(%arg0: i32, %arg1: memref<2x1024xbf16, #tpu.memory_space<vmem>>, %arg2: memref<1024x128xbf16, #tpu.memory_space<vmem>>, %arg3: memref<1x128xf32, #tpu.memory_space<vmem>>, %arg4: memref<2x128xf32, #tpu.memory_space<vmem>>) attributes {dimension_semantics = [#tpu.dimension_semantics<arbitrary>], iteration_bounds = array<i64: 1>, scalar_prefetch = 0 : i64, scratch_operands = 0 : i64, tpu.core_type = #tpu.core_type<tc>, window_params = [{pipeline_mode = #tpu.pipeline_mode<synchronous>, transform_indices = @transform_0, window_bounds = array<i64: 2, 1024>}, {pipeline_mode = #tpu.pipeline_mode<synchronous>, transform_indices = @transform_1, window_bounds = array<i64: 1024, 128>}, {pipeline_mode = #tpu.pipeline_mode<synchronous>, transform_indices = @transform_2, window_bounds = array<i64: 1, 128>}, {pipeline_mode = #tpu.pipeline_mode<synchronous>, transform_indices = @transform_3, window_bounds = array<i64: 2, 128>}]} {
    %c0 = arith.constant 0 : index
    %c0_0 = arith.constant 0 : index
    %0 = vector.load %arg1[%c0, %c0_0] : memref<2x1024xbf16, #tpu.memory_space<vmem>>, vector<2x1024xbf16>
    %c0_1 = arith.constant 0 : index
    %c0_2 = arith.constant 0 : index
    %1 = vector.load %arg2[%c0_1, %c0_2] : memref<1024x128xbf16, #tpu.memory_space<vmem>>, vector<1024x128xbf16>
    %cst = arith.constant dense<0.000000e+00> : vector<2x128xf32>
    %2 = tpu.matmul %0, %1, %cst {dimension_numbers = #tpu.dot_dimension_numbers<[1], [0], [0], [1], [0, 0, 1, 1], [], []>} : vector<2x1024xbf16>, vector<1024x128xbf16>, vector<2x128xf32> -> vector<2x128xf32>
    %c0_3 = arith.constant 0 : index
    %c0_4 = arith.constant 0 : index
    %3 = vector.load %arg3[%c0_3, %c0_4] : memref<1x128xf32, #tpu.memory_space<vmem>>, vector<1x128xf32>
    %4 = vector.broadcast %3 : vector<1x128xf32> to vector<2x128xf32>
    %5 = arith.addf %2, %4 : vector<2x128xf32>
    %c0_5 = arith.constant 0 : index
    %c0_6 = arith.constant 0 : index
    %6 = vector.load %arg4[%c0_5, %c0_6] : memref<2x128xf32, #tpu.memory_space<vmem>>, vector<2x128xf32>
    tpu.vector_store %arg4[%c0_5, %c0_6], %5 {strides = array<i32>} : memref<2x128xf32, #tpu.memory_space<vmem>>, vector<2x128xf32>,
    return
  }
  func.func @transform_0(%arg0: i32) -> (i32, i32) {
    %c0_i32 = arith.constant 0 : i32
    %c0_i32_0 = arith.constant 0 : i32
    %c0_i32_1 = arith.constant 0 : i32
    return %c0_i32, %c0_i32_0 : i32, i32
  }
  func.func @transform_1(%arg0: i32) -> (i32, i32) {
    %c0_i32 = arith.constant 0 : i32
    %c0_i32_0 = arith.constant 0 : i32
    %c0_i32_1 = arith.constant 0 : i32
    return %c0_i32, %c0_i32_0 : i32, i32
  }
  func.func @transform_2(%arg0: i32) -> (i32, i32) {
    %c0_i32 = arith.constant 0 : i32
    %c0_i32_0 = arith.constant 0 : i32
    %c0_i32_1 = arith.constant 0 : i32
    return %c0_i32, %c0_i32_0 : i32, i32
  }
  func.func @transform_3(%arg0: i32) -> (i32, i32) {
    %c0_i32 = arith.constant 0 : i32
    %c0_i32_0 = arith.constant 0 : i32
    %c0_i32_1 = arith.constant 0 : i32
    return %c0_i32, %c0_i32_0 : i32, i32
  }
}

</mosaic_0001>

<llo_original>
// kernel: test_et_al_forward.4
$region0: #{test_et_al_forward.4}
  #allocation0 [shape = 'u32[]', space=smem, size = 0x4, offset = 0x4, fixed_abs, tag = 'smem constant byte address 0x4 - core index']
  #allocation1 [shape = 'u32[144,128]{1,0:T(1,128)}', space=vmem, size = 0x12000, scoped, tag = 'internal scratch']
  %s0 = inlined_call_operand.vmem [shape: bf16[2,308,4], index: 0, kind: input, shape index: {}]
  %s1 = inlined_call_operand.vmem [shape: bf16[9,4,128], index: 1, kind: input, shape index: {}]
  %s2 = inlined_call_operand.vmem [shape: f32[1,128], index: 2, kind: input, shape index: {}]
  %s3 = inlined_call_operand.vmem [shape: bf16[2,272,128], index: 3, kind: output, shape index: {}]
  %s4 = sld [smem:[#allocation0]]
  $region45: #{test_et_al_forward.4} parent=0
    _
  %s6 = ssub.s32 1, %s4
  %s7 = scalar_select 0, %s6, %s4
  loop: start=0, step=1, limit=4
  $region2: #{test_et_al_forward.4} parent=0 // loop_pre_header
    _
  $region3: #{test_et_al_forward.4} parent=0 // loop_header
    %s9 = sphi 0, %s13
    %p10 = scmp.ge.s32.totalorder %s9, 4
    %s19 = sphi 0, %s21
    %s22 = sphi 0, %s19
    %s23 = sphi 0, %s22
    %s39 = sphi 0, %s23
    %s43 = sphi 0, %s43
    %s45 = sphi 0, %s43
    %s46 = sphi 0, %s45
    %s60 = sphi 0, %s46
    %s64 = sphi 0, %s64
    %s66 = sphi 0, %s64
    %s67 = sphi 0, %s66
    %s81 = sphi 0, %s67
    %s87 = sphi 0, %s89
    %s90 = sphi 0, %s87
    %s91 = sphi 0, %s90
    %s107 = sphi 0, %s91
  $region4: #{test_et_al_forward.4} parent=0 // loop_header_branch
    %12 = sbr.rel (%p10) target = $region8
  $region5: #{test_et_al_forward.4} parent=0 // loop_body
    %s14 = ssub.s32 %s9, 1
    %s15 = ssub.s32 %s9, 2
    %s16 = sadd.s32 %s9, 1
    %s17 = ssub.s32 %s9, %s16
    %p18 = scmp.eq.s32.totalorder %s17, 0
    %s20 = sadd.s32 %s19, 1
    %s21 = scalar_select %p18, %s19, %s20
    %p24 = pneg %p18
    %p25 = scmp.eq.s32.totalorder %s9, 1
    %p26 = por %p24, %p25
    %p27 = scmp.ne.s32.totalorder %s19, %s22
    %p28 = scmp.eq.s32.totalorder %s9, 0
    %p29 = por %p27, %p28
    %p30 = scmp.ne.s32.totalorder %s19, %s22
    %p31 = scmp.eq.s32.totalorder %s14, 1
    %p32 = por %p30, %p31
    %p33 = scmp.ne.s32.totalorder %s22, %s23
    %p34 = scmp.eq.s32.totalorder %s14, 0
    %p35 = por %p33, %p34
    %p36 = scmp.ne.s32.totalorder %s22, %s23
    %p37 = scmp.eq.s32.totalorder %s15, 1
    %p38 = por %p36, %p37
    %p40 = scmp.ne.s32.totalorder %s23, %s39
    %p41 = scmp.eq.s32.totalorder %s15, 0
    %p42 = por %p40, %p41
    %s44 = sadd.s32 %s43, 1
    %p47 = scmp.eq.s32.totalorder %s9, 1
    %p48 = scmp.ne.s32.totalorder %s43, %s45
    %p49 = scmp.eq.s32.totalorder %s9, 0
    %p50 = por %p48, %p49
    %p51 = scmp.ne.s32.totalorder %s43, %s45
    %p52 = scmp.eq.s32.totalorder %s14, 1
    %p53 = por %p51, %p52
    %p54 = scmp.ne.s32.totalorder %s45, %s46
    %p55 = scmp.eq.s32.totalorder %s14, 0
    %p56 = por %p54, %p55
    %p57 = scmp.ne.s32.totalorder %s45, %s46
    %p58 = scmp.eq.s32.totalorder %s15, 1
    %p59 = por %p57, %p58
    %p61 = scmp.ne.s32.totalorder %s46, %s60
    %p62 = scmp.eq.s32.totalorder %s15, 0
    %p63 = por %p61, %p62
    %s65 = sadd.s32 %s64, 1
    %p68 = scmp.eq.s32.totalorder %s9, 1
    %p69 = scmp.ne.s32.totalorder %s64, %s66
    %p70 = scmp.eq.s32.totalorder %s9, 0
    %p71 = por %p69, %p70
    %p72 = scmp.ne.s32.totalorder %s64, %s66
    %p73 = scmp.eq.s32.totalorder %s14, 1
    %p74 = por %p72, %p73
    %p75 = scmp.ne.s32.totalorder %s66, %s67
    %p76 = scmp.eq.s32.totalorder %s14, 0
    %p77 = por %p75, %p76
    %p78 = scmp.ne.s32.totalorder %s66, %s67
    %p79 = scmp.eq.s32.totalorder %s15, 1
    %p80 = por %p78, %p79
    %p82 = scmp.ne.s32.totalorder %s67, %s81
    %p83 = scmp.eq.s32.totalorder %s15, 0
    %p84 = por %p82, %p83
    %s85 = ssub.s32 %s9, %s16
    %p86 = scmp.eq.s32.totalorder %s85, 0
    %s88 = sadd.s32 %s87, 1
    %s89 = scalar_select %p86, %s87, %s88
    %p92 = pneg %p86
    %p93 = scmp.eq.s32.totalorder %s9, 1
    %p94 = por %p92, %p93
    %p95 = scmp.ne.s32.totalorder %s87, %s90
    %p96 = scmp.eq.s32.totalorder %s9, 0
    %p97 = por %p95, %p96
    %p98 = scmp.ne.s32.totalorder %s87, %s90
    %p99 = scmp.eq.s32.totalorder %s14, 1
    %p100 = por %p98, %p99
    %p101 = scmp.ne.s32.totalorder %s90, %s91
    %p102 = scmp.eq.s32.totalorder %s14, 0
    %p103 = por %p101, %p102
    %p104 = scmp.ne.s32.totalorder %s90, %s91
    %p105 = scmp.eq.s32.totalorder %s15, 1
    %p106 = por %p104, %p105
    %p108 = scmp.ne.s32.totalorder %s91, %s107
    %p109 = scmp.eq.s32.totalorder %s15, 0
    %p110 = por %p108, %p109
    %p111 = scmp.le.s32.totalorder 1, %s9
    %p112 = scmp.lt.s32.totalorder %s9, 3
    %p113 = pnand %p111, %p112
    %p114 = pneg %p113
    // Predicated region
    $region9: #{test_et_al_forward.4} parent=5 // pred_check
      _
    $region10: #{test_et_al_forward.4} parent=5 // pred_check_branch
      %116 = sbr.rel (%p113) target = $region12
    $region11: #{test_et_al_forward.4} parent=5 // pred_region
      %s117 = ssub.s32 %s9, 1
      // Predicated region
      $region13: #{test_et_al_forward.4} parent=11 // pred_check
        %p118 = pneg %p56
      $region14: #{test_et_al_forward.4} parent=11 // pred_check_branch
        %120 = sbr.rel (%p118) target = $region16
      $region15: #{test_et_al_forward.4} parent=11 // pred_region
        _
      $region16: #{test_et_al_forward.4} parent=11 // pred_fallthru
        _
      // Predicated region
      $region17: #{test_et_al_forward.4} parent=11 // pred_check
        %p121 = pneg %p77
      $region18: #{test_et_al_forward.4} parent=11 // pred_check_branch
        %123 = sbr.rel (%p121) target = $region20
      $region19: #{test_et_al_forward.4} parent=11 // pred_region
        _
      $region20: #{test_et_al_forward.4} parent=11 // pred_fallthru
        _
    $region12: #{test_et_al_forward.4} parent=5 // pred_fallthru
      _
    %p124 = scmp.lt.s32.totalorder %s9, 2
    // Predicated region
    $region21: #{test_et_al_forward.4} parent=5 // pred_check
      %p125 = pneg %p124
    $region22: #{test_et_al_forward.4} parent=5 // pred_check_branch
      %127 = sbr.rel (%p125) target = $region24
    $region23: #{test_et_al_forward.4} parent=5 // pred_region
      // Predicated region
      $region25: #{test_et_al_forward.4} parent=23 // pred_check
        %p128 = pneg %p29
      $region26: #{test_et_al_forward.4} parent=23 // pred_check_branch
        %130 = sbr.rel (%p128) target = $region28
      $region27: #{test_et_al_forward.4} parent=23 // pred_region
        %p131 = scmp.lt.s32.totalorder %s9, 1
        %s132 = scalar_select %p131, %s9, 1
        %s133 = smul.addr %s132, 39
        %s134 = smul.addr %s133, 4
        %s135 = scalar_lea.vmem %s0, %s134
      $region28: #{test_et_al_forward.4} parent=23 // pred_fallthru
        _
    $region24: #{test_et_al_forward.4} parent=5 // pred_fallthru
      _
    %p136 = scmp.le.s32.totalorder 1, %s9
    %p137 = scmp.lt.s32.totalorder %s9, 3
    %p138 = pnand %p136, %p137
    %p139 = pneg %p138
    // Predicated region
    $region29: #{test_et_al_forward.4} parent=5 // pred_check
      _
    $region30: #{test_et_al_forward.4} parent=5 // pred_check_branch
      %141 = sbr.rel (%p138) target = $region32
    $region31: #{test_et_al_forward.4} parent=5 // pred_region
      %s142 = ssub.s32 %s9, 1
      %p143 = scmp.lt.s32.totalorder %s14, 1
      %s144 = scalar_select %p143, %s14, 1
      %s145 = smul.addr %s144, 39
      %s146 = smul.addr %s145, 4
      %s147 = scalar_lea.vmem %s0, %s146
      %p148 = pneg %p35
      %p149 = pneg %p32
      %p150 = pneg %p56
      %p151 = pneg %p53
      %p152 = pneg %p77
      %p153 = pneg %p74
      %p154 = pneg %p103
      %p155 = pneg %p100
      %p156 = scmp.lt.s32.totalorder %s14, 1
      %s157 = scalar_select %p156, %s14, 1
      %s158 = smul.addr %s157, 34
      %s159 = smul.addr %s158, 4
      %s160 = scalar_lea.vmem %s3, %s159
      %p161 = scmp.lt.s32.totalorder %s14, 1
      %s162 = scalar_select %p161, %s14, 1
      %s163 = smul.addr %s162, 39
      %s164 = smul.addr %s163, 4
      %s165 = scalar_lea.vmem %s0, %s164
      %p166 = scmp.lt.s32.totalorder %s14, 1
      %s167 = scalar_select %p166, %s14, 1
      %s168 = smul.addr %s167, 34
      %s169 = smul.addr %s168, 4
      %s170 = scalar_lea.vmem %s3, %s169
      %v172 = vld [vmem:[%s165] sm:$0xf]
      %v173 = vld [vmem:[%s165 + $0x4] sm:$0xf]
      %v174 = vld [vmem:[%s165 + $0x8] sm:$0xf]
      %v175 = vld [vmem:[%s165 + $0xc] sm:$0xf]
      %v176 = vld [vmem:[%s165 + $0x10] sm:$0xf]
      %v177 = vld [vmem:[%s165 + $0x14] sm:$0xf]
      %v178 = vld [vmem:[%s165 + $0x18] sm:$0xf]
      %v179 = vld [vmem:[%s165 + $0x1c] sm:$0xf]
      %v180 = vld [vmem:[%s165 + $0x20] sm:$0xf]
      %v181 = vld [vmem:[%s165 + $0x24] sm:$0xf]
      %v182 = vld [vmem:[%s165 + $0x28] sm:$0xf]
      %v183 = vld [vmem:[%s165 + $0x2c] sm:$0xf]
      %v184 = vld [vmem:[%s165 + $0x30] sm:$0xf]
      %v185 = vld [vmem:[%s165 + $0x34] sm:$0xf]
      %v186 = vld [vmem:[%s165 + $0x38] sm:$0xf]
      %v187 = vld [vmem:[%s165 + $0x3c] sm:$0xf]
      %v188 = vld [vmem:[%s165 + $0x40] sm:$0xf]
      %v189 = vld [vmem:[%s165 + $0x44] sm:$0xf]
      %v190 = vld [vmem:[%s165 + $0x48] sm:$0xf]
      %v191 = vld [vmem:[%s165 + $0x4c] sm:$0xf]
      %v192 = vld [vmem:[%s165 + $0x50] sm:$0xf]
      %v193 = vld [vmem:[%s165 + $0x54] sm:$0xf]
      %v194 = vld [vmem:[%s165 + $0x58] sm:$0xf]
      %v195 = vld [vmem:[%s165 + $0x5c] sm:$0xf]
      %v196 = vld [vmem:[%s165 + $0x60] sm:$0xf]
      %v197 = vld [vmem:[%s165 + $0x64] sm:$0xf]
      %v198 = vld [vmem:[%s165 + $0x68] sm:$0xf]
      %v199 = vld [vmem:[%s165 + $0x6c] sm:$0xf]
      %v200 = vld [vmem:[%s165 + $0x70] sm:$0xf]
      %v201 = vld [vmem:[%s165 + $0x74] sm:$0xf]
      %v202 = vld [vmem:[%s165 + $0x78] sm:$0xf]
      %v203 = vld [vmem:[%s165 + $0x7c] sm:$0xf]
      %v204 = vld [vmem:[%s165 + $0x80] sm:$0xf]
      %v205 = vld [vmem:[%s165 + $0x84] sm:$0xf]
      %v206 = vld [vmem:[%s1] sm:$0x3]
      %v207 = vld [vmem:[%s165 + $0x88] sm:$0x1]
      %s208 = scalar_lea.vmem %s1, 2
      %v209 = vld [vmem:[%s208] sm:$0x3]
      %v245 = vunpack.c.l.b16 %v172
      %v246 = vunpack.c.l.b16 %v173
      %v247 = vunpack.c.l.b16 %v174
      %v248 = vunpack.c.l.b16 %v175
      %v249 = vunpack.c.l.b16 %v176
      %v250 = vunpack.c.l.b16 %v177
      %v251 = vunpack.c.l.b16 %v178
      %v252 = vunpack.c.l.b16 %v179
      %v253 = vunpack.c.l.b16 %v180
      %v254 = vunpack.c.l.b16 %v181
      %v255 = vunpack.c.l.b16 %v182
      %v256 = vunpack.c.l.b16 %v183
      %v257 = vunpack.c.l.b16 %v184
      %v258 = vunpack.c.l.b16 %v185
      %v259 = vunpack.c.l.b16 %v186
      %v260 = vunpack.c.l.b16 %v187
      %v261 = vunpack.c.l.b16 %v188
      %v262 = vunpack.c.l.b16 %v189
      %v263 = vunpack.c.l.b16 %v190
      %v264 = vunpack.c.l.b16 %v191
      %v265 = vunpack.c.l.b16 %v192
      %v266 = vunpack.c.l.b16 %v193
      %v267 = vunpack.c.l.b16 %v194
      %v268 = vunpack.c.l.b16 %v195
      %v269 = vunpack.c.l.b16 %v196
      %v270 = vunpack.c.l.b16 %v197
      %v271 = vunpack.c.l.b16 %v198
      %v272 = vunpack.c.l.b16 %v199
      %v273 = vunpack.c.l.b16 %v200
      %v274 = vunpack.c.l.b16 %v201
      %v275 = vunpack.c.l.b16 %v202
      %v276 = vunpack.c.l.b16 %v203
      %v277 = vunpack.c.l.b16 %v204
      %v278 = vunpack.c.l.b16 %v205
      %v279 = vunpack.c.l.b16 %v207
      %v280 = vpack.c.b16 %v246, %v245
      %v281 = vpack.c.b16 %v248, %v247
      %v282 = vpack.c.b16 %v250, %v249
      %v283 = vpack.c.b16 %v252, %v251
      %v284 = vpack.c.b16 %v254, %v253
      %v285 = vpack.c.b16 %v256, %v255
      %v286 = vpack.c.b16 %v258, %v257
      %v287 = vpack.c.b16 %v260, %v259
      %v288 = vpack.c.b16 %v262, %v261
      %v289 = vpack.c.b16 %v264, %v263
      %v290 = vpack.c.b16 %v266, %v265
      %v291 = vpack.c.b16 %v268, %v267
      %v292 = vpack.c.b16 %v270, %v269
      %v293 = vpack.c.b16 %v272, %v271
      %v294 = vpack.c.b16 %v274, %v273
      %v295 = vpack.c.b16 %v276, %v275
      %v296 = vpack.c.b16 %v278, %v277
      %v297 = vpack.c.b16 %v279, %v279
      %vm298 = vsmask.f32 7424
      %v300 = vshrl.u32 %v280, 16
      %v302 = vshll.u32 %v280, 16
      %v304 = vrot.slane %v302, 1
      %v305 = vor.u32 %v300, %v304
      %v307 = vshll.u32 %v281, 16
      %v309 = vrot.slane %v307, 1
      %v310 = vsel %vm298, %v305, %v309
      %v311 = vshrl.u32 %v281, 16
      %v313 = vor.u32 %v311, %v309
      %v315 = vshll.u32 %v282, 16
      %v317 = vrot.slane %v315, 1
      %v318 = vsel %vm298, %v313, %v317
      %v319 = vshrl.u32 %v282, 16
      %v321 = vor.u32 %v319, %v317
      %v323 = vshll.u32 %v283, 16
      %v325 = vrot.slane %v323, 1
      %v326 = vsel %vm298, %v321, %v325
      %v327 = vshrl.u32 %v283, 16
      %v329 = vor.u32 %v327, %v325
      %v331 = vshll.u32 %v284, 16
      %v333 = vrot.slane %v331, 1
      %v334 = vsel %vm298, %v329, %v333
      %v335 = vshrl.u32 %v284, 16
      %v337 = vor.u32 %v335, %v333
      %v339 = vshll.u32 %v285, 16
      %v341 = vrot.slane %v339, 1
      %v342 = vsel %vm298, %v337, %v341
      %v343 = vshrl.u32 %v285, 16
      %v345 = vor.u32 %v343, %v341
      %v347 = vshll.u32 %v286, 16
      %v349 = vrot.slane %v347, 1
      %v350 = vsel %vm298, %v345, %v349
      %v351 = vshrl.u32 %v286, 16
      %v353 = vor.u32 %v351, %v349
      %v355 = vshll.u32 %v287, 16
      %v357 = vrot.slane %v355, 1
      %v358 = vsel %vm298, %v353, %v357
      %v359 = vshrl.u32 %v287, 16
      %v361 = vor.u32 %v359, %v357
      %v363 = vshll.u32 %v288, 16
      %v365 = vrot.slane %v363, 1
      %v366 = vsel %vm298, %v361, %v365
      %v367 = vshrl.u32 %v288, 16
      %v369 = vor.u32 %v367, %v365
      %v371 = vshll.u32 %v289, 16
      %v373 = vrot.slane %v371, 1
      %v374 = vsel %vm298, %v369, %v373
      %v375 = vshrl.u32 %v289, 16
      %v377 = vor.u32 %v375, %v373
      %v379 = vshll.u32 %v290, 16
      %v381 = vrot.slane %v379, 1
      %v382 = vsel %vm298, %v377, %v381
      %v383 = vshrl.u32 %v290, 16
      %v385 = vor.u32 %v383, %v381
      %v387 = vshll.u32 %v291, 16
      %v389 = vrot.slane %v387, 1
      %v390 = vsel %vm298, %v385, %v389
      %v391 = vshrl.u32 %v291, 16
      %v393 = vor.u32 %v391, %v389
      %v395 = vshll.u32 %v292, 16
      %v397 = vrot.slane %v395, 1
      %v398 = vsel %vm298, %v393, %v397
      %v399 = vshrl.u32 %v292, 16
      %v401 = vor.u32 %v399, %v397
      %v403 = vshll.u32 %v293, 16
      %v405 = vrot.slane %v403, 1
      %v406 = vsel %vm298, %v401, %v405
      %v407 = vshrl.u32 %v293, 16
      %v409 = vor.u32 %v407, %v405
      %v411 = vshll.u32 %v294, 16
      %v413 = vrot.slane %v411, 1
      %v414 = vsel %vm298, %v409, %v413
      %v415 = vshrl.u32 %v294, 16
      %v417 = vor.u32 %v415, %v413
      %v419 = vshll.u32 %v295, 16
      %v421 = vrot.slane %v419, 1
      %v422 = vsel %vm298, %v417, %v421
      %v423 = vshrl.u32 %v295, 16
      %v425 = vor.u32 %v423, %v421
      %v427 = vshll.u32 %v296, 16
      %v429 = vrot.slane %v427, 1
      %v430 = vsel %vm298, %v425, %v429
      %v431 = vshrl.u32 %v296, 16
      %v433 = vor.u32 %v431, %v429
      %v435 = vshll.u32 %v297, 16
      %v437 = vrot.slane %v435, 1
      %v438 = vsel %vm298, %v433, %v437
      %vm439 = vcmask 31744
      %v441 = vsel %vm439, %v310, 0
      %v444 = vsel %vm439, %v318, 0
      %v447 = vsel %vm439, %v326, 0
      %v450 = vsel %vm439, %v334, 0
      %v453 = vsel %vm439, %v342, 0
      %v456 = vsel %vm439, %v350, 0
      %v459 = vsel %vm439, %v358, 0
      %v462 = vsel %vm439, %v366, 0
      %v465 = vsel %vm439, %v374, 0
      %v468 = vsel %vm439, %v382, 0
      %v471 = vsel %vm439, %v390, 0
      %v474 = vsel %vm439, %v398, 0
      %v477 = vsel %vm439, %v406, 0
      %v480 = vsel %vm439, %v414, 0
      %v483 = vsel %vm439, %v422, 0
      %v486 = vsel %vm439, %v430, 0
      %v489 = vsel %vm439, %v438, 0
      %vm491 = vcmask 1041408
      %v493 = vsel %vm491, %v209, 0
      %495 = vmatprep.subr.bf16.mxu0 0
      %496 = vmatpush1.bf16.msra.mxu0 %v493
      %497 = vmatprep.subr.bf16.mxu0 0
      %498 = vmatpush1.bf16.msra.mxu0 0
      %499 = vmatprep.subr.bf16.mxu0 0
      %500 = vmatpush1.bf16.msra.mxu0 0
      %501 = vmatprep.subr.bf16.mxu0 0
      %502 = vmatpush1.bf16.msra.mxu0 0
      %503 = vmatprep.subr.bf16.mxu0 0
      %504 = vmatpush1.bf16.msra.mxu0 0
      %505 = vmatprep.subr.bf16.mxu0 0
      %506 = vmatpush1.bf16.msra.mxu0 0
      %507 = vmatprep.subr.bf16.mxu0 0
      %508 = vmatpush1.bf16.msra.mxu0 0
      %509 = vmatprep.subr.bf16.mxu0 0
      %510 = vmatpush1.bf16.msra.mxu0 0
      %511 = vmatprep.subr.bf16.mxu0 0
      %512 = vmatpush1.bf16.msra.mxu0 0
      %513 = vmatprep.subr.bf16.mxu0 0
      %514 = vmatpush1.bf16.msra.mxu0 0
      %515 = vmatprep.subr.bf16.mxu0 0
      %516 = vmatpush1.bf16.msra.mxu0 0
      %517 = vmatprep.subr.bf16.mxu0 0
      %518 = vmatpush1.bf16.msra.mxu0 0
      %519 = vmatprep.subr.bf16.mxu0 0
      %520 = vmatpush1.bf16.msra.mxu0 0
      %521 = vmatprep.subr.bf16.mxu0 0
      %522 = vmatpush1.bf16.msra.mxu0 0
      %523 = vmatprep.subr.bf16.mxu0 0
      %524 = vmatpush1.bf16.msra.mxu0 0
      %525 = vmatprep.subr.bf16.mxu0 0
      %526 = vmatpush1.bf16.msra.mxu0 0
      %527 = vmatprep.mubr.bf16.mxu0 0
      %528 = vmatmul.mubr.bf16.gmra.mrb[0].mxu0 %v441
      %v529 = vpop.f32.mrb[0].mxu0
      %v530 = vadd.f32 0.0, %v529
      %v531 = vpop.f32.mrb[0].mxu0
      %v532 = vpop.f32.mrb[0].mxu0
      %v533 = vadd.f32 0.0, %v532
      %v534 = vpop.f32.mrb[0].mxu0
      %535 = vmatprep.mubr.bf16.mxu0 0
      %536 = vmatmul.mubr.bf16.gmra.mrb[0].mxu0 %v444
      %v537 = vpop.f32.mrb[0].mxu0
      %v538 = vadd.f32 0.0, %v537
      %v539 = vpop.f32.mrb[0].mxu0
      %v540 = vpop.f32.mrb[0].mxu0
      %v541 = vadd.f32 0.0, %v540
      %v542 = vpop.f32.mrb[0].mxu0
      %543 = vmatprep.mubr.bf16.mxu0 0
      %544 = vmatmul.mubr.bf16.gmra.mrb[0].mxu0 %v447
      %v545 = vpop.f32.mrb[0].mxu0
      %v546 = vadd.f32 0.0, %v545
      %v547 = vpop.f32.mrb[0].mxu0
      %v548 = vpop.f32.mrb[0].mxu0
      %v549 = vadd.f32 0.0, %v548
      %v550 = vpop.f32.mrb[0].mxu0
      %551 = vmatprep.mubr.bf16.mxu0 0
      %552 = vmatmul.mubr.bf16.gmra.mrb[0].mxu0 %v450
      %v553 = vpop.f32.mrb[0].mxu0
      %v554 = vadd.f32 0.0, %v553
      %v555 = vpop.f32.mrb[0].mxu0
      %v556 = vpop.f32.mrb[0].mxu0
      %v557 = vadd.f32 0.0, %v556
      %v558 = vpop.f32.mrb[0].mxu0
      %559 = vmatprep.mubr.bf16.mxu0 0
      %560 = vmatmul.mubr.bf16.gmra.mrb[0].mxu0 %v453
      %v561 = vpop.f32.mrb[0].mxu0
      %v562 = vadd.f32 0.0, %v561
      %v563 = vpop.f32.mrb[0].mxu0
      %v564 = vpop.f32.mrb[0].mxu0
      %v565 = vadd.f32 0.0, %v564
      %v566 = vpop.f32.mrb[0].mxu0
      %567 = vmatprep.mubr.bf16.mxu0 0
      %568 = vmatmul.mubr.bf16.gmra.mrb[0].mxu0 %v456
      %v569 = vpop.f32.mrb[0].mxu0
      %v570 = vadd.f32 0.0, %v569
      %v571 = vpop.f32.mrb[0].mxu0
      %v572 = vpop.f32.mrb[0].mxu0
      %v573 = vadd.f32 0.0, %v572
      %v574 = vpop.f32.mrb[0].mxu0
      %575 = vmatprep.mubr.bf16.mxu0 0
      %576 = vmatmul.mubr.bf16.gmra.mrb[0].mxu0 %v459
      %v577 = vpop.f32.mrb[0].mxu0
      %v578 = vadd.f32 0.0, %v577
      %v579 = vpop.f32.mrb[0].mxu0
      %v580 = vpop.f32.mrb[0].mxu0
      %v581 = vadd.f32 0.0, %v580
      %v582 = vpop.f32.mrb[0].mxu0
      %583 = vmatprep.mubr.bf16.mxu0 0
      %584 = vmatmul.mubr.bf16.gmra.mrb[0].mxu0 %v462
      %v585 = vpop.f32.mrb[0].mxu0
      %v586 = vadd.f32 0.0, %v585
      %v587 = vpop.f32.mrb[0].mxu0
      %v588 = vpop.f32.mrb[0].mxu0
      %v589 = vadd.f32 0.0, %v588
      %v590 = vpop.f32.mrb[0].mxu0
      %591 = vmatprep.mubr.bf16.mxu0 0
      %592 = vmatmul.mubr.bf16.gmra.mrb[0].mxu0 %v465
      %v593 = vpop.f32.mrb[0].mxu0
      %v594 = vadd.f32 0.0, %v593
      %v595 = vpop.f32.mrb[0].mxu0
      %v596 = vpop.f32.mrb[0].mxu0
      %v597 = vadd.f32 0.0, %v596
      %v598 = vpop.f32.mrb[0].mxu0
      %599 = vmatprep.mubr.bf16.mxu0 0
      %600 = vmatmul.mubr.bf16.gmra.mrb[0].mxu0 %v468
      %v601 = vpop.f32.mrb[0].mxu0
      %v602 = vadd.f32 0.0, %v601
      %v603 = vpop.f32.mrb[0].mxu0
      %v604 = vpop.f32.mrb[0].mxu0
      %v605 = vadd.f32 0.0, %v604
      %v606 = vpop.f32.mrb[0].mxu0
      %607 = vmatprep.mubr.bf16.mxu0 0
      %608 = vmatmul.mubr.bf16.gmra.mrb[0].mxu0 %v471
      %v609 = vpop.f32.mrb[0].mxu0
      %v610 = vadd.f32 0.0, %v609
      %v611 = vpop.f32.mrb[0].mxu0
      %v612 = vpop.f32.mrb[0].mxu0
      %v613 = vadd.f32 0.0, %v612
      %v614 = vpop.f32.mrb[0].mxu0
      %615 = vmatprep.mubr.bf16.mxu0 0
      %616 = vmatmul.mubr.bf16.gmra.mrb[0].mxu0 %v474
      %v617 = vpop.f32.mrb[0].mxu0
      %v618 = vadd.f32 0.0, %v617
      %v619 = vpop.f32.mrb[0].mxu0
      %v620 = vpop.f32.mrb[0].mxu0
      %v621 = vadd.f32 0.0, %v620
      %v622 = vpop.f32.mrb[0].mxu0
      %623 = vmatprep.mubr.bf16.mxu0 0
      %624 = vmatmul.mubr.bf16.gmra.mrb[0].mxu0 %v477
      %v625 = vpop.f32.mrb[0].mxu0
      %v626 = vadd.f32 0.0, %v625
      %v627 = vpop.f32.mrb[0].mxu0
      %v628 = vpop.f32.mrb[0].mxu0
      %v629 = vadd.f32 0.0, %v628
      %v630 = vpop.f32.mrb[0].mxu0
      %631 = vmatprep.mubr.bf16.mxu0 0
      %632 = vmatmul.mubr.bf16.gmra.mrb[0].mxu0 %v480
      %v633 = vpop.f32.mrb[0].mxu0
      %v634 = vadd.f32 0.0, %v633
      %v635 = vpop.f32.mrb[0].mxu0
      %v636 = vpop.f32.mrb[0].mxu0
      %v637 = vadd.f32 0.0, %v636
      %v638 = vpop.f32.mrb[0].mxu0
      %639 = vmatprep.mubr.bf16.mxu0 0
      %640 = vmatmul.mubr.bf16.gmra.mrb[0].mxu0 %v483
      %v641 = vpop.f32.mrb[0].mxu0
      %v642 = vadd.f32 0.0, %v641
      %v643 = vpop.f32.mrb[0].mxu0
      %v644 = vpop.f32.mrb[0].mxu0
      %v645 = vadd.f32 0.0, %v644
      %v646 = vpop.f32.mrb[0].mxu0
      %647 = vmatprep.mubr.bf16.mxu0 0
      %648 = vmatmul.mubr.bf16.gmra.mrb[0].mxu0 %v486
      %v649 = vpop.f32.mrb[0].mxu0
      %v650 = vadd.f32 0.0, %v649
      %v651 = vpop.f32.mrb[0].mxu0
      %v652 = vpop.f32.mrb[0].mxu0
      %v653 = vadd.f32 0.0, %v652
      %v654 = vpop.f32.mrb[0].mxu0
      %655 = vmatprep.mubr.bf16.mxu0 0
      %656 = vmatmul.mubr.bf16.gmra.mrb[0].mxu0 %v489
      %v657 = vpop.f32.mrb[0].mxu0
      %v658 = vadd.f32 0.0, %v657
      %v659 = vpop.f32.mrb[0].mxu0
      %v660 = vpop.f32.mrb[0].mxu0
      %v661 = vadd.f32 0.0, %v660
      %v662 = vpop.f32.mrb[0].mxu0
      %663 = vdwg.mxu0
      %v664 = vsel %vm439, %v280, 0
      %v666 = vsel %vm439, %v281, 0
      %v668 = vsel %vm439, %v282, 0
      %v670 = vsel %vm439, %v283, 0
      %v672 = vsel %vm439, %v284, 0
      %v674 = vsel %vm439, %v285, 0
      %v676 = vsel %vm439, %v286, 0
      %v678 = vsel %vm439, %v287, 0
      %v680 = vsel %vm439, %v288, 0
      %v682 = vsel %vm439, %v289, 0
      %v684 = vsel %vm439, %v290, 0
      %v686 = vsel %vm439, %v291, 0
      %v688 = vsel %vm439, %v292, 0
      %v690 = vsel %vm439, %v293, 0
      %v692 = vsel %vm439, %v294, 0
      %v694 = vsel %vm439, %v295, 0
      %v696 = vsel %vm439, %v296, 0
      %v699 = vsel %vm491, %v206, 0
      %701 = vmatprep.subr.bf16.mxu0 0
      %702 = vmatpush1.bf16.msra.mxu0 %v699
      %703 = vmatprep.subr.bf16.mxu0 0
      %704 = vmatpush1.bf16.msra.mxu0 0
      %705 = vmatprep.subr.bf16.mxu0 0
      %706 = vmatpush1.bf16.msra.mxu0 0
      %707 = vmatprep.subr.bf16.mxu0 0
      %708 = vmatpush1.bf16.msra.mxu0 0
      %709 = vmatprep.subr.bf16.mxu0 0
      %710 = vmatpush1.bf16.msra.mxu0 0
      %711 = vmatprep.subr.bf16.mxu0 0
      %712 = vmatpush1.bf16.msra.mxu0 0
      %713 = vmatprep.subr.bf16.mxu0 0
      %714 = vmatpush1.bf16.msra.mxu0 0
      %715 = vmatprep.subr.bf16.mxu0 0
      %716 = vmatpush1.bf16.msra.mxu0 0
      %717 = vmatprep.subr.bf16.mxu0 0
      %718 = vmatpush1.bf16.msra.mxu0 0
      %719 = vmatprep.subr.bf16.mxu0 0
      %720 = vmatpush1.bf16.msra.mxu0 0
      %721 = vmatprep.subr.bf16.mxu0 0
      %722 = vmatpush1.bf16.msra.mxu0 0
      %723 = vmatprep.subr.bf16.mxu0 0
      %724 = vmatpush1.bf16.msra.mxu0 0
      %725 = vmatprep.subr.bf16.mxu0 0
      %726 = vmatpush1.bf16.msra.mxu0 0
      %727 = vmatprep.subr.bf16.mxu0 0
      %728 = vmatpush1.bf16.msra.mxu0 0
      %729 = vmatprep.subr.bf16.mxu0 0
      %730 = vmatpush1.bf16.msra.mxu0 0
      %731 = vmatprep.subr.bf16.mxu0 0
      %732 = vmatpush1.bf16.msra.mxu0 0
      %733 = vmatprep.mubr.bf16.mxu0 0
      %734 = vmatmul.mubr.bf16.gmra.mrb[0].mxu0 %v664
      %v735 = vpop.f32.mrb[0].mxu0
      %v736 = vadd.f32 %v530, %v735
      %v737 = vpop.f32.mrb[0].mxu0
      %v738 = vpop.f32.mrb[0].mxu0
      %v739 = vadd.f32 %v533, %v738
      %v740 = vpop.f32.mrb[0].mxu0
      %741 = vmatprep.mubr.bf16.mxu0 0
      %742 = vmatmul.mubr.bf16.gmra.mrb[0].mxu0 %v666
      %v743 = vpop.f32.mrb[0].mxu0
      %v744 = vadd.f32 %v538, %v743
      %v745 = vpop.f32.mrb[0].mxu0
      %v746 = vpop.f32.mrb[0].mxu0
      %v747 = vadd.f32 %v541, %v746
      %v748 = vpop.f32.mrb[0].mxu0
      %749 = vmatprep.mubr.bf16.mxu0 0
      %750 = vmatmul.mubr.bf16.gmra.mrb[0].mxu0 %v668
      %v751 = vpop.f32.mrb[0].mxu0
      %v752 = vadd.f32 %v546, %v751
      %v753 = vpop.f32.mrb[0].mxu0
      %v754 = vpop.f32.mrb[0].mxu0
      %v755 = vadd.f32 %v549, %v754
      %v756 = vpop.f32.mrb[0].mxu0
      %757 = vmatprep.mubr.bf16.mxu0 0
      %758 = vmatmul.mubr.bf16.gmra.mrb[0].mxu0 %v670
      %v759 = vpop.f32.mrb[0].mxu0
      %v760 = vadd.f32 %v554, %v759
      %v761 = vpop.f32.mrb[0].mxu0
      %v762 = vpop.f32.mrb[0].mxu0
      %v763 = vadd.f32 %v557, %v762
      %v764 = vpop.f32.mrb[0].mxu0
      %765 = vmatprep.mubr.bf16.mxu0 0
      %766 = vmatmul.mubr.bf16.gmra.mrb[0].mxu0 %v672
      %v767 = vpop.f32.mrb[0].mxu0
      %v768 = vadd.f32 %v562, %v767
      %v769 = vpop.f32.mrb[0].mxu0
      %v770 = vpop.f32.mrb[0].mxu0
      %v771 = vadd.f32 %v565, %v770
      %v772 = vpop.f32.mrb[0].mxu0
      %773 = vmatprep.mubr.bf16.mxu0 0
      %774 = vmatmul.mubr.bf16.gmra.mrb[0].mxu0 %v674
      %v775 = vpop.f32.mrb[0].mxu0
      %v776 = vadd.f32 %v570, %v775
      %v777 = vpop.f32.mrb[0].mxu0
      %v778 = vpop.f32.mrb[0].mxu0
      %v779 = vadd.f32 %v573, %v778
      %v780 = vpop.f32.mrb[0].mxu0
      %781 = vmatprep.mubr.bf16.mxu0 0
      %782 = vmatmul.mubr.bf16.gmra.mrb[0].mxu0 %v676
      %v783 = vpop.f32.mrb[0].mxu0
      %v784 = vadd.f32 %v578, %v783
      %v785 = vpop.f32.mrb[0].mxu0
      %v786 = vpop.f32.mrb[0].mxu0
      %v787 = vadd.f32 %v581, %v786
      %v788 = vpop.f32.mrb[0].mxu0
      %789 = vmatprep.mubr.bf16.mxu0 0
      %790 = vmatmul.mubr.bf16.gmra.mrb[0].mxu0 %v678
      %v791 = vpop.f32.mrb[0].mxu0
      %v792 = vadd.f32 %v586, %v791
      %v793 = vpop.f32.mrb[0].mxu0
      %v794 = vpop.f32.mrb[0].mxu0
      %v795 = vadd.f32 %v589, %v794
      %v796 = vpop.f32.mrb[0].mxu0
      %797 = vmatprep.mubr.bf16.mxu0 0
      %798 = vmatmul.mubr.bf16.gmra.mrb[0].mxu0 %v680
      %v799 = vpop.f32.mrb[0].mxu0
      %v800 = vadd.f32 %v594, %v799
      %v801 = vpop.f32.mrb[0].mxu0
      %v802 = vpop.f32.mrb[0].mxu0
      %v803 = vadd.f32 %v597, %v802
      %v804 = vpop.f32.mrb[0].mxu0
      %805 = vmatprep.mubr.bf16.mxu0 0
      %806 = vmatmul.mubr.bf16.gmra.mrb[0].mxu0 %v682
      %v807 = vpop.f32.mrb[0].mxu0
      %v808 = vadd.f32 %v602, %v807
      %v809 = vpop.f32.mrb[0].mxu0
      %v810 = vpop.f32.mrb[0].mxu0
      %v811 = vadd.f32 %v605, %v810
      %v812 = vpop.f32.mrb[0].mxu0
      %813 = vmatprep.mubr.bf16.mxu0 0
      %814 = vmatmul.mubr.bf16.gmra.mrb[0].mxu0 %v684
      %v815 = vpop.f32.mrb[0].mxu0
      %v816 = vadd.f32 %v610, %v815
      %v817 = vpop.f32.mrb[0].mxu0
      %v818 = vpop.f32.mrb[0].mxu0
      %v819 = vadd.f32 %v613, %v818
      %v820 = vpop.f32.mrb[0].mxu0
      %821 = vmatprep.mubr.bf16.mxu0 0
      %822 = vmatmul.mubr.bf16.gmra.mrb[0].mxu0 %v686
      %v823 = vpop.f32.mrb[0].mxu0
      %v824 = vadd.f32 %v618, %v823
      %v825 = vpop.f32.mrb[0].mxu0
      %v826 = vpop.f32.mrb[0].mxu0
      %v827 = vadd.f32 %v621, %v826
      %v828 = vpop.f32.mrb[0].mxu0
      %829 = vmatprep.mubr.bf16.mxu0 0
      %830 = vmatmul.mubr.bf16.gmra.mrb[0].mxu0 %v688
      %v831 = vpop.f32.mrb[0].mxu0
      %v832 = vadd.f32 %v626, %v831
      %v833 = vpop.f32.mrb[0].mxu0
      %v834 = vpop.f32.mrb[0].mxu0
      %v835 = vadd.f32 %v629, %v834
      %v836 = vpop.f32.mrb[0].mxu0
      %837 = vmatprep.mubr.bf16.mxu0 0
      %838 = vmatmul.mubr.bf16.gmra.mrb[0].mxu0 %v690
      %v839 = vpop.f32.mrb[0].mxu0
      %v840 = vadd.f32 %v634, %v839
      %v841 = vpop.f32.mrb[0].mxu0
      %v842 = vpop.f32.mrb[0].mxu0
      %v843 = vadd.f32 %v637, %v842
      %v844 = vpop.f32.mrb[0].mxu0
      %845 = vmatprep.mubr.bf16.mxu0 0
      %846 = vmatmul.mubr.bf16.gmra.mrb[0].mxu0 %v692
      %v847 = vpop.f32.mrb[0].mxu0
      %v848 = vadd.f32 %v642, %v847
      %v849 = vpop.f32.mrb[0].mxu0
      %v850 = vpop.f32.mrb[0].mxu0
      %v851 = vadd.f32 %v645, %v850
      %v852 = vpop.f32.mrb[0].mxu0
      %853 = vmatprep.mubr.bf16.mxu0 0
      %854 = vmatmul.mubr.bf16.gmra.mrb[0].mxu0 %v694
      %v855 = vpop.f32.mrb[0].mxu0
      %v856 = vadd.f32 %v650, %v855
      %v857 = vpop.f32.mrb[0].mxu0
      %v858 = vpop.f32.mrb[0].mxu0
      %v859 = vadd.f32 %v653, %v858
      %v860 = vpop.f32.mrb[0].mxu0
      %861 = vmatprep.mubr.bf16.mxu0 0
      %862 = vmatmul.mubr.bf16.gmra.mrb[0].mxu0 %v696
      %v863 = vpop.f32.mrb[0].mxu0
      %v864 = vadd.f32 %v658, %v863
      %v865 = vpop.f32.mrb[0].mxu0
      %v866 = vpop.f32.mrb[0].mxu0
      %v867 = vadd.f32 %v661, %v866
      %v868 = vpop.f32.mrb[0].mxu0
      %869 = vdwg.mxu0
      %v870 = vld [vmem:[%s165] sm:$0xe]
      %s871 = scalar_lea.vmem %s1, 4
      %v872 = vld [vmem:[%s871] sm:$0x3]
      %v874 = vunpack.c.l.b16 %v870
      %v875 = vpack.c.b16 %v246, %v874
      %vm876 = vcmask 1046528
      %v877 = vrot.slane %v875, 1
      %v878 = vrot.slane %v281, 1
      %v879 = vsel %vm876, %v877, %v878
      %v880 = vrot.slane %v282, 1
      %v881 = vsel %vm876, %v878, %v880
      %v882 = vrot.slane %v283, 1
      %v883 = vsel %vm876, %v880, %v882
      %v884 = vrot.slane %v284, 1
      %v885 = vsel %vm876, %v882, %v884
      %v886 = vrot.slane %v285, 1
      %v887 = vsel %vm876, %v884, %v886
      %v888 = vrot.slane %v286, 1
      %v889 = vsel %vm876, %v886, %v888
      %v890 = vrot.slane %v287, 1
      %v891 = vsel %vm876, %v888, %v890
      %v892 = vrot.slane %v288, 1
      %v893 = vsel %vm876, %v890, %v892
      %v894 = vrot.slane %v289, 1
      %v895 = vsel %vm876, %v892, %v894
      %v896 = vrot.slane %v290, 1
      %v897 = vsel %vm876, %v894, %v896
      %v898 = vrot.slane %v291, 1
      %v899 = vsel %vm876, %v896, %v898
      %v900 = vrot.slane %v292, 1
      %v901 = vsel %vm876, %v898, %v900
      %v902 = vrot.slane %v293, 1
      %v903 = vsel %vm876, %v900, %v902
      %v904 = vrot.slane %v294, 1
      %v905 = vsel %vm876, %v902, %v904
      %v906 = vrot.slane %v295, 1
      %v907 = vsel %vm876, %v904, %v906
      %v908 = vrot.slane %v296, 1
      %v909 = vsel %vm876, %v906, %v908
      %v910 = vrot.slane %v297, 1
      %v911 = vsel %vm876, %v908, %v910
      %v913 = vsel %vm439, %v879, 0
      %v916 = vsel %vm439, %v881, 0
      %v919 = vsel %vm439, %v883, 0
      %v922 = vsel %vm439, %v885, 0
      %v925 = vsel %vm439, %v887, 0
      %v928 = vsel %vm439, %v889, 0
      %v931 = vsel %vm439, %v891, 0
      %v934 = vsel %vm439, %v893, 0
      %v937 = vsel %vm439, %v895, 0
      %v940 = vsel %vm439, %v897, 0
      %v943 = vsel %vm439, %v899, 0
      %v946 = vsel %vm439, %v901, 0
      %v949 = vsel %vm439, %v903, 0
      %v952 = vsel %vm439, %v905, 0
      %v955 = vsel %vm439, %v907, 0
      %v958 = vsel %vm439, %v909, 0
      %v961 = vsel %vm439, %v911, 0
      %v964 = vsel %vm491, %v872, 0
      %966 = vmatprep.subr.bf16.mxu0 0
      %967 = vmatpush1.bf16.msra.mxu0 %v964
      %968 = vmatprep.subr.bf16.mxu0 0
      %969 = vmatpush1.bf16.msra.mxu0 0
      %970 = vmatprep.subr.bf16.mxu0 0
      %971 = vmatpush1.bf16.msra.mxu0 0
      %972 = vmatprep.subr.bf16.mxu0 0
      %973 = vmatpush1.bf16.msra.mxu0 0
      %974 = vmatprep.subr.bf16.mxu0 0
      %975 = vmatpush1.bf16.msra.mxu0 0
      %976 = vmatprep.subr.bf16.mxu0 0
      %977 = vmatpush1.bf16.msra.mxu0 0
      %978 = vmatprep.subr.bf16.mxu0 0
      %979 = vmatpush1.bf16.msra.mxu0 0
      %980 = vmatprep.subr.bf16.mxu0 0
      %981 = vmatpush1.bf16.msra.mxu0 0
      %982 = vmatprep.subr.bf16.mxu0 0
      %983 = vmatpush1.bf16.msra.mxu0 0
      %984 = vmatprep.subr.bf16.mxu0 0
      %985 = vmatpush1.bf16.msra.mxu0 0
      %986 = vmatprep.subr.bf16.mxu0 0
      %987 = vmatpush1.bf16.msra.mxu0 0
      %988 = vmatprep.subr.bf16.mxu0 0
      %989 = vmatpush1.bf16.msra.mxu0 0
      %990 = vmatprep.subr.bf16.mxu0 0
      %991 = vmatpush1.bf16.msra.mxu0 0
      %992 = vmatprep.subr.bf16.mxu0 0
      %993 = vmatpush1.bf16.msra.mxu0 0
      %994 = vmatprep.subr.bf16.mxu0 0
      %995 = vmatpush1.bf16.msra.mxu0 0
      %996 = vmatprep.subr.bf16.mxu0 0
      %997 = vmatpush1.bf16.msra.mxu0 0
      %998 = vmatprep.mubr.bf16.mxu0 0
      %999 = vmatmul.mubr.bf16.gmra.mrb[0].mxu0 %v913
      %v1000 = vpop.f32.mrb[0].mxu0
      %v1001 = vadd.f32 0.0, %v1000
      %v1002 = vpop.f32.mrb[0].mxu0
      %v1003 = vpop.f32.mrb[0].mxu0
      %v1004 = vadd.f32 0.0, %v1003
      %v1005 = vpop.f32.mrb[0].mxu0
      %1006 = vmatprep.mubr.bf16.mxu0 0
      %1007 = vmatmul.mubr.bf16.gmra.mrb[0].mxu0 %v916
      %v1008 = vpop.f32.mrb[0].mxu0
      %v1009 = vadd.f32 0.0, %v1008
      %v1010 = vpop.f32.mrb[0].mxu0
      %v1011 = vpop.f32.mrb[0].mxu0
      %v1012 = vadd.f32 0.0, %v1011
      %v1013 = vpop.f32.mrb[0].mxu0
      %1014 = vmatprep.mubr.bf16.mxu0 0
      %1015 = vmatmul.mubr.bf16.gmra.mrb[0].mxu0 %v919
      %v1016 = vpop.f32.mrb[0].mxu0
      %v1017 = vadd.f32 0.0, %v1016
      %v1018 = vpop.f32.mrb[0].mxu0
      %v1019 = vpop.f32.mrb[0].mxu0
      %v1020 = vadd.f32 0.0, %v1019
      %v1021 = vpop.f32.mrb[0].mxu0
      %1022 = vmatprep.mubr.bf16.mxu0 0
      %1023 = vmatmul.mubr.bf16.gmra.mrb[0].mxu0 %v922
      %v1024 = vpop.f32.mrb[0].mxu0
      %v1025 = vadd.f32 0.0, %v1024
      %v1026 = vpop.f32.mrb[0].mxu0
      %v1027 = vpop.f32.mrb[0].mxu0
      %v1028 = vadd.f32 0.0, %v1027
      %v1029 = vpop.f32.mrb[0].mxu0
      %1030 = vmatprep.mubr.bf16.mxu0 0
      %1031 = vmatmul.mubr.bf16.gmra.mrb[0].mxu0 %v925
      %v1032 = vpop.f32.mrb[0].mxu0
      %v1033 = vadd.f32 0.0, %v1032
      %v1034 = vpop.f32.mrb[0].mxu0
      %v1035 = vpop.f32.mrb[0].mxu0
      %v1036 = vadd.f32 0.0, %v1035
      %v1037 = vpop.f32.mrb[0].mxu0
      %1038 = vmatprep.mubr.bf16.mxu0 0
      %1039 = vmatmul.mubr.bf16.gmra.mrb[0].mxu0 %v928
      %v1040 = vpop.f32.mrb[0].mxu0
      %v1041 = vadd.f32 0.0, %v1040
      %v1042 = vpop.f32.mrb[0].mxu0
      %v1043 = vpop.f32.mrb[0].mxu0
      %v1044 = vadd.f32 0.0, %v1043
      %v1045 = vpop.f32.mrb[0].mxu0
      %1046 = vmatprep.mubr.bf16.mxu0 0
      %1047 = vmatmul.mubr.bf16.gmra.mrb[0].mxu0 %v931
      %v1048 = vpop.f32.mrb[0].mxu0
      %v1049 = vadd.f32 0.0, %v1048
      %v1050 = vpop.f32.mrb[0].mxu0
      %v1051 = vpop.f32.mrb[0].mxu0
      %v1052 = vadd.f32 0.0, %v1051
      %v1053 = vpop.f32.mrb[0].mxu0
      %1054 = vmatprep.mubr.bf16.mxu0 0
      %1055 = vmatmul.mubr.bf16.gmra.mrb[0].mxu0 %v934
      %v1056 = vpop.f32.mrb[0].mxu0
      %v1057 = vadd.f32 0.0, %v1056
      %v1058 = vpop.f32.mrb[0].mxu0
      %v1059 = vpop.f32.mrb[0].mxu0
      %v1060 = vadd.f32 0.0, %v1059
      %v1061 = vpop.f32.mrb[0].mxu0
      %1062 = vmatprep.mubr.bf16.mxu0 0
      %1063 = vmatmul.mubr.bf16.gmra.mrb[0].mxu0 %v937
      %v1064 = vpop.f32.mrb[0].mxu0
      %v1065 = vadd.f32 0.0, %v1064
      %v1066 = vpop.f32.mrb[0].mxu0
      %v1067 = vpop.f32.mrb[0].mxu0
      %v1068 = vadd.f32 0.0, %v1067
      %v1069 = vpop.f32.mrb[0].mxu0
      %1070 = vmatprep.mubr.bf16.mxu0 0
      %1071 = vmatmul.mubr.bf16.gmra.mrb[0].mxu0 %v940
      %v1072 = vpop.f32.mrb[0].mxu0
      %v1073 = vadd.f32 0.0, %v1072
      %v1074 = vpop.f32.mrb[0].mxu0
      %v1075 = vpop.f32.mrb[0].mxu0
      %v1076 = vadd.f32 0.0, %v1075
      %v1077 = vpop.f32.mrb[0].mxu0
      %1078 = vmatprep.mubr.bf16.mxu0 0
      %1079 = vmatmul.mubr.bf16.gmra.mrb[0].mxu0 %v943
      %v1080 = vpop.f32.mrb[0].mxu0
      %v1081 = vadd.f32 0.0, %v1080
      %v1082 = vpop.f32.mrb[0].mxu0
      %v1083 = vpop.f32.mrb[0].mxu0
      %v1084 = vadd.f32 0.0, %v1083
      %v1085 = vpop.f32.mrb[0].mxu0
      %1086 = vmatprep.mubr.bf16.mxu0 0
      %1087 = vmatmul.mubr.bf16.gmra.mrb[0].mxu0 %v946
      %v1088 = vpop.f32.mrb[0].mxu0
      %v1089 = vadd.f32 0.0, %v1088
      %v1090 = vpop.f32.mrb[0].mxu0
      %v1091 = vpop.f32.mrb[0].mxu0
      %v1092 = vadd.f32 0.0, %v1091
      %v1093 = vpop.f32.mrb[0].mxu0
      %1094 = vmatprep.mubr.bf16.mxu0 0
      %1095 = vmatmul.mubr.bf16.gmra.mrb[0].mxu0 %v949
      %v1096 = vpop.f32.mrb[0].mxu0
      %v1097 = vadd.f32 0.0, %v1096
      %v1098 = vpop.f32.mrb[0].mxu0
      %v1099 = vpop.f32.mrb[0].mxu0
      %v1100 = vadd.f32 0.0, %v1099
      %v1101 = vpop.f32.mrb[0].mxu0
      %1102 = vmatprep.mubr.bf16.mxu0 0
      %1103 = vmatmul.mubr.bf16.gmra.mrb[0].mxu0 %v952
      %v1104 = vpop.f32.mrb[0].mxu0
      %v1105 = vadd.f32 0.0, %v1104
      %v1106 = vpop.f32.mrb[0].mxu0
      %v1107 = vpop.f32.mrb[0].mxu0
      %v1108 = vadd.f32 0.0, %v1107
      %v1109 = vpop.f32.mrb[0].mxu0
      %1110 = vmatprep.mubr.bf16.mxu0 0
      %1111 = vmatmul.mubr.bf16.gmra.mrb[0].mxu0 %v955
      %v1112 = vpop.f32.mrb[0].mxu0
      %v1113 = vadd.f32 0.0, %v1112
      %v1114 = vpop.f32.mrb[0].mxu0
      %v1115 = vpop.f32.mrb[0].mxu0
      %v1116 = vadd.f32 0.0, %v1115
      %v1117 = vpop.f32.mrb[0].mxu0
      %1118 = vmatprep.mubr.bf16.mxu0 0
      %1119 = vmatmul.mubr.bf16.gmra.mrb[0].mxu0 %v958
      %v1120 = vpop.f32.mrb[0].mxu0
      %v1121 = vadd.f32 0.0, %v1120
      %v1122 = vpop.f32.mrb[0].mxu0
      %v1123 = vpop.f32.mrb[0].mxu0
      %v1124 = vadd.f32 0.0, %v1123
      %v1125 = vpop.f32.mrb[0].mxu0
      %1126 = vmatprep.mubr.bf16.mxu0 0
      %1127 = vmatmul.mubr.bf16.gmra.mrb[0].mxu0 %v961
      %v1128 = vpop.f32.mrb[0].mxu0
      %v1129 = vadd.f32 0.0, %v1128
      %v1130 = vpop.f32.mrb[0].mxu0
      %v1131 = vpop.f32.mrb[0].mxu0
      %v1132 = vadd.f32 0.0, %v1131
      %v1133 = vpop.f32.mrb[0].mxu0
      %1134 = vdwg.mxu0
      %v1135 = vadd.f32 %v736, %v1001
      %v1136 = vadd.f32 %v739, %v1004
      %v1137 = vadd.f32 %v744, %v1009
      %v1138 = vadd.f32 %v747, %v1012
      %v1139 = vadd.f32 %v752, %v1017
      %v1140 = vadd.f32 %v755, %v1020
      %v1141 = vadd.f32 %v760, %v1025
      %v1142 = vadd.f32 %v763, %v1028
      %v1143 = vadd.f32 %v768, %v1033
      %v1144 = vadd.f32 %v771, %v1036
      %v1145 = vadd.f32 %v776, %v1041
      %v1146 = vadd.f32 %v779, %v1044
      %v1147 = vadd.f32 %v784, %v1049
      %v1148 = vadd.f32 %v787, %v1052
      %v1149 = vadd.f32 %v792, %v1057
      %v1150 = vadd.f32 %v795, %v1060
      %v1151 = vadd.f32 %v800, %v1065
      %v1152 = vadd.f32 %v803, %v1068
      %v1153 = vadd.f32 %v808, %v1073
      %v1154 = vadd.f32 %v811, %v1076
      %v1155 = vadd.f32 %v816, %v1081
      %v1156 = vadd.f32 %v819, %v1084
      %v1157 = vadd.f32 %v824, %v1089
      %v1158 = vadd.f32 %v827, %v1092
      %v1159 = vadd.f32 %v832, %v1097
      %v1160 = vadd.f32 %v835, %v1100
      %v1161 = vadd.f32 %v840, %v1105
      %v1162 = vadd.f32 %v843, %v1108
      %v1163 = vadd.f32 %v848, %v1113
      %v1164 = vadd.f32 %v851, %v1116
      %v1165 = vadd.f32 %v856, %v1121
      %v1166 = vadd.f32 %v859, %v1124
      %v1167 = vadd.f32 %v864, %v1129
      %v1168 = vadd.f32 %v867, %v1132
      %v1169 = vld [vmem:[%s165 + $0x8] sm:$0xf]
      %v1170 = vld [vmem:[%s165 + $0xc] sm:$0xf]
      %v1171 = vld [vmem:[%s165 + $0x10] sm:$0xf]
      %v1172 = vld [vmem:[%s165 + $0x14] sm:$0xf]
      %v1173 = vld [vmem:[%s165 + $0x18] sm:$0xf]
      %v1174 = vld [vmem:[%s165 + $0x1c] sm:$0xf]
      %v1175 = vld [vmem:[%s165 + $0x20] sm:$0xf]
      %v1176 = vld [vmem:[%s165 + $0x24] sm:$0xf]
      %v1177 = vld [vmem:[%s165 + $0x28] sm:$0xf]
      %v1178 = vld [vmem:[%s165 + $0x2c] sm:$0xf]
      %v1179 = vld [vmem:[%s165 + $0x30] sm:$0xf]
      %v1180 = vld [vmem:[%s165 + $0x34] sm:$0xf]
      %v1181 = vld [vmem:[%s165 + $0x38] sm:$0xf]
      %v1182 = vld [vmem:[%s165 + $0x3c] sm:$0xf]
      %v1183 = vld [vmem:[%s165 + $0x40] sm:$0xf]
      %v1184 = vld [vmem:[%s165 + $0x44] sm:$0xf]
      %v1185 = vld [vmem:[%s165 + $0x48] sm:$0xf]
      %v1186 = vld [vmem:[%s165 + $0x4c] sm:$0xf]
      %v1187 = vld [vmem:[%s165 + $0x50] sm:$0xf]
      %v1188 = vld [vmem:[%s165 + $0x54] sm:$0xf]
      %v1189 = vld [vmem:[%s165 + $0x58] sm:$0xf]
      %v1190 = vld [vmem:[%s165 + $0x5c] sm:$0xf]
      %v1191 = vld [vmem:[%s165 + $0x60] sm:$0xf]
      %v1192 = vld [vmem:[%s165 + $0x64] sm:$0xf]
      %v1193 = vld [vmem:[%s165 + $0x68] sm:$0xf]
      %v1194 = vld [vmem:[%s165 + $0x6c] sm:$0xf]
      %v1195 = vld [vmem:[%s165 + $0x70] sm:$0xf]
      %v1196 = vld [vmem:[%s165 + $0x74] sm:$0xf]
      %v1197 = vld [vmem:[%s165 + $0x78] sm:$0xf]
      %v1198 = vld [vmem:[%s165 + $0x7c] sm:$0xf]
      %v1199 = vld [vmem:[%s165 + $0x80] sm:$0xf]
      %v1200 = vld [vmem:[%s165 + $0x84] sm:$0xf]
      %v1201 = vld [vmem:[%s165 + $0x88] sm:$0xf]
      %v1202 = vld [vmem:[%s165 + $0x8c] sm:$0xf]
      %v1203 = vld [vmem:[%s165 + $0x90] sm:$0x1]
      %s1204 = scalar_lea.vmem %s1, 6
      %v1205 = vld [vmem:[%s1204] sm:$0x3]
      %v1241 = vunpack.c.l.b16 %v1169
      %v1242 = vunpack.c.l.b16 %v1170
      %v1243 = vunpack.c.l.b16 %v1171
      %v1244 = vunpack.c.l.b16 %v1172
      %v1245 = vunpack.c.l.b16 %v1173
      %v1246 = vunpack.c.l.b16 %v1174
      %v1247 = vunpack.c.l.b16 %v1175
      %v1248 = vunpack.c.l.b16 %v1176
      %v1249 = vunpack.c.l.b16 %v1177
      %v1250 = vunpack.c.l.b16 %v1178
      %v1251 = vunpack.c.l.b16 %v1179
      %v1252 = vunpack.c.l.b16 %v1180
      %v1253 = vunpack.c.l.b16 %v1181
      %v1254 = vunpack.c.l.b16 %v1182
      %v1255 = vunpack.c.l.b16 %v1183
      %v1256 = vunpack.c.l.b16 %v1184
      %v1257 = vunpack.c.l.b16 %v1185
      %v1258 = vunpack.c.l.b16 %v1186
      %v1259 = vunpack.c.l.b16 %v1187
      %v1260 = vunpack.c.l.b16 %v1188
      %v1261 = vunpack.c.l.b16 %v1189
      %v1262 = vunpack.c.l.b16 %v1190
      %v1263 = vunpack.c.l.b16 %v1191
      %v1264 = vunpack.c.l.b16 %v1192
      %v1265 = vunpack.c.l.b16 %v1193
      %v1266 = vunpack.c.l.b16 %v1194
      %v1267 = vunpack.c.l.b16 %v1195
      %v1268 = vunpack.c.l.b16 %v1196
      %v1269 = vunpack.c.l.b16 %v1197
      %v1270 = vunpack.c.l.b16 %v1198
      %v1271 = vunpack.c.l.b16 %v1199
      %v1272 = vunpack.c.l.b16 %v1200
      %v1273 = vunpack.c.l.b16 %v1201
      %v1274 = vunpack.c.l.b16 %v1202
      %v1275 = vunpack.c.l.b16 %v1203
      %v1276 = vpack.c.b16 %v1242, %v1241
      %v1277 = vpack.c.b16 %v1244, %v1243
      %v1278 = vpack.c.b16 %v1246, %v1245
      %v1279 = vpack.c.b16 %v1248, %v1247
      %v1280 = vpack.c.b16 %v1250, %v1249
      %v1281 = vpack.c.b16 %v1252, %v1251
      %v1282 = vpack.c.b16 %v1254, %v1253
      %v1283 = vpack.c.b16 %v1256, %v1255
      %v1284 = vpack.c.b16 %v1258, %v1257
      %v1285 = vpack.c.b16 %v1260, %v1259
      %v1286 = vpack.c.b16 %v1262, %v1261
      %v1287 = vpack.c.b16 %v1264, %v1263
      %v1288 = vpack.c.b16 %v1266, %v1265
      %v1289 = vpack.c.b16 %v1268, %v1267
      %v1290 = vpack.c.b16 %v1270, %v1269
      %v1291 = vpack.c.b16 %v1272, %v1271
      %v1292 = vpack.c.b16 %v1274, %v1273
      %v1293 = vpack.c.b16 %v1275, %v1275
      %v1295 = vshrl.u32 %v1276, 16
      %v1297 = vshll.u32 %v1276, 16
      %v1299 = vrot.slane %v1297, 1
      %v1300 = vor.u32 %v1295, %v1299
      %v1302 = vshll.u32 %v1277, 16
      %v1304 = vrot.slane %v1302, 1
      %v1305 = vsel %vm298, %v1300, %v1304
      %v1306 = vshrl.u32 %v1277, 16
      %v1308 = vor.u32 %v1306, %v1304
      %v1310 = vshll.u32 %v1278, 16
      %v1312 = vrot.slane %v1310, 1
      %v1313 = vsel %vm298, %v1308, %v1312
      %v1314 = vshrl.u32 %v1278, 16
      %v1316 = vor.u32 %v1314, %v1312
      %v1318 = vshll.u32 %v1279, 16
      %v1320 = vrot.slane %v1318, 1
      %v1321 = vsel %vm298, %v1316, %v1320
      %v1322 = vshrl.u32 %v1279, 16
      %v1324 = vor.u32 %v1322, %v1320
      %v1326 = vshll.u32 %v1280, 16
      %v1328 = vrot.slane %v1326, 1
      %v1329 = vsel %vm298, %v1324, %v1328
      %v1330 = vshrl.u32 %v1280, 16
      %v1332 = vor.u32 %v1330, %v1328
      %v1334 = vshll.u32 %v1281, 16
      %v1336 = vrot.slane %v1334, 1
      %v1337 = vsel %vm298, %v1332, %v1336
      %v1338 = vshrl.u32 %v1281, 16
      %v1340 = vor.u32 %v1338, %v1336
      %v1342 = vshll.u32 %v1282, 16
      %v1344 = vrot.slane %v1342, 1
      %v1345 = vsel %vm298, %v1340, %v1344
      %v1346 = vshrl.u32 %v1282, 16
      %v1348 = vor.u32 %v1346, %v1344
      %v1350 = vshll.u32 %v1283, 16
      %v1352 = vrot.slane %v1350, 1
      %v1353 = vsel %vm298, %v1348, %v1352
      %v1354 = vshrl.u32 %v1283, 16
      %v1356 = vor.u32 %v1354, %v1352
      %v1358 = vshll.u32 %v1284, 16
      %v1360 = vrot.slane %v1358, 1
      %v1361 = vsel %vm298, %v1356, %v1360
      %v1362 = vshrl.u32 %v1284, 16
      %v1364 = vor.u32 %v1362, %v1360
      %v1366 = vshll.u32 %v1285, 16
      %v1368 = vrot.slane %v1366, 1
      %v1369 = vsel %vm298, %v1364, %v1368
      %v1370 = vshrl.u32 %v1285, 16
      %v1372 = vor.u32 %v1370, %v1368
      %v1374 = vshll.u32 %v1286, 16
      %v1376 = vrot.slane %v1374, 1
      %v1377 = vsel %vm298, %v1372, %v1376
      %v1378 = vshrl.u32 %v1286, 16
      %v1380 = vor.u32 %v1378, %v1376
      %v1382 = vshll.u32 %v1287, 16
      %v1384 = vrot.slane %v1382, 1
      %v1385 = vsel %vm298, %v1380, %v1384
      %v1386 = vshrl.u32 %v1287, 16
      %v1388 = vor.u32 %v1386, %v1384
      %v1390 = vshll.u32 %v1288, 16
      %v1392 = vrot.slane %v1390, 1
      %v1393 = vsel %vm298, %v1388, %v1392
      %v1394 = vshrl.u32 %v1288, 16
      %v1396 = vor.u32 %v1394, %v1392
      %v1398 = vshll.u32 %v1289, 16
      %v1400 = vrot.slane %v1398, 1
      %v1401 = vsel %vm298, %v1396, %v1400
      %v1402 = vshrl.u32 %v1289, 16
      %v1404 = vor.u32 %v1402, %v1400
      %v1406 = vshll.u32 %v1290, 16
      %v1408 = vrot.slane %v1406, 1
      %v1409 = vsel %vm298, %v1404, %v1408
      %v1410 = vshrl.u32 %v1290, 16
      %v1412 = vor.u32 %v1410, %v1408
      %v1414 = vshll.u32 %v1291, 16
      %v1416 = vrot.slane %v1414, 1
      %v1417 = vsel %vm298, %v1412, %v1416
      %v1418 = vshrl.u32 %v1291, 16
      %v1420 = vor.u32 %v1418, %v1416
      %v1422 = vshll.u32 %v1292, 16
      %v1424 = vrot.slane %v1422, 1
      %v1425 = vsel %vm298, %v1420, %v1424
      %v1426 = vshrl.u32 %v1292, 16
      %v1428 = vor.u32 %v1426, %v1424
      %v1430 = vshll.u32 %v1293, 16
      %v1432 = vrot.slane %v1430, 1
      %v1433 = vsel %vm298, %v1428, %v1432
      %v1435 = vsel %vm439, %v1305, 0
      %v1438 = vsel %vm439, %v1313, 0
      %v1441 = vsel %vm439, %v1321, 0
      %v1444 = vsel %vm439, %v1329, 0
      %v1447 = vsel %vm439, %v1337, 0
      %v1450 = vsel %vm439, %v1345, 0
      %v1453 = vsel %vm439, %v1353, 0
      %v1456 = vsel %vm439, %v1361, 0
      %v1459 = vsel %vm439, %v1369, 0
      %v1462 = vsel %vm439, %v1377, 0
      %v1465 = vsel %vm439, %v1385, 0
      %v1468 = vsel %vm439, %v1393, 0
      %v1471 = vsel %vm439, %v1401, 0
      %v1474 = vsel %vm439, %v1409, 0
      %v1477 = vsel %vm439, %v1417, 0
      %v1480 = vsel %vm439, %v1425, 0
      %v1483 = vsel %vm439, %v1433, 0
      %v1486 = vsel %vm491, %v1205, 0
      %1488 = vmatprep.subr.bf16.mxu0 0
      %1489 = vmatpush1.bf16.msra.mxu0 %v1486
      %1490 = vmatprep.subr.bf16.mxu0 0
      %1491 = vmatpush1.bf16.msra.mxu0 0
      %1492 = vmatprep.subr.bf16.mxu0 0
      %1493 = vmatpush1.bf16.msra.mxu0 0
      %1494 = vmatprep.subr.bf16.mxu0 0
      %1495 = vmatpush1.bf16.msra.mxu0 0
      %1496 = vmatprep.subr.bf16.mxu0 0
      %1497 = vmatpush1.bf16.msra.mxu0 0
      %1498 = vmatprep.subr.bf16.mxu0 0
      %1499 = vmatpush1.bf16.msra.mxu0 0
      %1500 = vmatprep.subr.bf16.mxu0 0
      %1501 = vmatpush1.bf16.msra.mxu0 0
      %1502 = vmatprep.subr.bf16.mxu0 0
      %1503 = vmatpush1.bf16.msra.mxu0 0
      %1504 = vmatprep.subr.bf16.mxu0 0
      %1505 = vmatpush1.bf16.msra.mxu0 0
      %1506 = vmatprep.subr.bf16.mxu0 0
      %1507 = vmatpush1.bf16.msra.mxu0 0
      %1508 = vmatprep.subr.bf16.mxu0 0
      %1509 = vmatpush1.bf16.msra.mxu0 0
      %1510 = vmatprep.subr.bf16.mxu0 0
      %1511 = vmatpush1.bf16.msra.mxu0 0
      %1512 = vmatprep.subr.bf16.mxu0 0
      %1513 = vmatpush1.bf16.msra.mxu0 0
      %1514 = vmatprep.subr.bf16.mxu0 0
      %1515 = vmatpush1.bf16.msra.mxu0 0
      %1516 = vmatprep.subr.bf16.mxu0 0
      %1517 = vmatpush1.bf16.msra.mxu0 0
      %1518 = vmatprep.subr.bf16.mxu0 0
      %1519 = vmatpush1.bf16.msra.mxu0 0
      %1520 = vmatprep.mubr.bf16.mxu0 0
      %1521 = vmatmul.mubr.bf16.gmra.mrb[0].mxu0 %v1435
      %v1522 = vpop.f32.mrb[0].mxu0
      %v1523 = vadd.f32 0.0, %v1522
      %v1524 = vpop.f32.mrb[0].mxu0
      %v1525 = vpop.f32.mrb[0].mxu0
      %v1526 = vadd.f32 0.0, %v1525
      %v1527 = vpop.f32.mrb[0].mxu0
      %1528 = vmatprep.mubr.bf16.mxu0 0
      %1529 = vmatmul.mubr.bf16.gmra.mrb[0].mxu0 %v1438
      %v1530 = vpop.f32.mrb[0].mxu0
      %v1531 = vadd.f32 0.0, %v1530
      %v1532 = vpop.f32.mrb[0].mxu0
      %v1533 = vpop.f32.mrb[0].mxu0
      %v1534 = vadd.f32 0.0, %v1533
      %v1535 = vpop.f32.mrb[0].mxu0
      %1536 = vmatprep.mubr.bf16.mxu0 0
      %1537 = vmatmul.mubr.bf16.gmra.mrb[0].mxu0 %v1441
      %v1538 = vpop.f32.mrb[0].mxu0
      %v1539 = vadd.f32 0.0, %v1538
      %v1540 = vpop.f32.mrb[0].mxu0
      %v1541 = vpop.f32.mrb[0].mxu0
      %v1542 = vadd.f32 0.0, %v1541
      %v1543 = vpop.f32.mrb[0].mxu0
      %1544 = vmatprep.mubr.bf16.mxu0 0
      %1545 = vmatmul.mubr.bf16.gmra.mrb[0].mxu0 %v1444
      %v1546 = vpop.f32.mrb[0].mxu0
      %v1547 = vadd.f32 0.0, %v1546
      %v1548 = vpop.f32.mrb[0].mxu0
      %v1549 = vpop.f32.mrb[0].mxu0
      %v1550 = vadd.f32 0.0, %v1549
      %v1551 = vpop.f32.mrb[0].mxu0
      %1552 = vmatprep.mubr.bf16.mxu0 0
      %1553 = vmatmul.mubr.bf16.gmra.mrb[0].mxu0 %v1447
      %v1554 = vpop.f32.mrb[0].mxu0
      %v1555 = vadd.f32 0.0, %v1554
      %v1556 = vpop.f32.mrb[0].mxu0
      %v1557 = vpop.f32.mrb[0].mxu0
      %v1558 = vadd.f32 0.0, %v1557
      %v1559 = vpop.f32.mrb[0].mxu0
      %1560 = vmatprep.mubr.bf16.mxu0 0
      %1561 = vmatmul.mubr.bf16.gmra.mrb[0].mxu0 %v1450
      %v1562 = vpop.f32.mrb[0].mxu0
      %v1563 = vadd.f32 0.0, %v1562
      %v1564 = vpop.f32.mrb[0].mxu0
      %v1565 = vpop.f32.mrb[0].mxu0
      %v1566 = vadd.f32 0.0, %v1565
      %v1567 = vpop.f32.mrb[0].mxu0
      %1568 = vmatprep.mubr.bf16.mxu0 0
      %1569 = vmatmul.mubr.bf16.gmra.mrb[0].mxu0 %v1453
      %v1570 = vpop.f32.mrb[0].mxu0
      %v1571 = vadd.f32 0.0, %v1570
      %v1572 = vpop.f32.mrb[0].mxu0
      %v1573 = vpop.f32.mrb[0].mxu0
      %v1574 = vadd.f32 0.0, %v1573
      %v1575 = vpop.f32.mrb[0].mxu0
      %1576 = vmatprep.mubr.bf16.mxu0 0
      %1577 = vmatmul.mubr.bf16.gmra.mrb[0].mxu0 %v1456
      %v1578 = vpop.f32.mrb[0].mxu0
      %v1579 = vadd.f32 0.0, %v1578
      %v1580 = vpop.f32.mrb[0].mxu0
      %v1581 = vpop.f32.mrb[0].mxu0
      %v1582 = vadd.f32 0.0, %v1581
      %v1583 = vpop.f32.mrb[0].mxu0
      %1584 = vmatprep.mubr.bf16.mxu0 0
      %1585 = vmatmul.mubr.bf16.gmra.mrb[0].mxu0 %v1459
      %v1586 = vpop.f32.mrb[0].mxu0
      %v1587 = vadd.f32 0.0, %v1586
      %v1588 = vpop.f32.mrb[0].mxu0
      %v1589 = vpop.f32.mrb[0].mxu0
      %v1590 = vadd.f32 0.0, %v1589
      %v1591 = vpop.f32.mrb[0].mxu0
      %1592 = vmatprep.mubr.bf16.mxu0 0
      %1593 = vmatmul.mubr.bf16.gmra.mrb[0].mxu0 %v1462
      %v1594 = vpop.f32.mrb[0].mxu0
      %v1595 = vadd.f32 0.0, %v1594
      %v1596 = vpop.f32.mrb[0].mxu0
      %v1597 = vpop.f32.mrb[0].mxu0
      %v1598 = vadd.f32 0.0, %v1597
      %v1599 = vpop.f32.mrb[0].mxu0
      %1600 = vmatprep.mubr.bf16.mxu0 0
      %1601 = vmatmul.mubr.bf16.gmra.mrb[0].mxu0 %v1465
      %v1602 = vpop.f32.mrb[0].mxu0
      %v1603 = vadd.f32 0.0, %v1602
      %v1604 = vpop.f32.mrb[0].mxu0
      %v1605 = vpop.f32.mrb[0].mxu0
      %v1606 = vadd.f32 0.0, %v1605
      %v1607 = vpop.f32.mrb[0].mxu0
      %1608 = vmatprep.mubr.bf16.mxu0 0
      %1609 = vmatmul.mubr.bf16.gmra.mrb[0].mxu0 %v1468
      %v1610 = vpop.f32.mrb[0].mxu0
      %v1611 = vadd.f32 0.0, %v1610
      %v1612 = vpop.f32.mrb[0].mxu0
      %v1613 = vpop.f32.mrb[0].mxu0
      %v1614 = vadd.f32 0.0, %v1613
      %v1615 = vpop.f32.mrb[0].mxu0
      %1616 = vmatprep.mubr.bf16.mxu0 0
      %1617 = vmatmul.mubr.bf16.gmra.mrb[0].mxu0 %v1471
      %v1618 = vpop.f32.mrb[0].mxu0
      %v1619 = vadd.f32 0.0, %v1618
      %v1620 = vpop.f32.mrb[0].mxu0
      %v1621 = vpop.f32.mrb[0].mxu0
      %v1622 = vadd.f32 0.0, %v1621
      %v1623 = vpop.f32.mrb[0].mxu0
      %1624 = vmatprep.mubr.bf16.mxu0 0
      %1625 = vmatmul.mubr.bf16.gmra.mrb[0].mxu0 %v1474
      %v1626 = vpop.f32.mrb[0].mxu0
      %v1627 = vadd.f32 0.0, %v1626
      %v1628 = vpop.f32.mrb[0].mxu0
      %v1629 = vpop.f32.mrb[0].mxu0
      %v1630 = vadd.f32 0.0, %v1629
      %v1631 = vpop.f32.mrb[0].mxu0
      %1632 = vmatprep.mubr.bf16.mxu0 0
      %1633 = vmatmul.mubr.bf16.gmra.mrb[0].mxu0 %v1477
      %v1634 = vpop.f32.mrb[0].mxu0
      %v1635 = vadd.f32 0.0, %v1634
      %v1636 = vpop.f32.mrb[0].mxu0
      %v1637 = vpop.f32.mrb[0].mxu0
      %v1638 = vadd.f32 0.0, %v1637
      %v1639 = vpop.f32.mrb[0].mxu0
      %1640 = vmatprep.mubr.bf16.mxu0 0
      %1641 = vmatmul.mubr.bf16.gmra.mrb[0].mxu0 %v1480
      %v1642 = vpop.f32.mrb[0].mxu0
      %v1643 = vadd.f32 0.0, %v1642
      %v1644 = vpop.f32.mrb[0].mxu0
      %v1645 = vpop.f32.mrb[0].mxu0
      %v1646 = vadd.f32 0.0, %v1645
      %v1647 = vpop.f32.mrb[0].mxu0
      %1648 = vmatprep.mubr.bf16.mxu0 0
      %1649 = vmatmul.mubr.bf16.gmra.mrb[0].mxu0 %v1483
      %v1650 = vpop.f32.mrb[0].mxu0
      %v1651 = vadd.f32 0.0, %v1650
      %v1652 = vpop.f32.mrb[0].mxu0
      %v1653 = vpop.f32.mrb[0].mxu0
      %v1654 = vadd.f32 0.0, %v1653
      %v1655 = vpop.f32.mrb[0].mxu0
      %1656 = vdwg.mxu0
      %v1657 = vadd.f32 %v1135, %v1523
      %v1658 = vadd.f32 %v1136, %v1526
      %v1659 = vadd.f32 %v1137, %v1531
      %v1660 = vadd.f32 %v1138, %v1534
      %v1661 = vadd.f32 %v1139, %v1539
      %v1662 = vadd.f32 %v1140, %v1542
      %v1663 = vadd.f32 %v1141, %v1547
      %v1664 = vadd.f32 %v1142, %v1550
      %v1665 = vadd.f32 %v1143, %v1555
      %v1666 = vadd.f32 %v1144, %v1558
      %v1667 = vadd.f32 %v1145, %v1563
      %v1668 = vadd.f32 %v1146, %v1566
      %v1669 = vadd.f32 %v1147, %v1571
      %v1670 = vadd.f32 %v1148, %v1574
      %v1671 = vadd.f32 %v1149, %v1579
      %v1672 = vadd.f32 %v1150, %v1582
      %v1673 = vadd.f32 %v1151, %v1587
      %v1674 = vadd.f32 %v1152, %v1590
      %v1675 = vadd.f32 %v1153, %v1595
      %v1676 = vadd.f32 %v1154, %v1598
      %v1677 = vadd.f32 %v1155, %v1603
      %v1678 = vadd.f32 %v1156, %v1606
      %v1679 = vadd.f32 %v1157, %v1611
      %v1680 = vadd.f32 %v1158, %v1614
      %v1681 = vadd.f32 %v1159, %v1619
      %v1682 = vadd.f32 %v1160, %v1622
      %v1683 = vadd.f32 %v1161, %v1627
      %v1684 = vadd.f32 %v1162, %v1630
      %v1685 = vadd.f32 %v1163, %v1635
      %v1686 = vadd.f32 %v1164, %v1638
      %v1687 = vadd.f32 %v1165, %v1643
      %v1688 = vadd.f32 %v1166, %v1646
      %v1689 = vadd.f32 %v1167, %v1651
      %v1690 = vadd.f32 %v1168, %v1654
      %v1691 = vld [vmem:[%s165 + $0x8] sm:$0xe]
      %s1692 = scalar_lea.vmem %s1, 8
      %v1693 = vld [vmem:[%s1692] sm:$0x3]
      %v1695 = vunpack.c.l.b16 %v1691
      %v1696 = vpack.c.b16 %v1242, %v1695
      %v1697 = vrot.slane %v1696, 1
      %v1698 = vrot.slane %v1277, 1
      %v1699 = vsel %vm876, %v1697, %v1698
      %v1700 = vrot.slane %v1278, 1
      %v1701 = vsel %vm876, %v1698, %v1700
      %v1702 = vrot.slane %v1279, 1
      %v1703 = vsel %vm876, %v1700, %v1702
      %v1704 = vrot.slane %v1280, 1
      %v1705 = vsel %vm876, %v1702, %v1704
      %v1706 = vrot.slane %v1281, 1
      %v1707 = vsel %vm876, %v1704, %v1706
      %v1708 = vrot.slane %v1282, 1
      %v1709 = vsel %vm876, %v1706, %v1708
      %v1710 = vrot.slane %v1283, 1
      %v1711 = vsel %vm876, %v1708, %v1710
      %v1712 = vrot.slane %v1284, 1
      %v1713 = vsel %vm876, %v1710, %v1712
      %v1714 = vrot.slane %v1285, 1
      %v1715 = vsel %vm876, %v1712, %v1714
      %v1716 = vrot.slane %v1286, 1
      %v1717 = vsel %vm876, %v1714, %v1716
      %v1718 = vrot.slane %v1287, 1
      %v1719 = vsel %vm876, %v1716, %v1718
      %v1720 = vrot.slane %v1288, 1
      %v1721 = vsel %vm876, %v1718, %v1720
      %v1722 = vrot.slane %v1289, 1
      %v1723 = vsel %vm876, %v1720, %v1722
      %v1724 = vrot.slane %v1290, 1
      %v1725 = vsel %vm876, %v1722, %v1724
      %v1726 = vrot.slane %v1291, 1
      %v1727 = vsel %vm876, %v1724, %v1726
      %v1728 = vrot.slane %v1292, 1
      %v1729 = vsel %vm876, %v1726, %v1728
      %v1730 = vrot.slane %v1293, 1
      %v1731 = vsel %vm876, %v1728, %v1730
      %v1733 = vsel %vm439, %v1699, 0
      %v1736 = vsel %vm439, %v1701, 0
      %v1739 = vsel %vm439, %v1703, 0
      %v1742 = vsel %vm439, %v1705, 0
      %v1745 = vsel %vm439, %v1707, 0
      %v1748 = vsel %vm439, %v1709, 0
      %v1751 = vsel %vm439, %v1711, 0
      %v1754 = vsel %vm439, %v1713, 0
      %v1757 = vsel %vm439, %v1715, 0
      %v1760 = vsel %vm439, %v1717, 0
      %v1763 = vsel %vm439, %v1719, 0
      %v1766 = vsel %vm439, %v1721, 0
      %v1769 = vsel %vm439, %v1723, 0
      %v1772 = vsel %vm439, %v1725, 0
      %v1775 = vsel %vm439, %v1727, 0
      %v1778 = vsel %vm439, %v1729, 0
      %v1781 = vsel %vm439, %v1731, 0
      %v1784 = vsel %vm491, %v1693, 0
      %1786 = vmatprep.subr.bf16.mxu0 0
      %1787 = vmatpush1.bf16.msra.mxu0 %v1784
      %1788 = vmatprep.subr.bf16.mxu0 0
      %1789 = vmatpush1.bf16.msra.mxu0 0
      %1790 = vmatprep.subr.bf16.mxu0 0
      %1791 = vmatpush1.bf16.msra.mxu0 0
      %1792 = vmatprep.subr.bf16.mxu0 0
      %1793 = vmatpush1.bf16.msra.mxu0 0
      %1794 = vmatprep.subr.bf16.mxu0 0
      %1795 = vmatpush1.bf16.msra.mxu0 0
      %1796 = vmatprep.subr.bf16.mxu0 0
      %1797 = vmatpush1.bf16.msra.mxu0 0
      %1798 = vmatprep.subr.bf16.mxu0 0
      %1799 = vmatpush1.bf16.msra.mxu0 0
      %1800 = vmatprep.subr.bf16.mxu0 0
      %1801 = vmatpush1.bf16.msra.mxu0 0
      %1802 = vmatprep.subr.bf16.mxu0 0
      %1803 = vmatpush1.bf16.msra.mxu0 0
      %1804 = vmatprep.subr.bf16.mxu0 0
      %1805 = vmatpush1.bf16.msra.mxu0 0
      %1806 = vmatprep.subr.bf16.mxu0 0
      %1807 = vmatpush1.bf16.msra.mxu0 0
      %1808 = vmatprep.subr.bf16.mxu0 0
      %1809 = vmatpush1.bf16.msra.mxu0 0
      %1810 = vmatprep.subr.bf16.mxu0 0
      %1811 = vmatpush1.bf16.msra.mxu0 0
      %1812 = vmatprep.subr.bf16.mxu0 0
      %1813 = vmatpush1.bf16.msra.mxu0 0
      %1814 = vmatprep.subr.bf16.mxu0 0
      %1815 = vmatpush1.bf16.msra.mxu0 0
      %1816 = vmatprep.subr.bf16.mxu0 0
      %1817 = vmatpush1.bf16.msra.mxu0 0
      %1818 = vmatprep.mubr.bf16.mxu0 0
      %1819 = vmatmul.mubr.bf16.gmra.mrb[0].mxu0 %v1733
      %v1820 = vpop.f32.mrb[0].mxu0
      %v1821 = vadd.f32 0.0, %v1820
      %v1822 = vpop.f32.mrb[0].mxu0
      %v1823 = vpop.f32.mrb[0].mxu0
      %v1824 = vadd.f32 0.0, %v1823
      %v1825 = vpop.f32.mrb[0].mxu0
      %1826 = vmatprep.mubr.bf16.mxu0 0
      %1827 = vmatmul.mubr.bf16.gmra.mrb[0].mxu0 %v1736
      %v1828 = vpop.f32.mrb[0].mxu0
      %v1829 = vadd.f32 0.0, %v1828
      %v1830 = vpop.f32.mrb[0].mxu0
      %v1831 = vpop.f32.mrb[0].mxu0
      %v1832 = vadd.f32 0.0, %v1831
      %v1833 = vpop.f32.mrb[0].mxu0
      %1834 = vmatprep.mubr.bf16.mxu0 0
      %1835 = vmatmul.mubr.bf16.gmra.mrb[0].mxu0 %v1739
      %v1836 = vpop.f32.mrb[0].mxu0
      %v1837 = vadd.f32 0.0, %v1836
      %v1838 = vpop.f32.mrb[0].mxu0
      %v1839 = vpop.f32.mrb[0].mxu0
      %v1840 = vadd.f32 0.0, %v1839
      %v1841 = vpop.f32.mrb[0].mxu0
      %1842 = vmatprep.mubr.bf16.mxu0 0
      %1843 = vmatmul.mubr.bf16.gmra.mrb[0].mxu0 %v1742
      %v1844 = vpop.f32.mrb[0].mxu0
      %v1845 = vadd.f32 0.0, %v1844
      %v1846 = vpop.f32.mrb[0].mxu0
      %v1847 = vpop.f32.mrb[0].mxu0
      %v1848 = vadd.f32 0.0, %v1847
      %v1849 = vpop.f32.mrb[0].mxu0
      %1850 = vmatprep.mubr.bf16.mxu0 0
      %1851 = vmatmul.mubr.bf16.gmra.mrb[0].mxu0 %v1745
      %v1852 = vpop.f32.mrb[0].mxu0
      %v1853 = vadd.f32 0.0, %v1852
      %v1854 = vpop.f32.mrb[0].mxu0
      %v1855 = vpop.f32.mrb[0].mxu0
      %v1856 = vadd.f32 0.0, %v1855
      %v1857 = vpop.f32.mrb[0].mxu0
      %1858 = vmatprep.mubr.bf16.mxu0 0
      %1859 = vmatmul.mubr.bf16.gmra.mrb[0].mxu0 %v1748
      %v1860 = vpop.f32.mrb[0].mxu0
      %v1861 = vadd.f32 0.0, %v1860
      %v1862 = vpop.f32.mrb[0].mxu0
      %v1863 = vpop.f32.mrb[0].mxu0
      %v1864 = vadd.f32 0.0, %v1863
      %v1865 = vpop.f32.mrb[0].mxu0
      %1866 = vmatprep.mubr.bf16.mxu0 0
      %1867 = vmatmul.mubr.bf16.gmra.mrb[0].mxu0 %v1751
      %v1868 = vpop.f32.mrb[0].mxu0
      %v1869 = vadd.f32 0.0, %v1868
      %v1870 = vpop.f32.mrb[0].mxu0
      %v1871 = vpop.f32.mrb[0].mxu0
      %v1872 = vadd.f32 0.0, %v1871
      %v1873 = vpop.f32.mrb[0].mxu0
      %1874 = vmatprep.mubr.bf16.mxu0 0
      %1875 = vmatmul.mubr.bf16.gmra.mrb[0].mxu0 %v1754
      %v1876 = vpop.f32.mrb[0].mxu0
      %v1877 = vadd.f32 0.0, %v1876
      %v1878 = vpop.f32.mrb[0].mxu0
      %v1879 = vpop.f32.mrb[0].mxu0
      %v1880 = vadd.f32 0.0, %v1879
      %v1881 = vpop.f32.mrb[0].mxu0
      %1882 = vmatprep.mubr.bf16.mxu0 0
      %1883 = vmatmul.mubr.bf16.gmra.mrb[0].mxu0 %v1757
      %v1884 = vpop.f32.mrb[0].mxu0
      %v1885 = vadd.f32 0.0, %v1884
      %v1886 = vpop.f32.mrb[0].mxu0
      %v1887 = vpop.f32.mrb[0].mxu0
      %v1888 = vadd.f32 0.0, %v1887
      %v1889 = vpop.f32.mrb[0].mxu0
      %1890 = vmatprep.mubr.bf16.mxu0 0
      %1891 = vmatmul.mubr.bf16.gmra.mrb[0].mxu0 %v1760
      %v1892 = vpop.f32.mrb[0].mxu0
      %v1893 = vadd.f32 0.0, %v1892
      %v1894 = vpop.f32.mrb[0].mxu0
      %v1895 = vpop.f32.mrb[0].mxu0
      %v1896 = vadd.f32 0.0, %v1895
      %v1897 = vpop.f32.mrb[0].mxu0
      %1898 = vmatprep.mubr.bf16.mxu0 0
      %1899 = vmatmul.mubr.bf16.gmra.mrb[0].mxu0 %v1763
      %v1900 = vpop.f32.mrb[0].mxu0
      %v1901 = vadd.f32 0.0, %v1900
      %v1902 = vpop.f32.mrb[0].mxu0
      %v1903 = vpop.f32.mrb[0].mxu0
      %v1904 = vadd.f32 0.0, %v1903
      %v1905 = vpop.f32.mrb[0].mxu0
      %1906 = vmatprep.mubr.bf16.mxu0 0
      %1907 = vmatmul.mubr.bf16.gmra.mrb[0].mxu0 %v1766
      %v1908 = vpop.f32.mrb[0].mxu0
      %v1909 = vadd.f32 0.0, %v1908
      %v1910 = vpop.f32.mrb[0].mxu0
      %v1911 = vpop.f32.mrb[0].mxu0
      %v1912 = vadd.f32 0.0, %v1911
      %v1913 = vpop.f32.mrb[0].mxu0
      %1914 = vmatprep.mubr.bf16.mxu0 0
      %1915 = vmatmul.mubr.bf16.gmra.mrb[0].mxu0 %v1769
      %v1916 = vpop.f32.mrb[0].mxu0
      %v1917 = vadd.f32 0.0, %v1916
      %v1918 = vpop.f32.mrb[0].mxu0
      %v1919 = vpop.f32.mrb[0].mxu0
      %v1920 = vadd.f32 0.0, %v1919
      %v1921 = vpop.f32.mrb[0].mxu0
      %1922 = vmatprep.mubr.bf16.mxu0 0
      %1923 = vmatmul.mubr.bf16.gmra.mrb[0].mxu0 %v1772
      %v1924 = vpop.f32.mrb[0].mxu0
      %v1925 = vadd.f32 0.0, %v1924
      %v1926 = vpop.f32.mrb[0].mxu0
      %v1927 = vpop.f32.mrb[0].mxu0
      %v1928 = vadd.f32 0.0, %v1927
      %v1929 = vpop.f32.mrb[0].mxu0
      %1930 = vmatprep.mubr.bf16.mxu0 0
      %1931 = vmatmul.mubr.bf16.gmra.mrb[0].mxu0 %v1775
      %v1932 = vpop.f32.mrb[0].mxu0
      %v1933 = vadd.f32 0.0, %v1932
      %v1934 = vpop.f32.mrb[0].mxu0
      %v1935 = vpop.f32.mrb[0].mxu0
      %v1936 = vadd.f32 0.0, %v1935
      %v1937 = vpop.f32.mrb[0].mxu0
      %1938 = vmatprep.mubr.bf16.mxu0 0
      %1939 = vmatmul.mubr.bf16.gmra.mrb[0].mxu0 %v1778
      %v1940 = vpop.f32.mrb[0].mxu0
      %v1941 = vadd.f32 0.0, %v1940
      %v1942 = vpop.f32.mrb[0].mxu0
      %v1943 = vpop.f32.mrb[0].mxu0
      %v1944 = vadd.f32 0.0, %v1943
      %v1945 = vpop.f32.mrb[0].mxu0
      %1946 = vmatprep.mubr.bf16.mxu0 0
      %1947 = vmatmul.mubr.bf16.gmra.mrb[0].mxu0 %v1781
      %v1948 = vpop.f32.mrb[0].mxu0
      %v1949 = vadd.f32 0.0, %v1948
      %v1950 = vpop.f32.mrb[0].mxu0
      %v1951 = vpop.f32.mrb[0].mxu0
      %v1952 = vadd.f32 0.0, %v1951
      %v1953 = vpop.f32.mrb[0].mxu0
      %1954 = vdwg.mxu0
      %v1955 = vadd.f32 %v1657, %v1821
      %v1956 = vadd.f32 %v1658, %v1824
      %v1957 = vadd.f32 %v1659, %v1829
      %v1958 = vadd.f32 %v1660, %v1832
      %v1959 = vadd.f32 %v1661, %v1837
      %v1960 = vadd.f32 %v1662, %v1840
      %v1961 = vadd.f32 %v1663, %v1845
      %v1962 = vadd.f32 %v1664, %v1848
      %v1963 = vadd.f32 %v1665, %v1853
      %v1964 = vadd.f32 %v1666, %v1856
      %v1965 = vadd.f32 %v1667, %v1861
      %v1966 = vadd.f32 %v1668, %v1864
      %v1967 = vadd.f32 %v1669, %v1869
      %v1968 = vadd.f32 %v1670, %v1872
      %v1969 = vadd.f32 %v1671, %v1877
      %v1970 = vadd.f32 %v1672, %v1880
      %v1971 = vadd.f32 %v1673, %v1885
      %v1972 = vadd.f32 %v1674, %v1888
      %v1973 = vadd.f32 %v1675, %v1893
      %v1974 = vadd.f32 %v1676, %v1896
      %v1975 = vadd.f32 %v1677, %v1901
      %v1976 = vadd.f32 %v1678, %v1904
      %v1977 = vadd.f32 %v1679, %v1909
      %v1978 = vadd.f32 %v1680, %v1912
      %v1979 = vadd.f32 %v1681, %v1917
      %v1980 = vadd.f32 %v1682, %v1920
      %v1981 = vadd.f32 %v1683, %v1925
      %v1982 = vadd.f32 %v1684, %v1928
      %v1983 = vadd.f32 %v1685, %v1933
      %v1984 = vadd.f32 %v1686, %v1936
      %v1985 = vadd.f32 %v1687, %v1941
      %v1986 = vadd.f32 %v1688, %v1944
      %v1987 = vadd.f32 %v1689, %v1949
      %v1988 = vadd.f32 %v1690, %v1952
      %v1989 = vld [vmem:[%s165 + $0x90] sm:$0x3]
      %s1990 = scalar_lea.vmem %s1, 10
      %v1991 = vld [vmem:[%s1990] sm:$0x3]
      %v1993 = vunpack.c.l.b16 %v1989
      %v1994 = vpack.c.b16 %v1993, %v1993
      %vm1995 = vsmask.f32 6400
      %v1997 = vshrl.u32 %v1696, 16
      %v1999 = vrot.slane %v1997, 1
      %v2000 = vshll.u32 %v1696, 16
      %v2002 = vrot.slane %v2000, 2
      %v2003 = vor.u32 %v1999, %v2002
      %v2004 = vrot.slane %v1306, 1
      %v2005 = vrot.slane %v1302, 2
      %v2006 = vor.u32 %v2004, %v2005
      %v2007 = vsel %vm1995, %v2003, %v2006
      %v2008 = vrot.slane %v1314, 1
      %v2009 = vrot.slane %v1310, 2
      %v2010 = vor.u32 %v2008, %v2009
      %v2011 = vsel %vm1995, %v2006, %v2010
      %v2012 = vrot.slane %v1322, 1
      %v2013 = vrot.slane %v1318, 2
      %v2014 = vor.u32 %v2012, %v2013
      %v2015 = vsel %vm1995, %v2010, %v2014
      %v2016 = vrot.slane %v1330, 1
      %v2017 = vrot.slane %v1326, 2
      %v2018 = vor.u32 %v2016, %v2017
      %v2019 = vsel %vm1995, %v2014, %v2018
      %v2020 = vrot.slane %v1338, 1
      %v2021 = vrot.slane %v1334, 2
      %v2022 = vor.u32 %v2020, %v2021
      %v2023 = vsel %vm1995, %v2018, %v2022
      %v2024 = vrot.slane %v1346, 1
      %v2025 = vrot.slane %v1342, 2
      %v2026 = vor.u32 %v2024, %v2025
      %v2027 = vsel %vm1995, %v2022, %v2026
      %v2028 = vrot.slane %v1354, 1
      %v2029 = vrot.slane %v1350, 2
      %v2030 = vor.u32 %v2028, %v2029
      %v2031 = vsel %vm1995, %v2026, %v2030
      %v2032 = vrot.slane %v1362, 1
      %v2033 = vrot.slane %v1358, 2
      %v2034 = vor.u32 %v2032, %v2033
      %v2035 = vsel %vm1995, %v2030, %v2034
      %v2036 = vrot.slane %v1370, 1
      %v2037 = vrot.slane %v1366, 2
      %v2038 = vor.u32 %v2036, %v2037
      %v2039 = vsel %vm1995, %v2034, %v2038
      %v2040 = vrot.slane %v1378, 1
      %v2041 = vrot.slane %v1374, 2
      %v2042 = vor.u32 %v2040, %v2041
      %v2043 = vsel %vm1995, %v2038, %v2042
      %v2044 = vrot.slane %v1386, 1
      %v2045 = vrot.slane %v1382, 2
      %v2046 = vor.u32 %v2044, %v2045
      %v2047 = vsel %vm1995, %v2042, %v2046
      %v2048 = vrot.slane %v1394, 1
      %v2049 = vrot.slane %v1390, 2
      %v2050 = vor.u32 %v2048, %v2049
      %v2051 = vsel %vm1995, %v2046, %v2050
      %v2052 = vrot.slane %v1402, 1
      %v2053 = vrot.slane %v1398, 2
      %v2054 = vor.u32 %v2052, %v2053
      %v2055 = vsel %vm1995, %v2050, %v2054
      %v2056 = vrot.slane %v1410, 1
      %v2057 = vrot.slane %v1406, 2
      %v2058 = vor.u32 %v2056, %v2057
      %v2059 = vsel %vm1995, %v2054, %v2058
      %v2060 = vrot.slane %v1418, 1
      %v2061 = vrot.slane %v1414, 2
      %v2062 = vor.u32 %v2060, %v2061
      %v2063 = vsel %vm1995, %v2058, %v2062
      %v2064 = vrot.slane %v1426, 1
      %v2065 = vrot.slane %v1422, 2
      %v2066 = vor.u32 %v2064, %v2065
      %v2067 = vsel %vm1995, %v2062, %v2066
      %v2069 = vshrl.u32 %v1994, 16
      %v2071 = vrot.slane %v2069, 1
      %v2072 = vshll.u32 %v1994, 16
      %v2074 = vrot.slane %v2072, 2
      %v2075 = vor.u32 %v2071, %v2074
      %v2076 = vsel %vm1995, %v2066, %v2075
      %v2078 = vsel %vm439, %v2007, 0
      %v2081 = vsel %vm439, %v2011, 0
      %v2084 = vsel %vm439, %v2015, 0
      %v2087 = vsel %vm439, %v2019, 0
      %v2090 = vsel %vm439, %v2023, 0
      %v2093 = vsel %vm439, %v2027, 0
      %v2096 = vsel %vm439, %v2031, 0
      %v2099 = vsel %vm439, %v2035, 0
      %v2102 = vsel %vm439, %v2039, 0
      %v2105 = vsel %vm439, %v2043, 0
      %v2108 = vsel %vm439, %v2047, 0
      %v2111 = vsel %vm439, %v2051, 0
      %v2114 = vsel %vm439, %v2055, 0
      %v2117 = vsel %vm439, %v2059, 0
      %v2120 = vsel %vm439, %v2063, 0
      %v2123 = vsel %vm439, %v2067, 0
      %v2126 = vsel %vm439, %v2076, 0
      %v2129 = vsel %vm491, %v1991, 0
      %2131 = vmatprep.subr.bf16.mxu0 0
      %2132 = vmatpush1.bf16.msra.mxu0 %v2129
      %2133 = vmatprep.subr.bf16.mxu0 0
      %2134 = vmatpush1.bf16.msra.mxu0 0
      %2135 = vmatprep.subr.bf16.mxu0 0
      %2136 = vmatpush1.bf16.msra.mxu0 0
      %2137 = vmatprep.subr.bf16.mxu0 0
      %2138 = vmatpush1.bf16.msra.mxu0 0
      %2139 = vmatprep.subr.bf16.mxu0 0
      %2140 = vmatpush1.bf16.msra.mxu0 0
      %2141 = vmatprep.subr.bf16.mxu0 0
      %2142 = vmatpush1.bf16.msra.mxu0 0
      %2143 = vmatprep.subr.bf16.mxu0 0
      %2144 = vmatpush1.bf16.msra.mxu0 0
      %2145 = vmatprep.subr.bf16.mxu0 0
      %2146 = vmatpush1.bf16.msra.mxu0 0
      %2147 = vmatprep.subr.bf16.mxu0 0
      %2148 = vmatpush1.bf16.msra.mxu0 0
      %2149 = vmatprep.subr.bf16.mxu0 0
      %2150 = vmatpush1.bf16.msra.mxu0 0
      %2151 = vmatprep.subr.bf16.mxu0 0
      %2152 = vmatpush1.bf16.msra.mxu0 0
      %2153 = vmatprep.subr.bf16.mxu0 0
      %2154 = vmatpush1.bf16.msra.mxu0 0
      %2155 = vmatprep.subr.bf16.mxu0 0
      %2156 = vmatpush1.bf16.msra.mxu0 0
      %2157 = vmatprep.subr.bf16.mxu0 0
      %2158 = vmatpush1.bf16.msra.mxu0 0
      %2159 = vmatprep.subr.bf16.mxu0 0
      %2160 = vmatpush1.bf16.msra.mxu0 0
      %2161 = vmatprep.subr.bf16.mxu0 0
      %2162 = vmatpush1.bf16.msra.mxu0 0
      %2163 = vmatprep.mubr.bf16.mxu0 0
      %2164 = vmatmul.mubr.bf16.gmra.mrb[0].mxu0 %v2078
      %v2165 = vpop.f32.mrb[0].mxu0
      %v2166 = vadd.f32 0.0, %v2165
      %v2167 = vpop.f32.mrb[0].mxu0
      %v2168 = vpop.f32.mrb[0].mxu0
      %v2169 = vadd.f32 0.0, %v2168
      %v2170 = vpop.f32.mrb[0].mxu0
      %2171 = vmatprep.mubr.bf16.mxu0 0
      %2172 = vmatmul.mubr.bf16.gmra.mrb[0].mxu0 %v2081
      %v2173 = vpop.f32.mrb[0].mxu0
      %v2174 = vadd.f32 0.0, %v2173
      %v2175 = vpop.f32.mrb[0].mxu0
      %v2176 = vpop.f32.mrb[0].mxu0
      %v2177 = vadd.f32 0.0, %v2176
      %v2178 = vpop.f32.mrb[0].mxu0
      %2179 = vmatprep.mubr.bf16.mxu0 0
      %2180 = vmatmul.mubr.bf16.gmra.mrb[0].mxu0 %v2084
      %v2181 = vpop.f32.mrb[0].mxu0
      %v2182 = vadd.f32 0.0, %v2181
      %v2183 = vpop.f32.mrb[0].mxu0
      %v2184 = vpop.f32.mrb[0].mxu0
      %v2185 = vadd.f32 0.0, %v2184
      %v2186 = vpop.f32.mrb[0].mxu0
      %2187 = vmatprep.mubr.bf16.mxu0 0
      %2188 = vmatmul.mubr.bf16.gmra.mrb[0].mxu0 %v2087
      %v2189 = vpop.f32.mrb[0].mxu0
      %v2190 = vadd.f32 0.0, %v2189
      %v2191 = vpop.f32.mrb[0].mxu0
      %v2192 = vpop.f32.mrb[0].mxu0
      %v2193 = vadd.f32 0.0, %v2192
      %v2194 = vpop.f32.mrb[0].mxu0
      %2195 = vmatprep.mubr.bf16.mxu0 0
      %2196 = vmatmul.mubr.bf16.gmra.mrb[0].mxu0 %v2090
      %v2197 = vpop.f32.mrb[0].mxu0
      %v2198 = vadd.f32 0.0, %v2197
      %v2199 = vpop.f32.mrb[0].mxu0
      %v2200 = vpop.f32.mrb[0].mxu0
      %v2201 = vadd.f32 0.0, %v2200
      %v2202 = vpop.f32.mrb[0].mxu0
      %2203 = vmatprep.mubr.bf16.mxu0 0
      %2204 = vmatmul.mubr.bf16.gmra.mrb[0].mxu0 %v2093
      %v2205 = vpop.f32.mrb[0].mxu0
      %v2206 = vadd.f32 0.0, %v2205
      %v2207 = vpop.f32.mrb[0].mxu0
      %v2208 = vpop.f32.mrb[0].mxu0
      %v2209 = vadd.f32 0.0, %v2208
      %v2210 = vpop.f32.mrb[0].mxu0
      %2211 = vmatprep.mubr.bf16.mxu0 0
      %2212 = vmatmul.mubr.bf16.gmra.mrb[0].mxu0 %v2096
      %v2213 = vpop.f32.mrb[0].mxu0
      %v2214 = vadd.f32 0.0, %v2213
      %v2215 = vpop.f32.mrb[0].mxu0
      %v2216 = vpop.f32.mrb[0].mxu0
      %v2217 = vadd.f32 0.0, %v2216
      %v2218 = vpop.f32.mrb[0].mxu0
      %2219 = vmatprep.mubr.bf16.mxu0 0
      %2220 = vmatmul.mubr.bf16.gmra.mrb[0].mxu0 %v2099
      %v2221 = vpop.f32.mrb[0].mxu0
      %v2222 = vadd.f32 0.0, %v2221
      %v2223 = vpop.f32.mrb[0].mxu0
      %v2224 = vpop.f32.mrb[0].mxu0
      %v2225 = vadd.f32 0.0, %v2224
      %v2226 = vpop.f32.mrb[0].mxu0
      %2227 = vmatprep.mubr.bf16.mxu0 0
      %2228 = vmatmul.mubr.bf16.gmra.mrb[0].mxu0 %v2102
      %v2229 = vpop.f32.mrb[0].mxu0
      %v2230 = vadd.f32 0.0, %v2229
      %v2231 = vpop.f32.mrb[0].mxu0
      %v2232 = vpop.f32.mrb[0].mxu0
      %v2233 = vadd.f32 0.0, %v2232
      %v2234 = vpop.f32.mrb[0].mxu0
      %2235 = vmatprep.mubr.bf16.mxu0 0
      %2236 = vmatmul.mubr.bf16.gmra.mrb[0].mxu0 %v2105
      %v2237 = vpop.f32.mrb[0].mxu0
      %v2238 = vadd.f32 0.0, %v2237
      %v2239 = vpop.f32.mrb[0].mxu0
      %v2240 = vpop.f32.mrb[0].mxu0
      %v2241 = vadd.f32 0.0, %v2240
      %v2242 = vpop.f32.mrb[0].mxu0
      %2243 = vmatprep.mubr.bf16.mxu0 0
      %2244 = vmatmul.mubr.bf16.gmra.mrb[0].mxu0 %v2108
      %v2245 = vpop.f32.mrb[0].mxu0
      %v2246 = vadd.f32 0.0, %v2245
      %v2247 = vpop.f32.mrb[0].mxu0
      %v2248 = vpop.f32.mrb[0].mxu0
      %v2249 = vadd.f32 0.0, %v2248
      %v2250 = vpop.f32.mrb[0].mxu0
      %2251 = vmatprep.mubr.bf16.mxu0 0
      %2252 = vmatmul.mubr.bf16.gmra.mrb[0].mxu0 %v2111
      %v2253 = vpop.f32.mrb[0].mxu0
      %v2254 = vadd.f32 0.0, %v2253
      %v2255 = vpop.f32.mrb[0].mxu0
      %v2256 = vpop.f32.mrb[0].mxu0
      %v2257 = vadd.f32 0.0, %v2256
      %v2258 = vpop.f32.mrb[0].mxu0
      %2259 = vmatprep.mubr.bf16.mxu0 0
      %2260 = vmatmul.mubr.bf16.gmra.mrb[0].mxu0 %v2114
      %v2261 = vpop.f32.mrb[0].mxu0
      %v2262 = vadd.f32 0.0, %v2261
      %v2263 = vpop.f32.mrb[0].mxu0
      %v2264 = vpop.f32.mrb[0].mxu0
      %v2265 = vadd.f32 0.0, %v2264
      %v2266 = vpop.f32.mrb[0].mxu0
      %2267 = vmatprep.mubr.bf16.mxu0 0
      %2268 = vmatmul.mubr.bf16.gmra.mrb[0].mxu0 %v2117
      %v2269 = vpop.f32.mrb[0].mxu0
      %v2270 = vadd.f32 0.0, %v2269
      %v2271 = vpop.f32.mrb[0].mxu0
      %v2272 = vpop.f32.mrb[0].mxu0
      %v2273 = vadd.f32 0.0, %v2272
      %v2274 = vpop.f32.mrb[0].mxu0
      %2275 = vmatprep.mubr.bf16.mxu0 0
      %2276 = vmatmul.mubr.bf16.gmra.mrb[0].mxu0 %v2120
      %v2277 = vpop.f32.mrb[0].mxu0
      %v2278 = vadd.f32 0.0, %v2277
      %v2279 = vpop.f32.mrb[0].mxu0
      %v2280 = vpop.f32.mrb[0].mxu0
      %v2281 = vadd.f32 0.0, %v2280
      %v2282 = vpop.f32.mrb[0].mxu0
      %2283 = vmatprep.mubr.bf16.mxu0 0
      %2284 = vmatmul.mubr.bf16.gmra.mrb[0].mxu0 %v2123
      %v2285 = vpop.f32.mrb[0].mxu0
      %v2286 = vadd.f32 0.0, %v2285
      %v2287 = vpop.f32.mrb[0].mxu0
      %v2288 = vpop.f32.mrb[0].mxu0
      %v2289 = vadd.f32 0.0, %v2288
      %v2290 = vpop.f32.mrb[0].mxu0
      %2291 = vmatprep.mubr.bf16.mxu0 0
      %2292 = vmatmul.mubr.bf16.gmra.mrb[0].mxu0 %v2126
      %v2293 = vpop.f32.mrb[0].mxu0
      %v2294 = vadd.f32 0.0, %v2293
      %v2295 = vpop.f32.mrb[0].mxu0
      %v2296 = vpop.f32.mrb[0].mxu0
      %v2297 = vadd.f32 0.0, %v2296
      %v2298 = vpop.f32.mrb[0].mxu0
      %2299 = vdwg.mxu0
      %v2300 = vadd.f32 %v1955, %v2166
      %v2301 = vadd.f32 %v1956, %v2169
      %v2302 = vadd.f32 %v1957, %v2174
      %v2303 = vadd.f32 %v1958, %v2177
      %v2304 = vadd.f32 %v1959, %v2182
      %v2305 = vadd.f32 %v1960, %v2185
      %v2306 = vadd.f32 %v1961, %v2190
      %v2307 = vadd.f32 %v1962, %v2193
      %v2308 = vadd.f32 %v1963, %v2198
      %v2309 = vadd.f32 %v1964, %v2201
      %v2310 = vadd.f32 %v1965, %v2206
      %v2311 = vadd.f32 %v1966, %v2209
      %v2312 = vadd.f32 %v1967, %v2214
      %v2313 = vadd.f32 %v1968, %v2217
      %v2314 = vadd.f32 %v1969, %v2222
      %v2315 = vadd.f32 %v1970, %v2225
      %v2316 = vadd.f32 %v1971, %v2230
      %v2317 = vadd.f32 %v1972, %v2233
      %v2318 = vadd.f32 %v1973, %v2238
      %v2319 = vadd.f32 %v1974, %v2241
      %v2320 = vadd.f32 %v1975, %v2246
      %v2321 = vadd.f32 %v1976, %v2249
      %v2322 = vadd.f32 %v1977, %v2254
      %v2323 = vadd.f32 %v1978, %v2257
      %v2324 = vadd.f32 %v1979, %v2262
      %v2325 = vadd.f32 %v1980, %v2265
      %v2326 = vadd.f32 %v1981, %v2270
      %v2327 = vadd.f32 %v1982, %v2273
      %v2328 = vadd.f32 %v1983, %v2278
      %v2329 = vadd.f32 %v1984, %v2281
      %v2330 = vadd.f32 %v1985, %v2286
      %v2331 = vadd.f32 %v1986, %v2289
      %v2332 = vadd.f32 %v1987, %v2294
      %v2333 = vadd.f32 %v1988, %v2297
      %v2334 = vld [vmem:[%s165 + $0x10] sm:$0xe]
      %v2335 = vld [vmem:[%s165 + $0x14] sm:$0xf]
      %v2336 = vld [vmem:[%s165 + $0x18] sm:$0xf]
      %v2337 = vld [vmem:[%s165 + $0x1c] sm:$0xf]
      %v2338 = vld [vmem:[%s165 + $0x20] sm:$0xf]
      %v2339 = vld [vmem:[%s165 + $0x24] sm:$0xf]
      %v2340 = vld [vmem:[%s165 + $0x28] sm:$0xf]
      %v2341 = vld [vmem:[%s165 + $0x2c] sm:$0xf]
      %v2342 = vld [vmem:[%s165 + $0x30] sm:$0xf]
      %v2343 = vld [vmem:[%s165 + $0x34] sm:$0xf]
      %v2344 = vld [vmem:[%s165 + $0x38] sm:$0xf]
      %v2345 = vld [vmem:[%s165 + $0x3c] sm:$0xf]
      %v2346 = vld [vmem:[%s165 + $0x40] sm:$0xf]
      %v2347 = vld [vmem:[%s165 + $0x44] sm:$0xf]
      %v2348 = vld [vmem:[%s165 + $0x48] sm:$0xf]
      %v2349 = vld [vmem:[%s165 + $0x4c] sm:$0xf]
      %v2350 = vld [vmem:[%s165 + $0x50] sm:$0xf]
      %v2351 = vld [vmem:[%s165 + $0x54] sm:$0xf]
      %v2352 = vld [vmem:[%s165 + $0x58] sm:$0xf]
      %v2353 = vld [vmem:[%s165 + $0x5c] sm:$0xf]
      %v2354 = vld [vmem:[%s165 + $0x60] sm:$0xf]
      %v2355 = vld [vmem:[%s165 + $0x64] sm:$0xf]
      %v2356 = vld [vmem:[%s165 + $0x68] sm:$0xf]
      %v2357 = vld [vmem:[%s165 + $0x6c] sm:$0xf]
      %v2358 = vld [vmem:[%s165 + $0x70] sm:$0xf]
      %v2359 = vld [vmem:[%s165 + $0x74] sm:$0xf]
      %v2360 = vld [vmem:[%s165 + $0x78] sm:$0xf]
      %v2361 = vld [vmem:[%s165 + $0x7c] sm:$0xf]
      %v2362 = vld [vmem:[%s165 + $0x80] sm:$0xf]
      %v2363 = vld [vmem:[%s165 + $0x84] sm:$0xf]
      %v2364 = vld [vmem:[%s165 + $0x88] sm:$0xf]
      %v2365 = vld [vmem:[%s165 + $0x8c] sm:$0xf]
      %v2366 = vld [vmem:[%s165 + $0x90] sm:$0xf]
      %v2367 = vld [vmem:[%s165 + $0x94] sm:$0xf]
      %v2368 = vld [vmem:[%s165 + $0x98] sm:$0x1]
      %s2369 = scalar_lea.vmem %s1, 12
      %v2370 = vld [vmem:[%s2369] sm:$0x3]
      %v2406 = vunpack.c.l.b16 %v2334
      %v2407 = vunpack.c.l.b16 %v2335
      %v2408 = vunpack.c.l.b16 %v2336
      %v2409 = vunpack.c.l.b16 %v2337
      %v2410 = vunpack.c.l.b16 %v2338
      %v2411 = vunpack.c.l.b16 %v2339
      %v2412 = vunpack.c.l.b16 %v2340
      %v2413 = vunpack.c.l.b16 %v2341
      %v2414 = vunpack.c.l.b16 %v2342
      %v2415 = vunpack.c.l.b16 %v2343
      %v2416 = vunpack.c.l.b16 %v2344
      %v2417 = vunpack.c.l.b16 %v2345
      %v2418 = vunpack.c.l.b16 %v2346
      %v2419 = vunpack.c.l.b16 %v2347
      %v2420 = vunpack.c.l.b16 %v2348
      %v2421 = vunpack.c.l.b16 %v2349
      %v2422 = vunpack.c.l.b16 %v2350
      %v2423 = vunpack.c.l.b16 %v2351
      %v2424 = vunpack.c.l.b16 %v2352
      %v2425 = vunpack.c.l.b16 %v2353
      %v2426 = vunpack.c.l.b16 %v2354
      %v2427 = vunpack.c.l.b16 %v2355
      %v2428 = vunpack.c.l.b16 %v2356
      %v2429 = vunpack.c.l.b16 %v2357
      %v2430 = vunpack.c.l.b16 %v2358
      %v2431 = vunpack.c.l.b16 %v2359
      %v2432 = vunpack.c.l.b16 %v2360
      %v2433 = vunpack.c.l.b16 %v2361
      %v2434 = vunpack.c.l.b16 %v2362
      %v2435 = vunpack.c.l.b16 %v2363
      %v2436 = vunpack.c.l.b16 %v2364
      %v2437 = vunpack.c.l.b16 %v2365
      %v2438 = vunpack.c.l.b16 %v2366
      %v2439 = vunpack.c.l.b16 %v2367
      %v2440 = vunpack.c.l.b16 %v2368
      %v2441 = vpack.c.b16 %v2407, %v2406
      %v2442 = vpack.c.b16 %v2409, %v2408
      %v2443 = vpack.c.b16 %v2411, %v2410
      %v2444 = vpack.c.b16 %v2413, %v2412
      %v2445 = vpack.c.b16 %v2415, %v2414
      %v2446 = vpack.c.b16 %v2417, %v2416
      %v2447 = vpack.c.b16 %v2419, %v2418
      %v2448 = vpack.c.b16 %v2421, %v2420
      %v2449 = vpack.c.b16 %v2423, %v2422
      %v2450 = vpack.c.b16 %v2425, %v2424
      %v2451 = vpack.c.b16 %v2427, %v2426
      %v2452 = vpack.c.b16 %v2429, %v2428
      %v2453 = vpack.c.b16 %v2431, %v2430
      %v2454 = vpack.c.b16 %v2433, %v2432
      %v2455 = vpack.c.b16 %v2435, %v2434
      %v2456 = vpack.c.b16 %v2437, %v2436
      %v2457 = vpack.c.b16 %v2439, %v2438
      %v2458 = vpack.c.b16 %v2440, %v2440
      %v2459 = vrot.slane %v2441, 1
      %v2460 = vrot.slane %v2442, 1
      %v2461 = vsel %vm876, %v2459, %v2460
      %v2462 = vrot.slane %v2443, 1
      %v2463 = vsel %vm876, %v2460, %v2462
      %v2464 = vrot.slane %v2444, 1
      %v2465 = vsel %vm876, %v2462, %v2464
      %v2466 = vrot.slane %v2445, 1
      %v2467 = vsel %vm876, %v2464, %v2466
      %v2468 = vrot.slane %v2446, 1
      %v2469 = vsel %vm876, %v2466, %v2468
      %v2470 = vrot.slane %v2447, 1
      %v2471 = vsel %vm876, %v2468, %v2470
      %v2472 = vrot.slane %v2448, 1
      %v2473 = vsel %vm876, %v2470, %v2472
      %v2474 = vrot.slane %v2449, 1
      %v2475 = vsel %vm876, %v2472, %v2474
      %v2476 = vrot.slane %v2450, 1
      %v2477 = vsel %vm876, %v2474, %v2476
      %v2478 = vrot.slane %v2451, 1
      %v2479 = vsel %vm876, %v2476, %v2478
      %v2480 = vrot.slane %v2452, 1
      %v2481 = vsel %vm876, %v2478, %v2480
      %v2482 = vrot.slane %v2453, 1
      %v2483 = vsel %vm876, %v2480, %v2482
      %v2484 = vrot.slane %v2454, 1
      %v2485 = vsel %vm876, %v2482, %v2484
      %v2486 = vrot.slane %v2455, 1
      %v2487 = vsel %vm876, %v2484, %v2486
      %v2488 = vrot.slane %v2456, 1
      %v2489 = vsel %vm876, %v2486, %v2488
      %v2490 = vrot.slane %v2457, 1
      %v2491 = vsel %vm876, %v2488, %v2490
      %v2492 = vrot.slane %v2458, 1
      %v2493 = vsel %vm876, %v2490, %v2492
      %v2495 = vsel %vm439, %v2461, 0
      %v2498 = vsel %vm439, %v2463, 0
      %v2501 = vsel %vm439, %v2465, 0
      %v2504 = vsel %vm439, %v2467, 0
      %v2507 = vsel %vm439, %v2469, 0
      %v2510 = vsel %vm439, %v2471, 0
      %v2513 = vsel %vm439, %v2473, 0
      %v2516 = vsel %vm439, %v2475, 0
      %v2519 = vsel %vm439, %v2477, 0
      %v2522 = vsel %vm439, %v2479, 0
      %v2525 = vsel %vm439, %v2481, 0
      %v2528 = vsel %vm439, %v2483, 0
      %v2531 = vsel %vm439, %v2485, 0
      %v2534 = vsel %vm439, %v2487, 0
      %v2537 = vsel %vm439, %v2489, 0
      %v2540 = vsel %vm439, %v2491, 0
      %v2543 = vsel %vm439, %v2493, 0
      %v2546 = vsel %vm491, %v2370, 0
      %2548 = vmatprep.subr.bf16.mxu0 0
      %2549 = vmatpush1.bf16.msra.mxu0 %v2546
      %2550 = vmatprep.subr.bf16.mxu0 0
      %2551 = vmatpush1.bf16.msra.mxu0 0
      %2552 = vmatprep.subr.bf16.mxu0 0
      %2553 = vmatpush1.bf16.msra.mxu0 0
      %2554 = vmatprep.subr.bf16.mxu0 0
      %2555 = vmatpush1.bf16.msra.mxu0 0
      %2556 = vmatprep.subr.bf16.mxu0 0
      %2557 = vmatpush1.bf16.msra.mxu0 0
      %2558 = vmatprep.subr.bf16.mxu0 0
      %2559 = vmatpush1.bf16.msra.mxu0 0
      %2560 = vmatprep.subr.bf16.mxu0 0
      %2561 = vmatpush1.bf16.msra.mxu0 0
      %2562 = vmatprep.subr.bf16.mxu0 0
      %2563 = vmatpush1.bf16.msra.mxu0 0
      %2564 = vmatprep.subr.bf16.mxu0 0
      %2565 = vmatpush1.bf16.msra.mxu0 0
      %2566 = vmatprep.subr.bf16.mxu0 0
      %2567 = vmatpush1.bf16.msra.mxu0 0
      %2568 = vmatprep.subr.bf16.mxu0 0
      %2569 = vmatpush1.bf16.msra.mxu0 0
      %2570 = vmatprep.subr.bf16.mxu0 0
      %2571 = vmatpush1.bf16.msra.mxu0 0
      %2572 = vmatprep.subr.bf16.mxu0 0
      %2573 = vmatpush1.bf16.msra.mxu0 0
      %2574 = vmatprep.subr.bf16.mxu0 0
      %2575 = vmatpush1.bf16.msra.mxu0 0
      %2576 = vmatprep.subr.bf16.mxu0 0
      %2577 = vmatpush1.bf16.msra.mxu0 0
      %2578 = vmatprep.subr.bf16.mxu0 0
      %2579 = vmatpush1.bf16.msra.mxu0 0
      %2580 = vmatprep.mubr.bf16.mxu0 0
      %2581 = vmatmul.mubr.bf16.gmra.mrb[0].mxu0 %v2495
      %v2582 = vpop.f32.mrb[0].mxu0
      %v2583 = vadd.f32 0.0, %v2582
      %v2584 = vpop.f32.mrb[0].mxu0
      %v2585 = vpop.f32.mrb[0].mxu0
      %v2586 = vadd.f32 0.0, %v2585
      %v2587 = vpop.f32.mrb[0].mxu0
      %2588 = vmatprep.mubr.bf16.mxu0 0
      %2589 = vmatmul.mubr.bf16.gmra.mrb[0].mxu0 %v2498
      %v2590 = vpop.f32.mrb[0].mxu0
      %v2591 = vadd.f32 0.0, %v2590
      %v2592 = vpop.f32.mrb[0].mxu0
      %v2593 = vpop.f32.mrb[0].mxu0
      %v2594 = vadd.f32 0.0, %v2593
      %v2595 = vpop.f32.mrb[0].mxu0
      %2596 = vmatprep.mubr.bf16.mxu0 0
      %2597 = vmatmul.mubr.bf16.gmra.mrb[0].mxu0 %v2501
      %v2598 = vpop.f32.mrb[0].mxu0
      %v2599 = vadd.f32 0.0, %v2598
      %v2600 = vpop.f32.mrb[0].mxu0
      %v2601 = vpop.f32.mrb[0].mxu0
      %v2602 = vadd.f32 0.0, %v2601
      %v2603 = vpop.f32.mrb[0].mxu0
      %2604 = vmatprep.mubr.bf16.mxu0 0
      %2605 = vmatmul.mubr.bf16.gmra.mrb[0].mxu0 %v2504
      %v2606 = vpop.f32.mrb[0].mxu0
      %v2607 = vadd.f32 0.0, %v2606
      %v2608 = vpop.f32.mrb[0].mxu0
      %v2609 = vpop.f32.mrb[0].mxu0
      %v2610 = vadd.f32 0.0, %v2609
      %v2611 = vpop.f32.mrb[0].mxu0
      %2612 = vmatprep.mubr.bf16.mxu0 0
      %2613 = vmatmul.mubr.bf16.gmra.mrb[0].mxu0 %v2507
      %v2614 = vpop.f32.mrb[0].mxu0
      %v2615 = vadd.f32 0.0, %v2614
      %v2616 = vpop.f32.mrb[0].mxu0
      %v2617 = vpop.f32.mrb[0].mxu0
      %v2618 = vadd.f32 0.0, %v2617
      %v2619 = vpop.f32.mrb[0].mxu0
      %2620 = vmatprep.mubr.bf16.mxu0 0
      %2621 = vmatmul.mubr.bf16.gmra.mrb[0].mxu0 %v2510
      %v2622 = vpop.f32.mrb[0].mxu0
      %v2623 = vadd.f32 0.0, %v2622
      %v2624 = vpop.f32.mrb[0].mxu0
      %v2625 = vpop.f32.mrb[0].mxu0
      %v2626 = vadd.f32 0.0, %v2625
      %v2627 = vpop.f32.mrb[0].mxu0
      %2628 = vmatprep.mubr.bf16.mxu0 0
      %2629 = vmatmul.mubr.bf16.gmra.mrb[0].mxu0 %v2513
      %v2630 = vpop.f32.mrb[0].mxu0
      %v2631 = vadd.f32 0.0, %v2630
      %v2632 = vpop.f32.mrb[0].mxu0
      %v2633 = vpop.f32.mrb[0].mxu0
      %v2634 = vadd.f32 0.0, %v2633
      %v2635 = vpop.f32.mrb[0].mxu0
      %2636 = vmatprep.mubr.bf16.mxu0 0
      %2637 = vmatmul.mubr.bf16.gmra.mrb[0].mxu0 %v2516
      %v2638 = vpop.f32.mrb[0].mxu0
      %v2639 = vadd.f32 0.0, %v2638
      %v2640 = vpop.f32.mrb[0].mxu0
      %v2641 = vpop.f32.mrb[0].mxu0
      %v2642 = vadd.f32 0.0, %v2641
      %v2643 = vpop.f32.mrb[0].mxu0
      %2644 = vmatprep.mubr.bf16.mxu0 0
      %2645 = vmatmul.mubr.bf16.gmra.mrb[0].mxu0 %v2519
      %v2646 = vpop.f32.mrb[0].mxu0
      %v2647 = vadd.f32 0.0, %v2646
      %v2648 = vpop.f32.mrb[0].mxu0
      %v2649 = vpop.f32.mrb[0].mxu0
      %v2650 = vadd.f32 0.0, %v2649
      %v2651 = vpop.f32.mrb[0].mxu0
      %2652 = vmatprep.mubr.bf16.mxu0 0
      %2653 = vmatmul.mubr.bf16.gmra.mrb[0].mxu0 %v2522
      %v2654 = vpop.f32.mrb[0].mxu0
      %v2655 = vadd.f32 0.0, %v2654
      %v2656 = vpop.f32.mrb[0].mxu0
      %v2657 = vpop.f32.mrb[0].mxu0
      %v2658 = vadd.f32 0.0, %v2657
      %v2659 = vpop.f32.mrb[0].mxu0
      %2660 = vmatprep.mubr.bf16.mxu0 0
      %2661 = vmatmul.mubr.bf16.gmra.mrb[0].mxu0 %v2525
      %v2662 = vpop.f32.mrb[0].mxu0
      %v2663 = vadd.f32 0.0, %v2662
      %v2664 = vpop.f32.mrb[0].mxu0
      %v2665 = vpop.f32.mrb[0].mxu0
      %v2666 = vadd.f32 0.0, %v2665
      %v2667 = vpop.f32.mrb[0].mxu0
      %2668 = vmatprep.mubr.bf16.mxu0 0
      %2669 = vmatmul.mubr.bf16.gmra.mrb[0].mxu0 %v2528
      %v2670 = vpop.f32.mrb[0].mxu0
      %v2671 = vadd.f32 0.0, %v2670
      %v2672 = vpop.f32.mrb[0].mxu0
      %v2673 = vpop.f32.mrb[0].mxu0
      %v2674 = vadd.f32 0.0, %v2673
      %v2675 = vpop.f32.mrb[0].mxu0
      %2676 = vmatprep.mubr.bf16.mxu0 0
      %2677 = vmatmul.mubr.bf16.gmra.mrb[0].mxu0 %v2531
      %v2678 = vpop.f32.mrb[0].mxu0
      %v2679 = vadd.f32 0.0, %v2678
      %v2680 = vpop.f32.mrb[0].mxu0
      %v2681 = vpop.f32.mrb[0].mxu0
      %v2682 = vadd.f32 0.0, %v2681
      %v2683 = vpop.f32.mrb[0].mxu0
      %2684 = vmatprep.mubr.bf16.mxu0 0
      %2685 = vmatmul.mubr.bf16.gmra.mrb[0].mxu0 %v2534
      %v2686 = vpop.f32.mrb[0].mxu0
      %v2687 = vadd.f32 0.0, %v2686
      %v2688 = vpop.f32.mrb[0].mxu0
      %v2689 = vpop.f32.mrb[0].mxu0
      %v2690 = vadd.f32 0.0, %v2689
      %v2691 = vpop.f32.mrb[0].mxu0
      %2692 = vmatprep.mubr.bf16.mxu0 0
      %2693 = vmatmul.mubr.bf16.gmra.mrb[0].mxu0 %v2537
      %v2694 = vpop.f32.mrb[0].mxu0
      %v2695 = vadd.f32 0.0, %v2694
      %v2696 = vpop.f32.mrb[0].mxu0
      %v2697 = vpop.f32.mrb[0].mxu0
      %v2698 = vadd.f32 0.0, %v2697
      %v2699 = vpop.f32.mrb[0].mxu0
      %2700 = vmatprep.mubr.bf16.mxu0 0
      %2701 = vmatmul.mubr.bf16.gmra.mrb[0].mxu0 %v2540
      %v2702 = vpop.f32.mrb[0].mxu0
      %v2703 = vadd.f32 0.0, %v2702
      %v2704 = vpop.f32.mrb[0].mxu0
      %v2705 = vpop.f32.mrb[0].mxu0
      %v2706 = vadd.f32 0.0, %v2705
      %v2707 = vpop.f32.mrb[0].mxu0
      %2708 = vmatprep.mubr.bf16.mxu0 0
      %2709 = vmatmul.mubr.bf16.gmra.mrb[0].mxu0 %v2543
      %v2710 = vpop.f32.mrb[0].mxu0
      %v2711 = vadd.f32 0.0, %v2710
      %v2712 = vpop.f32.mrb[0].mxu0
      %v2713 = vpop.f32.mrb[0].mxu0
      %v2714 = vadd.f32 0.0, %v2713
      %v2715 = vpop.f32.mrb[0].mxu0
      %2716 = vdwg.mxu0
      %v2717 = vadd.f32 %v2300, %v2583
      %v2718 = vadd.f32 %v2301, %v2586
      %v2719 = vadd.f32 %v2302, %v2591
      %v2720 = vadd.f32 %v2303, %v2594
      %v2721 = vadd.f32 %v2304, %v2599
      %v2722 = vadd.f32 %v2305, %v2602
      %v2723 = vadd.f32 %v2306, %v2607
      %v2724 = vadd.f32 %v2307, %v2610
      %v2725 = vadd.f32 %v2308, %v2615
      %v2726 = vadd.f32 %v2309, %v2618
      %v2727 = vadd.f32 %v2310, %v2623
      %v2728 = vadd.f32 %v2311, %v2626
      %v2729 = vadd.f32 %v2312, %v2631
      %v2730 = vadd.f32 %v2313, %v2634
      %v2731 = vadd.f32 %v2314, %v2639
      %v2732 = vadd.f32 %v2315, %v2642
      %v2733 = vadd.f32 %v2316, %v2647
      %v2734 = vadd.f32 %v2317, %v2650
      %v2735 = vadd.f32 %v2318, %v2655
      %v2736 = vadd.f32 %v2319, %v2658
      %v2737 = vadd.f32 %v2320, %v2663
      %v2738 = vadd.f32 %v2321, %v2666
      %v2739 = vadd.f32 %v2322, %v2671
      %v2740 = vadd.f32 %v2323, %v2674
      %v2741 = vadd.f32 %v2324, %v2679
      %v2742 = vadd.f32 %v2325, %v2682
      %v2743 = vadd.f32 %v2326, %v2687
      %v2744 = vadd.f32 %v2327, %v2690
      %v2745 = vadd.f32 %v2328, %v2695
      %v2746 = vadd.f32 %v2329, %v2698
      %v2747 = vadd.f32 %v2330, %v2703
      %v2748 = vadd.f32 %v2331, %v2706
      %v2749 = vadd.f32 %v2332, %v2711
      %v2750 = vadd.f32 %v2333, %v2714
      %v2751 = vld [vmem:[%s165 + $0x98] sm:$0x3]
      %s2752 = scalar_lea.vmem %s1, 14
      %v2753 = vld [vmem:[%s2752] sm:$0x3]
      %v2755 = vunpack.c.l.b16 %v2751
      %v2756 = vpack.c.b16 %v2755, %v2755
      %v2758 = vshrl.u32 %v2441, 16
      %v2760 = vrot.slane %v2758, 1
      %v2761 = vshll.u32 %v2441, 16
      %v2763 = vrot.slane %v2761, 2
      %v2764 = vor.u32 %v2760, %v2763
      %v2766 = vshrl.u32 %v2442, 16
      %v2768 = vrot.slane %v2766, 1
      %v2769 = vshll.u32 %v2442, 16
      %v2771 = vrot.slane %v2769, 2
      %v2772 = vor.u32 %v2768, %v2771
      %v2773 = vsel %vm1995, %v2764, %v2772
      %v2775 = vshrl.u32 %v2443, 16
      %v2777 = vrot.slane %v2775, 1
      %v2778 = vshll.u32 %v2443, 16
      %v2780 = vrot.slane %v2778, 2
      %v2781 = vor.u32 %v2777, %v2780
      %v2782 = vsel %vm1995, %v2772, %v2781
      %v2784 = vshrl.u32 %v2444, 16
      %v2786 = vrot.slane %v2784, 1
      %v2787 = vshll.u32 %v2444, 16
      %v2789 = vrot.slane %v2787, 2
      %v2790 = vor.u32 %v2786, %v2789
      %v2791 = vsel %vm1995, %v2781, %v2790
      %v2793 = vshrl.u32 %v2445, 16
      %v2795 = vrot.slane %v2793, 1
      %v2796 = vshll.u32 %v2445, 16
      %v2798 = vrot.slane %v2796, 2
      %v2799 = vor.u32 %v2795, %v2798
      %v2800 = vsel %vm1995, %v2790, %v2799
      %v2802 = vshrl.u32 %v2446, 16
      %v2804 = vrot.slane %v2802, 1
      %v2805 = vshll.u32 %v2446, 16
      %v2807 = vrot.slane %v2805, 2
      %v2808 = vor.u32 %v2804, %v2807
      %v2809 = vsel %vm1995, %v2799, %v2808
      %v2811 = vshrl.u32 %v2447, 16
      %v2813 = vrot.slane %v2811, 1
      %v2814 = vshll.u32 %v2447, 16
      %v2816 = vrot.slane %v2814, 2
      %v2817 = vor.u32 %v2813, %v2816
      %v2818 = vsel %vm1995, %v2808, %v2817
      %v2820 = vshrl.u32 %v2448, 16
      %v2822 = vrot.slane %v2820, 1
      %v2823 = vshll.u32 %v2448, 16
      %v2825 = vrot.slane %v2823, 2
      %v2826 = vor.u32 %v2822, %v2825
      %v2827 = vsel %vm1995, %v2817, %v2826
      %v2829 = vshrl.u32 %v2449, 16
      %v2831 = vrot.slane %v2829, 1
      %v2832 = vshll.u32 %v2449, 16
      %v2834 = vrot.slane %v2832, 2
      %v2835 = vor.u32 %v2831, %v2834
      %v2836 = vsel %vm1995, %v2826, %v2835
      %v2838 = vshrl.u32 %v2450, 16
      %v2840 = vrot.slane %v2838, 1
      %v2841 = vshll.u32 %v2450, 16
      %v2843 = vrot.slane %v2841, 2
      %v2844 = vor.u32 %v2840, %v2843
      %v2845 = vsel %vm1995, %v2835, %v2844
      %v2847 = vshrl.u32 %v2451, 16
      %v2849 = vrot.slane %v2847, 1
      %v2850 = vshll.u32 %v2451, 16
      %v2852 = vrot.slane %v2850, 2
      %v2853 = vor.u32 %v2849, %v2852
      %v2854 = vsel %vm1995, %v2844, %v2853
      %v2856 = vshrl.u32 %v2452, 16
      %v2858 = vrot.slane %v2856, 1
      %v2859 = vshll.u32 %v2452, 16
      %v2861 = vrot.slane %v2859, 2
      %v2862 = vor.u32 %v2858, %v2861
      %v2863 = vsel %vm1995, %v2853, %v2862
      %v2865 = vshrl.u32 %v2453, 16
      %v2867 = vrot.slane %v2865, 1
      %v2868 = vshll.u32 %v2453, 16
      %v2870 = vrot.slane %v2868, 2
      %v2871 = vor.u32 %v2867, %v2870
      %v2872 = vsel %vm1995, %v2862, %v2871
      %v2874 = vshrl.u32 %v2454, 16
      %v2876 = vrot.slane %v2874, 1
      %v2877 = vshll.u32 %v2454, 16
      %v2879 = vrot.slane %v2877, 2
      %v2880 = vor.u32 %v2876, %v2879
      %v2881 = vsel %vm1995, %v2871, %v2880
      %v2883 = vshrl.u32 %v2455, 16
      %v2885 = vrot.slane %v2883, 1
      %v2886 = vshll.u32 %v2455, 16
      %v2888 = vrot.slane %v2886, 2
      %v2889 = vor.u32 %v2885, %v2888
      %v2890 = vsel %vm1995, %v2880, %v2889
      %v2892 = vshrl.u32 %v2456, 16
      %v2894 = vrot.slane %v2892, 1
      %v2895 = vshll.u32 %v2456, 16
      %v2897 = vrot.slane %v2895, 2
      %v2898 = vor.u32 %v2894, %v2897
      %v2899 = vsel %vm1995, %v2889, %v2898
      %v2901 = vshrl.u32 %v2457, 16
      %v2903 = vrot.slane %v2901, 1
      %v2904 = vshll.u32 %v2457, 16
      %v2906 = vrot.slane %v2904, 2
      %v2907 = vor.u32 %v2903, %v2906
      %v2908 = vsel %vm1995, %v2898, %v2907
      %v2910 = vshrl.u32 %v2756, 16
      %v2912 = vrot.slane %v2910, 1
      %v2913 = vshll.u32 %v2756, 16
      %v2915 = vrot.slane %v2913, 2
      %v2916 = vor.u32 %v2912, %v2915
      %v2917 = vsel %vm1995, %v2907, %v2916
      %v2919 = vsel %vm439, %v2773, 0
      %v2922 = vsel %vm439, %v2782, 0
      %v2925 = vsel %vm439, %v2791, 0
      %v2928 = vsel %vm439, %v2800, 0
      %v2931 = vsel %vm439, %v2809, 0
      %v2934 = vsel %vm439, %v2818, 0
      %v2937 = vsel %vm439, %v2827, 0
      %v2940 = vsel %vm439, %v2836, 0
      %v2943 = vsel %vm439, %v2845, 0
      %v2946 = vsel %vm439, %v2854, 0
      %v2949 = vsel %vm439, %v2863, 0
      %v2952 = vsel %vm439, %v2872, 0
      %v2955 = vsel %vm439, %v2881, 0
      %v2958 = vsel %vm439, %v2890, 0
      %v2961 = vsel %vm439, %v2899, 0
      %v2964 = vsel %vm439, %v2908, 0
      %v2967 = vsel %vm439, %v2917, 0
      %v2970 = vsel %vm491, %v2753, 0
      %2972 = vmatprep.subr.bf16.mxu0 0
      %2973 = vmatpush1.bf16.msra.mxu0 %v2970
      %2974 = vmatprep.subr.bf16.mxu0 0
      %2975 = vmatpush1.bf16.msra.mxu0 0
      %2976 = vmatprep.subr.bf16.mxu0 0
      %2977 = vmatpush1.bf16.msra.mxu0 0
      %2978 = vmatprep.subr.bf16.mxu0 0
      %2979 = vmatpush1.bf16.msra.mxu0 0
      %2980 = vmatprep.subr.bf16.mxu0 0
      %2981 = vmatpush1.bf16.msra.mxu0 0
      %2982 = vmatprep.subr.bf16.mxu0 0
      %2983 = vmatpush1.bf16.msra.mxu0 0
      %2984 = vmatprep.subr.bf16.mxu0 0
      %2985 = vmatpush1.bf16.msra.mxu0 0
      %2986 = vmatprep.subr.bf16.mxu0 0
      %2987 = vmatpush1.bf16.msra.mxu0 0
      %2988 = vmatprep.subr.bf16.mxu0 0
      %2989 = vmatpush1.bf16.msra.mxu0 0
      %2990 = vmatprep.subr.bf16.mxu0 0
      %2991 = vmatpush1.bf16.msra.mxu0 0
      %2992 = vmatprep.subr.bf16.mxu0 0
      %2993 = vmatpush1.bf16.msra.mxu0 0
      %2994 = vmatprep.subr.bf16.mxu0 0
      %2995 = vmatpush1.bf16.msra.mxu0 0
      %2996 = vmatprep.subr.bf16.mxu0 0
      %2997 = vmatpush1.bf16.msra.mxu0 0
      %2998 = vmatprep.subr.bf16.mxu0 0
      %2999 = vmatpush1.bf16.msra.mxu0 0
      %3000 = vmatprep.subr.bf16.mxu0 0
      %3001 = vmatpush1.bf16.msra.mxu0 0
      %3002 = vmatprep.subr.bf16.mxu0 0
      %3003 = vmatpush1.bf16.msra.mxu0 0
      %3004 = vmatprep.mubr.bf16.mxu0 0
      %3005 = vmatmul.mubr.bf16.gmra.mrb[0].mxu0 %v2919
      %v3006 = vpop.f32.mrb[0].mxu0
      %v3007 = vadd.f32 0.0, %v3006
      %v3008 = vpop.f32.mrb[0].mxu0
      %v3009 = vpop.f32.mrb[0].mxu0
      %v3010 = vadd.f32 0.0, %v3009
      %v3011 = vpop.f32.mrb[0].mxu0
      %3012 = vmatprep.mubr.bf16.mxu0 0
      %3013 = vmatmul.mubr.bf16.gmra.mrb[0].mxu0 %v2922
      %v3014 = vpop.f32.mrb[0].mxu0
      %v3015 = vadd.f32 0.0, %v3014
      %v3016 = vpop.f32.mrb[0].mxu0
      %v3017 = vpop.f32.mrb[0].mxu0
      %v3018 = vadd.f32 0.0, %v3017
      %v3019 = vpop.f32.mrb[0].mxu0
      %3020 = vmatprep.mubr.bf16.mxu0 0
      %3021 = vmatmul.mubr.bf16.gmra.mrb[0].mxu0 %v2925
      %v3022 = vpop.f32.mrb[0].mxu0
      %v3023 = vadd.f32 0.0, %v3022
      %v3024 = vpop.f32.mrb[0].mxu0
      %v3025 = vpop.f32.mrb[0].mxu0
      %v3026 = vadd.f32 0.0, %v3025
      %v3027 = vpop.f32.mrb[0].mxu0
      %3028 = vmatprep.mubr.bf16.mxu0 0
      %3029 = vmatmul.mubr.bf16.gmra.mrb[0].mxu0 %v2928
      %v3030 = vpop.f32.mrb[0].mxu0
      %v3031 = vadd.f32 0.0, %v3030
      %v3032 = vpop.f32.mrb[0].mxu0
      %v3033 = vpop.f32.mrb[0].mxu0
      %v3034 = vadd.f32 0.0, %v3033
      %v3035 = vpop.f32.mrb[0].mxu0
      %3036 = vmatprep.mubr.bf16.mxu0 0
      %3037 = vmatmul.mubr.bf16.gmra.mrb[0].mxu0 %v2931
      %v3038 = vpop.f32.mrb[0].mxu0
      %v3039 = vadd.f32 0.0, %v3038
      %v3040 = vpop.f32.mrb[0].mxu0
      %v3041 = vpop.f32.mrb[0].mxu0
      %v3042 = vadd.f32 0.0, %v3041
      %v3043 = vpop.f32.mrb[0].mxu0
      %3044 = vmatprep.mubr.bf16.mxu0 0
      %3045 = vmatmul.mubr.bf16.gmra.mrb[0].mxu0 %v2934
      %v3046 = vpop.f32.mrb[0].mxu0
      %v3047 = vadd.f32 0.0, %v3046
      %v3048 = vpop.f32.mrb[0].mxu0
      %v3049 = vpop.f32.mrb[0].mxu0
      %v3050 = vadd.f32 0.0, %v3049
      %v3051 = vpop.f32.mrb[0].mxu0
      %3052 = vmatprep.mubr.bf16.mxu0 0
      %3053 = vmatmul.mubr.bf16.gmra.mrb[0].mxu0 %v2937
      %v3054 = vpop.f32.mrb[0].mxu0
      %v3055 = vadd.f32 0.0, %v3054
      %v3056 = vpop.f32.mrb[0].mxu0
      %v3057 = vpop.f32.mrb[0].mxu0
      %v3058 = vadd.f32 0.0, %v3057
      %v3059 = vpop.f32.mrb[0].mxu0
      %3060 = vmatprep.mubr.bf16.mxu0 0
      %3061 = vmatmul.mubr.bf16.gmra.mrb[0].mxu0 %v2940
      %v3062 = vpop.f32.mrb[0].mxu0
      %v3063 = vadd.f32 0.0, %v3062
      %v3064 = vpop.f32.mrb[0].mxu0
      %v3065 = vpop.f32.mrb[0].mxu0
      %v3066 = vadd.f32 0.0, %v3065
      %v3067 = vpop.f32.mrb[0].mxu0
      %3068 = vmatprep.mubr.bf16.mxu0 0
      %3069 = vmatmul.mubr.bf16.gmra.mrb[0].mxu0 %v2943
      %v3070 = vpop.f32.mrb[0].mxu0
      %v3071 = vadd.f32 0.0, %v3070
      %v3072 = vpop.f32.mrb[0].mxu0
      %v3073 = vpop.f32.mrb[0].mxu0
      %v3074 = vadd.f32 0.0, %v3073
      %v3075 = vpop.f32.mrb[0].mxu0
      %3076 = vmatprep.mubr.bf16.mxu0 0
      %3077 = vmatmul.mubr.bf16.gmra.mrb[0].mxu0 %v2946
      %v3078 = vpop.f32.mrb[0].mxu0
      %v3079 = vadd.f32 0.0, %v3078
      %v3080 = vpop.f32.mrb[0].mxu0
      %v3081 = vpop.f32.mrb[0].mxu0
      %v3082 = vadd.f32 0.0, %v3081
      %v3083 = vpop.f32.mrb[0].mxu0
      %3084 = vmatprep.mubr.bf16.mxu0 0
      %3085 = vmatmul.mubr.bf16.gmra.mrb[0].mxu0 %v2949
      %v3086 = vpop.f32.mrb[0].mxu0
      %v3087 = vadd.f32 0.0, %v3086
      %v3088 = vpop.f32.mrb[0].mxu0
      %v3089 = vpop.f32.mrb[0].mxu0
      %v3090 = vadd.f32 0.0, %v3089
      %v3091 = vpop.f32.mrb[0].mxu0
      %3092 = vmatprep.mubr.bf16.mxu0 0
      %3093 = vmatmul.mubr.bf16.gmra.mrb[0].mxu0 %v2952
      %v3094 = vpop.f32.mrb[0].mxu0
      %v3095 = vadd.f32 0.0, %v3094
      %v3096 = vpop.f32.mrb[0].mxu0
      %v3097 = vpop.f32.mrb[0].mxu0
      %v3098 = vadd.f32 0.0, %v3097
      %v3099 = vpop.f32.mrb[0].mxu0
      %3100 = vmatprep.mubr.bf16.mxu0 0
      %3101 = vmatmul.mubr.bf16.gmra.mrb[0].mxu0 %v2955
      %v3102 = vpop.f32.mrb[0].mxu0
      %v3103 = vadd.f32 0.0, %v3102
      %v3104 = vpop.f32.mrb[0].mxu0
      %v3105 = vpop.f32.mrb[0].mxu0
      %v3106 = vadd.f32 0.0, %v3105
      %v3107 = vpop.f32.mrb[0].mxu0
      %3108 = vmatprep.mubr.bf16.mxu0 0
      %3109 = vmatmul.mubr.bf16.gmra.mrb[0].mxu0 %v2958
      %v3110 = vpop.f32.mrb[0].mxu0
      %v3111 = vadd.f32 0.0, %v3110
      %v3112 = vpop.f32.mrb[0].mxu0
      %v3113 = vpop.f32.mrb[0].mxu0
      %v3114 = vadd.f32 0.0, %v3113
      %v3115 = vpop.f32.mrb[0].mxu0
      %3116 = vmatprep.mubr.bf16.mxu0 0
      %3117 = vmatmul.mubr.bf16.gmra.mrb[0].mxu0 %v2961
      %v3118 = vpop.f32.mrb[0].mxu0
      %v3119 = vadd.f32 0.0, %v3118
      %v3120 = vpop.f32.mrb[0].mxu0
      %v3121 = vpop.f32.mrb[0].mxu0
      %v3122 = vadd.f32 0.0, %v3121
      %v3123 = vpop.f32.mrb[0].mxu0
      %3124 = vmatprep.mubr.bf16.mxu0 0
      %3125 = vmatmul.mubr.bf16.gmra.mrb[0].mxu0 %v2964
      %v3126 = vpop.f32.mrb[0].mxu0
      %v3127 = vadd.f32 0.0, %v3126
      %v3128 = vpop.f32.mrb[0].mxu0
      %v3129 = vpop.f32.mrb[0].mxu0
      %v3130 = vadd.f32 0.0, %v3129
      %v3131 = vpop.f32.mrb[0].mxu0
      %3132 = vmatprep.mubr.bf16.mxu0 0
      %3133 = vmatmul.mubr.bf16.gmra.mrb[0].mxu0 %v2967
      %v3134 = vpop.f32.mrb[0].mxu0
      %v3135 = vadd.f32 0.0, %v3134
      %v3136 = vpop.f32.mrb[0].mxu0
      %v3137 = vpop.f32.mrb[0].mxu0
      %v3138 = vadd.f32 0.0, %v3137
      %v3139 = vpop.f32.mrb[0].mxu0
      %3140 = vdwg.mxu0
      %v3141 = vadd.f32 %v2717, %v3007
      %v3142 = vadd.f32 %v2718, %v3010
      %v3143 = vadd.f32 %v2719, %v3015
      %v3144 = vadd.f32 %v2720, %v3018
      %v3145 = vadd.f32 %v2721, %v3023
      %v3146 = vadd.f32 %v2722, %v3026
      %v3147 = vadd.f32 %v2723, %v3031
      %v3148 = vadd.f32 %v2724, %v3034
      %v3149 = vadd.f32 %v2725, %v3039
      %v3150 = vadd.f32 %v2726, %v3042
      %v3151 = vadd.f32 %v2727, %v3047
      %v3152 = vadd.f32 %v2728, %v3050
      %v3153 = vadd.f32 %v2729, %v3055
      %v3154 = vadd.f32 %v2730, %v3058
      %v3155 = vadd.f32 %v2731, %v3063
      %v3156 = vadd.f32 %v2732, %v3066
      %v3157 = vadd.f32 %v2733, %v3071
      %v3158 = vadd.f32 %v2734, %v3074
      %v3159 = vadd.f32 %v2735, %v3079
      %v3160 = vadd.f32 %v2736, %v3082
      %v3161 = vadd.f32 %v2737, %v3087
      %v3162 = vadd.f32 %v2738, %v3090
      %v3163 = vadd.f32 %v2739, %v3095
      %v3164 = vadd.f32 %v2740, %v3098
      %v3165 = vadd.f32 %v2741, %v3103
      %v3166 = vadd.f32 %v2742, %v3106
      %v3167 = vadd.f32 %v2743, %v3111
      %v3168 = vadd.f32 %v2744, %v3114
      %v3169 = vadd.f32 %v2745, %v3119
      %v3170 = vadd.f32 %v2746, %v3122
      %v3171 = vadd.f32 %v2747, %v3127
      %v3172 = vadd.f32 %v2748, %v3130
      %v3173 = vadd.f32 %v2749, %v3135
      %v3174 = vadd.f32 %v2750, %v3138
      %v3175 = vld [vmem:[%s165 + $0x10] sm:$0xc]
      %s3176 = scalar_lea.vmem %s1, 16
      %v3177 = vld [vmem:[%s3176] sm:$0x3]
      %v3179 = vunpack.c.l.b16 %v3175
      %v3180 = vpack.c.b16 %v2407, %v3179
      %vm3181 = vcmask 1045504
      %v3182 = vrot.slane %v3180, 2
      %v3183 = vrot.slane %v2442, 2
      %v3184 = vsel %vm3181, %v3182, %v3183
      %v3185 = vrot.slane %v2443, 2
      %v3186 = vsel %vm3181, %v3183, %v3185
      %v3187 = vrot.slane %v2444, 2
      %v3188 = vsel %vm3181, %v3185, %v3187
      %v3189 = vrot.slane %v2445, 2
      %v3190 = vsel %vm3181, %v3187, %v3189
      %v3191 = vrot.slane %v2446, 2
      %v3192 = vsel %vm3181, %v3189, %v3191
      %v3193 = vrot.slane %v2447, 2
      %v3194 = vsel %vm3181, %v3191, %v3193
      %v3195 = vrot.slane %v2448, 2
      %v3196 = vsel %vm3181, %v3193, %v3195
      %v3197 = vrot.slane %v2449, 2
      %v3198 = vsel %vm3181, %v3195, %v3197
      %v3199 = vrot.slane %v2450, 2
      %v3200 = vsel %vm3181, %v3197, %v3199
      %v3201 = vrot.slane %v2451, 2
      %v3202 = vsel %vm3181, %v3199, %v3201
      %v3203 = vrot.slane %v2452, 2
      %v3204 = vsel %vm3181, %v3201, %v3203
      %v3205 = vrot.slane %v2453, 2
      %v3206 = vsel %vm3181, %v3203, %v3205
      %v3207 = vrot.slane %v2454, 2
      %v3208 = vsel %vm3181, %v3205, %v3207
      %v3209 = vrot.slane %v2455, 2
      %v3210 = vsel %vm3181, %v3207, %v3209
      %v3211 = vrot.slane %v2456, 2
      %v3212 = vsel %vm3181, %v3209, %v3211
      %v3213 = vrot.slane %v2457, 2
      %v3214 = vsel %vm3181, %v3211, %v3213
      %v3215 = vrot.slane %v2756, 2
      %v3216 = vsel %vm3181, %v3213, %v3215
      %v3218 = vsel %vm439, %v3184, 0
      %v3221 = vsel %vm439, %v3186, 0
      %v3224 = vsel %vm439, %v3188, 0
      %v3227 = vsel %vm439, %v3190, 0
      %v3230 = vsel %vm439, %v3192, 0
      %v3233 = vsel %vm439, %v3194, 0
      %v3236 = vsel %vm439, %v3196, 0
      %v3239 = vsel %vm439, %v3198, 0
      %v3242 = vsel %vm439, %v3200, 0
      %v3245 = vsel %vm439, %v3202, 0
      %v3248 = vsel %vm439, %v3204, 0
      %v3251 = vsel %vm439, %v3206, 0
      %v3254 = vsel %vm439, %v3208, 0
      %v3257 = vsel %vm439, %v3210, 0
      %v3260 = vsel %vm439, %v3212, 0
      %v3263 = vsel %vm439, %v3214, 0
      %v3266 = vsel %vm439, %v3216, 0
      %v3269 = vsel %vm491, %v3177, 0
      %3271 = vmatprep.subr.bf16.mxu0 0
      %3272 = vmatpush1.bf16.msra.mxu0 %v3269
      %3273 = vmatprep.subr.bf16.mxu0 0
      %3274 = vmatpush1.bf16.msra.mxu0 0
      %3275 = vmatprep.subr.bf16.mxu0 0
      %3276 = vmatpush1.bf16.msra.mxu0 0
      %3277 = vmatprep.subr.bf16.mxu0 0
      %3278 = vmatpush1.bf16.msra.mxu0 0
      %3279 = vmatprep.subr.bf16.mxu0 0
      %3280 = vmatpush1.bf16.msra.mxu0 0
      %3281 = vmatprep.subr.bf16.mxu0 0
      %3282 = vmatpush1.bf16.msra.mxu0 0
      %3283 = vmatprep.subr.bf16.mxu0 0
      %3284 = vmatpush1.bf16.msra.mxu0 0
      %3285 = vmatprep.subr.bf16.mxu0 0
      %3286 = vmatpush1.bf16.msra.mxu0 0
      %3287 = vmatprep.subr.bf16.mxu0 0
      %3288 = vmatpush1.bf16.msra.mxu0 0
      %3289 = vmatprep.subr.bf16.mxu0 0
      %3290 = vmatpush1.bf16.msra.mxu0 0
      %3291 = vmatprep.subr.bf16.mxu0 0
      %3292 = vmatpush1.bf16.msra.mxu0 0
      %3293 = vmatprep.subr.bf16.mxu0 0
      %3294 = vmatpush1.bf16.msra.mxu0 0
      %3295 = vmatprep.subr.bf16.mxu0 0
      %3296 = vmatpush1.bf16.msra.mxu0 0
      %3297 = vmatprep.subr.bf16.mxu0 0
      %3298 = vmatpush1.bf16.msra.mxu0 0
      %3299 = vmatprep.subr.bf16.mxu0 0
      %3300 = vmatpush1.bf16.msra.mxu0 0
      %3301 = vmatprep.subr.bf16.mxu0 0
      %3302 = vmatpush1.bf16.msra.mxu0 0
      %3303 = vmatprep.mubr.bf16.mxu0 0
      %3304 = vmatmul.mubr.bf16.gmra.mrb[0].mxu0 %v3218
      %v3305 = vpop.f32.mrb[0].mxu0
      %v3306 = vadd.f32 0.0, %v3305
      %v3307 = vpop.f32.mrb[0].mxu0
      %v3308 = vpop.f32.mrb[0].mxu0
      %v3309 = vadd.f32 0.0, %v3308
      %v3310 = vpop.f32.mrb[0].mxu0
      %3311 = vmatprep.mubr.bf16.mxu0 0
      %3312 = vmatmul.mubr.bf16.gmra.mrb[0].mxu0 %v3221
      %v3313 = vpop.f32.mrb[0].mxu0
      %v3314 = vadd.f32 0.0, %v3313
      %v3315 = vpop.f32.mrb[0].mxu0
      %v3316 = vpop.f32.mrb[0].mxu0
      %v3317 = vadd.f32 0.0, %v3316
      %v3318 = vpop.f32.mrb[0].mxu0
      %3319 = vmatprep.mubr.bf16.mxu0 0
      %3320 = vmatmul.mubr.bf16.gmra.mrb[0].mxu0 %v3224
      %v3321 = vpop.f32.mrb[0].mxu0
      %v3322 = vadd.f32 0.0, %v3321
      %v3323 = vpop.f32.mrb[0].mxu0
      %v3324 = vpop.f32.mrb[0].mxu0
      %v3325 = vadd.f32 0.0, %v3324
      %v3326 = vpop.f32.mrb[0].mxu0
      %3327 = vmatprep.mubr.bf16.mxu0 0
      %3328 = vmatmul.mubr.bf16.gmra.mrb[0].mxu0 %v3227
      %v3329 = vpop.f32.mrb[0].mxu0
      %v3330 = vadd.f32 0.0, %v3329
      %v3331 = vpop.f32.mrb[0].mxu0
      %v3332 = vpop.f32.mrb[0].mxu0
      %v3333 = vadd.f32 0.0, %v3332
      %v3334 = vpop.f32.mrb[0].mxu0
      %3335 = vmatprep.mubr.bf16.mxu0 0
      %3336 = vmatmul.mubr.bf16.gmra.mrb[0].mxu0 %v3230
      %v3337 = vpop.f32.mrb[0].mxu0
      %v3338 = vadd.f32 0.0, %v3337
      %v3339 = vpop.f32.mrb[0].mxu0
      %v3340 = vpop.f32.mrb[0].mxu0
      %v3341 = vadd.f32 0.0, %v3340
      %v3342 = vpop.f32.mrb[0].mxu0
      %3343 = vmatprep.mubr.bf16.mxu0 0
      %3344 = vmatmul.mubr.bf16.gmra.mrb[0].mxu0 %v3233
      %v3345 = vpop.f32.mrb[0].mxu0
      %v3346 = vadd.f32 0.0, %v3345
      %v3347 = vpop.f32.mrb[0].mxu0
      %v3348 = vpop.f32.mrb[0].mxu0
      %v3349 = vadd.f32 0.0, %v3348
      %v3350 = vpop.f32.mrb[0].mxu0
      %3351 = vmatprep.mubr.bf16.mxu0 0
      %3352 = vmatmul.mubr.bf16.gmra.mrb[0].mxu0 %v3236
      %v3353 = vpop.f32.mrb[0].mxu0
      %v3354 = vadd.f32 0.0, %v3353
      %v3355 = vpop.f32.mrb[0].mxu0
      %v3356 = vpop.f32.mrb[0].mxu0
      %v3357 = vadd.f32 0.0, %v3356
      %v3358 = vpop.f32.mrb[0].mxu0
      %3359 = vmatprep.mubr.bf16.mxu0 0
      %3360 = vmatmul.mubr.bf16.gmra.mrb[0].mxu0 %v3239
      %v3361 = vpop.f32.mrb[0].mxu0
      %v3362 = vadd.f32 0.0, %v3361
      %v3363 = vpop.f32.mrb[0].mxu0
      %v3364 = vpop.f32.mrb[0].mxu0
      %v3365 = vadd.f32 0.0, %v3364
      %v3366 = vpop.f32.mrb[0].mxu0
      %3367 = vmatprep.mubr.bf16.mxu0 0
      %3368 = vmatmul.mubr.bf16.gmra.mrb[0].mxu0 %v3242
      %v3369 = vpop.f32.mrb[0].mxu0
      %v3370 = vadd.f32 0.0, %v3369
      %v3371 = vpop.f32.mrb[0].mxu0
      %v3372 = vpop.f32.mrb[0].mxu0
      %v3373 = vadd.f32 0.0, %v3372
      %v3374 = vpop.f32.mrb[0].mxu0
      %3375 = vmatprep.mubr.bf16.mxu0 0
      %3376 = vmatmul.mubr.bf16.gmra.mrb[0].mxu0 %v3245
      %v3377 = vpop.f32.mrb[0].mxu0
      %v3378 = vadd.f32 0.0, %v3377
      %v3379 = vpop.f32.mrb[0].mxu0
      %v3380 = vpop.f32.mrb[0].mxu0
      %v3381 = vadd.f32 0.0, %v3380
      %v3382 = vpop.f32.mrb[0].mxu0
      %3383 = vmatprep.mubr.bf16.mxu0 0
      %3384 = vmatmul.mubr.bf16.gmra.mrb[0].mxu0 %v3248
      %v3385 = vpop.f32.mrb[0].mxu0
      %v3386 = vadd.f32 0.0, %v3385
      %v3387 = vpop.f32.mrb[0].mxu0
      %v3388 = vpop.f32.mrb[0].mxu0
      %v3389 = vadd.f32 0.0, %v3388
      %v3390 = vpop.f32.mrb[0].mxu0
      %3391 = vmatprep.mubr.bf16.mxu0 0
      %3392 = vmatmul.mubr.bf16.gmra.mrb[0].mxu0 %v3251
      %v3393 = vpop.f32.mrb[0].mxu0
      %v3394 = vadd.f32 0.0, %v3393
      %v3395 = vpop.f32.mrb[0].mxu0
      %v3396 = vpop.f32.mrb[0].mxu0
      %v3397 = vadd.f32 0.0, %v3396
      %v3398 = vpop.f32.mrb[0].mxu0
      %3399 = vmatprep.mubr.bf16.mxu0 0
      %3400 = vmatmul.mubr.bf16.gmra.mrb[0].mxu0 %v3254
      %v3401 = vpop.f32.mrb[0].mxu0
      %v3402 = vadd.f32 0.0, %v3401
      %v3403 = vpop.f32.mrb[0].mxu0
      %v3404 = vpop.f32.mrb[0].mxu0
      %v3405 = vadd.f32 0.0, %v3404
      %v3406 = vpop.f32.mrb[0].mxu0
      %3407 = vmatprep.mubr.bf16.mxu0 0
      %3408 = vmatmul.mubr.bf16.gmra.mrb[0].mxu0 %v3257
      %v3409 = vpop.f32.mrb[0].mxu0
      %v3410 = vadd.f32 0.0, %v3409
      %v3411 = vpop.f32.mrb[0].mxu0
      %v3412 = vpop.f32.mrb[0].mxu0
      %v3413 = vadd.f32 0.0, %v3412
      %v3414 = vpop.f32.mrb[0].mxu0
      %3415 = vmatprep.mubr.bf16.mxu0 0
      %3416 = vmatmul.mubr.bf16.gmra.mrb[0].mxu0 %v3260
      %v3417 = vpop.f32.mrb[0].mxu0
      %v3418 = vadd.f32 0.0, %v3417
      %v3419 = vpop.f32.mrb[0].mxu0
      %v3420 = vpop.f32.mrb[0].mxu0
      %v3421 = vadd.f32 0.0, %v3420
      %v3422 = vpop.f32.mrb[0].mxu0
      %3423 = vmatprep.mubr.bf16.mxu0 0
      %3424 = vmatmul.mubr.bf16.gmra.mrb[0].mxu0 %v3263
      %v3425 = vpop.f32.mrb[0].mxu0
      %v3426 = vadd.f32 0.0, %v3425
      %v3427 = vpop.f32.mrb[0].mxu0
      %v3428 = vpop.f32.mrb[0].mxu0
      %v3429 = vadd.f32 0.0, %v3428
      %v3430 = vpop.f32.mrb[0].mxu0
      %3431 = vmatprep.mubr.bf16.mxu0 0
      %3432 = vmatmul.mubr.bf16.gmra.mrb[0].mxu0 %v3266
      %v3433 = vpop.f32.mrb[0].mxu0
      %v3434 = vadd.f32 0.0, %v3433
      %v3435 = vpop.f32.mrb[0].mxu0
      %v3436 = vpop.f32.mrb[0].mxu0
      %v3437 = vadd.f32 0.0, %v3436
      %v3438 = vpop.f32.mrb[0].mxu0
      %3439 = vdwg.mxu0
      %v3440 = vadd.f32 %v3141, %v3306
      %v3441 = vadd.f32 %v3142, %v3309
      %v3442 = vadd.f32 %v3143, %v3314
      %v3443 = vadd.f32 %v3144, %v3317
      %v3444 = vadd.f32 %v3145, %v3322
      %v3445 = vadd.f32 %v3146, %v3325
      %v3446 = vadd.f32 %v3147, %v3330
      %v3447 = vadd.f32 %v3148, %v3333
      %v3448 = vadd.f32 %v3149, %v3338
      %v3449 = vadd.f32 %v3150, %v3341
      %v3450 = vadd.f32 %v3151, %v3346
      %v3451 = vadd.f32 %v3152, %v3349
      %v3452 = vadd.f32 %v3153, %v3354
      %v3453 = vadd.f32 %v3154, %v3357
      %v3454 = vadd.f32 %v3155, %v3362
      %v3455 = vadd.f32 %v3156, %v3365
      %v3456 = vadd.f32 %v3157, %v3370
      %v3457 = vadd.f32 %v3158, %v3373
      %v3458 = vadd.f32 %v3159, %v3378
      %v3459 = vadd.f32 %v3160, %v3381
      %v3460 = vadd.f32 %v3161, %v3386
      %v3461 = vadd.f32 %v3162, %v3389
      %v3462 = vadd.f32 %v3163, %v3394
      %v3463 = vadd.f32 %v3164, %v3397
      %v3464 = vadd.f32 %v3165, %v3402
      %v3465 = vadd.f32 %v3166, %v3405
      %v3466 = vadd.f32 %v3167, %v3410
      %v3467 = vadd.f32 %v3168, %v3413
      %v3468 = vadd.f32 %v3169, %v3418
      %v3469 = vadd.f32 %v3170, %v3421
      %v3470 = vadd.f32 %v3171, %v3426
      %v3471 = vadd.f32 %v3172, %v3429
      %v3472 = vadd.f32 %v3173, %v3434
      %v3473 = vadd.f32 %v3174, %v3437
      %v3474 = vld [vmem:[%s2] sm:$0x1]
      %v3476 = vlaneseq
      %v3477 = vshrl.u32 %v3476, 7
      %v3478 = vsub.s32 0, %v3477
      %v3479 = vrot.slane %v3474, %v3478
      %v3481 = vadd.f32 %v3440, %v3479
      %v3482 = vadd.f32 %v3441, %v3479
      %v3483 = vadd.f32 %v3442, %v3479
      %v3484 = vadd.f32 %v3443, %v3479
      %v3485 = vadd.f32 %v3444, %v3479
      %v3486 = vadd.f32 %v3445, %v3479
      %v3487 = vadd.f32 %v3446, %v3479
      %v3488 = vadd.f32 %v3447, %v3479
      %v3489 = vadd.f32 %v3448, %v3479
      %v3490 = vadd.f32 %v3449, %v3479
      %v3491 = vadd.f32 %v3450, %v3479
      %v3492 = vadd.f32 %v3451, %v3479
      %v3493 = vadd.f32 %v3452, %v3479
      %v3494 = vadd.f32 %v3453, %v3479
      %v3495 = vadd.f32 %v3454, %v3479
      %v3496 = vadd.f32 %v3455, %v3479
      %v3497 = vadd.f32 %v3456, %v3479
      %v3498 = vadd.f32 %v3457, %v3479
      %v3499 = vadd.f32 %v3458, %v3479
      %v3500 = vadd.f32 %v3459, %v3479
      %v3501 = vadd.f32 %v3460, %v3479
      %v3502 = vadd.f32 %v3461, %v3479
      %v3503 = vadd.f32 %v3462, %v3479
      %v3504 = vadd.f32 %v3463, %v3479
      %v3505 = vadd.f32 %v3464, %v3479
      %v3506 = vadd.f32 %v3465, %v3479
      %v3507 = vadd.f32 %v3466, %v3479
      %v3508 = vadd.f32 %v3467, %v3479
      %v3509 = vadd.f32 %v3468, %v3479
      %v3510 = vadd.f32 %v3469, %v3479
      %v3511 = vadd.f32 %v3470, %v3479
      %v3512 = vadd.f32 %v3471, %v3479
      %v3513 = vadd.f32 %v3472, %v3479
      %v3514 = vadd.f32 %v3473, %v3479
      %v3515 = vmax.f32 %v3481, 0.0
      %v3516 = vmax.f32 %v3482, 0.0
      %v3517 = vmax.f32 %v3483, 0.0
      %v3518 = vmax.f32 %v3484, 0.0
      %v3519 = vmax.f32 %v3485, 0.0
      %v3520 = vmax.f32 %v3486, 0.0
      %v3521 = vmax.f32 %v3487, 0.0
      %v3522 = vmax.f32 %v3488, 0.0
      %v3523 = vmax.f32 %v3489, 0.0
      %v3524 = vmax.f32 %v3490, 0.0
      %v3525 = vmax.f32 %v3491, 0.0
      %v3526 = vmax.f32 %v3492, 0.0
      %v3527 = vmax.f32 %v3493, 0.0
      %v3528 = vmax.f32 %v3494, 0.0
      %v3529 = vmax.f32 %v3495, 0.0
      %v3530 = vmax.f32 %v3496, 0.0
      %v3531 = vmax.f32 %v3497, 0.0
      %v3532 = vmax.f32 %v3498, 0.0
      %v3533 = vmax.f32 %v3499, 0.0
      %v3534 = vmax.f32 %v3500, 0.0
      %v3535 = vmax.f32 %v3501, 0.0
      %v3536 = vmax.f32 %v3502, 0.0
      %v3537 = vmax.f32 %v3503, 0.0
      %v3538 = vmax.f32 %v3504, 0.0
      %v3539 = vmax.f32 %v3505, 0.0
      %v3540 = vmax.f32 %v3506, 0.0
      %v3541 = vmax.f32 %v3507, 0.0
      %v3542 = vmax.f32 %v3508, 0.0
      %v3543 = vmax.f32 %v3509, 0.0
      %v3544 = vmax.f32 %v3510, 0.0
      %v3545 = vmax.f32 %v3511, 0.0
      %v3546 = vmax.f32 %v3512, 0.0
      %v3547 = vmax.f32 %v3513, 0.0
      %v3548 = vmax.f32 %v3514, 0.0
      %v3549 = vpack.c.bf16 %v3516, %v3515
      %v3550 = vpack.c.bf16 %v3518, %v3517
      %v3551 = vpack.c.bf16 %v3520, %v3519
      %v3552 = vpack.c.bf16 %v3522, %v3521
      %v3553 = vpack.c.bf16 %v3524, %v3523
      %v3554 = vpack.c.bf16 %v3526, %v3525
      %v3555 = vpack.c.bf16 %v3528, %v3527
      %v3556 = vpack.c.bf16 %v3530, %v3529
      %v3557 = vpack.c.bf16 %v3532, %v3531
      %v3558 = vpack.c.bf16 %v3534, %v3533
      %v3559 = vpack.c.bf16 %v3536, %v3535
      %v3560 = vpack.c.bf16 %v3538, %v3537
      %v3561 = vpack.c.bf16 %v3540, %v3539
      %v3562 = vpack.c.bf16 %v3542, %v3541
      %v3563 = vpack.c.bf16 %v3544, %v3543
      %v3564 = vpack.c.bf16 %v3546, %v3545
      %v3565 = vpack.c.bf16 %v3548, %v3547
      %v3583 = vunpack.c.l.b16 %v3549
      %v3584 = vunpack.c.h.b16 %v3549
      %v3585 = vunpack.c.l.b16 %v3550
      %v3586 = vunpack.c.h.b16 %v3550
      %v3587 = vunpack.c.l.b16 %v3551
      %v3588 = vunpack.c.h.b16 %v3551
      %v3589 = vunpack.c.l.b16 %v3552
      %v3590 = vunpack.c.h.b16 %v3552
      %v3591 = vunpack.c.l.b16 %v3553
      %v3592 = vunpack.c.h.b16 %v3553
      %v3593 = vunpack.c.l.b16 %v3554
      %v3594 = vunpack.c.h.b16 %v3554
      %v3595 = vunpack.c.l.b16 %v3555
      %v3596 = vunpack.c.h.b16 %v3555
      %v3597 = vunpack.c.l.b16 %v3556
      %v3598 = vunpack.c.h.b16 %v3556
      %v3599 = vunpack.c.l.b16 %v3557
      %v3600 = vunpack.c.h.b16 %v3557
      %v3601 = vunpack.c.l.b16 %v3558
      %v3602 = vunpack.c.h.b16 %v3558
      %v3603 = vunpack.c.l.b16 %v3559
      %v3604 = vunpack.c.h.b16 %v3559
      %v3605 = vunpack.c.l.b16 %v3560
      %v3606 = vunpack.c.h.b16 %v3560
      %v3607 = vunpack.c.l.b16 %v3561
      %v3608 = vunpack.c.h.b16 %v3561
      %v3609 = vunpack.c.l.b16 %v3562
      %v3610 = vunpack.c.h.b16 %v3562
      %v3611 = vunpack.c.l.b16 %v3563
      %v3612 = vunpack.c.h.b16 %v3563
      %v3613 = vunpack.c.l.b16 %v3564
      %v3614 = vunpack.c.h.b16 %v3564
      %v3615 = vunpack.c.l.b16 %v3565
      %v3616 = vunpack.c.h.b16 %v3565
      %v3617 = vpack.c.b16 %v3583, %v3583
      %v3618 = vpack.c.b16 %v3584, %v3584
      %v3619 = vpack.c.b16 %v3585, %v3585
      %v3620 = vpack.c.b16 %v3586, %v3586
      %v3621 = vpack.c.b16 %v3587, %v3587
      %v3622 = vpack.c.b16 %v3588, %v3588
      %v3623 = vpack.c.b16 %v3589, %v3589
      %v3624 = vpack.c.b16 %v3590, %v3590
      %v3625 = vpack.c.b16 %v3591, %v3591
      %v3626 = vpack.c.b16 %v3592, %v3592
      %v3627 = vpack.c.b16 %v3593, %v3593
      %v3628 = vpack.c.b16 %v3594, %v3594
      %v3629 = vpack.c.b16 %v3595, %v3595
      %v3630 = vpack.c.b16 %v3596, %v3596
      %v3631 = vpack.c.b16 %v3597, %v3597
      %v3632 = vpack.c.b16 %v3598, %v3598
      %v3633 = vpack.c.b16 %v3599, %v3599
      %v3634 = vpack.c.b16 %v3600, %v3600
      %v3635 = vpack.c.b16 %v3601, %v3601
      %v3636 = vpack.c.b16 %v3602, %v3602
      %v3637 = vpack.c.b16 %v3603, %v3603
      %v3638 = vpack.c.b16 %v3604, %v3604
      %v3639 = vpack.c.b16 %v3605, %v3605
      %v3640 = vpack.c.b16 %v3606, %v3606
      %v3641 = vpack.c.b16 %v3607, %v3607
      %v3642 = vpack.c.b16 %v3608, %v3608
      %v3643 = vpack.c.b16 %v3609, %v3609
      %v3644 = vpack.c.b16 %v3610, %v3610
      %v3645 = vpack.c.b16 %v3611, %v3611
      %v3646 = vpack.c.b16 %v3612, %v3612
      %v3647 = vpack.c.b16 %v3613, %v3613
      %v3648 = vpack.c.b16 %v3614, %v3614
      %v3649 = vpack.c.b16 %v3615, %v3615
      %v3650 = vpack.c.b16 %v3616, %v3616
      %3685 = vst [vmem:[%s170] sm:$0xf] %v3617
      %3686 = vst [vmem:[%s170 + $0x4] sm:$0xf] %v3618
      %3687 = vst [vmem:[%s170 + $0x8] sm:$0xf] %v3619
      %3688 = vst [vmem:[%s170 + $0xc] sm:$0xf] %v3620
      %3689 = vst [vmem:[%s170 + $0x10] sm:$0xf] %v3621
      %3690 = vst [vmem:[%s170 + $0x14] sm:$0xf] %v3622
      %3691 = vst [vmem:[%s170 + $0x18] sm:$0xf] %v3623
      %3692 = vst [vmem:[%s170 + $0x1c] sm:$0xf] %v3624
      %3693 = vst [vmem:[%s170 + $0x20] sm:$0xf] %v3625
      %3694 = vst [vmem:[%s170 + $0x24] sm:$0xf] %v3626
      %3695 = vst [vmem:[%s170 + $0x28] sm:$0xf] %v3627
      %3696 = vst [vmem:[%s170 + $0x2c] sm:$0xf] %v3628
      %3697 = vst [vmem:[%s170 + $0x30] sm:$0xf] %v3629
      %3698 = vst [vmem:[%s170 + $0x34] sm:$0xf] %v3630
      %3699 = vst [vmem:[%s170 + $0x38] sm:$0xf] %v3631
      %3700 = vst [vmem:[%s170 + $0x3c] sm:$0xf] %v3632
      %3701 = vst [vmem:[%s170 + $0x40] sm:$0xf] %v3633
      %3702 = vst [vmem:[%s170 + $0x44] sm:$0xf] %v3634
      %3703 = vst [vmem:[%s170 + $0x48] sm:$0xf] %v3635
      %3704 = vst [vmem:[%s170 + $0x4c] sm:$0xf] %v3636
      %3705 = vst [vmem:[%s170 + $0x50] sm:$0xf] %v3637
      %3706 = vst [vmem:[%s170 + $0x54] sm:$0xf] %v3638
      %3707 = vst [vmem:[%s170 + $0x58] sm:$0xf] %v3639
      %3708 = vst [vmem:[%s170 + $0x5c] sm:$0xf] %v3640
      %3709 = vst [vmem:[%s170 + $0x60] sm:$0xf] %v3641
      %3710 = vst [vmem:[%s170 + $0x64] sm:$0xf] %v3642
      %3711 = vst [vmem:[%s170 + $0x68] sm:$0xf] %v3643
      %3712 = vst [vmem:[%s170 + $0x6c] sm:$0xf] %v3644
      %3713 = vst [vmem:[%s170 + $0x70] sm:$0xf] %v3645
      %3714 = vst [vmem:[%s170 + $0x74] sm:$0xf] %v3646
      %3715 = vst [vmem:[%s170 + $0x78] sm:$0xf] %v3647
      %3716 = vst [vmem:[%s170 + $0x7c] sm:$0xf] %v3648
      %3717 = vst [vmem:[%s170 + $0x80] sm:$0xf] %v3649
      %3718 = vst [vmem:[%s170 + $0x84] sm:$0xf] %v3650
      %p3719 = scmp.lt.s32.totalorder %s14, 1
      %s3720 = scalar_select %p3719, %s14, 1
      %s3721 = smul.addr %s3720, 34
      %s3722 = smul.addr %s3721, 4
      %s3723 = scalar_lea.vmem %s3, %s3722
      // Predicated region
      $region33: #{test_et_al_forward.4} parent=31 // pred_check
        %p3724 = pneg %p100
      $region34: #{test_et_al_forward.4} parent=31 // pred_check_branch
        %3726 = sbr.rel (%p3724) target = $region36
      $region35: #{test_et_al_forward.4} parent=31 // pred_region
        _
      $region36: #{test_et_al_forward.4} parent=31 // pred_fallthru
        _
    $region32: #{test_et_al_forward.4} parent=5 // pred_fallthru
      _
    %p3727 = scmp.le.s32.totalorder 2, %s9
    // Predicated region
    $region37: #{test_et_al_forward.4} parent=5 // pred_check
      %p3728 = pneg %p3727
    $region38: #{test_et_al_forward.4} parent=5 // pred_check_branch
      %3730 = sbr.rel (%p3728) target = $region40
    $region39: #{test_et_al_forward.4} parent=5 // pred_region
      %s3731 = ssub.s32 %s9, 2
      // Predicated region
      $region41: #{test_et_al_forward.4} parent=39 // pred_check
        %p3732 = pneg %p106
      $region42: #{test_et_al_forward.4} parent=39 // pred_check_branch
        %3734 = sbr.rel (%p3732) target = $region44
      $region43: #{test_et_al_forward.4} parent=39 // pred_region
        %p3735 = scmp.lt.s32.totalorder %s15, 1
        %s3736 = scalar_select %p3735, %s15, 1
        %s3737 = smul.addr %s3736, 34
        %s3738 = smul.addr %s3737, 4
        %s3739 = scalar_lea.vmem %s3, %s3738
      $region44: #{test_et_al_forward.4} parent=39 // pred_fallthru
        _
    $region40: #{test_et_al_forward.4} parent=5 // pred_fallthru
      _
  $region6: #{test_et_al_forward.4} parent=0 // loop_footer
    %s13 = sadd.s32 1, %s9
  $region7: #{test_et_al_forward.4} parent=0 // loop_footer_branch
    %8 = sbr.rel target = $region3
  $region8: #{test_et_al_forward.4} parent=0 // loop_exit
    _

// kernel: test_et_al_forward.5
$region0: #{test_et_al_forward.5}
  #allocation0 [shape = 'u32[]', space=smem, size = 0x4, offset = 0x4, fixed_abs, tag = 'smem constant byte address 0x4 - core index']
  #allocation1 [shape = 'u32[144,128]{1,0:T(1,128)}', space=vmem, size = 0x12000, scoped, tag = 'internal scratch']
  %s0 = inlined_call_operand.vmem [shape: bf16[2,92,128], index: 0, kind: input, shape index: {}]
  %s1 = inlined_call_operand.vmem [shape: bf16[9,128,128], index: 1, kind: input, shape index: {}]
  %s2 = inlined_call_operand.vmem [shape: f32[1,128], index: 2, kind: input, shape index: {}]
  %s3 = inlined_call_operand.vmem [shape: bf16[2,72,128], index: 3, kind: output, shape index: {}]
  %s4 = sld [smem:[#allocation0]]
  $region45: #{test_et_al_forward.5} parent=0
    _
  %s6 = ssub.s32 1, %s4
  %s7 = scalar_select 0, %s6, %s4
  loop: start=0, step=1, limit=4
  $region2: #{test_et_al_forward.5} parent=0 // loop_pre_header
    _
  $region3: #{test_et_al_forward.5} parent=0 // loop_header
    %s9 = sphi 0, %s13
    %p10 = scmp.ge.s32.totalorder %s9, 4
    %s19 = sphi 0, %s21
    %s22 = sphi 0, %s19
    %s23 = sphi 0, %s22
    %s39 = sphi 0, %s23
    %s43 = sphi 0, %s43
    %s45 = sphi 0, %s43
    %s46 = sphi 0, %s45
    %s60 = sphi 0, %s46
    %s64 = sphi 0, %s64
    %s66 = sphi 0, %s64
    %s67 = sphi 0, %s66
    %s81 = sphi 0, %s67
    %s87 = sphi 0, %s89
    %s90 = sphi 0, %s87
    %s91 = sphi 0, %s90
    %s107 = sphi 0, %s91
  $region4: #{test_et_al_forward.5} parent=0 // loop_header_branch
    %12 = sbr.rel (%p10) target = $region8
  $region5: #{test_et_al_forward.5} parent=0 // loop_body
    %s14 = ssub.s32 %s9, 1
    %s15 = ssub.s32 %s9, 2
    %s16 = sadd.s32 %s9, 1
    %s17 = ssub.s32 %s9, %s16
    %p18 = scmp.eq.s32.totalorder %s17, 0
    %s20 = sadd.s32 %s19, 1
    %s21 = scalar_select %p18, %s19, %s20
    %p24 = pneg %p18
    %p25 = scmp.eq.s32.totalorder %s9, 1
    %p26 = por %p24, %p25
    %p27 = scmp.ne.s32.totalorder %s19, %s22
    %p28 = scmp.eq.s32.totalorder %s9, 0
    %p29 = por %p27, %p28
    %p30 = scmp.ne.s32.totalorder %s19, %s22
    %p31 = scmp.eq.s32.totalorder %s14, 1
    %p32 = por %p30, %p31
    %p33 = scmp.ne.s32.totalorder %s22, %s23
    %p34 = scmp.eq.s32.totalorder %s14, 0
    %p35 = por %p33, %p34
    %p36 = scmp.ne.s32.totalorder %s22, %s23
    %p37 = scmp.eq.s32.totalorder %s15, 1
    %p38 = por %p36, %p37
    %p40 = scmp.ne.s32.totalorder %s23, %s39
    %p41 = scmp.eq.s32.totalorder %s15, 0
    %p42 = por %p40, %p41
    %s44 = sadd.s32 %s43, 1
    %p47 = scmp.eq.s32.totalorder %s9, 1
    %p48 = scmp.ne.s32.totalorder %s43, %s45
    %p49 = scmp.eq.s32.totalorder %s9, 0
    %p50 = por %p48, %p49
    %p51 = scmp.ne.s32.totalorder %s43, %s45
    %p52 = scmp.eq.s32.totalorder %s14, 1
    %p53 = por %p51, %p52
    %p54 = scmp.ne.s32.totalorder %s45, %s46
    %p55 = scmp.eq.s32.totalorder %s14, 0
    %p56 = por %p54, %p55
    %p57 = scmp.ne.s32.totalorder %s45, %s46
    %p58 = scmp.eq.s32.totalorder %s15, 1
    %p59 = por %p57, %p58
    %p61 = scmp.ne.s32.totalorder %s46, %s60
    %p62 = scmp.eq.s32.totalorder %s15, 0
    %p63 = por %p61, %p62
    %s65 = sadd.s32 %s64, 1
    %p68 = scmp.eq.s32.totalorder %s9, 1
    %p69 = scmp.ne.s32.totalorder %s64, %s66
    %p70 = scmp.eq.s32.totalorder %s9, 0
    %p71 = por %p69, %p70
    %p72 = scmp.ne.s32.totalorder %s64, %s66
    %p73 = scmp.eq.s32.totalorder %s14, 1
    %p74 = por %p72, %p73
    %p75 = scmp.ne.s32.totalorder %s66, %s67
    %p76 = scmp.eq.s32.totalorder %s14, 0
    %p77 = por %p75, %p76
    %p78 = scmp.ne.s32.totalorder %s66, %s67
    %p79 = scmp.eq.s32.totalorder %s15, 1
    %p80 = por %p78, %p79
    %p82 = scmp.ne.s32.totalorder %s67, %s81
    %p83 = scmp.eq.s32.totalorder %s15, 0
    %p84 = por %p82, %p83
    %s85 = ssub.s32 %s9, %s16
    %p86 = scmp.eq.s32.totalorder %s85, 0
    %s88 = sadd.s32 %s87, 1
    %s89 = scalar_select %p86, %s87, %s88
    %p92 = pneg %p86
    %p93 = scmp.eq.s32.totalorder %s9, 1
    %p94 = por %p92, %p93
    %p95 = scmp.ne.s32.totalorder %s87, %s90
    %p96 = scmp.eq.s32.totalorder %s9, 0
    %p97 = por %p95, %p96
    %p98 = scmp.ne.s32.totalorder %s87, %s90
    %p99 = scmp.eq.s32.totalorder %s14, 1
    %p100 = por %p98, %p99
    %p101 = scmp.ne.s32.totalorder %s90, %s91
    %p102 = scmp.eq.s32.totalorder %s14, 0
    %p103 = por %p101, %p102
    %p104 = scmp.ne.s32.totalorder %s90, %s91
    %p105 = scmp.eq.s32.totalorder %s15, 1
    %p106 = por %p104, %p105
    %p108 = scmp.ne.s32.totalorder %s91, %s107
    %p109 = scmp.eq.s32.totalorder %s15, 0
    %p110 = por %p108, %p109
    %p111 = scmp.le.s32.totalorder 1, %s9
    %p112 = scmp.lt.s32.totalorder %s9, 3
    %p113 = pnand %p111, %p112
    %p114 = pneg %p113
    // Predicated region
    $region9: #{test_et_al_forward.5} parent=5 // pred_check
      _
    $region10: #{test_et_al_forward.5} parent=5 // pred_check_branch
      %116 = sbr.rel (%p113) target = $region12
    $region11: #{test_et_al_forward.5} parent=5 // pred_region
      %s117 = ssub.s32 %s9, 1
      // Predicated region
      $region13: #{test_et_al_forward.5} parent=11 // pred_check
        %p118 = pneg %p56
      $region14: #{test_et_al_forward.5} parent=11 // pred_check_branch
        %120 = sbr.rel (%p118) target = $region16
      $region15: #{test_et_al_forward.5} parent=11 // pred_region
        _
      $region16: #{test_et_al_forward.5} parent=11 // pred_fallthru
        _
      // Predicated region
      $region17: #{test_et_al_forward.5} parent=11 // pred_check
        %p121 = pneg %p77
      $region18: #{test_et_al_forward.5} parent=11 // pred_check_branch
        %123 = sbr.rel (%p121) target = $region20
      $region19: #{test_et_al_forward.5} parent=11 // pred_region
        _
      $region20: #{test_et_al_forward.5} parent=11 // pred_fallthru
        _
    $region12: #{test_et_al_forward.5} parent=5 // pred_fallthru
      _
    %p124 = scmp.lt.s32.totalorder %s9, 2
    // Predicated region
    $region21: #{test_et_al_forward.5} parent=5 // pred_check
      %p125 = pneg %p124
    $region22: #{test_et_al_forward.5} parent=5 // pred_check_branch
      %127 = sbr.rel (%p125) target = $region24
    $region23: #{test_et_al_forward.5} parent=5 // pred_region
      // Predicated region
      $region25: #{test_et_al_forward.5} parent=23 // pred_check
        %p128 = pneg %p29
      $region26: #{test_et_al_forward.5} parent=23 // pred_check_branch
        %130 = sbr.rel (%p128) target = $region28
      $region27: #{test_et_al_forward.5} parent=23 // pred_region
        %p131 = scmp.lt.s32.totalorder %s9, 1
        %s132 = scalar_select %p131, %s9, 1
        %s133 = smul.addr %s132, 12
        %s134 = smul.addr %s133, 4
        %s135 = scalar_lea.vmem %s0, %s134
      $region28: #{test_et_al_forward.5} parent=23 // pred_fallthru
        _
    $region24: #{test_et_al_forward.5} parent=5 // pred_fallthru
      _
    %p136 = scmp.le.s32.totalorder 1, %s9
    %p137 = scmp.lt.s32.totalorder %s9, 3
    %p138 = pnand %p136, %p137
    %p139 = pneg %p138
    // Predicated region
    $region29: #{test_et_al_forward.5} parent=5 // pred_check
      _
    $region30: #{test_et_al_forward.5} parent=5 // pred_check_branch
      %141 = sbr.rel (%p138) target = $region32
    $region31: #{test_et_al_forward.5} parent=5 // pred_region
      %s142 = ssub.s32 %s9, 1
      %p143 = scmp.lt.s32.totalorder %s14, 1
      %s144 = scalar_select %p143, %s14, 1
      %s145 = smul.addr %s144, 12
      %s146 = smul.addr %s145, 4
      %s147 = scalar_lea.vmem %s0, %s146
      %p148 = pneg %p35
      %p149 = pneg %p32
      %p150 = pneg %p56
      %p151 = pneg %p53
      %p152 = pneg %p77
      %p153 = pneg %p74
      %p154 = pneg %p103
      %p155 = pneg %p100
      %p156 = scmp.lt.s32.totalorder %s14, 1
      %s157 = scalar_select %p156, %s14, 1
      %s158 = smul.addr %s157, 9
      %s159 = smul.addr %s158, 4
      %s160 = scalar_lea.vmem %s3, %s159
      %p161 = scmp.lt.s32.totalorder %s14, 1
      %s162 = scalar_select %p161, %s14, 1
      %s163 = smul.addr %s162, 12
      %s164 = smul.addr %s163, 4
      %s165 = scalar_lea.vmem %s0, %s164
      %p166 = scmp.lt.s32.totalorder %s14, 1
      %s167 = scalar_select %p166, %s14, 1
      %s168 = smul.addr %s167, 9
      %s169 = smul.addr %s168, 4
      %s170 = scalar_lea.vmem %s3, %s169
      %v172 = vld [vmem:[%s165] sm:$0xf]
      %v173 = vld [vmem:[%s165 + $0x4] sm:$0xf]
      %v174 = vld [vmem:[%s165 + $0x8] sm:$0xf]
      %v175 = vld [vmem:[%s165 + $0xc] sm:$0xf]
      %v176 = vld [vmem:[%s165 + $0x10] sm:$0xf]
      %v177 = vld [vmem:[%s165 + $0x14] sm:$0xf]
      %v178 = vld [vmem:[%s165 + $0x18] sm:$0xf]
      %v179 = vld [vmem:[%s165 + $0x1c] sm:$0xf]
      %v180 = vld [vmem:[%s165 + $0x20] sm:$0xf]
      %v181 = vld [vmem:[%s1] sm:$0xf]
      %v182 = vld [vmem:[%s1 + $0x4] sm:$0xf]
      %v183 = vld [vmem:[%s1 + $0x8] sm:$0xf]
      %v184 = vld [vmem:[%s1 + $0xc] sm:$0xf]
      %v185 = vld [vmem:[%s1 + $0x10] sm:$0xf]
      %v186 = vld [vmem:[%s1 + $0x14] sm:$0xf]
      %v187 = vld [vmem:[%s1 + $0x18] sm:$0xf]
      %v188 = vld [vmem:[%s1 + $0x1c] sm:$0xf]
      %v189 = vld [vmem:[%s1 + $0x20] sm:$0xf]
      %v190 = vld [vmem:[%s1 + $0x24] sm:$0xf]
      %v191 = vld [vmem:[%s1 + $0x28] sm:$0xf]
      %v192 = vld [vmem:[%s1 + $0x2c] sm:$0xf]
      %v193 = vld [vmem:[%s1 + $0x30] sm:$0xf]
      %v194 = vld [vmem:[%s1 + $0x34] sm:$0xf]
      %v195 = vld [vmem:[%s1 + $0x38] sm:$0xf]
      %v196 = vld [vmem:[%s1 + $0x3c] sm:$0xf]
      %v197 = vld [vmem:[%s165 + $0x24] sm:$0x1]
      %s198 = scalar_lea.vmem %s1, 64
      %v199 = vld [vmem:[%s198] sm:$0xf]
      %v200 = vld [vmem:[%s198 + $0x4] sm:$0xf]
      %v201 = vld [vmem:[%s198 + $0x8] sm:$0xf]
      %v202 = vld [vmem:[%s198 + $0xc] sm:$0xf]
      %v203 = vld [vmem:[%s198 + $0x10] sm:$0xf]
      %v204 = vld [vmem:[%s198 + $0x14] sm:$0xf]
      %v205 = vld [vmem:[%s198 + $0x18] sm:$0xf]
      %v206 = vld [vmem:[%s198 + $0x1c] sm:$0xf]
      %v207 = vld [vmem:[%s198 + $0x20] sm:$0xf]
      %v208 = vld [vmem:[%s198 + $0x24] sm:$0xf]
      %v209 = vld [vmem:[%s198 + $0x28] sm:$0xf]
      %v210 = vld [vmem:[%s198 + $0x2c] sm:$0xf]
      %v211 = vld [vmem:[%s198 + $0x30] sm:$0xf]
      %v212 = vld [vmem:[%s198 + $0x34] sm:$0xf]
      %v213 = vld [vmem:[%s198 + $0x38] sm:$0xf]
      %v214 = vld [vmem:[%s198 + $0x3c] sm:$0xf]
      %v225 = vunpack.c.l.b16 %v172
      %v226 = vunpack.c.l.b16 %v173
      %v227 = vunpack.c.l.b16 %v174
      %v228 = vunpack.c.l.b16 %v175
      %v229 = vunpack.c.l.b16 %v176
      %v230 = vunpack.c.l.b16 %v177
      %v231 = vunpack.c.l.b16 %v178
      %v232 = vunpack.c.l.b16 %v179
      %v233 = vunpack.c.l.b16 %v180
      %v234 = vunpack.c.l.b16 %v197
      %v235 = vpack.c.b16 %v226, %v225
      %v236 = vpack.c.b16 %v228, %v227
      %v237 = vpack.c.b16 %v230, %v229
      %v238 = vpack.c.b16 %v232, %v231
      %v239 = vpack.c.b16 %v234, %v233
      %vm240 = vsmask.f32 7424
      %v242 = vshrl.u32 %v235, 16
      %v244 = vshll.u32 %v235, 16
      %v246 = vrot.slane %v244, 1
      %v247 = vor.u32 %v242, %v246
      %v249 = vshll.u32 %v236, 16
      %v251 = vrot.slane %v249, 1
      %v252 = vsel %vm240, %v247, %v251
      %v253 = vshrl.u32 %v236, 16
      %v255 = vor.u32 %v253, %v251
      %v257 = vshll.u32 %v237, 16
      %v259 = vrot.slane %v257, 1
      %v260 = vsel %vm240, %v255, %v259
      %v261 = vshrl.u32 %v237, 16
      %v263 = vor.u32 %v261, %v259
      %v265 = vshll.u32 %v238, 16
      %v267 = vrot.slane %v265, 1
      %v268 = vsel %vm240, %v263, %v267
      %v269 = vshrl.u32 %v238, 16
      %v271 = vor.u32 %v269, %v267
      %v273 = vshll.u32 %v239, 16
      %v275 = vrot.slane %v273, 1
      %v276 = vsel %vm240, %v271, %v275
      %v277 = vshrl.u32 %v239, 16
      %v279 = vor.u32 %v277, %v275
      %v301 = vunpack.c.l.b16 %v199
      %v302 = vunpack.c.l.b16 %v200
      %v303 = vunpack.c.l.b16 %v201
      %v304 = vunpack.c.l.b16 %v202
      %v305 = vunpack.c.l.b16 %v203
      %v306 = vunpack.c.l.b16 %v204
      %v307 = vunpack.c.l.b16 %v205
      %v308 = vunpack.c.l.b16 %v206
      %v309 = vunpack.c.l.b16 %v207
      %v310 = vunpack.c.l.b16 %v208
      %v311 = vunpack.c.l.b16 %v209
      %v312 = vunpack.c.l.b16 %v210
      %v313 = vunpack.c.l.b16 %v211
      %v314 = vunpack.c.l.b16 %v212
      %v315 = vunpack.c.l.b16 %v213
      %v316 = vunpack.c.l.b16 %v214
      %v317 = vpack.c.b16 %v302, %v301
      %v318 = vpack.c.b16 %v304, %v303
      %v319 = vpack.c.b16 %v306, %v305
      %v320 = vpack.c.b16 %v308, %v307
      %v321 = vpack.c.b16 %v310, %v309
      %v322 = vpack.c.b16 %v312, %v311
      %v323 = vpack.c.b16 %v314, %v313
      %v324 = vpack.c.b16 %v316, %v315
      %333 = vmatprep.subr.bf16.mxu0 0
      %334 = vmatpush1.bf16.msra.mxu0 %v317
      %335 = vmatprep.subr.bf16.mxu0 0
      %336 = vmatpush1.bf16.msra.mxu0 %v318
      %337 = vmatprep.subr.bf16.mxu0 0
      %338 = vmatpush1.bf16.msra.mxu0 %v319
      %339 = vmatprep.subr.bf16.mxu0 0
      %340 = vmatpush1.bf16.msra.mxu0 %v320
      %341 = vmatprep.subr.bf16.mxu0 0
      %342 = vmatpush1.bf16.msra.mxu0 %v321
      %343 = vmatprep.subr.bf16.mxu0 0
      %344 = vmatpush1.bf16.msra.mxu0 %v322
      %345 = vmatprep.subr.bf16.mxu0 0
      %346 = vmatpush1.bf16.msra.mxu0 %v323
      %347 = vmatprep.subr.bf16.mxu0 0
      %348 = vmatpush1.bf16.msra.mxu0 %v324
      %349 = vmatprep.subr.bf16.mxu0 0
      %350 = vmatpush1.bf16.msra.mxu0 0
      %351 = vmatprep.subr.bf16.mxu0 0
      %352 = vmatpush1.bf16.msra.mxu0 0
      %353 = vmatprep.subr.bf16.mxu0 0
      %354 = vmatpush1.bf16.msra.mxu0 0
      %355 = vmatprep.subr.bf16.mxu0 0
      %356 = vmatpush1.bf16.msra.mxu0 0
      %357 = vmatprep.subr.bf16.mxu0 0
      %358 = vmatpush1.bf16.msra.mxu0 0
      %359 = vmatprep.subr.bf16.mxu0 0
      %360 = vmatpush1.bf16.msra.mxu0 0
      %361 = vmatprep.subr.bf16.mxu0 0
      %362 = vmatpush1.bf16.msra.mxu0 0
      %363 = vmatprep.subr.bf16.mxu0 0
      %364 = vmatpush1.bf16.msra.mxu0 0
      %365 = vmatprep.mubr.bf16.mxu0 0
      %366 = vmatmul.mubr.bf16.gmra.mrb[0].mxu0 %v252
      %v367 = vpop.f32.mrb[0].mxu0
      %v368 = vadd.f32 0.0, %v367
      %v369 = vpop.f32.mrb[0].mxu0
      %v370 = vpop.f32.mrb[0].mxu0
      %v371 = vadd.f32 0.0, %v370
      %v372 = vpop.f32.mrb[0].mxu0
      %373 = vmatprep.mubr.bf16.mxu0 0
      %374 = vmatmul.mubr.bf16.gmra.mrb[0].mxu0 %v260
      %v375 = vpop.f32.mrb[0].mxu0
      %v376 = vadd.f32 0.0, %v375
      %v377 = vpop.f32.mrb[0].mxu0
      %v378 = vpop.f32.mrb[0].mxu0
      %v379 = vadd.f32 0.0, %v378
      %v380 = vpop.f32.mrb[0].mxu0
      %381 = vmatprep.mubr.bf16.mxu0 0
      %382 = vmatmul.mubr.bf16.gmra.mrb[0].mxu0 %v268
      %v383 = vpop.f32.mrb[0].mxu0
      %v384 = vadd.f32 0.0, %v383
      %v385 = vpop.f32.mrb[0].mxu0
      %v386 = vpop.f32.mrb[0].mxu0
      %v387 = vadd.f32 0.0, %v386
      %v388 = vpop.f32.mrb[0].mxu0
      %389 = vmatprep.mubr.bf16.mxu0 0
      %390 = vmatmul.mubr.bf16.gmra.mrb[0].mxu0 %v276
      %v391 = vpop.f32.mrb[0].mxu0
      %v392 = vadd.f32 0.0, %v391
      %v393 = vpop.f32.mrb[0].mxu0
      %v394 = vpop.f32.mrb[0].mxu0
      %v395 = vadd.f32 0.0, %v394
      %v396 = vpop.f32.mrb[0].mxu0
      %397 = vmatprep.mubr.bf16.mxu0 0
      %398 = vmatmul.mubr.bf16.gmra.mrb[0].mxu0 %v279
      %v399 = vpop.f32.mrb[0].mxu0
      %v400 = vadd.f32 0.0, %v399
      %v401 = vpop.f32.mrb[0].mxu0
      %v402 = vpop.f32.mrb[0].mxu0
      %v403 = vpop.f32.mrb[0].mxu0
      %404 = vdwg.mxu0
      %v405 = vpack.c.b16 %v233, %v233
      %v427 = vunpack.c.l.b16 %v181
      %v428 = vunpack.c.l.b16 %v182
      %v429 = vunpack.c.l.b16 %v183
      %v430 = vunpack.c.l.b16 %v184
      %v431 = vunpack.c.l.b16 %v185
      %v432 = vunpack.c.l.b16 %v186
      %v433 = vunpack.c.l.b16 %v187
      %v434 = vunpack.c.l.b16 %v188
      %v435 = vunpack.c.l.b16 %v189
      %v436 = vunpack.c.l.b16 %v190
      %v437 = vunpack.c.l.b16 %v191
      %v438 = vunpack.c.l.b16 %v192
      %v439 = vunpack.c.l.b16 %v193
      %v440 = vunpack.c.l.b16 %v194
      %v441 = vunpack.c.l.b16 %v195
      %v442 = vunpack.c.l.b16 %v196
      %v443 = vpack.c.b16 %v428, %v427
      %v444 = vpack.c.b16 %v430, %v429
      %v445 = vpack.c.b16 %v432, %v431
      %v446 = vpack.c.b16 %v434, %v433
      %v447 = vpack.c.b16 %v436, %v435
      %v448 = vpack.c.b16 %v438, %v437
      %v449 = vpack.c.b16 %v440, %v439
      %v450 = vpack.c.b16 %v442, %v441
      %459 = vmatprep.subr.bf16.mxu0 0
      %460 = vmatpush1.bf16.msra.mxu0 %v443
      %461 = vmatprep.subr.bf16.mxu0 0
      %462 = vmatpush1.bf16.msra.mxu0 %v444
      %463 = vmatprep.subr.bf16.mxu0 0
      %464 = vmatpush1.bf16.msra.mxu0 %v445
      %465 = vmatprep.subr.bf16.mxu0 0
      %466 = vmatpush1.bf16.msra.mxu0 %v446
      %467 = vmatprep.subr.bf16.mxu0 0
      %468 = vmatpush1.bf16.msra.mxu0 %v447
      %469 = vmatprep.subr.bf16.mxu0 0
      %470 = vmatpush1.bf16.msra.mxu0 %v448
      %471 = vmatprep.subr.bf16.mxu0 0
      %472 = vmatpush1.bf16.msra.mxu0 %v449
      %473 = vmatprep.subr.bf16.mxu0 0
      %474 = vmatpush1.bf16.msra.mxu0 %v450
      %475 = vmatprep.subr.bf16.mxu0 0
      %476 = vmatpush1.bf16.msra.mxu0 0
      %477 = vmatprep.subr.bf16.mxu0 0
      %478 = vmatpush1.bf16.msra.mxu0 0
      %479 = vmatprep.subr.bf16.mxu0 0
      %480 = vmatpush1.bf16.msra.mxu0 0
      %481 = vmatprep.subr.bf16.mxu0 0
      %482 = vmatpush1.bf16.msra.mxu0 0
      %483 = vmatprep.subr.bf16.mxu0 0
      %484 = vmatpush1.bf16.msra.mxu0 0
      %485 = vmatprep.subr.bf16.mxu0 0
      %486 = vmatpush1.bf16.msra.mxu0 0
      %487 = vmatprep.subr.bf16.mxu0 0
      %488 = vmatpush1.bf16.msra.mxu0 0
      %489 = vmatprep.subr.bf16.mxu0 0
      %490 = vmatpush1.bf16.msra.mxu0 0
      %491 = vmatprep.mubr.bf16.mxu0 0
      %492 = vmatmul.mubr.bf16.gmra.mrb[0].mxu0 %v235
      %v493 = vpop.f32.mrb[0].mxu0
      %v494 = vadd.f32 %v368, %v493
      %v495 = vpop.f32.mrb[0].mxu0
      %v496 = vpop.f32.mrb[0].mxu0
      %v497 = vadd.f32 %v371, %v496
      %v498 = vpop.f32.mrb[0].mxu0
      %499 = vmatprep.mubr.bf16.mxu0 0
      %500 = vmatmul.mubr.bf16.gmra.mrb[0].mxu0 %v236
      %v501 = vpop.f32.mrb[0].mxu0
      %v502 = vadd.f32 %v376, %v501
      %v503 = vpop.f32.mrb[0].mxu0
      %v504 = vpop.f32.mrb[0].mxu0
      %v505 = vadd.f32 %v379, %v504
      %v506 = vpop.f32.mrb[0].mxu0
      %507 = vmatprep.mubr.bf16.mxu0 0
      %508 = vmatmul.mubr.bf16.gmra.mrb[0].mxu0 %v237
      %v509 = vpop.f32.mrb[0].mxu0
      %v510 = vadd.f32 %v384, %v509
      %v511 = vpop.f32.mrb[0].mxu0
      %v512 = vpop.f32.mrb[0].mxu0
      %v513 = vadd.f32 %v387, %v512
      %v514 = vpop.f32.mrb[0].mxu0
      %515 = vmatprep.mubr.bf16.mxu0 0
      %516 = vmatmul.mubr.bf16.gmra.mrb[0].mxu0 %v238
      %v517 = vpop.f32.mrb[0].mxu0
      %v518 = vadd.f32 %v392, %v517
      %v519 = vpop.f32.mrb[0].mxu0
      %v520 = vpop.f32.mrb[0].mxu0
      %v521 = vadd.f32 %v395, %v520
      %v522 = vpop.f32.mrb[0].mxu0
      %523 = vmatprep.mubr.bf16.mxu0 0
      %524 = vmatmul.mubr.bf16.gmra.mrb[0].mxu0 %v405
      %v525 = vpop.f32.mrb[0].mxu0
      %v526 = vadd.f32 %v400, %v525
      %v527 = vpop.f32.mrb[0].mxu0
      %v528 = vpop.f32.mrb[0].mxu0
      %v529 = vpop.f32.mrb[0].mxu0
      %530 = vdwg.mxu0
      %v531 = vld [vmem:[%s165] sm:$0xe]
      %s532 = scalar_lea.vmem %s1, 128
      %v533 = vld [vmem:[%s532] sm:$0xf]
      %v534 = vld [vmem:[%s532 + $0x4] sm:$0xf]
      %v535 = vld [vmem:[%s532 + $0x8] sm:$0xf]
      %v536 = vld [vmem:[%s532 + $0xc] sm:$0xf]
      %v537 = vld [vmem:[%s532 + $0x10] sm:$0xf]
      %v538 = vld [vmem:[%s532 + $0x14] sm:$0xf]
      %v539 = vld [vmem:[%s532 + $0x18] sm:$0xf]
      %v540 = vld [vmem:[%s532 + $0x1c] sm:$0xf]
      %v541 = vld [vmem:[%s532 + $0x20] sm:$0xf]
      %v542 = vld [vmem:[%s532 + $0x24] sm:$0xf]
      %v543 = vld [vmem:[%s532 + $0x28] sm:$0xf]
      %v544 = vld [vmem:[%s532 + $0x2c] sm:$0xf]
      %v545 = vld [vmem:[%s532 + $0x30] sm:$0xf]
      %v546 = vld [vmem:[%s532 + $0x34] sm:$0xf]
      %v547 = vld [vmem:[%s532 + $0x38] sm:$0xf]
      %v548 = vld [vmem:[%s532 + $0x3c] sm:$0xf]
      %v550 = vunpack.c.l.b16 %v531
      %v551 = vpack.c.b16 %v226, %v550
      %vm552 = vcmask 1046528
      %v553 = vrot.slane %v551, 1
      %v554 = vrot.slane %v236, 1
      %v555 = vsel %vm552, %v553, %v554
      %v556 = vrot.slane %v237, 1
      %v557 = vsel %vm552, %v554, %v556
      %v558 = vrot.slane %v238, 1
      %v559 = vsel %vm552, %v556, %v558
      %v560 = vrot.slane %v239, 1
      %v561 = vsel %vm552, %v558, %v560
      %v583 = vunpack.c.l.b16 %v533
      %v584 = vunpack.c.l.b16 %v534
      %v585 = vunpack.c.l.b16 %v535
      %v586 = vunpack.c.l.b16 %v536
      %v587 = vunpack.c.l.b16 %v537
      %v588 = vunpack.c.l.b16 %v538
      %v589 = vunpack.c.l.b16 %v539
      %v590 = vunpack.c.l.b16 %v540
      %v591 = vunpack.c.l.b16 %v541
      %v592 = vunpack.c.l.b16 %v542
      %v593 = vunpack.c.l.b16 %v543
      %v594 = vunpack.c.l.b16 %v544
      %v595 = vunpack.c.l.b16 %v545
      %v596 = vunpack.c.l.b16 %v546
      %v597 = vunpack.c.l.b16 %v547
      %v598 = vunpack.c.l.b16 %v548
      %v599 = vpack.c.b16 %v584, %v583
      %v600 = vpack.c.b16 %v586, %v585
      %v601 = vpack.c.b16 %v588, %v587
      %v602 = vpack.c.b16 %v590, %v589
      %v603 = vpack.c.b16 %v592, %v591
      %v604 = vpack.c.b16 %v594, %v593
      %v605 = vpack.c.b16 %v596, %v595
      %v606 = vpack.c.b16 %v598, %v597
      %615 = vmatprep.subr.bf16.mxu0 0
      %616 = vmatpush1.bf16.msra.mxu0 %v599
      %617 = vmatprep.subr.bf16.mxu0 0
      %618 = vmatpush1.bf16.msra.mxu0 %v600
      %619 = vmatprep.subr.bf16.mxu0 0
      %620 = vmatpush1.bf16.msra.mxu0 %v601
      %621 = vmatprep.subr.bf16.mxu0 0
      %622 = vmatpush1.bf16.msra.mxu0 %v602
      %623 = vmatprep.subr.bf16.mxu0 0
      %624 = vmatpush1.bf16.msra.mxu0 %v603
      %625 = vmatprep.subr.bf16.mxu0 0
      %626 = vmatpush1.bf16.msra.mxu0 %v604
      %627 = vmatprep.subr.bf16.mxu0 0
      %628 = vmatpush1.bf16.msra.mxu0 %v605
      %629 = vmatprep.subr.bf16.mxu0 0
      %630 = vmatpush1.bf16.msra.mxu0 %v606
      %631 = vmatprep.subr.bf16.mxu0 0
      %632 = vmatpush1.bf16.msra.mxu0 0
      %633 = vmatprep.subr.bf16.mxu0 0
      %634 = vmatpush1.bf16.msra.mxu0 0
      %635 = vmatprep.subr.bf16.mxu0 0
      %636 = vmatpush1.bf16.msra.mxu0 0
      %637 = vmatprep.subr.bf16.mxu0 0
      %638 = vmatpush1.bf16.msra.mxu0 0
      %639 = vmatprep.subr.bf16.mxu0 0
      %640 = vmatpush1.bf16.msra.mxu0 0
      %641 = vmatprep.subr.bf16.mxu0 0
      %642 = vmatpush1.bf16.msra.mxu0 0
      %643 = vmatprep.subr.bf16.mxu0 0
      %644 = vmatpush1.bf16.msra.mxu0 0
      %645 = vmatprep.subr.bf16.mxu0 0
      %646 = vmatpush1.bf16.msra.mxu0 0
      %647 = vmatprep.mubr.bf16.mxu0 0
      %648 = vmatmul.mubr.bf16.gmra.mrb[0].mxu0 %v555
      %v649 = vpop.f32.mrb[0].mxu0
      %v650 = vadd.f32 0.0, %v649
      %v651 = vpop.f32.mrb[0].mxu0
      %v652 = vpop.f32.mrb[0].mxu0
      %v653 = vadd.f32 0.0, %v652
      %v654 = vpop.f32.mrb[0].mxu0
      %655 = vmatprep.mubr.bf16.mxu0 0
      %656 = vmatmul.mubr.bf16.gmra.mrb[0].mxu0 %v557
      %v657 = vpop.f32.mrb[0].mxu0
      %v658 = vadd.f32 0.0, %v657
      %v659 = vpop.f32.mrb[0].mxu0
      %v660 = vpop.f32.mrb[0].mxu0
      %v661 = vadd.f32 0.0, %v660
      %v662 = vpop.f32.mrb[0].mxu0
      %663 = vmatprep.mubr.bf16.mxu0 0
      %664 = vmatmul.mubr.bf16.gmra.mrb[0].mxu0 %v559
      %v665 = vpop.f32.mrb[0].mxu0
      %v666 = vadd.f32 0.0, %v665
      %v667 = vpop.f32.mrb[0].mxu0
      %v668 = vpop.f32.mrb[0].mxu0
      %v669 = vadd.f32 0.0, %v668
      %v670 = vpop.f32.mrb[0].mxu0
      %671 = vmatprep.mubr.bf16.mxu0 0
      %672 = vmatmul.mubr.bf16.gmra.mrb[0].mxu0 %v561
      %v673 = vpop.f32.mrb[0].mxu0
      %v674 = vadd.f32 0.0, %v673
      %v675 = vpop.f32.mrb[0].mxu0
      %v676 = vpop.f32.mrb[0].mxu0
      %v677 = vadd.f32 0.0, %v676
      %v678 = vpop.f32.mrb[0].mxu0
      %679 = vmatprep.mubr.bf16.mxu0 0
      %680 = vmatmul.mubr.bf16.gmra.mrb[0].mxu0 %v560
      %v681 = vpop.f32.mrb[0].mxu0
      %v682 = vadd.f32 0.0, %v681
      %v683 = vpop.f32.mrb[0].mxu0
      %v684 = vpop.f32.mrb[0].mxu0
      %v685 = vpop.f32.mrb[0].mxu0
      %686 = vdwg.mxu0
      %v687 = vadd.f32 %v494, %v650
      %v688 = vadd.f32 %v497, %v653
      %v689 = vadd.f32 %v502, %v658
      %v690 = vadd.f32 %v505, %v661
      %v691 = vadd.f32 %v510, %v666
      %v692 = vadd.f32 %v513, %v669
      %v693 = vadd.f32 %v518, %v674
      %v694 = vadd.f32 %v521, %v677
      %v695 = vadd.f32 %v526, %v682
      %v696 = vld [vmem:[%s165 + $0x4] sm:$0xf]
      %v697 = vld [vmem:[%s165 + $0x8] sm:$0xf]
      %v698 = vld [vmem:[%s165 + $0xc] sm:$0xf]
      %v699 = vld [vmem:[%s165 + $0x10] sm:$0xf]
      %v700 = vld [vmem:[%s165 + $0x14] sm:$0xf]
      %v701 = vld [vmem:[%s165 + $0x18] sm:$0xf]
      %v702 = vld [vmem:[%s165 + $0x1c] sm:$0xf]
      %v703 = vld [vmem:[%s165 + $0x20] sm:$0xf]
      %v704 = vld [vmem:[%s165 + $0x24] sm:$0xf]
      %v705 = vld [vmem:[%s165 + $0x28] sm:$0x1]
      %s706 = scalar_lea.vmem %s1, 192
      %v707 = vld [vmem:[%s706] sm:$0xf]
      %v708 = vld [vmem:[%s706 + $0x4] sm:$0xf]
      %v709 = vld [vmem:[%s706 + $0x8] sm:$0xf]
      %v710 = vld [vmem:[%s706 + $0xc] sm:$0xf]
      %v711 = vld [vmem:[%s706 + $0x10] sm:$0xf]
      %v712 = vld [vmem:[%s706 + $0x14] sm:$0xf]
      %v713 = vld [vmem:[%s706 + $0x18] sm:$0xf]
      %v714 = vld [vmem:[%s706 + $0x1c] sm:$0xf]
      %v715 = vld [vmem:[%s706 + $0x20] sm:$0xf]
      %v716 = vld [vmem:[%s706 + $0x24] sm:$0xf]
      %v717 = vld [vmem:[%s706 + $0x28] sm:$0xf]
      %v718 = vld [vmem:[%s706 + $0x2c] sm:$0xf]
      %v719 = vld [vmem:[%s706 + $0x30] sm:$0xf]
      %v720 = vld [vmem:[%s706 + $0x34] sm:$0xf]
      %v721 = vld [vmem:[%s706 + $0x38] sm:$0xf]
      %v722 = vld [vmem:[%s706 + $0x3c] sm:$0xf]
      %v733 = vunpack.c.l.b16 %v696
      %v734 = vunpack.c.l.b16 %v697
      %v735 = vunpack.c.l.b16 %v698
      %v736 = vunpack.c.l.b16 %v699
      %v737 = vunpack.c.l.b16 %v700
      %v738 = vunpack.c.l.b16 %v701
      %v739 = vunpack.c.l.b16 %v702
      %v740 = vunpack.c.l.b16 %v703
      %v741 = vunpack.c.l.b16 %v704
      %v742 = vunpack.c.l.b16 %v705
      %v743 = vpack.c.b16 %v734, %v733
      %v744 = vpack.c.b16 %v736, %v735
      %v745 = vpack.c.b16 %v738, %v737
      %v746 = vpack.c.b16 %v740, %v739
      %v747 = vpack.c.b16 %v742, %v741
      %v749 = vshrl.u32 %v743, 16
      %v751 = vshll.u32 %v743, 16
      %v753 = vrot.slane %v751, 1
      %v754 = vor.u32 %v749, %v753
      %v756 = vshll.u32 %v744, 16
      %v758 = vrot.slane %v756, 1
      %v759 = vsel %vm240, %v754, %v758
      %v760 = vshrl.u32 %v744, 16
      %v762 = vor.u32 %v760, %v758
      %v764 = vshll.u32 %v745, 16
      %v766 = vrot.slane %v764, 1
      %v767 = vsel %vm240, %v762, %v766
      %v768 = vshrl.u32 %v745, 16
      %v770 = vor.u32 %v768, %v766
      %v772 = vshll.u32 %v746, 16
      %v774 = vrot.slane %v772, 1
      %v775 = vsel %vm240, %v770, %v774
      %v776 = vshrl.u32 %v746, 16
      %v778 = vor.u32 %v776, %v774
      %v780 = vshll.u32 %v747, 16
      %v782 = vrot.slane %v780, 1
      %v783 = vsel %vm240, %v778, %v782
      %v784 = vshrl.u32 %v747, 16
      %v786 = vor.u32 %v784, %v782
      %v808 = vunpack.c.l.b16 %v707
      %v809 = vunpack.c.l.b16 %v708
      %v810 = vunpack.c.l.b16 %v709
      %v811 = vunpack.c.l.b16 %v710
      %v812 = vunpack.c.l.b16 %v711
      %v813 = vunpack.c.l.b16 %v712
      %v814 = vunpack.c.l.b16 %v713
      %v815 = vunpack.c.l.b16 %v714
      %v816 = vunpack.c.l.b16 %v715
      %v817 = vunpack.c.l.b16 %v716
      %v818 = vunpack.c.l.b16 %v717
      %v819 = vunpack.c.l.b16 %v718
      %v820 = vunpack.c.l.b16 %v719
      %v821 = vunpack.c.l.b16 %v720
      %v822 = vunpack.c.l.b16 %v721
      %v823 = vunpack.c.l.b16 %v722
      %v824 = vpack.c.b16 %v809, %v808
      %v825 = vpack.c.b16 %v811, %v810
      %v826 = vpack.c.b16 %v813, %v812
      %v827 = vpack.c.b16 %v815, %v814
      %v828 = vpack.c.b16 %v817, %v816
      %v829 = vpack.c.b16 %v819, %v818
      %v830 = vpack.c.b16 %v821, %v820
      %v831 = vpack.c.b16 %v823, %v822
      %840 = vmatprep.subr.bf16.mxu0 0
      %841 = vmatpush1.bf16.msra.mxu0 %v824
      %842 = vmatprep.subr.bf16.mxu0 0
      %843 = vmatpush1.bf16.msra.mxu0 %v825
      %844 = vmatprep.subr.bf16.mxu0 0
      %845 = vmatpush1.bf16.msra.mxu0 %v826
      %846 = vmatprep.subr.bf16.mxu0 0
      %847 = vmatpush1.bf16.msra.mxu0 %v827
      %848 = vmatprep.subr.bf16.mxu0 0
      %849 = vmatpush1.bf16.msra.mxu0 %v828
      %850 = vmatprep.subr.bf16.mxu0 0
      %851 = vmatpush1.bf16.msra.mxu0 %v829
      %852 = vmatprep.subr.bf16.mxu0 0
      %853 = vmatpush1.bf16.msra.mxu0 %v830
      %854 = vmatprep.subr.bf16.mxu0 0
      %855 = vmatpush1.bf16.msra.mxu0 %v831
      %856 = vmatprep.subr.bf16.mxu0 0
      %857 = vmatpush1.bf16.msra.mxu0 0
      %858 = vmatprep.subr.bf16.mxu0 0
      %859 = vmatpush1.bf16.msra.mxu0 0
      %860 = vmatprep.subr.bf16.mxu0 0
      %861 = vmatpush1.bf16.msra.mxu0 0
      %862 = vmatprep.subr.bf16.mxu0 0
      %863 = vmatpush1.bf16.msra.mxu0 0
      %864 = vmatprep.subr.bf16.mxu0 0
      %865 = vmatpush1.bf16.msra.mxu0 0
      %866 = vmatprep.subr.bf16.mxu0 0
      %867 = vmatpush1.bf16.msra.mxu0 0
      %868 = vmatprep.subr.bf16.mxu0 0
      %869 = vmatpush1.bf16.msra.mxu0 0
      %870 = vmatprep.subr.bf16.mxu0 0
      %871 = vmatpush1.bf16.msra.mxu0 0
      %872 = vmatprep.mubr.bf16.mxu0 0
      %873 = vmatmul.mubr.bf16.gmra.mrb[0].mxu0 %v759
      %v874 = vpop.f32.mrb[0].mxu0
      %v875 = vadd.f32 0.0, %v874
      %v876 = vpop.f32.mrb[0].mxu0
      %v877 = vpop.f32.mrb[0].mxu0
      %v878 = vadd.f32 0.0, %v877
      %v879 = vpop.f32.mrb[0].mxu0
      %880 = vmatprep.mubr.bf16.mxu0 0
      %881 = vmatmul.mubr.bf16.gmra.mrb[0].mxu0 %v767
      %v882 = vpop.f32.mrb[0].mxu0
      %v883 = vadd.f32 0.0, %v882
      %v884 = vpop.f32.mrb[0].mxu0
      %v885 = vpop.f32.mrb[0].mxu0
      %v886 = vadd.f32 0.0, %v885
      %v887 = vpop.f32.mrb[0].mxu0
      %888 = vmatprep.mubr.bf16.mxu0 0
      %889 = vmatmul.mubr.bf16.gmra.mrb[0].mxu0 %v775
      %v890 = vpop.f32.mrb[0].mxu0
      %v891 = vadd.f32 0.0, %v890
      %v892 = vpop.f32.mrb[0].mxu0
      %v893 = vpop.f32.mrb[0].mxu0
      %v894 = vadd.f32 0.0, %v893
      %v895 = vpop.f32.mrb[0].mxu0
      %896 = vmatprep.mubr.bf16.mxu0 0
      %897 = vmatmul.mubr.bf16.gmra.mrb[0].mxu0 %v783
      %v898 = vpop.f32.mrb[0].mxu0
      %v899 = vadd.f32 0.0, %v898
      %v900 = vpop.f32.mrb[0].mxu0
      %v901 = vpop.f32.mrb[0].mxu0
      %v902 = vadd.f32 0.0, %v901
      %v903 = vpop.f32.mrb[0].mxu0
      %904 = vmatprep.mubr.bf16.mxu0 0
      %905 = vmatmul.mubr.bf16.gmra.mrb[0].mxu0 %v786
      %v906 = vpop.f32.mrb[0].mxu0
      %v907 = vadd.f32 0.0, %v906
      %v908 = vpop.f32.mrb[0].mxu0
      %v909 = vpop.f32.mrb[0].mxu0
      %v910 = vpop.f32.mrb[0].mxu0
      %911 = vdwg.mxu0
      %v912 = vadd.f32 %v687, %v875
      %v913 = vadd.f32 %v688, %v878
      %v914 = vadd.f32 %v689, %v883
      %v915 = vadd.f32 %v690, %v886
      %v916 = vadd.f32 %v691, %v891
      %v917 = vadd.f32 %v692, %v894
      %v918 = vadd.f32 %v693, %v899
      %v919 = vadd.f32 %v694, %v902
      %v920 = vadd.f32 %v695, %v907
      %v921 = vld [vmem:[%s165 + $0x4] sm:$0xe]
      %s922 = scalar_lea.vmem %s1, 256
      %v923 = vld [vmem:[%s922] sm:$0xf]
      %v924 = vld [vmem:[%s922 + $0x4] sm:$0xf]
      %v925 = vld [vmem:[%s922 + $0x8] sm:$0xf]
      %v926 = vld [vmem:[%s922 + $0xc] sm:$0xf]
      %v927 = vld [vmem:[%s922 + $0x10] sm:$0xf]
      %v928 = vld [vmem:[%s922 + $0x14] sm:$0xf]
      %v929 = vld [vmem:[%s922 + $0x18] sm:$0xf]
      %v930 = vld [vmem:[%s922 + $0x1c] sm:$0xf]
      %v931 = vld [vmem:[%s922 + $0x20] sm:$0xf]
      %v932 = vld [vmem:[%s922 + $0x24] sm:$0xf]
      %v933 = vld [vmem:[%s922 + $0x28] sm:$0xf]
      %v934 = vld [vmem:[%s922 + $0x2c] sm:$0xf]
      %v935 = vld [vmem:[%s922 + $0x30] sm:$0xf]
      %v936 = vld [vmem:[%s922 + $0x34] sm:$0xf]
      %v937 = vld [vmem:[%s922 + $0x38] sm:$0xf]
      %v938 = vld [vmem:[%s922 + $0x3c] sm:$0xf]
      %v940 = vunpack.c.l.b16 %v921
      %v941 = vpack.c.b16 %v734, %v940
      %v942 = vrot.slane %v941, 1
      %v943 = vrot.slane %v744, 1
      %v944 = vsel %vm552, %v942, %v943
      %v945 = vrot.slane %v745, 1
      %v946 = vsel %vm552, %v943, %v945
      %v947 = vrot.slane %v746, 1
      %v948 = vsel %vm552, %v945, %v947
      %v949 = vrot.slane %v747, 1
      %v950 = vsel %vm552, %v947, %v949
      %v972 = vunpack.c.l.b16 %v923
      %v973 = vunpack.c.l.b16 %v924
      %v974 = vunpack.c.l.b16 %v925
      %v975 = vunpack.c.l.b16 %v926
      %v976 = vunpack.c.l.b16 %v927
      %v977 = vunpack.c.l.b16 %v928
      %v978 = vunpack.c.l.b16 %v929
      %v979 = vunpack.c.l.b16 %v930
      %v980 = vunpack.c.l.b16 %v931
      %v981 = vunpack.c.l.b16 %v932
      %v982 = vunpack.c.l.b16 %v933
      %v983 = vunpack.c.l.b16 %v934
      %v984 = vunpack.c.l.b16 %v935
      %v985 = vunpack.c.l.b16 %v936
      %v986 = vunpack.c.l.b16 %v937
      %v987 = vunpack.c.l.b16 %v938
      %v988 = vpack.c.b16 %v973, %v972
      %v989 = vpack.c.b16 %v975, %v974
      %v990 = vpack.c.b16 %v977, %v976
      %v991 = vpack.c.b16 %v979, %v978
      %v992 = vpack.c.b16 %v981, %v980
      %v993 = vpack.c.b16 %v983, %v982
      %v994 = vpack.c.b16 %v985, %v984
      %v995 = vpack.c.b16 %v987, %v986
      %1004 = vmatprep.subr.bf16.mxu0 0
      %1005 = vmatpush1.bf16.msra.mxu0 %v988
      %1006 = vmatprep.subr.bf16.mxu0 0
      %1007 = vmatpush1.bf16.msra.mxu0 %v989
      %1008 = vmatprep.subr.bf16.mxu0 0
      %1009 = vmatpush1.bf16.msra.mxu0 %v990
      %1010 = vmatprep.subr.bf16.mxu0 0
      %1011 = vmatpush1.bf16.msra.mxu0 %v991
      %1012 = vmatprep.subr.bf16.mxu0 0
      %1013 = vmatpush1.bf16.msra.mxu0 %v992
      %1014 = vmatprep.subr.bf16.mxu0 0
      %1015 = vmatpush1.bf16.msra.mxu0 %v993
      %1016 = vmatprep.subr.bf16.mxu0 0
      %1017 = vmatpush1.bf16.msra.mxu0 %v994
      %1018 = vmatprep.subr.bf16.mxu0 0
      %1019 = vmatpush1.bf16.msra.mxu0 %v995
      %1020 = vmatprep.subr.bf16.mxu0 0
      %1021 = vmatpush1.bf16.msra.mxu0 0
      %1022 = vmatprep.subr.bf16.mxu0 0
      %1023 = vmatpush1.bf16.msra.mxu0 0
      %1024 = vmatprep.subr.bf16.mxu0 0
      %1025 = vmatpush1.bf16.msra.mxu0 0
      %1026 = vmatprep.subr.bf16.mxu0 0
      %1027 = vmatpush1.bf16.msra.mxu0 0
      %1028 = vmatprep.subr.bf16.mxu0 0
      %1029 = vmatpush1.bf16.msra.mxu0 0
      %1030 = vmatprep.subr.bf16.mxu0 0
      %1031 = vmatpush1.bf16.msra.mxu0 0
      %1032 = vmatprep.subr.bf16.mxu0 0
      %1033 = vmatpush1.bf16.msra.mxu0 0
      %1034 = vmatprep.subr.bf16.mxu0 0
      %1035 = vmatpush1.bf16.msra.mxu0 0
      %1036 = vmatprep.mubr.bf16.mxu0 0
      %1037 = vmatmul.mubr.bf16.gmra.mrb[0].mxu0 %v944
      %v1038 = vpop.f32.mrb[0].mxu0
      %v1039 = vadd.f32 0.0, %v1038
      %v1040 = vpop.f32.mrb[0].mxu0
      %v1041 = vpop.f32.mrb[0].mxu0
      %v1042 = vadd.f32 0.0, %v1041
      %v1043 = vpop.f32.mrb[0].mxu0
      %1044 = vmatprep.mubr.bf16.mxu0 0
      %1045 = vmatmul.mubr.bf16.gmra.mrb[0].mxu0 %v946
      %v1046 = vpop.f32.mrb[0].mxu0
      %v1047 = vadd.f32 0.0, %v1046
      %v1048 = vpop.f32.mrb[0].mxu0
      %v1049 = vpop.f32.mrb[0].mxu0
      %v1050 = vadd.f32 0.0, %v1049
      %v1051 = vpop.f32.mrb[0].mxu0
      %1052 = vmatprep.mubr.bf16.mxu0 0
      %1053 = vmatmul.mubr.bf16.gmra.mrb[0].mxu0 %v948
      %v1054 = vpop.f32.mrb[0].mxu0
      %v1055 = vadd.f32 0.0, %v1054
      %v1056 = vpop.f32.mrb[0].mxu0
      %v1057 = vpop.f32.mrb[0].mxu0
      %v1058 = vadd.f32 0.0, %v1057
      %v1059 = vpop.f32.mrb[0].mxu0
      %1060 = vmatprep.mubr.bf16.mxu0 0
      %1061 = vmatmul.mubr.bf16.gmra.mrb[0].mxu0 %v950
      %v1062 = vpop.f32.mrb[0].mxu0
      %v1063 = vadd.f32 0.0, %v1062
      %v1064 = vpop.f32.mrb[0].mxu0
      %v1065 = vpop.f32.mrb[0].mxu0
      %v1066 = vadd.f32 0.0, %v1065
      %v1067 = vpop.f32.mrb[0].mxu0
      %1068 = vmatprep.mubr.bf16.mxu0 0
      %1069 = vmatmul.mubr.bf16.gmra.mrb[0].mxu0 %v949
      %v1070 = vpop.f32.mrb[0].mxu0
      %v1071 = vadd.f32 0.0, %v1070
      %v1072 = vpop.f32.mrb[0].mxu0
      %v1073 = vpop.f32.mrb[0].mxu0
      %v1074 = vpop.f32.mrb[0].mxu0
      %1075 = vdwg.mxu0
      %v1076 = vadd.f32 %v912, %v1039
      %v1077 = vadd.f32 %v913, %v1042
      %v1078 = vadd.f32 %v914, %v1047
      %v1079 = vadd.f32 %v915, %v1050
      %v1080 = vadd.f32 %v916, %v1055
      %v1081 = vadd.f32 %v917, %v1058
      %v1082 = vadd.f32 %v918, %v1063
      %v1083 = vadd.f32 %v919, %v1066
      %v1084 = vadd.f32 %v920, %v1071
      %v1085 = vld [vmem:[%s165 + $0x28] sm:$0x3]
      %s1086 = scalar_lea.vmem %s1, 320
      %v1087 = vld [vmem:[%s1086] sm:$0xf]
      %v1088 = vld [vmem:[%s1086 + $0x4] sm:$0xf]
      %v1089 = vld [vmem:[%s1086 + $0x8] sm:$0xf]
      %v1090 = vld [vmem:[%s1086 + $0xc] sm:$0xf]
      %v1091 = vld [vmem:[%s1086 + $0x10] sm:$0xf]
      %v1092 = vld [vmem:[%s1086 + $0x14] sm:$0xf]
      %v1093 = vld [vmem:[%s1086 + $0x18] sm:$0xf]
      %v1094 = vld [vmem:[%s1086 + $0x1c] sm:$0xf]
      %v1095 = vld [vmem:[%s1086 + $0x20] sm:$0xf]
      %v1096 = vld [vmem:[%s1086 + $0x24] sm:$0xf]
      %v1097 = vld [vmem:[%s1086 + $0x28] sm:$0xf]
      %v1098 = vld [vmem:[%s1086 + $0x2c] sm:$0xf]
      %v1099 = vld [vmem:[%s1086 + $0x30] sm:$0xf]
      %v1100 = vld [vmem:[%s1086 + $0x34] sm:$0xf]
      %v1101 = vld [vmem:[%s1086 + $0x38] sm:$0xf]
      %v1102 = vld [vmem:[%s1086 + $0x3c] sm:$0xf]
      %v1104 = vunpack.c.l.b16 %v1085
      %v1105 = vpack.c.b16 %v1104, %v741
      %vm1106 = vsmask.f32 6400
      %v1108 = vshrl.u32 %v941, 16
      %v1110 = vrot.slane %v1108, 1
      %v1111 = vshll.u32 %v941, 16
      %v1113 = vrot.slane %v1111, 2
      %v1114 = vor.u32 %v1110, %v1113
      %v1115 = vrot.slane %v760, 1
      %v1116 = vrot.slane %v756, 2
      %v1117 = vor.u32 %v1115, %v1116
      %v1118 = vsel %vm1106, %v1114, %v1117
      %v1119 = vrot.slane %v768, 1
      %v1120 = vrot.slane %v764, 2
      %v1121 = vor.u32 %v1119, %v1120
      %v1122 = vsel %vm1106, %v1117, %v1121
      %v1123 = vrot.slane %v776, 1
      %v1124 = vrot.slane %v772, 2
      %v1125 = vor.u32 %v1123, %v1124
      %v1126 = vsel %vm1106, %v1121, %v1125
      %v1128 = vshrl.u32 %v1105, 16
      %v1130 = vrot.slane %v1128, 1
      %v1131 = vshll.u32 %v1105, 16
      %v1133 = vrot.slane %v1131, 2
      %v1134 = vor.u32 %v1130, %v1133
      %v1135 = vsel %vm1106, %v1125, %v1134
      %v1157 = vunpack.c.l.b16 %v1087
      %v1158 = vunpack.c.l.b16 %v1088
      %v1159 = vunpack.c.l.b16 %v1089
      %v1160 = vunpack.c.l.b16 %v1090
      %v1161 = vunpack.c.l.b16 %v1091
      %v1162 = vunpack.c.l.b16 %v1092
      %v1163 = vunpack.c.l.b16 %v1093
      %v1164 = vunpack.c.l.b16 %v1094
      %v1165 = vunpack.c.l.b16 %v1095
      %v1166 = vunpack.c.l.b16 %v1096
      %v1167 = vunpack.c.l.b16 %v1097
      %v1168 = vunpack.c.l.b16 %v1098
      %v1169 = vunpack.c.l.b16 %v1099
      %v1170 = vunpack.c.l.b16 %v1100
      %v1171 = vunpack.c.l.b16 %v1101
      %v1172 = vunpack.c.l.b16 %v1102
      %v1173 = vpack.c.b16 %v1158, %v1157
      %v1174 = vpack.c.b16 %v1160, %v1159
      %v1175 = vpack.c.b16 %v1162, %v1161
      %v1176 = vpack.c.b16 %v1164, %v1163
      %v1177 = vpack.c.b16 %v1166, %v1165
      %v1178 = vpack.c.b16 %v1168, %v1167
      %v1179 = vpack.c.b16 %v1170, %v1169
      %v1180 = vpack.c.b16 %v1172, %v1171
      %1189 = vmatprep.subr.bf16.mxu0 0
      %1190 = vmatpush1.bf16.msra.mxu0 %v1173
      %1191 = vmatprep.subr.bf16.mxu0 0
      %1192 = vmatpush1.bf16.msra.mxu0 %v1174
      %1193 = vmatprep.subr.bf16.mxu0 0
      %1194 = vmatpush1.bf16.msra.mxu0 %v1175
      %1195 = vmatprep.subr.bf16.mxu0 0
      %1196 = vmatpush1.bf16.msra.mxu0 %v1176
      %1197 = vmatprep.subr.bf16.mxu0 0
      %1198 = vmatpush1.bf16.msra.mxu0 %v1177
      %1199 = vmatprep.subr.bf16.mxu0 0
      %1200 = vmatpush1.bf16.msra.mxu0 %v1178
      %1201 = vmatprep.subr.bf16.mxu0 0
      %1202 = vmatpush1.bf16.msra.mxu0 %v1179
      %1203 = vmatprep.subr.bf16.mxu0 0
      %1204 = vmatpush1.bf16.msra.mxu0 %v1180
      %1205 = vmatprep.subr.bf16.mxu0 0
      %1206 = vmatpush1.bf16.msra.mxu0 0
      %1207 = vmatprep.subr.bf16.mxu0 0
      %1208 = vmatpush1.bf16.msra.mxu0 0
      %1209 = vmatprep.subr.bf16.mxu0 0
      %1210 = vmatpush1.bf16.msra.mxu0 0
      %1211 = vmatprep.subr.bf16.mxu0 0
      %1212 = vmatpush1.bf16.msra.mxu0 0
      %1213 = vmatprep.subr.bf16.mxu0 0
      %1214 = vmatpush1.bf16.msra.mxu0 0
      %1215 = vmatprep.subr.bf16.mxu0 0
      %1216 = vmatpush1.bf16.msra.mxu0 0
      %1217 = vmatprep.subr.bf16.mxu0 0
      %1218 = vmatpush1.bf16.msra.mxu0 0
      %1219 = vmatprep.subr.bf16.mxu0 0
      %1220 = vmatpush1.bf16.msra.mxu0 0
      %1221 = vmatprep.mubr.bf16.mxu0 0
      %1222 = vmatmul.mubr.bf16.gmra.mrb[0].mxu0 %v1118
      %v1223 = vpop.f32.mrb[0].mxu0
      %v1224 = vadd.f32 0.0, %v1223
      %v1225 = vpop.f32.mrb[0].mxu0
      %v1226 = vpop.f32.mrb[0].mxu0
      %v1227 = vadd.f32 0.0, %v1226
      %v1228 = vpop.f32.mrb[0].mxu0
      %1229 = vmatprep.mubr.bf16.mxu0 0
      %1230 = vmatmul.mubr.bf16.gmra.mrb[0].mxu0 %v1122
      %v1231 = vpop.f32.mrb[0].mxu0
      %v1232 = vadd.f32 0.0, %v1231
      %v1233 = vpop.f32.mrb[0].mxu0
      %v1234 = vpop.f32.mrb[0].mxu0
      %v1235 = vadd.f32 0.0, %v1234
      %v1236 = vpop.f32.mrb[0].mxu0
      %1237 = vmatprep.mubr.bf16.mxu0 0
      %1238 = vmatmul.mubr.bf16.gmra.mrb[0].mxu0 %v1126
      %v1239 = vpop.f32.mrb[0].mxu0
      %v1240 = vadd.f32 0.0, %v1239
      %v1241 = vpop.f32.mrb[0].mxu0
      %v1242 = vpop.f32.mrb[0].mxu0
      %v1243 = vadd.f32 0.0, %v1242
      %v1244 = vpop.f32.mrb[0].mxu0
      %1245 = vmatprep.mubr.bf16.mxu0 0
      %1246 = vmatmul.mubr.bf16.gmra.mrb[0].mxu0 %v1135
      %v1247 = vpop.f32.mrb[0].mxu0
      %v1248 = vadd.f32 0.0, %v1247
      %v1249 = vpop.f32.mrb[0].mxu0
      %v1250 = vpop.f32.mrb[0].mxu0
      %v1251 = vadd.f32 0.0, %v1250
      %v1252 = vpop.f32.mrb[0].mxu0
      %1253 = vmatprep.mubr.bf16.mxu0 0
      %1254 = vmatmul.mubr.bf16.gmra.mrb[0].mxu0 %v1134
      %v1255 = vpop.f32.mrb[0].mxu0
      %v1256 = vadd.f32 0.0, %v1255
      %v1257 = vpop.f32.mrb[0].mxu0
      %v1258 = vpop.f32.mrb[0].mxu0
      %v1259 = vpop.f32.mrb[0].mxu0
      %1260 = vdwg.mxu0
      %v1261 = vadd.f32 %v1076, %v1224
      %v1262 = vadd.f32 %v1077, %v1227
      %v1263 = vadd.f32 %v1078, %v1232
      %v1264 = vadd.f32 %v1079, %v1235
      %v1265 = vadd.f32 %v1080, %v1240
      %v1266 = vadd.f32 %v1081, %v1243
      %v1267 = vadd.f32 %v1082, %v1248
      %v1268 = vadd.f32 %v1083, %v1251
      %v1269 = vadd.f32 %v1084, %v1256
      %v1270 = vld [vmem:[%s165 + $0x8] sm:$0xe]
      %v1271 = vld [vmem:[%s165 + $0xc] sm:$0xf]
      %v1272 = vld [vmem:[%s165 + $0x10] sm:$0xf]
      %v1273 = vld [vmem:[%s165 + $0x14] sm:$0xf]
      %v1274 = vld [vmem:[%s165 + $0x18] sm:$0xf]
      %v1275 = vld [vmem:[%s165 + $0x1c] sm:$0xf]
      %v1276 = vld [vmem:[%s165 + $0x20] sm:$0xf]
      %v1277 = vld [vmem:[%s165 + $0x24] sm:$0xf]
      %v1278 = vld [vmem:[%s165 + $0x28] sm:$0xf]
      %v1279 = vld [vmem:[%s165 + $0x2c] sm:$0x1]
      %s1280 = scalar_lea.vmem %s1, 384
      %v1281 = vld [vmem:[%s1280] sm:$0xf]
      %v1282 = vld [vmem:[%s1280 + $0x4] sm:$0xf]
      %v1283 = vld [vmem:[%s1280 + $0x8] sm:$0xf]
      %v1284 = vld [vmem:[%s1280 + $0xc] sm:$0xf]
      %v1285 = vld [vmem:[%s1280 + $0x10] sm:$0xf]
      %v1286 = vld [vmem:[%s1280 + $0x14] sm:$0xf]
      %v1287 = vld [vmem:[%s1280 + $0x18] sm:$0xf]
      %v1288 = vld [vmem:[%s1280 + $0x1c] sm:$0xf]
      %v1289 = vld [vmem:[%s1280 + $0x20] sm:$0xf]
      %v1290 = vld [vmem:[%s1280 + $0x24] sm:$0xf]
      %v1291 = vld [vmem:[%s1280 + $0x28] sm:$0xf]
      %v1292 = vld [vmem:[%s1280 + $0x2c] sm:$0xf]
      %v1293 = vld [vmem:[%s1280 + $0x30] sm:$0xf]
      %v1294 = vld [vmem:[%s1280 + $0x34] sm:$0xf]
      %v1295 = vld [vmem:[%s1280 + $0x38] sm:$0xf]
      %v1296 = vld [vmem:[%s1280 + $0x3c] sm:$0xf]
      %v1307 = vunpack.c.l.b16 %v1270
      %v1308 = vunpack.c.l.b16 %v1271
      %v1309 = vunpack.c.l.b16 %v1272
      %v1310 = vunpack.c.l.b16 %v1273
      %v1311 = vunpack.c.l.b16 %v1274
      %v1312 = vunpack.c.l.b16 %v1275
      %v1313 = vunpack.c.l.b16 %v1276
      %v1314 = vunpack.c.l.b16 %v1277
      %v1315 = vunpack.c.l.b16 %v1278
      %v1316 = vunpack.c.l.b16 %v1279
      %v1317 = vpack.c.b16 %v1308, %v1307
      %v1318 = vpack.c.b16 %v1310, %v1309
      %v1319 = vpack.c.b16 %v1312, %v1311
      %v1320 = vpack.c.b16 %v1314, %v1313
      %v1321 = vpack.c.b16 %v1316, %v1315
      %v1322 = vrot.slane %v1317, 1
      %v1323 = vrot.slane %v1318, 1
      %v1324 = vsel %vm552, %v1322, %v1323
      %v1325 = vrot.slane %v1319, 1
      %v1326 = vsel %vm552, %v1323, %v1325
      %v1327 = vrot.slane %v1320, 1
      %v1328 = vsel %vm552, %v1325, %v1327
      %v1329 = vrot.slane %v1321, 1
      %v1330 = vsel %vm552, %v1327, %v1329
      %v1352 = vunpack.c.l.b16 %v1281
      %v1353 = vunpack.c.l.b16 %v1282
      %v1354 = vunpack.c.l.b16 %v1283
      %v1355 = vunpack.c.l.b16 %v1284
      %v1356 = vunpack.c.l.b16 %v1285
      %v1357 = vunpack.c.l.b16 %v1286
      %v1358 = vunpack.c.l.b16 %v1287
      %v1359 = vunpack.c.l.b16 %v1288
      %v1360 = vunpack.c.l.b16 %v1289
      %v1361 = vunpack.c.l.b16 %v1290
      %v1362 = vunpack.c.l.b16 %v1291
      %v1363 = vunpack.c.l.b16 %v1292
      %v1364 = vunpack.c.l.b16 %v1293
      %v1365 = vunpack.c.l.b16 %v1294
      %v1366 = vunpack.c.l.b16 %v1295
      %v1367 = vunpack.c.l.b16 %v1296
      %v1368 = vpack.c.b16 %v1353, %v1352
      %v1369 = vpack.c.b16 %v1355, %v1354
      %v1370 = vpack.c.b16 %v1357, %v1356
      %v1371 = vpack.c.b16 %v1359, %v1358
      %v1372 = vpack.c.b16 %v1361, %v1360
      %v1373 = vpack.c.b16 %v1363, %v1362
      %v1374 = vpack.c.b16 %v1365, %v1364
      %v1375 = vpack.c.b16 %v1367, %v1366
      %1384 = vmatprep.subr.bf16.mxu0 0
      %1385 = vmatpush1.bf16.msra.mxu0 %v1368
      %1386 = vmatprep.subr.bf16.mxu0 0
      %1387 = vmatpush1.bf16.msra.mxu0 %v1369
      %1388 = vmatprep.subr.bf16.mxu0 0
      %1389 = vmatpush1.bf16.msra.mxu0 %v1370
      %1390 = vmatprep.subr.bf16.mxu0 0
      %1391 = vmatpush1.bf16.msra.mxu0 %v1371
      %1392 = vmatprep.subr.bf16.mxu0 0
      %1393 = vmatpush1.bf16.msra.mxu0 %v1372
      %1394 = vmatprep.subr.bf16.mxu0 0
      %1395 = vmatpush1.bf16.msra.mxu0 %v1373
      %1396 = vmatprep.subr.bf16.mxu0 0
      %1397 = vmatpush1.bf16.msra.mxu0 %v1374
      %1398 = vmatprep.subr.bf16.mxu0 0
      %1399 = vmatpush1.bf16.msra.mxu0 %v1375
      %1400 = vmatprep.subr.bf16.mxu0 0
      %1401 = vmatpush1.bf16.msra.mxu0 0
      %1402 = vmatprep.subr.bf16.mxu0 0
      %1403 = vmatpush1.bf16.msra.mxu0 0
      %1404 = vmatprep.subr.bf16.mxu0 0
      %1405 = vmatpush1.bf16.msra.mxu0 0
      %1406 = vmatprep.subr.bf16.mxu0 0
      %1407 = vmatpush1.bf16.msra.mxu0 0
      %1408 = vmatprep.subr.bf16.mxu0 0
      %1409 = vmatpush1.bf16.msra.mxu0 0
      %1410 = vmatprep.subr.bf16.mxu0 0
      %1411 = vmatpush1.bf16.msra.mxu0 0
      %1412 = vmatprep.subr.bf16.mxu0 0
      %1413 = vmatpush1.bf16.msra.mxu0 0
      %1414 = vmatprep.subr.bf16.mxu0 0
      %1415 = vmatpush1.bf16.msra.mxu0 0
      %1416 = vmatprep.mubr.bf16.mxu0 0
      %1417 = vmatmul.mubr.bf16.gmra.mrb[0].mxu0 %v1324
      %v1418 = vpop.f32.mrb[0].mxu0
      %v1419 = vadd.f32 0.0, %v1418
      %v1420 = vpop.f32.mrb[0].mxu0
      %v1421 = vpop.f32.mrb[0].mxu0
      %v1422 = vadd.f32 0.0, %v1421
      %v1423 = vpop.f32.mrb[0].mxu0
      %1424 = vmatprep.mubr.bf16.mxu0 0
      %1425 = vmatmul.mubr.bf16.gmra.mrb[0].mxu0 %v1326
      %v1426 = vpop.f32.mrb[0].mxu0
      %v1427 = vadd.f32 0.0, %v1426
      %v1428 = vpop.f32.mrb[0].mxu0
      %v1429 = vpop.f32.mrb[0].mxu0
      %v1430 = vadd.f32 0.0, %v1429
      %v1431 = vpop.f32.mrb[0].mxu0
      %1432 = vmatprep.mubr.bf16.mxu0 0
      %1433 = vmatmul.mubr.bf16.gmra.mrb[0].mxu0 %v1328
      %v1434 = vpop.f32.mrb[0].mxu0
      %v1435 = vadd.f32 0.0, %v1434
      %v1436 = vpop.f32.mrb[0].mxu0
      %v1437 = vpop.f32.mrb[0].mxu0
      %v1438 = vadd.f32 0.0, %v1437
      %v1439 = vpop.f32.mrb[0].mxu0
      %1440 = vmatprep.mubr.bf16.mxu0 0
      %1441 = vmatmul.mubr.bf16.gmra.mrb[0].mxu0 %v1330
      %v1442 = vpop.f32.mrb[0].mxu0
      %v1443 = vadd.f32 0.0, %v1442
      %v1444 = vpop.f32.mrb[0].mxu0
      %v1445 = vpop.f32.mrb[0].mxu0
      %v1446 = vadd.f32 0.0, %v1445
      %v1447 = vpop.f32.mrb[0].mxu0
      %1448 = vmatprep.mubr.bf16.mxu0 0
      %1449 = vmatmul.mubr.bf16.gmra.mrb[0].mxu0 %v1329
      %v1450 = vpop.f32.mrb[0].mxu0
      %v1451 = vadd.f32 0.0, %v1450
      %v1452 = vpop.f32.mrb[0].mxu0
      %v1453 = vpop.f32.mrb[0].mxu0
      %v1454 = vpop.f32.mrb[0].mxu0
      %1455 = vdwg.mxu0
      %v1456 = vadd.f32 %v1261, %v1419
      %v1457 = vadd.f32 %v1262, %v1422
      %v1458 = vadd.f32 %v1263, %v1427
      %v1459 = vadd.f32 %v1264, %v1430
      %v1460 = vadd.f32 %v1265, %v1435
      %v1461 = vadd.f32 %v1266, %v1438
      %v1462 = vadd.f32 %v1267, %v1443
      %v1463 = vadd.f32 %v1268, %v1446
      %v1464 = vadd.f32 %v1269, %v1451
      %v1465 = vld [vmem:[%s165 + $0x2c] sm:$0x3]
      %s1466 = scalar_lea.vmem %s1, 448
      %v1467 = vld [vmem:[%s1466] sm:$0xf]
      %v1468 = vld [vmem:[%s1466 + $0x4] sm:$0xf]
      %v1469 = vld [vmem:[%s1466 + $0x8] sm:$0xf]
      %v1470 = vld [vmem:[%s1466 + $0xc] sm:$0xf]
      %v1471 = vld [vmem:[%s1466 + $0x10] sm:$0xf]
      %v1472 = vld [vmem:[%s1466 + $0x14] sm:$0xf]
      %v1473 = vld [vmem:[%s1466 + $0x18] sm:$0xf]
      %v1474 = vld [vmem:[%s1466 + $0x1c] sm:$0xf]
      %v1475 = vld [vmem:[%s1466 + $0x20] sm:$0xf]
      %v1476 = vld [vmem:[%s1466 + $0x24] sm:$0xf]
      %v1477 = vld [vmem:[%s1466 + $0x28] sm:$0xf]
      %v1478 = vld [vmem:[%s1466 + $0x2c] sm:$0xf]
      %v1479 = vld [vmem:[%s1466 + $0x30] sm:$0xf]
      %v1480 = vld [vmem:[%s1466 + $0x34] sm:$0xf]
      %v1481 = vld [vmem:[%s1466 + $0x38] sm:$0xf]
      %v1482 = vld [vmem:[%s1466 + $0x3c] sm:$0xf]
      %v1484 = vunpack.c.l.b16 %v1465
      %v1485 = vpack.c.b16 %v1484, %v1315
      %v1487 = vshrl.u32 %v1317, 16
      %v1489 = vrot.slane %v1487, 1
      %v1490 = vshll.u32 %v1317, 16
      %v1492 = vrot.slane %v1490, 2
      %v1493 = vor.u32 %v1489, %v1492
      %v1495 = vshrl.u32 %v1318, 16
      %v1497 = vrot.slane %v1495, 1
      %v1498 = vshll.u32 %v1318, 16
      %v1500 = vrot.slane %v1498, 2
      %v1501 = vor.u32 %v1497, %v1500
      %v1502 = vsel %vm1106, %v1493, %v1501
      %v1504 = vshrl.u32 %v1319, 16
      %v1506 = vrot.slane %v1504, 1
      %v1507 = vshll.u32 %v1319, 16
      %v1509 = vrot.slane %v1507, 2
      %v1510 = vor.u32 %v1506, %v1509
      %v1511 = vsel %vm1106, %v1501, %v1510
      %v1513 = vshrl.u32 %v1320, 16
      %v1515 = vrot.slane %v1513, 1
      %v1516 = vshll.u32 %v1320, 16
      %v1518 = vrot.slane %v1516, 2
      %v1519 = vor.u32 %v1515, %v1518
      %v1520 = vsel %vm1106, %v1510, %v1519
      %v1522 = vshrl.u32 %v1485, 16
      %v1524 = vrot.slane %v1522, 1
      %v1525 = vshll.u32 %v1485, 16
      %v1527 = vrot.slane %v1525, 2
      %v1528 = vor.u32 %v1524, %v1527
      %v1529 = vsel %vm1106, %v1519, %v1528
      %v1551 = vunpack.c.l.b16 %v1467
      %v1552 = vunpack.c.l.b16 %v1468
      %v1553 = vunpack.c.l.b16 %v1469
      %v1554 = vunpack.c.l.b16 %v1470
      %v1555 = vunpack.c.l.b16 %v1471
      %v1556 = vunpack.c.l.b16 %v1472
      %v1557 = vunpack.c.l.b16 %v1473
      %v1558 = vunpack.c.l.b16 %v1474
      %v1559 = vunpack.c.l.b16 %v1475
      %v1560 = vunpack.c.l.b16 %v1476
      %v1561 = vunpack.c.l.b16 %v1477
      %v1562 = vunpack.c.l.b16 %v1478
      %v1563 = vunpack.c.l.b16 %v1479
      %v1564 = vunpack.c.l.b16 %v1480
      %v1565 = vunpack.c.l.b16 %v1481
      %v1566 = vunpack.c.l.b16 %v1482
      %v1567 = vpack.c.b16 %v1552, %v1551
      %v1568 = vpack.c.b16 %v1554, %v1553
      %v1569 = vpack.c.b16 %v1556, %v1555
      %v1570 = vpack.c.b16 %v1558, %v1557
      %v1571 = vpack.c.b16 %v1560, %v1559
      %v1572 = vpack.c.b16 %v1562, %v1561
      %v1573 = vpack.c.b16 %v1564, %v1563
      %v1574 = vpack.c.b16 %v1566, %v1565
      %1583 = vmatprep.subr.bf16.mxu0 0
      %1584 = vmatpush1.bf16.msra.mxu0 %v1567
      %1585 = vmatprep.subr.bf16.mxu0 0
      %1586 = vmatpush1.bf16.msra.mxu0 %v1568
      %1587 = vmatprep.subr.bf16.mxu0 0
      %1588 = vmatpush1.bf16.msra.mxu0 %v1569
      %1589 = vmatprep.subr.bf16.mxu0 0
      %1590 = vmatpush1.bf16.msra.mxu0 %v1570
      %1591 = vmatprep.subr.bf16.mxu0 0
      %1592 = vmatpush1.bf16.msra.mxu0 %v1571
      %1593 = vmatprep.subr.bf16.mxu0 0
      %1594 = vmatpush1.bf16.msra.mxu0 %v1572
      %1595 = vmatprep.subr.bf16.mxu0 0
      %1596 = vmatpush1.bf16.msra.mxu0 %v1573
      %1597 = vmatprep.subr.bf16.mxu0 0
      %1598 = vmatpush1.bf16.msra.mxu0 %v1574
      %1599 = vmatprep.subr.bf16.mxu0 0
      %1600 = vmatpush1.bf16.msra.mxu0 0
      %1601 = vmatprep.subr.bf16.mxu0 0
      %1602 = vmatpush1.bf16.msra.mxu0 0
      %1603 = vmatprep.subr.bf16.mxu0 0
      %1604 = vmatpush1.bf16.msra.mxu0 0
      %1605 = vmatprep.subr.bf16.mxu0 0
      %1606 = vmatpush1.bf16.msra.mxu0 0
      %1607 = vmatprep.subr.bf16.mxu0 0
      %1608 = vmatpush1.bf16.msra.mxu0 0
      %1609 = vmatprep.subr.bf16.mxu0 0
      %1610 = vmatpush1.bf16.msra.mxu0 0
      %1611 = vmatprep.subr.bf16.mxu0 0
      %1612 = vmatpush1.bf16.msra.mxu0 0
      %1613 = vmatprep.subr.bf16.mxu0 0
      %1614 = vmatpush1.bf16.msra.mxu0 0
      %1615 = vmatprep.mubr.bf16.mxu0 0
      %1616 = vmatmul.mubr.bf16.gmra.mrb[0].mxu0 %v1502
      %v1617 = vpop.f32.mrb[0].mxu0
      %v1618 = vadd.f32 0.0, %v1617
      %v1619 = vpop.f32.mrb[0].mxu0
      %v1620 = vpop.f32.mrb[0].mxu0
      %v1621 = vadd.f32 0.0, %v1620
      %v1622 = vpop.f32.mrb[0].mxu0
      %1623 = vmatprep.mubr.bf16.mxu0 0
      %1624 = vmatmul.mubr.bf16.gmra.mrb[0].mxu0 %v1511
      %v1625 = vpop.f32.mrb[0].mxu0
      %v1626 = vadd.f32 0.0, %v1625
      %v1627 = vpop.f32.mrb[0].mxu0
      %v1628 = vpop.f32.mrb[0].mxu0
      %v1629 = vadd.f32 0.0, %v1628
      %v1630 = vpop.f32.mrb[0].mxu0
      %1631 = vmatprep.mubr.bf16.mxu0 0
      %1632 = vmatmul.mubr.bf16.gmra.mrb[0].mxu0 %v1520
      %v1633 = vpop.f32.mrb[0].mxu0
      %v1634 = vadd.f32 0.0, %v1633
      %v1635 = vpop.f32.mrb[0].mxu0
      %v1636 = vpop.f32.mrb[0].mxu0
      %v1637 = vadd.f32 0.0, %v1636
      %v1638 = vpop.f32.mrb[0].mxu0
      %1639 = vmatprep.mubr.bf16.mxu0 0
      %1640 = vmatmul.mubr.bf16.gmra.mrb[0].mxu0 %v1529
      %v1641 = vpop.f32.mrb[0].mxu0
      %v1642 = vadd.f32 0.0, %v1641
      %v1643 = vpop.f32.mrb[0].mxu0
      %v1644 = vpop.f32.mrb[0].mxu0
      %v1645 = vadd.f32 0.0, %v1644
      %v1646 = vpop.f32.mrb[0].mxu0
      %1647 = vmatprep.mubr.bf16.mxu0 0
      %1648 = vmatmul.mubr.bf16.gmra.mrb[0].mxu0 %v1528
      %v1649 = vpop.f32.mrb[0].mxu0
      %v1650 = vadd.f32 0.0, %v1649
      %v1651 = vpop.f32.mrb[0].mxu0
      %v1652 = vpop.f32.mrb[0].mxu0
      %v1653 = vpop.f32.mrb[0].mxu0
      %1654 = vdwg.mxu0
      %v1655 = vadd.f32 %v1456, %v1618
      %v1656 = vadd.f32 %v1457, %v1621
      %v1657 = vadd.f32 %v1458, %v1626
      %v1658 = vadd.f32 %v1459, %v1629
      %v1659 = vadd.f32 %v1460, %v1634
      %v1660 = vadd.f32 %v1461, %v1637
      %v1661 = vadd.f32 %v1462, %v1642
      %v1662 = vadd.f32 %v1463, %v1645
      %v1663 = vadd.f32 %v1464, %v1650
      %v1664 = vld [vmem:[%s165 + $0x8] sm:$0xc]
      %s1665 = scalar_lea.vmem %s1, 512
      %v1666 = vld [vmem:[%s1665] sm:$0xf]
      %v1667 = vld [vmem:[%s1665 + $0x4] sm:$0xf]
      %v1668 = vld [vmem:[%s1665 + $0x8] sm:$0xf]
      %v1669 = vld [vmem:[%s1665 + $0xc] sm:$0xf]
      %v1670 = vld [vmem:[%s1665 + $0x10] sm:$0xf]
      %v1671 = vld [vmem:[%s1665 + $0x14] sm:$0xf]
      %v1672 = vld [vmem:[%s1665 + $0x18] sm:$0xf]
      %v1673 = vld [vmem:[%s1665 + $0x1c] sm:$0xf]
      %v1674 = vld [vmem:[%s1665 + $0x20] sm:$0xf]
      %v1675 = vld [vmem:[%s1665 + $0x24] sm:$0xf]
      %v1676 = vld [vmem:[%s1665 + $0x28] sm:$0xf]
      %v1677 = vld [vmem:[%s1665 + $0x2c] sm:$0xf]
      %v1678 = vld [vmem:[%s1665 + $0x30] sm:$0xf]
      %v1679 = vld [vmem:[%s1665 + $0x34] sm:$0xf]
      %v1680 = vld [vmem:[%s1665 + $0x38] sm:$0xf]
      %v1681 = vld [vmem:[%s1665 + $0x3c] sm:$0xf]
      %v1683 = vunpack.c.l.b16 %v1664
      %v1684 = vpack.c.b16 %v1308, %v1683
      %vm1685 = vcmask 1045504
      %v1686 = vrot.slane %v1684, 2
      %v1687 = vrot.slane %v1318, 2
      %v1688 = vsel %vm1685, %v1686, %v1687
      %v1689 = vrot.slane %v1319, 2
      %v1690 = vsel %vm1685, %v1687, %v1689
      %v1691 = vrot.slane %v1320, 2
      %v1692 = vsel %vm1685, %v1689, %v1691
      %v1693 = vrot.slane %v1485, 2
      %v1694 = vsel %vm1685, %v1691, %v1693
      %v1716 = vunpack.c.l.b16 %v1666
      %v1717 = vunpack.c.l.b16 %v1667
      %v1718 = vunpack.c.l.b16 %v1668
      %v1719 = vunpack.c.l.b16 %v1669
      %v1720 = vunpack.c.l.b16 %v1670
      %v1721 = vunpack.c.l.b16 %v1671
      %v1722 = vunpack.c.l.b16 %v1672
      %v1723 = vunpack.c.l.b16 %v1673
      %v1724 = vunpack.c.l.b16 %v1674
      %v1725 = vunpack.c.l.b16 %v1675
      %v1726 = vunpack.c.l.b16 %v1676
      %v1727 = vunpack.c.l.b16 %v1677
      %v1728 = vunpack.c.l.b16 %v1678
      %v1729 = vunpack.c.l.b16 %v1679
      %v1730 = vunpack.c.l.b16 %v1680
      %v1731 = vunpack.c.l.b16 %v1681
      %v1732 = vpack.c.b16 %v1717, %v1716
      %v1733 = vpack.c.b16 %v1719, %v1718
      %v1734 = vpack.c.b16 %v1721, %v1720
      %v1735 = vpack.c.b16 %v1723, %v1722
      %v1736 = vpack.c.b16 %v1725, %v1724
      %v1737 = vpack.c.b16 %v1727, %v1726
      %v1738 = vpack.c.b16 %v1729, %v1728
      %v1739 = vpack.c.b16 %v1731, %v1730
      %1748 = vmatprep.subr.bf16.mxu0 0
      %1749 = vmatpush1.bf16.msra.mxu0 %v1732
      %1750 = vmatprep.subr.bf16.mxu0 0
      %1751 = vmatpush1.bf16.msra.mxu0 %v1733
      %1752 = vmatprep.subr.bf16.mxu0 0
      %1753 = vmatpush1.bf16.msra.mxu0 %v1734
      %1754 = vmatprep.subr.bf16.mxu0 0
      %1755 = vmatpush1.bf16.msra.mxu0 %v1735
      %1756 = vmatprep.subr.bf16.mxu0 0
      %1757 = vmatpush1.bf16.msra.mxu0 %v1736
      %1758 = vmatprep.subr.bf16.mxu0 0
      %1759 = vmatpush1.bf16.msra.mxu0 %v1737
      %1760 = vmatprep.subr.bf16.mxu0 0
      %1761 = vmatpush1.bf16.msra.mxu0 %v1738
      %1762 = vmatprep.subr.bf16.mxu0 0
      %1763 = vmatpush1.bf16.msra.mxu0 %v1739
      %1764 = vmatprep.subr.bf16.mxu0 0
      %1765 = vmatpush1.bf16.msra.mxu0 0
      %1766 = vmatprep.subr.bf16.mxu0 0
      %1767 = vmatpush1.bf16.msra.mxu0 0
      %1768 = vmatprep.subr.bf16.mxu0 0
      %1769 = vmatpush1.bf16.msra.mxu0 0
      %1770 = vmatprep.subr.bf16.mxu0 0
      %1771 = vmatpush1.bf16.msra.mxu0 0
      %1772 = vmatprep.subr.bf16.mxu0 0
      %1773 = vmatpush1.bf16.msra.mxu0 0
      %1774 = vmatprep.subr.bf16.mxu0 0
      %1775 = vmatpush1.bf16.msra.mxu0 0
      %1776 = vmatprep.subr.bf16.mxu0 0
      %1777 = vmatpush1.bf16.msra.mxu0 0
      %1778 = vmatprep.subr.bf16.mxu0 0
      %1779 = vmatpush1.bf16.msra.mxu0 0
      %1780 = vmatprep.mubr.bf16.mxu0 0
      %1781 = vmatmul.mubr.bf16.gmra.mrb[0].mxu0 %v1688
      %v1782 = vpop.f32.mrb[0].mxu0
      %v1783 = vadd.f32 0.0, %v1782
      %v1784 = vpop.f32.mrb[0].mxu0
      %v1785 = vpop.f32.mrb[0].mxu0
      %v1786 = vadd.f32 0.0, %v1785
      %v1787 = vpop.f32.mrb[0].mxu0
      %1788 = vmatprep.mubr.bf16.mxu0 0
      %1789 = vmatmul.mubr.bf16.gmra.mrb[0].mxu0 %v1690
      %v1790 = vpop.f32.mrb[0].mxu0
      %v1791 = vadd.f32 0.0, %v1790
      %v1792 = vpop.f32.mrb[0].mxu0
      %v1793 = vpop.f32.mrb[0].mxu0
      %v1794 = vadd.f32 0.0, %v1793
      %v1795 = vpop.f32.mrb[0].mxu0
      %1796 = vmatprep.mubr.bf16.mxu0 0
      %1797 = vmatmul.mubr.bf16.gmra.mrb[0].mxu0 %v1692
      %v1798 = vpop.f32.mrb[0].mxu0
      %v1799 = vadd.f32 0.0, %v1798
      %v1800 = vpop.f32.mrb[0].mxu0
      %v1801 = vpop.f32.mrb[0].mxu0
      %v1802 = vadd.f32 0.0, %v1801
      %v1803 = vpop.f32.mrb[0].mxu0
      %1804 = vmatprep.mubr.bf16.mxu0 0
      %1805 = vmatmul.mubr.bf16.gmra.mrb[0].mxu0 %v1694
      %v1806 = vpop.f32.mrb[0].mxu0
      %v1807 = vadd.f32 0.0, %v1806
      %v1808 = vpop.f32.mrb[0].mxu0
      %v1809 = vpop.f32.mrb[0].mxu0
      %v1810 = vadd.f32 0.0, %v1809
      %v1811 = vpop.f32.mrb[0].mxu0
      %1812 = vmatprep.mubr.bf16.mxu0 0
      %1813 = vmatmul.mubr.bf16.gmra.mrb[0].mxu0 %v1693
      %v1814 = vpop.f32.mrb[0].mxu0
      %v1815 = vadd.f32 0.0, %v1814
      %v1816 = vpop.f32.mrb[0].mxu0
      %v1817 = vpop.f32.mrb[0].mxu0
      %v1818 = vpop.f32.mrb[0].mxu0
      %1819 = vdwg.mxu0
      %v1820 = vadd.f32 %v1655, %v1783
      %v1821 = vadd.f32 %v1656, %v1786
      %v1822 = vadd.f32 %v1657, %v1791
      %v1823 = vadd.f32 %v1658, %v1794
      %v1824 = vadd.f32 %v1659, %v1799
      %v1825 = vadd.f32 %v1660, %v1802
      %v1826 = vadd.f32 %v1661, %v1807
      %v1827 = vadd.f32 %v1662, %v1810
      %v1828 = vadd.f32 %v1663, %v1815
      %v1829 = vld [vmem:[%s2] sm:$0x1]
      %v1831 = vlaneseq
      %v1832 = vshrl.u32 %v1831, 7
      %v1833 = vsub.s32 0, %v1832
      %v1834 = vrot.slane %v1829, %v1833
      %v1836 = vadd.f32 %v1820, %v1834
      %v1837 = vadd.f32 %v1821, %v1834
      %v1838 = vadd.f32 %v1822, %v1834
      %v1839 = vadd.f32 %v1823, %v1834
      %v1840 = vadd.f32 %v1824, %v1834
      %v1841 = vadd.f32 %v1825, %v1834
      %v1842 = vadd.f32 %v1826, %v1834
      %v1843 = vadd.f32 %v1827, %v1834
      %v1844 = vadd.f32 %v1828, %v1834
      %v1845 = vmax.f32 %v1836, 0.0
      %v1846 = vmax.f32 %v1837, 0.0
      %v1847 = vmax.f32 %v1838, 0.0
      %v1848 = vmax.f32 %v1839, 0.0
      %v1849 = vmax.f32 %v1840, 0.0
      %v1850 = vmax.f32 %v1841, 0.0
      %v1851 = vmax.f32 %v1842, 0.0
      %v1852 = vmax.f32 %v1843, 0.0
      %v1853 = vmax.f32 %v1844, 0.0
      %v1854 = vpack.c.bf16 %v1846, %v1845
      %v1855 = vpack.c.bf16 %v1848, %v1847
      %v1856 = vpack.c.bf16 %v1850, %v1849
      %v1857 = vpack.c.bf16 %v1852, %v1851
      %v1858 = vpack.c.bf16 %v1853, %v1853
      %v1864 = vunpack.c.l.b16 %v1854
      %v1865 = vunpack.c.h.b16 %v1854
      %v1866 = vunpack.c.l.b16 %v1855
      %v1867 = vunpack.c.h.b16 %v1855
      %v1868 = vunpack.c.l.b16 %v1856
      %v1869 = vunpack.c.h.b16 %v1856
      %v1870 = vunpack.c.l.b16 %v1857
      %v1871 = vunpack.c.h.b16 %v1857
      %v1872 = vunpack.c.l.b16 %v1858
      %v1873 = vpack.c.b16 %v1864, %v1864
      %v1874 = vpack.c.b16 %v1865, %v1865
      %v1875 = vpack.c.b16 %v1866, %v1866
      %v1876 = vpack.c.b16 %v1867, %v1867
      %v1877 = vpack.c.b16 %v1868, %v1868
      %v1878 = vpack.c.b16 %v1869, %v1869
      %v1879 = vpack.c.b16 %v1870, %v1870
      %v1880 = vpack.c.b16 %v1871, %v1871
      %v1881 = vpack.c.b16 %v1872, %v1872
      %1891 = vst [vmem:[%s170] sm:$0xf] %v1873
      %1892 = vst [vmem:[%s170 + $0x4] sm:$0xf] %v1874
      %1893 = vst [vmem:[%s170 + $0x8] sm:$0xf] %v1875
      %1894 = vst [vmem:[%s170 + $0xc] sm:$0xf] %v1876
      %1895 = vst [vmem:[%s170 + $0x10] sm:$0xf] %v1877
      %1896 = vst [vmem:[%s170 + $0x14] sm:$0xf] %v1878
      %1897 = vst [vmem:[%s170 + $0x18] sm:$0xf] %v1879
      %1898 = vst [vmem:[%s170 + $0x1c] sm:$0xf] %v1880
      %1899 = vst [vmem:[%s170 + $0x20] sm:$0xf] %v1881
      %p1900 = scmp.lt.s32.totalorder %s14, 1
      %s1901 = scalar_select %p1900, %s14, 1
      %s1902 = smul.addr %s1901, 9
      %s1903 = smul.addr %s1902, 4
      %s1904 = scalar_lea.vmem %s3, %s1903
      // Predicated region
      $region33: #{test_et_al_forward.5} parent=31 // pred_check
        %p1905 = pneg %p100
      $region34: #{test_et_al_forward.5} parent=31 // pred_check_branch
        %1907 = sbr.rel (%p1905) target = $region36
      $region35: #{test_et_al_forward.5} parent=31 // pred_region
        _
      $region36: #{test_et_al_forward.5} parent=31 // pred_fallthru
        _
    $region32: #{test_et_al_forward.5} parent=5 // pred_fallthru
      _
    %p1908 = scmp.le.s32.totalorder 2, %s9
    // Predicated region
    $region37: #{test_et_al_forward.5} parent=5 // pred_check
      %p1909 = pneg %p1908
    $region38: #{test_et_al_forward.5} parent=5 // pred_check_branch
      %1911 = sbr.rel (%p1909) target = $region40
    $region39: #{test_et_al_forward.5} parent=5 // pred_region
      %s1912 = ssub.s32 %s9, 2
      // Predicated region
      $region41: #{test_et_al_forward.5} parent=39 // pred_check
        %p1913 = pneg %p106
      $region42: #{test_et_al_forward.5} parent=39 // pred_check_branch
        %1915 = sbr.rel (%p1913) target = $region44
      $region43: #{test_et_al_forward.5} parent=39 // pred_region
        %p1916 = scmp.lt.s32.totalorder %s15, 1
        %s1917 = scalar_select %p1916, %s15, 1
        %s1918 = smul.addr %s1917, 9
        %s1919 = smul.addr %s1918, 4
        %s1920 = scalar_lea.vmem %s3, %s1919
      $region44: #{test_et_al_forward.5} parent=39 // pred_fallthru
        _
    $region40: #{test_et_al_forward.5} parent=5 // pred_fallthru
      _
  $region6: #{test_et_al_forward.5} parent=0 // loop_footer
    %s13 = sadd.s32 1, %s9
  $region7: #{test_et_al_forward.5} parent=0 // loop_footer_branch
    %8 = sbr.rel target = $region3
  $region8: #{test_et_al_forward.5} parent=0 // loop_exit
    _

// kernel: test_et_al_forward.6
$region0: #{test_et_al_forward.6}
  #allocation0 [shape = 'u32[]', space=smem, size = 0x4, offset = 0x4, fixed_abs, tag = 'smem constant byte address 0x4 - core index']
  #allocation1 [shape = 'u32[144,128]{1,0:T(1,128)}', space=vmem, size = 0x12000, scoped, tag = 'internal scratch']
  %s0 = inlined_call_operand.vmem [shape: bf16[2,32,128], index: 0, kind: input, shape index: {}]
  %s1 = inlined_call_operand.vmem [shape: bf16[9,128,256], index: 1, kind: input, shape index: {}]
  %s2 = inlined_call_operand.vmem [shape: f32[1,256], index: 2, kind: input, shape index: {}]
  %s3 = inlined_call_operand.vmem [shape: bf16[2,20,256], index: 3, kind: output, shape index: {}]
  %s4 = sld [smem:[#allocation0]]
  $region45: #{test_et_al_forward.6} parent=0
    _
  %s6 = ssub.s32 1, %s4
  %s7 = scalar_select 0, %s6, %s4
  loop: start=0, step=1, limit=4
  $region2: #{test_et_al_forward.6} parent=0 // loop_pre_header
    _
  $region3: #{test_et_al_forward.6} parent=0 // loop_header
    %s9 = sphi 0, %s13
    %p10 = scmp.ge.s32.totalorder %s9, 4
    %s19 = sphi 0, %s21
    %s22 = sphi 0, %s19
    %s23 = sphi 0, %s22
    %s39 = sphi 0, %s23
    %s43 = sphi 0, %s43
    %s45 = sphi 0, %s43
    %s46 = sphi 0, %s45
    %s60 = sphi 0, %s46
    %s64 = sphi 0, %s64
    %s66 = sphi 0, %s64
    %s67 = sphi 0, %s66
    %s81 = sphi 0, %s67
    %s87 = sphi 0, %s89
    %s90 = sphi 0, %s87
    %s91 = sphi 0, %s90
    %s107 = sphi 0, %s91
  $region4: #{test_et_al_forward.6} parent=0 // loop_header_branch
    %12 = sbr.rel (%p10) target = $region8
  $region5: #{test_et_al_forward.6} parent=0 // loop_body
    %s14 = ssub.s32 %s9, 1
    %s15 = ssub.s32 %s9, 2
    %s16 = sadd.s32 %s9, 1
    %s17 = ssub.s32 %s9, %s16
    %p18 = scmp.eq.s32.totalorder %s17, 0
    %s20 = sadd.s32 %s19, 1
    %s21 = scalar_select %p18, %s19, %s20
    %p24 = pneg %p18
    %p25 = scmp.eq.s32.totalorder %s9, 1
    %p26 = por %p24, %p25
    %p27 = scmp.ne.s32.totalorder %s19, %s22
    %p28 = scmp.eq.s32.totalorder %s9, 0
    %p29 = por %p27, %p28
    %p30 = scmp.ne.s32.totalorder %s19, %s22
    %p31 = scmp.eq.s32.totalorder %s14, 1
    %p32 = por %p30, %p31
    %p33 = scmp.ne.s32.totalorder %s22, %s23
    %p34 = scmp.eq.s32.totalorder %s14, 0
    %p35 = por %p33, %p34
    %p36 = scmp.ne.s32.totalorder %s22, %s23
    %p37 = scmp.eq.s32.totalorder %s15, 1
    %p38 = por %p36, %p37
    %p40 = scmp.ne.s32.totalorder %s23, %s39
    %p41 = scmp.eq.s32.totalorder %s15, 0
    %p42 = por %p40, %p41
    %s44 = sadd.s32 %s43, 1
    %p47 = scmp.eq.s32.totalorder %s9, 1
    %p48 = scmp.ne.s32.totalorder %s43, %s45
    %p49 = scmp.eq.s32.totalorder %s9, 0
    %p50 = por %p48, %p49
    %p51 = scmp.ne.s32.totalorder %s43, %s45
    %p52 = scmp.eq.s32.totalorder %s14, 1
    %p53 = por %p51, %p52
    %p54 = scmp.ne.s32.totalorder %s45, %s46
    %p55 = scmp.eq.s32.totalorder %s14, 0
    %p56 = por %p54, %p55
    %p57 = scmp.ne.s32.totalorder %s45, %s46
    %p58 = scmp.eq.s32.totalorder %s15, 1
    %p59 = por %p57, %p58
    %p61 = scmp.ne.s32.totalorder %s46, %s60
    %p62 = scmp.eq.s32.totalorder %s15, 0
    %p63 = por %p61, %p62
    %s65 = sadd.s32 %s64, 1
    %p68 = scmp.eq.s32.totalorder %s9, 1
    %p69 = scmp.ne.s32.totalorder %s64, %s66
    %p70 = scmp.eq.s32.totalorder %s9, 0
    %p71 = por %p69, %p70
    %p72 = scmp.ne.s32.totalorder %s64, %s66
    %p73 = scmp.eq.s32.totalorder %s14, 1
    %p74 = por %p72, %p73
    %p75 = scmp.ne.s32.totalorder %s66, %s67
    %p76 = scmp.eq.s32.totalorder %s14, 0
    %p77 = por %p75, %p76
    %p78 = scmp.ne.s32.totalorder %s66, %s67
    %p79 = scmp.eq.s32.totalorder %s15, 1
    %p80 = por %p78, %p79
    %p82 = scmp.ne.s32.totalorder %s67, %s81
    %p83 = scmp.eq.s32.totalorder %s15, 0
    %p84 = por %p82, %p83
    %s85 = ssub.s32 %s9, %s16
    %p86 = scmp.eq.s32.totalorder %s85, 0
    %s88 = sadd.s32 %s87, 1
    %s89 = scalar_select %p86, %s87, %s88
    %p92 = pneg %p86
    %p93 = scmp.eq.s32.totalorder %s9, 1
    %p94 = por %p92, %p93
    %p95 = scmp.ne.s32.totalorder %s87, %s90
    %p96 = scmp.eq.s32.totalorder %s9, 0
    %p97 = por %p95, %p96
    %p98 = scmp.ne.s32.totalorder %s87, %s90
    %p99 = scmp.eq.s32.totalorder %s14, 1
    %p100 = por %p98, %p99
    %p101 = scmp.ne.s32.totalorder %s90, %s91
    %p102 = scmp.eq.s32.totalorder %s14, 0
    %p103 = por %p101, %p102
    %p104 = scmp.ne.s32.totalorder %s90, %s91
    %p105 = scmp.eq.s32.totalorder %s15, 1
    %p106 = por %p104, %p105
    %p108 = scmp.ne.s32.totalorder %s91, %s107
    %p109 = scmp.eq.s32.totalorder %s15, 0
    %p110 = por %p108, %p109
    %p111 = scmp.le.s32.totalorder 1, %s9
    %p112 = scmp.lt.s32.totalorder %s9, 3
    %p113 = pnand %p111, %p112
    %p114 = pneg %p113
    // Predicated region
    $region9: #{test_et_al_forward.6} parent=5 // pred_check
      _
    $region10: #{test_et_al_forward.6} parent=5 // pred_check_branch
      %116 = sbr.rel (%p113) target = $region12
    $region11: #{test_et_al_forward.6} parent=5 // pred_region
      %s117 = ssub.s32 %s9, 1
      // Predicated region
      $region13: #{test_et_al_forward.6} parent=11 // pred_check
        %p118 = pneg %p56
      $region14: #{test_et_al_forward.6} parent=11 // pred_check_branch
        %120 = sbr.rel (%p118) target = $region16
      $region15: #{test_et_al_forward.6} parent=11 // pred_region
        _
      $region16: #{test_et_al_forward.6} parent=11 // pred_fallthru
        _
      // Predicated region
      $region17: #{test_et_al_forward.6} parent=11 // pred_check
        %p121 = pneg %p77
      $region18: #{test_et_al_forward.6} parent=11 // pred_check_branch
        %123 = sbr.rel (%p121) target = $region20
      $region19: #{test_et_al_forward.6} parent=11 // pred_region
        _
      $region20: #{test_et_al_forward.6} parent=11 // pred_fallthru
        _
    $region12: #{test_et_al_forward.6} parent=5 // pred_fallthru
      _
    %p124 = scmp.lt.s32.totalorder %s9, 2
    // Predicated region
    $region21: #{test_et_al_forward.6} parent=5 // pred_check
      %p125 = pneg %p124
    $region22: #{test_et_al_forward.6} parent=5 // pred_check_branch
      %127 = sbr.rel (%p125) target = $region24
    $region23: #{test_et_al_forward.6} parent=5 // pred_region
      // Predicated region
      $region25: #{test_et_al_forward.6} parent=23 // pred_check
        %p128 = pneg %p29
      $region26: #{test_et_al_forward.6} parent=23 // pred_check_branch
        %130 = sbr.rel (%p128) target = $region28
      $region27: #{test_et_al_forward.6} parent=23 // pred_region
        %p131 = scmp.lt.s32.totalorder %s9, 1
        %s132 = scalar_select %p131, %s9, 1
        %s133 = smul.addr %s132, 4
        %s134 = smul.addr %s133, 4
        %s135 = scalar_lea.vmem %s0, %s134
      $region28: #{test_et_al_forward.6} parent=23 // pred_fallthru
        _
    $region24: #{test_et_al_forward.6} parent=5 // pred_fallthru
      _
    %p136 = scmp.le.s32.totalorder 1, %s9
    %p137 = scmp.lt.s32.totalorder %s9, 3
    %p138 = pnand %p136, %p137
    %p139 = pneg %p138
    // Predicated region
    $region29: #{test_et_al_forward.6} parent=5 // pred_check
      _
    $region30: #{test_et_al_forward.6} parent=5 // pred_check_branch
      %141 = sbr.rel (%p138) target = $region32
    $region31: #{test_et_al_forward.6} parent=5 // pred_region
      %s142 = ssub.s32 %s9, 1
      %p143 = scmp.lt.s32.totalorder %s14, 1
      %s144 = scalar_select %p143, %s14, 1
      %s145 = smul.addr %s144, 4
      %s146 = smul.addr %s145, 4
      %s147 = scalar_lea.vmem %s0, %s146
      %p148 = pneg %p35
      %p149 = pneg %p32
      %p150 = pneg %p56
      %p151 = pneg %p53
      %p152 = pneg %p77
      %p153 = pneg %p74
      %p154 = pneg %p103
      %p155 = pneg %p100
      %p156 = scmp.lt.s32.totalorder %s14, 1
      %s157 = scalar_select %p156, %s14, 1
      %s158 = smul.addr %s157, 6
      %s159 = smul.addr %s158, 4
      %s160 = scalar_lea.vmem %s3, %s159
      %p161 = scmp.lt.s32.totalorder %s14, 1
      %s162 = scalar_select %p161, %s14, 1
      %s163 = smul.addr %s162, 4
      %s164 = smul.addr %s163, 4
      %s165 = scalar_lea.vmem %s0, %s164
      %p166 = scmp.lt.s32.totalorder %s14, 1
      %s167 = scalar_select %p166, %s14, 1
      %s168 = smul.addr %s167, 6
      %s169 = smul.addr %s168, 4
      %s170 = scalar_lea.vmem %s3, %s169
      %v172 = vld [vmem:[%s165] sm:$0xf]
      %v173 = vld [vmem:[%s165 + $0x4] sm:$0xf]
      %v174 = vld [vmem:[%s165 + $0x8] sm:$0x3]
      %v175 = vld [vmem:[%s1] sm:$0xff]
      %v176 = vld [vmem:[%s1 + $0x8] sm:$0xff]
      %v177 = vld [vmem:[%s1 + $0x10] sm:$0xff]
      %v178 = vld [vmem:[%s1 + $0x18] sm:$0xff]
      %v179 = vld [vmem:[%s1 + $0x20] sm:$0xff]
      %v180 = vld [vmem:[%s1 + $0x28] sm:$0xff]
      %v181 = vld [vmem:[%s1 + $0x30] sm:$0xff]
      %v182 = vld [vmem:[%s1 + $0x38] sm:$0xff]
      %v183 = vld [vmem:[%s1 + $0x40] sm:$0xff]
      %v184 = vld [vmem:[%s1 + $0x48] sm:$0xff]
      %v185 = vld [vmem:[%s1 + $0x50] sm:$0xff]
      %v186 = vld [vmem:[%s1 + $0x58] sm:$0xff]
      %v187 = vld [vmem:[%s1 + $0x60] sm:$0xff]
      %v188 = vld [vmem:[%s1 + $0x68] sm:$0xff]
      %v189 = vld [vmem:[%s1 + $0x70] sm:$0xff]
      %v190 = vld [vmem:[%s1 + $0x78] sm:$0xff]
      %v191 = vld [vmem:[%s165 + $0x8] sm:$0x7]
      %s192 = scalar_lea.vmem %s1, 128
      %v193 = vld [vmem:[%s192] sm:$0xff]
      %v194 = vld [vmem:[%s192 + $0x8] sm:$0xff]
      %v195 = vld [vmem:[%s192 + $0x10] sm:$0xff]
      %v196 = vld [vmem:[%s192 + $0x18] sm:$0xff]
      %v197 = vld [vmem:[%s192 + $0x20] sm:$0xff]
      %v198 = vld [vmem:[%s192 + $0x28] sm:$0xff]
      %v199 = vld [vmem:[%s192 + $0x30] sm:$0xff]
      %v200 = vld [vmem:[%s192 + $0x38] sm:$0xff]
      %v201 = vld [vmem:[%s192 + $0x40] sm:$0xff]
      %v202 = vld [vmem:[%s192 + $0x48] sm:$0xff]
      %v203 = vld [vmem:[%s192 + $0x50] sm:$0xff]
      %v204 = vld [vmem:[%s192 + $0x58] sm:$0xff]
      %v205 = vld [vmem:[%s192 + $0x60] sm:$0xff]
      %v206 = vld [vmem:[%s192 + $0x68] sm:$0xff]
      %v207 = vld [vmem:[%s192 + $0x70] sm:$0xff]
      %v208 = vld [vmem:[%s192 + $0x78] sm:$0xff]
      %v212 = vunpack.c.l.b16 %v172
      %v213 = vunpack.c.l.b16 %v173
      %v214 = vunpack.c.l.b16 %v191
      %v215 = vpack.c.b16 %v213, %v212
      %v216 = vpack.c.b16 %v214, %v214
      %vm217 = vsmask.f32 7424
      %v219 = vshrl.u32 %v215, 16
      %v221 = vshll.u32 %v215, 16
      %v223 = vrot.slane %v221, 1
      %v224 = vor.u32 %v219, %v223
      %v226 = vshll.u32 %v216, 16
      %v228 = vrot.slane %v226, 1
      %v229 = vsel %vm217, %v224, %v228
      %v230 = vshrl.u32 %v216, 16
      %v232 = vor.u32 %v230, %v228
      %v251 = vunpack.c.l.b16 %v193
      %v252 = vunpack.c.h.b16 %v193
      %v253 = vunpack.c.l.b16 %v194
      %v254 = vunpack.c.h.b16 %v194
      %v255 = vunpack.c.l.b16 %v195
      %v256 = vunpack.c.h.b16 %v195
      %v257 = vunpack.c.l.b16 %v196
      %v258 = vunpack.c.h.b16 %v196
      %v259 = vunpack.c.l.b16 %v197
      %v260 = vunpack.c.h.b16 %v197
      %v261 = vunpack.c.l.b16 %v198
      %v262 = vunpack.c.h.b16 %v198
      %v263 = vunpack.c.l.b16 %v199
      %v264 = vunpack.c.h.b16 %v199
      %v265 = vunpack.c.l.b16 %v200
      %v266 = vunpack.c.h.b16 %v200
      %v267 = vunpack.c.l.b16 %v201
      %v268 = vunpack.c.h.b16 %v201
      %v269 = vunpack.c.l.b16 %v202
      %v270 = vunpack.c.h.b16 %v202
      %v271 = vunpack.c.l.b16 %v203
      %v272 = vunpack.c.h.b16 %v203
      %v273 = vunpack.c.l.b16 %v204
      %v274 = vunpack.c.h.b16 %v204
      %v275 = vunpack.c.l.b16 %v205
      %v276 = vunpack.c.h.b16 %v205
      %v277 = vunpack.c.l.b16 %v206
      %v278 = vunpack.c.h.b16 %v206
      %v279 = vunpack.c.l.b16 %v207
      %v280 = vunpack.c.h.b16 %v207
      %v281 = vunpack.c.l.b16 %v208
      %v282 = vunpack.c.h.b16 %v208
      %v283 = vpack.c.b16 %v253, %v251
      %v284 = vpack.c.b16 %v254, %v252
      %v285 = vpack.c.b16 %v257, %v255
      %v286 = vpack.c.b16 %v258, %v256
      %v287 = vpack.c.b16 %v261, %v259
      %v288 = vpack.c.b16 %v262, %v260
      %v289 = vpack.c.b16 %v265, %v263
      %v290 = vpack.c.b16 %v266, %v264
      %v291 = vpack.c.b16 %v269, %v267
      %v292 = vpack.c.b16 %v270, %v268
      %v293 = vpack.c.b16 %v273, %v271
      %v294 = vpack.c.b16 %v274, %v272
      %v295 = vpack.c.b16 %v277, %v275
      %v296 = vpack.c.b16 %v278, %v276
      %v297 = vpack.c.b16 %v281, %v279
      %v298 = vpack.c.b16 %v282, %v280
      %315 = vmatprep.subr.bf16.mxu0 %v284
      %316 = vmatpush1.bf16.msra.mxu0 %v283
      %317 = vmatprep.subr.bf16.mxu0 %v286
      %318 = vmatpush1.bf16.msra.mxu0 %v285
      %319 = vmatprep.subr.bf16.mxu0 %v288
      %320 = vmatpush1.bf16.msra.mxu0 %v287
      %321 = vmatprep.subr.bf16.mxu0 %v290
      %322 = vmatpush1.bf16.msra.mxu0 %v289
      %323 = vmatprep.subr.bf16.mxu0 %v292
      %324 = vmatpush1.bf16.msra.mxu0 %v291
      %325 = vmatprep.subr.bf16.mxu0 %v294
      %326 = vmatpush1.bf16.msra.mxu0 %v293
      %327 = vmatprep.subr.bf16.mxu0 %v296
      %328 = vmatpush1.bf16.msra.mxu0 %v295
      %329 = vmatprep.subr.bf16.mxu0 %v298
      %330 = vmatpush1.bf16.msra.mxu0 %v297
      %331 = vmatprep.subr.bf16.mxu0 0
      %332 = vmatpush1.bf16.msra.mxu0 0
      %333 = vmatprep.subr.bf16.mxu0 0
      %334 = vmatpush1.bf16.msra.mxu0 0
      %335 = vmatprep.subr.bf16.mxu0 0
      %336 = vmatpush1.bf16.msra.mxu0 0
      %337 = vmatprep.subr.bf16.mxu0 0
      %338 = vmatpush1.bf16.msra.mxu0 0
      %339 = vmatprep.subr.bf16.mxu0 0
      %340 = vmatpush1.bf16.msra.mxu0 0
      %341 = vmatprep.subr.bf16.mxu0 0
      %342 = vmatpush1.bf16.msra.mxu0 0
      %343 = vmatprep.subr.bf16.mxu0 0
      %344 = vmatpush1.bf16.msra.mxu0 0
      %345 = vmatprep.subr.bf16.mxu0 0
      %346 = vmatpush1.bf16.msra.mxu0 0
      %347 = vmatprep.mubr.bf16.mxu0 0
      %348 = vmatmul.mubr.bf16.gmra.mrb[0].mxu0 %v229
      %v349 = vpop.f32.mrb[0].mxu0
      %v350 = vadd.f32 0.0, %v349
      %v351 = vpop.f32.mrb[0].mxu0
      %v352 = vadd.f32 0.0, %v351
      %v353 = vpop.f32.mrb[0].mxu0
      %v354 = vadd.f32 0.0, %v353
      %v355 = vpop.f32.mrb[0].mxu0
      %v356 = vadd.f32 0.0, %v355
      %357 = vmatprep.mubr.bf16.mxu0 0
      %358 = vmatmul.mubr.bf16.gmra.mrb[0].mxu0 %v232
      %v359 = vpop.f32.mrb[0].mxu0
      %v360 = vadd.f32 0.0, %v359
      %v361 = vpop.f32.mrb[0].mxu0
      %v362 = vadd.f32 0.0, %v361
      %v363 = vpop.f32.mrb[0].mxu0
      %v364 = vpop.f32.mrb[0].mxu0
      %365 = vdwg.mxu0
      %v367 = vunpack.c.l.b16 %v174
      %v368 = vpack.c.b16 %v367, %v367
      %v387 = vunpack.c.l.b16 %v175
      %v388 = vunpack.c.h.b16 %v175
      %v389 = vunpack.c.l.b16 %v176
      %v390 = vunpack.c.h.b16 %v176
      %v391 = vunpack.c.l.b16 %v177
      %v392 = vunpack.c.h.b16 %v177
      %v393 = vunpack.c.l.b16 %v178
      %v394 = vunpack.c.h.b16 %v178
      %v395 = vunpack.c.l.b16 %v179
      %v396 = vunpack.c.h.b16 %v179
      %v397 = vunpack.c.l.b16 %v180
      %v398 = vunpack.c.h.b16 %v180
      %v399 = vunpack.c.l.b16 %v181
      %v400 = vunpack.c.h.b16 %v181
      %v401 = vunpack.c.l.b16 %v182
      %v402 = vunpack.c.h.b16 %v182
      %v403 = vunpack.c.l.b16 %v183
      %v404 = vunpack.c.h.b16 %v183
      %v405 = vunpack.c.l.b16 %v184
      %v406 = vunpack.c.h.b16 %v184
      %v407 = vunpack.c.l.b16 %v185
      %v408 = vunpack.c.h.b16 %v185
      %v409 = vunpack.c.l.b16 %v186
      %v410 = vunpack.c.h.b16 %v186
      %v411 = vunpack.c.l.b16 %v187
      %v412 = vunpack.c.h.b16 %v187
      %v413 = vunpack.c.l.b16 %v188
      %v414 = vunpack.c.h.b16 %v188
      %v415 = vunpack.c.l.b16 %v189
      %v416 = vunpack.c.h.b16 %v189
      %v417 = vunpack.c.l.b16 %v190
      %v418 = vunpack.c.h.b16 %v190
      %v419 = vpack.c.b16 %v389, %v387
      %v420 = vpack.c.b16 %v390, %v388
      %v421 = vpack.c.b16 %v393, %v391
      %v422 = vpack.c.b16 %v394, %v392
      %v423 = vpack.c.b16 %v397, %v395
      %v424 = vpack.c.b16 %v398, %v396
      %v425 = vpack.c.b16 %v401, %v399
      %v426 = vpack.c.b16 %v402, %v400
      %v427 = vpack.c.b16 %v405, %v403
      %v428 = vpack.c.b16 %v406, %v404
      %v429 = vpack.c.b16 %v409, %v407
      %v430 = vpack.c.b16 %v410, %v408
      %v431 = vpack.c.b16 %v413, %v411
      %v432 = vpack.c.b16 %v414, %v412
      %v433 = vpack.c.b16 %v417, %v415
      %v434 = vpack.c.b16 %v418, %v416
      %451 = vmatprep.subr.bf16.mxu0 %v420
      %452 = vmatpush1.bf16.msra.mxu0 %v419
      %453 = vmatprep.subr.bf16.mxu0 %v422
      %454 = vmatpush1.bf16.msra.mxu0 %v421
      %455 = vmatprep.subr.bf16.mxu0 %v424
      %456 = vmatpush1.bf16.msra.mxu0 %v423
      %457 = vmatprep.subr.bf16.mxu0 %v426
      %458 = vmatpush1.bf16.msra.mxu0 %v425
      %459 = vmatprep.subr.bf16.mxu0 %v428
      %460 = vmatpush1.bf16.msra.mxu0 %v427
      %461 = vmatprep.subr.bf16.mxu0 %v430
      %462 = vmatpush1.bf16.msra.mxu0 %v429
      %463 = vmatprep.subr.bf16.mxu0 %v432
      %464 = vmatpush1.bf16.msra.mxu0 %v431
      %465 = vmatprep.subr.bf16.mxu0 %v434
      %466 = vmatpush1.bf16.msra.mxu0 %v433
      %467 = vmatprep.subr.bf16.mxu0 0
      %468 = vmatpush1.bf16.msra.mxu0 0
      %469 = vmatprep.subr.bf16.mxu0 0
      %470 = vmatpush1.bf16.msra.mxu0 0
      %471 = vmatprep.subr.bf16.mxu0 0
      %472 = vmatpush1.bf16.msra.mxu0 0
      %473 = vmatprep.subr.bf16.mxu0 0
      %474 = vmatpush1.bf16.msra.mxu0 0
      %475 = vmatprep.subr.bf16.mxu0 0
      %476 = vmatpush1.bf16.msra.mxu0 0
      %477 = vmatprep.subr.bf16.mxu0 0
      %478 = vmatpush1.bf16.msra.mxu0 0
      %479 = vmatprep.subr.bf16.mxu0 0
      %480 = vmatpush1.bf16.msra.mxu0 0
      %481 = vmatprep.subr.bf16.mxu0 0
      %482 = vmatpush1.bf16.msra.mxu0 0
      %483 = vmatprep.mubr.bf16.mxu0 0
      %484 = vmatmul.mubr.bf16.gmra.mrb[0].mxu0 %v215
      %v485 = vpop.f32.mrb[0].mxu0
      %v486 = vadd.f32 %v350, %v485
      %v487 = vpop.f32.mrb[0].mxu0
      %v488 = vadd.f32 %v352, %v487
      %v489 = vpop.f32.mrb[0].mxu0
      %v490 = vadd.f32 %v354, %v489
      %v491 = vpop.f32.mrb[0].mxu0
      %v492 = vadd.f32 %v356, %v491
      %493 = vmatprep.mubr.bf16.mxu0 0
      %494 = vmatmul.mubr.bf16.gmra.mrb[0].mxu0 %v368
      %v495 = vpop.f32.mrb[0].mxu0
      %v496 = vadd.f32 %v360, %v495
      %v497 = vpop.f32.mrb[0].mxu0
      %v498 = vadd.f32 %v362, %v497
      %v499 = vpop.f32.mrb[0].mxu0
      %v500 = vpop.f32.mrb[0].mxu0
      %501 = vdwg.mxu0
      %v502 = vld [vmem:[%s165] sm:$0xe]
      %s503 = scalar_lea.vmem %s1, 256
      %v504 = vld [vmem:[%s503] sm:$0xff]
      %v505 = vld [vmem:[%s503 + $0x8] sm:$0xff]
      %v506 = vld [vmem:[%s503 + $0x10] sm:$0xff]
      %v507 = vld [vmem:[%s503 + $0x18] sm:$0xff]
      %v508 = vld [vmem:[%s503 + $0x20] sm:$0xff]
      %v509 = vld [vmem:[%s503 + $0x28] sm:$0xff]
      %v510 = vld [vmem:[%s503 + $0x30] sm:$0xff]
      %v511 = vld [vmem:[%s503 + $0x38] sm:$0xff]
      %v512 = vld [vmem:[%s503 + $0x40] sm:$0xff]
      %v513 = vld [vmem:[%s503 + $0x48] sm:$0xff]
      %v514 = vld [vmem:[%s503 + $0x50] sm:$0xff]
      %v515 = vld [vmem:[%s503 + $0x58] sm:$0xff]
      %v516 = vld [vmem:[%s503 + $0x60] sm:$0xff]
      %v517 = vld [vmem:[%s503 + $0x68] sm:$0xff]
      %v518 = vld [vmem:[%s503 + $0x70] sm:$0xff]
      %v519 = vld [vmem:[%s503 + $0x78] sm:$0xff]
      %v521 = vunpack.c.l.b16 %v502
      %v522 = vpack.c.b16 %v213, %v521
      %vm523 = vcmask 1046528
      %v524 = vrot.slane %v522, 1
      %v525 = vrot.slane %v216, 1
      %v526 = vsel %vm523, %v524, %v525
      %v545 = vunpack.c.l.b16 %v504
      %v546 = vunpack.c.h.b16 %v504
      %v547 = vunpack.c.l.b16 %v505
      %v548 = vunpack.c.h.b16 %v505
      %v549 = vunpack.c.l.b16 %v506
      %v550 = vunpack.c.h.b16 %v506
      %v551 = vunpack.c.l.b16 %v507
      %v552 = vunpack.c.h.b16 %v507
      %v553 = vunpack.c.l.b16 %v508
      %v554 = vunpack.c.h.b16 %v508
      %v555 = vunpack.c.l.b16 %v509
      %v556 = vunpack.c.h.b16 %v509
      %v557 = vunpack.c.l.b16 %v510
      %v558 = vunpack.c.h.b16 %v510
      %v559 = vunpack.c.l.b16 %v511
      %v560 = vunpack.c.h.b16 %v511
      %v561 = vunpack.c.l.b16 %v512
      %v562 = vunpack.c.h.b16 %v512
      %v563 = vunpack.c.l.b16 %v513
      %v564 = vunpack.c.h.b16 %v513
      %v565 = vunpack.c.l.b16 %v514
      %v566 = vunpack.c.h.b16 %v514
      %v567 = vunpack.c.l.b16 %v515
      %v568 = vunpack.c.h.b16 %v515
      %v569 = vunpack.c.l.b16 %v516
      %v570 = vunpack.c.h.b16 %v516
      %v571 = vunpack.c.l.b16 %v517
      %v572 = vunpack.c.h.b16 %v517
      %v573 = vunpack.c.l.b16 %v518
      %v574 = vunpack.c.h.b16 %v518
      %v575 = vunpack.c.l.b16 %v519
      %v576 = vunpack.c.h.b16 %v519
      %v577 = vpack.c.b16 %v547, %v545
      %v578 = vpack.c.b16 %v548, %v546
      %v579 = vpack.c.b16 %v551, %v549
      %v580 = vpack.c.b16 %v552, %v550
      %v581 = vpack.c.b16 %v555, %v553
      %v582 = vpack.c.b16 %v556, %v554
      %v583 = vpack.c.b16 %v559, %v557
      %v584 = vpack.c.b16 %v560, %v558
      %v585 = vpack.c.b16 %v563, %v561
      %v586 = vpack.c.b16 %v564, %v562
      %v587 = vpack.c.b16 %v567, %v565
      %v588 = vpack.c.b16 %v568, %v566
      %v589 = vpack.c.b16 %v571, %v569
      %v590 = vpack.c.b16 %v572, %v570
      %v591 = vpack.c.b16 %v575, %v573
      %v592 = vpack.c.b16 %v576, %v574
      %609 = vmatprep.subr.bf16.mxu0 %v578
      %610 = vmatpush1.bf16.msra.mxu0 %v577
      %611 = vmatprep.subr.bf16.mxu0 %v580
      %612 = vmatpush1.bf16.msra.mxu0 %v579
      %613 = vmatprep.subr.bf16.mxu0 %v582
      %614 = vmatpush1.bf16.msra.mxu0 %v581
      %615 = vmatprep.subr.bf16.mxu0 %v584
      %616 = vmatpush1.bf16.msra.mxu0 %v583
      %617 = vmatprep.subr.bf16.mxu0 %v586
      %618 = vmatpush1.bf16.msra.mxu0 %v585
      %619 = vmatprep.subr.bf16.mxu0 %v588
      %620 = vmatpush1.bf16.msra.mxu0 %v587
      %621 = vmatprep.subr.bf16.mxu0 %v590
      %622 = vmatpush1.bf16.msra.mxu0 %v589
      %623 = vmatprep.subr.bf16.mxu0 %v592
      %624 = vmatpush1.bf16.msra.mxu0 %v591
      %625 = vmatprep.subr.bf16.mxu0 0
      %626 = vmatpush1.bf16.msra.mxu0 0
      %627 = vmatprep.subr.bf16.mxu0 0
      %628 = vmatpush1.bf16.msra.mxu0 0
      %629 = vmatprep.subr.bf16.mxu0 0
      %630 = vmatpush1.bf16.msra.mxu0 0
      %631 = vmatprep.subr.bf16.mxu0 0
      %632 = vmatpush1.bf16.msra.mxu0 0
      %633 = vmatprep.subr.bf16.mxu0 0
      %634 = vmatpush1.bf16.msra.mxu0 0
      %635 = vmatprep.subr.bf16.mxu0 0
      %636 = vmatpush1.bf16.msra.mxu0 0
      %637 = vmatprep.subr.bf16.mxu0 0
      %638 = vmatpush1.bf16.msra.mxu0 0
      %639 = vmatprep.subr.bf16.mxu0 0
      %640 = vmatpush1.bf16.msra.mxu0 0
      %641 = vmatprep.mubr.bf16.mxu0 0
      %642 = vmatmul.mubr.bf16.gmra.mrb[0].mxu0 %v526
      %v643 = vpop.f32.mrb[0].mxu0
      %v644 = vadd.f32 0.0, %v643
      %v645 = vpop.f32.mrb[0].mxu0
      %v646 = vadd.f32 0.0, %v645
      %v647 = vpop.f32.mrb[0].mxu0
      %v648 = vadd.f32 0.0, %v647
      %v649 = vpop.f32.mrb[0].mxu0
      %v650 = vadd.f32 0.0, %v649
      %651 = vmatprep.mubr.bf16.mxu0 0
      %652 = vmatmul.mubr.bf16.gmra.mrb[0].mxu0 %v525
      %v653 = vpop.f32.mrb[0].mxu0
      %v654 = vadd.f32 0.0, %v653
      %v655 = vpop.f32.mrb[0].mxu0
      %v656 = vadd.f32 0.0, %v655
      %v657 = vpop.f32.mrb[0].mxu0
      %v658 = vpop.f32.mrb[0].mxu0
      %659 = vdwg.mxu0
      %v660 = vadd.f32 %v486, %v644
      %v661 = vadd.f32 %v488, %v646
      %v662 = vadd.f32 %v490, %v648
      %v663 = vadd.f32 %v492, %v650
      %v664 = vadd.f32 %v496, %v654
      %v665 = vadd.f32 %v498, %v656
      %v666 = vld [vmem:[%s165] sm:$0xc]
      %v667 = vld [vmem:[%s165 + $0x4] sm:$0xf]
      %v668 = vld [vmem:[%s165 + $0x8] sm:$0xf]
      %v669 = vld [vmem:[%s165 + $0xc] sm:$0x1]
      %s670 = scalar_lea.vmem %s1, 384
      %v671 = vld [vmem:[%s670] sm:$0xff]
      %v672 = vld [vmem:[%s670 + $0x8] sm:$0xff]
      %v673 = vld [vmem:[%s670 + $0x10] sm:$0xff]
      %v674 = vld [vmem:[%s670 + $0x18] sm:$0xff]
      %v675 = vld [vmem:[%s670 + $0x20] sm:$0xff]
      %v676 = vld [vmem:[%s670 + $0x28] sm:$0xff]
      %v677 = vld [vmem:[%s670 + $0x30] sm:$0xff]
      %v678 = vld [vmem:[%s670 + $0x38] sm:$0xff]
      %v679 = vld [vmem:[%s670 + $0x40] sm:$0xff]
      %v680 = vld [vmem:[%s670 + $0x48] sm:$0xff]
      %v681 = vld [vmem:[%s670 + $0x50] sm:$0xff]
      %v682 = vld [vmem:[%s670 + $0x58] sm:$0xff]
      %v683 = vld [vmem:[%s670 + $0x60] sm:$0xff]
      %v684 = vld [vmem:[%s670 + $0x68] sm:$0xff]
      %v685 = vld [vmem:[%s670 + $0x70] sm:$0xff]
      %v686 = vld [vmem:[%s670 + $0x78] sm:$0xff]
      %v691 = vunpack.c.l.b16 %v666
      %v692 = vunpack.c.l.b16 %v667
      %v693 = vunpack.c.l.b16 %v668
      %v694 = vunpack.c.l.b16 %v669
      %v695 = vpack.c.b16 %v692, %v691
      %v696 = vpack.c.b16 %v694, %v693
      %vm697 = vsmask.f32 5376
      %v699 = vshrl.u32 %v695, 16
      %v701 = vrot.slane %v699, 2
      %v702 = vshll.u32 %v695, 16
      %v704 = vrot.slane %v702, 3
      %v705 = vor.u32 %v701, %v704
      %v707 = vshrl.u32 %v696, 16
      %v709 = vrot.slane %v707, 2
      %v710 = vshll.u32 %v696, 16
      %v712 = vrot.slane %v710, 3
      %v713 = vor.u32 %v709, %v712
      %v714 = vsel %vm697, %v705, %v713
      %v733 = vunpack.c.l.b16 %v671
      %v734 = vunpack.c.h.b16 %v671
      %v735 = vunpack.c.l.b16 %v672
      %v736 = vunpack.c.h.b16 %v672
      %v737 = vunpack.c.l.b16 %v673
      %v738 = vunpack.c.h.b16 %v673
      %v739 = vunpack.c.l.b16 %v674
      %v740 = vunpack.c.h.b16 %v674
      %v741 = vunpack.c.l.b16 %v675
      %v742 = vunpack.c.h.b16 %v675
      %v743 = vunpack.c.l.b16 %v676
      %v744 = vunpack.c.h.b16 %v676
      %v745 = vunpack.c.l.b16 %v677
      %v746 = vunpack.c.h.b16 %v677
      %v747 = vunpack.c.l.b16 %v678
      %v748 = vunpack.c.h.b16 %v678
      %v749 = vunpack.c.l.b16 %v679
      %v750 = vunpack.c.h.b16 %v679
      %v751 = vunpack.c.l.b16 %v680
      %v752 = vunpack.c.h.b16 %v680
      %v753 = vunpack.c.l.b16 %v681
      %v754 = vunpack.c.h.b16 %v681
      %v755 = vunpack.c.l.b16 %v682
      %v756 = vunpack.c.h.b16 %v682
      %v757 = vunpack.c.l.b16 %v683
      %v758 = vunpack.c.h.b16 %v683
      %v759 = vunpack.c.l.b16 %v684
      %v760 = vunpack.c.h.b16 %v684
      %v761 = vunpack.c.l.b16 %v685
      %v762 = vunpack.c.h.b16 %v685
      %v763 = vunpack.c.l.b16 %v686
      %v764 = vunpack.c.h.b16 %v686
      %v765 = vpack.c.b16 %v735, %v733
      %v766 = vpack.c.b16 %v736, %v734
      %v767 = vpack.c.b16 %v739, %v737
      %v768 = vpack.c.b16 %v740, %v738
      %v769 = vpack.c.b16 %v743, %v741
      %v770 = vpack.c.b16 %v744, %v742
      %v771 = vpack.c.b16 %v747, %v745
      %v772 = vpack.c.b16 %v748, %v746
      %v773 = vpack.c.b16 %v751, %v749
      %v774 = vpack.c.b16 %v752, %v750
      %v775 = vpack.c.b16 %v755, %v753
      %v776 = vpack.c.b16 %v756, %v754
      %v777 = vpack.c.b16 %v759, %v757
      %v778 = vpack.c.b16 %v760, %v758
      %v779 = vpack.c.b16 %v763, %v761
      %v780 = vpack.c.b16 %v764, %v762
      %797 = vmatprep.subr.bf16.mxu0 %v766
      %798 = vmatpush1.bf16.msra.mxu0 %v765
      %799 = vmatprep.subr.bf16.mxu0 %v768
      %800 = vmatpush1.bf16.msra.mxu0 %v767
      %801 = vmatprep.subr.bf16.mxu0 %v770
      %802 = vmatpush1.bf16.msra.mxu0 %v769
      %803 = vmatprep.subr.bf16.mxu0 %v772
      %804 = vmatpush1.bf16.msra.mxu0 %v771
      %805 = vmatprep.subr.bf16.mxu0 %v774
      %806 = vmatpush1.bf16.msra.mxu0 %v773
      %807 = vmatprep.subr.bf16.mxu0 %v776
      %808 = vmatpush1.bf16.msra.mxu0 %v775
      %809 = vmatprep.subr.bf16.mxu0 %v778
      %810 = vmatpush1.bf16.msra.mxu0 %v777
      %811 = vmatprep.subr.bf16.mxu0 %v780
      %812 = vmatpush1.bf16.msra.mxu0 %v779
      %813 = vmatprep.subr.bf16.mxu0 0
      %814 = vmatpush1.bf16.msra.mxu0 0
      %815 = vmatprep.subr.bf16.mxu0 0
      %816 = vmatpush1.bf16.msra.mxu0 0
      %817 = vmatprep.subr.bf16.mxu0 0
      %818 = vmatpush1.bf16.msra.mxu0 0
      %819 = vmatprep.subr.bf16.mxu0 0
      %820 = vmatpush1.bf16.msra.mxu0 0
      %821 = vmatprep.subr.bf16.mxu0 0
      %822 = vmatpush1.bf16.msra.mxu0 0
      %823 = vmatprep.subr.bf16.mxu0 0
      %824 = vmatpush1.bf16.msra.mxu0 0
      %825 = vmatprep.subr.bf16.mxu0 0
      %826 = vmatpush1.bf16.msra.mxu0 0
      %827 = vmatprep.subr.bf16.mxu0 0
      %828 = vmatpush1.bf16.msra.mxu0 0
      %829 = vmatprep.mubr.bf16.mxu0 0
      %830 = vmatmul.mubr.bf16.gmra.mrb[0].mxu0 %v714
      %v831 = vpop.f32.mrb[0].mxu0
      %v832 = vadd.f32 0.0, %v831
      %v833 = vpop.f32.mrb[0].mxu0
      %v834 = vadd.f32 0.0, %v833
      %v835 = vpop.f32.mrb[0].mxu0
      %v836 = vadd.f32 0.0, %v835
      %v837 = vpop.f32.mrb[0].mxu0
      %v838 = vadd.f32 0.0, %v837
      %839 = vmatprep.mubr.bf16.mxu0 0
      %840 = vmatmul.mubr.bf16.gmra.mrb[0].mxu0 %v713
      %v841 = vpop.f32.mrb[0].mxu0
      %v842 = vadd.f32 0.0, %v841
      %v843 = vpop.f32.mrb[0].mxu0
      %v844 = vadd.f32 0.0, %v843
      %v845 = vpop.f32.mrb[0].mxu0
      %v846 = vpop.f32.mrb[0].mxu0
      %847 = vdwg.mxu0
      %v848 = vadd.f32 %v660, %v832
      %v849 = vadd.f32 %v661, %v834
      %v850 = vadd.f32 %v662, %v836
      %v851 = vadd.f32 %v663, %v838
      %v852 = vadd.f32 %v664, %v842
      %v853 = vadd.f32 %v665, %v844
      %v854 = vld [vmem:[%s165] sm:$0x8]
      %s855 = scalar_lea.vmem %s1, 512
      %v856 = vld [vmem:[%s855] sm:$0xff]
      %v857 = vld [vmem:[%s855 + $0x8] sm:$0xff]
      %v858 = vld [vmem:[%s855 + $0x10] sm:$0xff]
      %v859 = vld [vmem:[%s855 + $0x18] sm:$0xff]
      %v860 = vld [vmem:[%s855 + $0x20] sm:$0xff]
      %v861 = vld [vmem:[%s855 + $0x28] sm:$0xff]
      %v862 = vld [vmem:[%s855 + $0x30] sm:$0xff]
      %v863 = vld [vmem:[%s855 + $0x38] sm:$0xff]
      %v864 = vld [vmem:[%s855 + $0x40] sm:$0xff]
      %v865 = vld [vmem:[%s855 + $0x48] sm:$0xff]
      %v866 = vld [vmem:[%s855 + $0x50] sm:$0xff]
      %v867 = vld [vmem:[%s855 + $0x58] sm:$0xff]
      %v868 = vld [vmem:[%s855 + $0x60] sm:$0xff]
      %v869 = vld [vmem:[%s855 + $0x68] sm:$0xff]
      %v870 = vld [vmem:[%s855 + $0x70] sm:$0xff]
      %v871 = vld [vmem:[%s855 + $0x78] sm:$0xff]
      %v873 = vunpack.c.l.b16 %v854
      %v874 = vpack.c.b16 %v692, %v873
      %vm875 = vcmask 1044480
      %v876 = vrot.slane %v874, 3
      %v877 = vrot.slane %v696, 3
      %v878 = vsel %vm875, %v876, %v877
      %v897 = vunpack.c.l.b16 %v856
      %v898 = vunpack.c.h.b16 %v856
      %v899 = vunpack.c.l.b16 %v857
      %v900 = vunpack.c.h.b16 %v857
      %v901 = vunpack.c.l.b16 %v858
      %v902 = vunpack.c.h.b16 %v858
      %v903 = vunpack.c.l.b16 %v859
      %v904 = vunpack.c.h.b16 %v859
      %v905 = vunpack.c.l.b16 %v860
      %v906 = vunpack.c.h.b16 %v860
      %v907 = vunpack.c.l.b16 %v861
      %v908 = vunpack.c.h.b16 %v861
      %v909 = vunpack.c.l.b16 %v862
      %v910 = vunpack.c.h.b16 %v862
      %v911 = vunpack.c.l.b16 %v863
      %v912 = vunpack.c.h.b16 %v863
      %v913 = vunpack.c.l.b16 %v864
      %v914 = vunpack.c.h.b16 %v864
      %v915 = vunpack.c.l.b16 %v865
      %v916 = vunpack.c.h.b16 %v865
      %v917 = vunpack.c.l.b16 %v866
      %v918 = vunpack.c.h.b16 %v866
      %v919 = vunpack.c.l.b16 %v867
      %v920 = vunpack.c.h.b16 %v867
      %v921 = vunpack.c.l.b16 %v868
      %v922 = vunpack.c.h.b16 %v868
      %v923 = vunpack.c.l.b16 %v869
      %v924 = vunpack.c.h.b16 %v869
      %v925 = vunpack.c.l.b16 %v870
      %v926 = vunpack.c.h.b16 %v870
      %v927 = vunpack.c.l.b16 %v871
      %v928 = vunpack.c.h.b16 %v871
      %v929 = vpack.c.b16 %v899, %v897
      %v930 = vpack.c.b16 %v900, %v898
      %v931 = vpack.c.b16 %v903, %v901
      %v932 = vpack.c.b16 %v904, %v902
      %v933 = vpack.c.b16 %v907, %v905
      %v934 = vpack.c.b16 %v908, %v906
      %v935 = vpack.c.b16 %v911, %v909
      %v936 = vpack.c.b16 %v912, %v910
      %v937 = vpack.c.b16 %v915, %v913
      %v938 = vpack.c.b16 %v916, %v914
      %v939 = vpack.c.b16 %v919, %v917
      %v940 = vpack.c.b16 %v920, %v918
      %v941 = vpack.c.b16 %v923, %v921
      %v942 = vpack.c.b16 %v924, %v922
      %v943 = vpack.c.b16 %v927, %v925
      %v944 = vpack.c.b16 %v928, %v926
      %961 = vmatprep.subr.bf16.mxu0 %v930
      %962 = vmatpush1.bf16.msra.mxu0 %v929
      %963 = vmatprep.subr.bf16.mxu0 %v932
      %964 = vmatpush1.bf16.msra.mxu0 %v931
      %965 = vmatprep.subr.bf16.mxu0 %v934
      %966 = vmatpush1.bf16.msra.mxu0 %v933
      %967 = vmatprep.subr.bf16.mxu0 %v936
      %968 = vmatpush1.bf16.msra.mxu0 %v935
      %969 = vmatprep.subr.bf16.mxu0 %v938
      %970 = vmatpush1.bf16.msra.mxu0 %v937
      %971 = vmatprep.subr.bf16.mxu0 %v940
      %972 = vmatpush1.bf16.msra.mxu0 %v939
      %973 = vmatprep.subr.bf16.mxu0 %v942
      %974 = vmatpush1.bf16.msra.mxu0 %v941
      %975 = vmatprep.subr.bf16.mxu0 %v944
      %976 = vmatpush1.bf16.msra.mxu0 %v943
      %977 = vmatprep.subr.bf16.mxu0 0
      %978 = vmatpush1.bf16.msra.mxu0 0
      %979 = vmatprep.subr.bf16.mxu0 0
      %980 = vmatpush1.bf16.msra.mxu0 0
      %981 = vmatprep.subr.bf16.mxu0 0
      %982 = vmatpush1.bf16.msra.mxu0 0
      %983 = vmatprep.subr.bf16.mxu0 0
      %984 = vmatpush1.bf16.msra.mxu0 0
      %985 = vmatprep.subr.bf16.mxu0 0
      %986 = vmatpush1.bf16.msra.mxu0 0
      %987 = vmatprep.subr.bf16.mxu0 0
      %988 = vmatpush1.bf16.msra.mxu0 0
      %989 = vmatprep.subr.bf16.mxu0 0
      %990 = vmatpush1.bf16.msra.mxu0 0
      %991 = vmatprep.subr.bf16.mxu0 0
      %992 = vmatpush1.bf16.msra.mxu0 0
      %993 = vmatprep.mubr.bf16.mxu0 0
      %994 = vmatmul.mubr.bf16.gmra.mrb[0].mxu0 %v878
      %v995 = vpop.f32.mrb[0].mxu0
      %v996 = vadd.f32 0.0, %v995
      %v997 = vpop.f32.mrb[0].mxu0
      %v998 = vadd.f32 0.0, %v997
      %v999 = vpop.f32.mrb[0].mxu0
      %v1000 = vadd.f32 0.0, %v999
      %v1001 = vpop.f32.mrb[0].mxu0
      %v1002 = vadd.f32 0.0, %v1001
      %1003 = vmatprep.mubr.bf16.mxu0 0
      %1004 = vmatmul.mubr.bf16.gmra.mrb[0].mxu0 %v877
      %v1005 = vpop.f32.mrb[0].mxu0
      %v1006 = vadd.f32 0.0, %v1005
      %v1007 = vpop.f32.mrb[0].mxu0
      %v1008 = vadd.f32 0.0, %v1007
      %v1009 = vpop.f32.mrb[0].mxu0
      %v1010 = vpop.f32.mrb[0].mxu0
      %1011 = vdwg.mxu0
      %v1012 = vadd.f32 %v848, %v996
      %v1013 = vadd.f32 %v849, %v998
      %v1014 = vadd.f32 %v850, %v1000
      %v1015 = vadd.f32 %v851, %v1002
      %v1016 = vadd.f32 %v852, %v1006
      %v1017 = vadd.f32 %v853, %v1008
      %v1018 = vld [vmem:[%s165 + $0xc] sm:$0x3]
      %s1019 = scalar_lea.vmem %s1, 640
      %v1020 = vld [vmem:[%s1019] sm:$0xff]
      %v1021 = vld [vmem:[%s1019 + $0x8] sm:$0xff]
      %v1022 = vld [vmem:[%s1019 + $0x10] sm:$0xff]
      %v1023 = vld [vmem:[%s1019 + $0x18] sm:$0xff]
      %v1024 = vld [vmem:[%s1019 + $0x20] sm:$0xff]
      %v1025 = vld [vmem:[%s1019 + $0x28] sm:$0xff]
      %v1026 = vld [vmem:[%s1019 + $0x30] sm:$0xff]
      %v1027 = vld [vmem:[%s1019 + $0x38] sm:$0xff]
      %v1028 = vld [vmem:[%s1019 + $0x40] sm:$0xff]
      %v1029 = vld [vmem:[%s1019 + $0x48] sm:$0xff]
      %v1030 = vld [vmem:[%s1019 + $0x50] sm:$0xff]
      %v1031 = vld [vmem:[%s1019 + $0x58] sm:$0xff]
      %v1032 = vld [vmem:[%s1019 + $0x60] sm:$0xff]
      %v1033 = vld [vmem:[%s1019 + $0x68] sm:$0xff]
      %v1034 = vld [vmem:[%s1019 + $0x70] sm:$0xff]
      %v1035 = vld [vmem:[%s1019 + $0x78] sm:$0xff]
      %v1037 = vunpack.c.l.b16 %v1018
      %v1038 = vpack.c.b16 %v1037, %v693
      %vm1039 = vsmask.f32 4352
      %v1041 = vshrl.u32 %v874, 16
      %v1043 = vrot.slane %v1041, 3
      %v1044 = vshll.u32 %v874, 16
      %v1046 = vrot.slane %v1044, 4
      %v1047 = vor.u32 %v1043, %v1046
      %v1049 = vshrl.u32 %v1038, 16
      %v1051 = vrot.slane %v1049, 3
      %v1052 = vshll.u32 %v1038, 16
      %v1054 = vrot.slane %v1052, 4
      %v1055 = vor.u32 %v1051, %v1054
      %v1056 = vsel %vm1039, %v1047, %v1055
      %v1075 = vunpack.c.l.b16 %v1020
      %v1076 = vunpack.c.h.b16 %v1020
      %v1077 = vunpack.c.l.b16 %v1021
      %v1078 = vunpack.c.h.b16 %v1021
      %v1079 = vunpack.c.l.b16 %v1022
      %v1080 = vunpack.c.h.b16 %v1022
      %v1081 = vunpack.c.l.b16 %v1023
      %v1082 = vunpack.c.h.b16 %v1023
      %v1083 = vunpack.c.l.b16 %v1024
      %v1084 = vunpack.c.h.b16 %v1024
      %v1085 = vunpack.c.l.b16 %v1025
      %v1086 = vunpack.c.h.b16 %v1025
      %v1087 = vunpack.c.l.b16 %v1026
      %v1088 = vunpack.c.h.b16 %v1026
      %v1089 = vunpack.c.l.b16 %v1027
      %v1090 = vunpack.c.h.b16 %v1027
      %v1091 = vunpack.c.l.b16 %v1028
      %v1092 = vunpack.c.h.b16 %v1028
      %v1093 = vunpack.c.l.b16 %v1029
      %v1094 = vunpack.c.h.b16 %v1029
      %v1095 = vunpack.c.l.b16 %v1030
      %v1096 = vunpack.c.h.b16 %v1030
      %v1097 = vunpack.c.l.b16 %v1031
      %v1098 = vunpack.c.h.b16 %v1031
      %v1099 = vunpack.c.l.b16 %v1032
      %v1100 = vunpack.c.h.b16 %v1032
      %v1101 = vunpack.c.l.b16 %v1033
      %v1102 = vunpack.c.h.b16 %v1033
      %v1103 = vunpack.c.l.b16 %v1034
      %v1104 = vunpack.c.h.b16 %v1034
      %v1105 = vunpack.c.l.b16 %v1035
      %v1106 = vunpack.c.h.b16 %v1035
      %v1107 = vpack.c.b16 %v1077, %v1075
      %v1108 = vpack.c.b16 %v1078, %v1076
      %v1109 = vpack.c.b16 %v1081, %v1079
      %v1110 = vpack.c.b16 %v1082, %v1080
      %v1111 = vpack.c.b16 %v1085, %v1083
      %v1112 = vpack.c.b16 %v1086, %v1084
      %v1113 = vpack.c.b16 %v1089, %v1087
      %v1114 = vpack.c.b16 %v1090, %v1088
      %v1115 = vpack.c.b16 %v1093, %v1091
      %v1116 = vpack.c.b16 %v1094, %v1092
      %v1117 = vpack.c.b16 %v1097, %v1095
      %v1118 = vpack.c.b16 %v1098, %v1096
      %v1119 = vpack.c.b16 %v1101, %v1099
      %v1120 = vpack.c.b16 %v1102, %v1100
      %v1121 = vpack.c.b16 %v1105, %v1103
      %v1122 = vpack.c.b16 %v1106, %v1104
      %1139 = vmatprep.subr.bf16.mxu0 %v1108
      %1140 = vmatpush1.bf16.msra.mxu0 %v1107
      %1141 = vmatprep.subr.bf16.mxu0 %v1110
      %1142 = vmatpush1.bf16.msra.mxu0 %v1109
      %1143 = vmatprep.subr.bf16.mxu0 %v1112
      %1144 = vmatpush1.bf16.msra.mxu0 %v1111
      %1145 = vmatprep.subr.bf16.mxu0 %v1114
      %1146 = vmatpush1.bf16.msra.mxu0 %v1113
      %1147 = vmatprep.subr.bf16.mxu0 %v1116
      %1148 = vmatpush1.bf16.msra.mxu0 %v1115
      %1149 = vmatprep.subr.bf16.mxu0 %v1118
      %1150 = vmatpush1.bf16.msra.mxu0 %v1117
      %1151 = vmatprep.subr.bf16.mxu0 %v1120
      %1152 = vmatpush1.bf16.msra.mxu0 %v1119
      %1153 = vmatprep.subr.bf16.mxu0 %v1122
      %1154 = vmatpush1.bf16.msra.mxu0 %v1121
      %1155 = vmatprep.subr.bf16.mxu0 0
      %1156 = vmatpush1.bf16.msra.mxu0 0
      %1157 = vmatprep.subr.bf16.mxu0 0
      %1158 = vmatpush1.bf16.msra.mxu0 0
      %1159 = vmatprep.subr.bf16.mxu0 0
      %1160 = vmatpush1.bf16.msra.mxu0 0
      %1161 = vmatprep.subr.bf16.mxu0 0
      %1162 = vmatpush1.bf16.msra.mxu0 0
      %1163 = vmatprep.subr.bf16.mxu0 0
      %1164 = vmatpush1.bf16.msra.mxu0 0
      %1165 = vmatprep.subr.bf16.mxu0 0
      %1166 = vmatpush1.bf16.msra.mxu0 0
      %1167 = vmatprep.subr.bf16.mxu0 0
      %1168 = vmatpush1.bf16.msra.mxu0 0
      %1169 = vmatprep.subr.bf16.mxu0 0
      %1170 = vmatpush1.bf16.msra.mxu0 0
      %1171 = vmatprep.mubr.bf16.mxu0 0
      %1172 = vmatmul.mubr.bf16.gmra.mrb[0].mxu0 %v1056
      %v1173 = vpop.f32.mrb[0].mxu0
      %v1174 = vadd.f32 0.0, %v1173
      %v1175 = vpop.f32.mrb[0].mxu0
      %v1176 = vadd.f32 0.0, %v1175
      %v1177 = vpop.f32.mrb[0].mxu0
      %v1178 = vadd.f32 0.0, %v1177
      %v1179 = vpop.f32.mrb[0].mxu0
      %v1180 = vadd.f32 0.0, %v1179
      %1181 = vmatprep.mubr.bf16.mxu0 0
      %1182 = vmatmul.mubr.bf16.gmra.mrb[0].mxu0 %v1055
      %v1183 = vpop.f32.mrb[0].mxu0
      %v1184 = vadd.f32 0.0, %v1183
      %v1185 = vpop.f32.mrb[0].mxu0
      %v1186 = vadd.f32 0.0, %v1185
      %v1187 = vpop.f32.mrb[0].mxu0
      %v1188 = vpop.f32.mrb[0].mxu0
      %1189 = vdwg.mxu0
      %v1190 = vadd.f32 %v1012, %v1174
      %v1191 = vadd.f32 %v1013, %v1176
      %v1192 = vadd.f32 %v1014, %v1178
      %v1193 = vadd.f32 %v1015, %v1180
      %v1194 = vadd.f32 %v1016, %v1184
      %v1195 = vadd.f32 %v1017, %v1186
      %v1196 = vld [vmem:[%s165 + $0x4] sm:$0xe]
      %v1197 = vld [vmem:[%s165 + $0xc] sm:$0x7]
      %s1198 = scalar_lea.vmem %s1, 768
      %v1199 = vld [vmem:[%s1198] sm:$0xff]
      %v1200 = vld [vmem:[%s1198 + $0x8] sm:$0xff]
      %v1201 = vld [vmem:[%s1198 + $0x10] sm:$0xff]
      %v1202 = vld [vmem:[%s1198 + $0x18] sm:$0xff]
      %v1203 = vld [vmem:[%s1198 + $0x20] sm:$0xff]
      %v1204 = vld [vmem:[%s1198 + $0x28] sm:$0xff]
      %v1205 = vld [vmem:[%s1198 + $0x30] sm:$0xff]
      %v1206 = vld [vmem:[%s1198 + $0x38] sm:$0xff]
      %v1207 = vld [vmem:[%s1198 + $0x40] sm:$0xff]
      %v1208 = vld [vmem:[%s1198 + $0x48] sm:$0xff]
      %v1209 = vld [vmem:[%s1198 + $0x50] sm:$0xff]
      %v1210 = vld [vmem:[%s1198 + $0x58] sm:$0xff]
      %v1211 = vld [vmem:[%s1198 + $0x60] sm:$0xff]
      %v1212 = vld [vmem:[%s1198 + $0x68] sm:$0xff]
      %v1213 = vld [vmem:[%s1198 + $0x70] sm:$0xff]
      %v1214 = vld [vmem:[%s1198 + $0x78] sm:$0xff]
      %v1217 = vunpack.c.l.b16 %v1196
      %v1218 = vunpack.c.l.b16 %v1197
      %v1219 = vpack.c.b16 %v693, %v1217
      %v1220 = vpack.c.b16 %v1218, %v1218
      %v1221 = vrot.slane %v1219, 1
      %v1222 = vrot.slane %v1220, 1
      %v1223 = vsel %vm523, %v1221, %v1222
      %v1242 = vunpack.c.l.b16 %v1199
      %v1243 = vunpack.c.h.b16 %v1199
      %v1244 = vunpack.c.l.b16 %v1200
      %v1245 = vunpack.c.h.b16 %v1200
      %v1246 = vunpack.c.l.b16 %v1201
      %v1247 = vunpack.c.h.b16 %v1201
      %v1248 = vunpack.c.l.b16 %v1202
      %v1249 = vunpack.c.h.b16 %v1202
      %v1250 = vunpack.c.l.b16 %v1203
      %v1251 = vunpack.c.h.b16 %v1203
      %v1252 = vunpack.c.l.b16 %v1204
      %v1253 = vunpack.c.h.b16 %v1204
      %v1254 = vunpack.c.l.b16 %v1205
      %v1255 = vunpack.c.h.b16 %v1205
      %v1256 = vunpack.c.l.b16 %v1206
      %v1257 = vunpack.c.h.b16 %v1206
      %v1258 = vunpack.c.l.b16 %v1207
      %v1259 = vunpack.c.h.b16 %v1207
      %v1260 = vunpack.c.l.b16 %v1208
      %v1261 = vunpack.c.h.b16 %v1208
      %v1262 = vunpack.c.l.b16 %v1209
      %v1263 = vunpack.c.h.b16 %v1209
      %v1264 = vunpack.c.l.b16 %v1210
      %v1265 = vunpack.c.h.b16 %v1210
      %v1266 = vunpack.c.l.b16 %v1211
      %v1267 = vunpack.c.h.b16 %v1211
      %v1268 = vunpack.c.l.b16 %v1212
      %v1269 = vunpack.c.h.b16 %v1212
      %v1270 = vunpack.c.l.b16 %v1213
      %v1271 = vunpack.c.h.b16 %v1213
      %v1272 = vunpack.c.l.b16 %v1214
      %v1273 = vunpack.c.h.b16 %v1214
      %v1274 = vpack.c.b16 %v1244, %v1242
      %v1275 = vpack.c.b16 %v1245, %v1243
      %v1276 = vpack.c.b16 %v1248, %v1246
      %v1277 = vpack.c.b16 %v1249, %v1247
      %v1278 = vpack.c.b16 %v1252, %v1250
      %v1279 = vpack.c.b16 %v1253, %v1251
      %v1280 = vpack.c.b16 %v1256, %v1254
      %v1281 = vpack.c.b16 %v1257, %v1255
      %v1282 = vpack.c.b16 %v1260, %v1258
      %v1283 = vpack.c.b16 %v1261, %v1259
      %v1284 = vpack.c.b16 %v1264, %v1262
      %v1285 = vpack.c.b16 %v1265, %v1263
      %v1286 = vpack.c.b16 %v1268, %v1266
      %v1287 = vpack.c.b16 %v1269, %v1267
      %v1288 = vpack.c.b16 %v1272, %v1270
      %v1289 = vpack.c.b16 %v1273, %v1271
      %1306 = vmatprep.subr.bf16.mxu0 %v1275
      %1307 = vmatpush1.bf16.msra.mxu0 %v1274
      %1308 = vmatprep.subr.bf16.mxu0 %v1277
      %1309 = vmatpush1.bf16.msra.mxu0 %v1276
      %1310 = vmatprep.subr.bf16.mxu0 %v1279
      %1311 = vmatpush1.bf16.msra.mxu0 %v1278
      %1312 = vmatprep.subr.bf16.mxu0 %v1281
      %1313 = vmatpush1.bf16.msra.mxu0 %v1280
      %1314 = vmatprep.subr.bf16.mxu0 %v1283
      %1315 = vmatpush1.bf16.msra.mxu0 %v1282
      %1316 = vmatprep.subr.bf16.mxu0 %v1285
      %1317 = vmatpush1.bf16.msra.mxu0 %v1284
      %1318 = vmatprep.subr.bf16.mxu0 %v1287
      %1319 = vmatpush1.bf16.msra.mxu0 %v1286
      %1320 = vmatprep.subr.bf16.mxu0 %v1289
      %1321 = vmatpush1.bf16.msra.mxu0 %v1288
      %1322 = vmatprep.subr.bf16.mxu0 0
      %1323 = vmatpush1.bf16.msra.mxu0 0
      %1324 = vmatprep.subr.bf16.mxu0 0
      %1325 = vmatpush1.bf16.msra.mxu0 0
      %1326 = vmatprep.subr.bf16.mxu0 0
      %1327 = vmatpush1.bf16.msra.mxu0 0
      %1328 = vmatprep.subr.bf16.mxu0 0
      %1329 = vmatpush1.bf16.msra.mxu0 0
      %1330 = vmatprep.subr.bf16.mxu0 0
      %1331 = vmatpush1.bf16.msra.mxu0 0
      %1332 = vmatprep.subr.bf16.mxu0 0
      %1333 = vmatpush1.bf16.msra.mxu0 0
      %1334 = vmatprep.subr.bf16.mxu0 0
      %1335 = vmatpush1.bf16.msra.mxu0 0
      %1336 = vmatprep.subr.bf16.mxu0 0
      %1337 = vmatpush1.bf16.msra.mxu0 0
      %1338 = vmatprep.mubr.bf16.mxu0 0
      %1339 = vmatmul.mubr.bf16.gmra.mrb[0].mxu0 %v1223
      %v1340 = vpop.f32.mrb[0].mxu0
      %v1341 = vadd.f32 0.0, %v1340
      %v1342 = vpop.f32.mrb[0].mxu0
      %v1343 = vadd.f32 0.0, %v1342
      %v1344 = vpop.f32.mrb[0].mxu0
      %v1345 = vadd.f32 0.0, %v1344
      %v1346 = vpop.f32.mrb[0].mxu0
      %v1347 = vadd.f32 0.0, %v1346
      %1348 = vmatprep.mubr.bf16.mxu0 0
      %1349 = vmatmul.mubr.bf16.gmra.mrb[0].mxu0 %v1222
      %v1350 = vpop.f32.mrb[0].mxu0
      %v1351 = vadd.f32 0.0, %v1350
      %v1352 = vpop.f32.mrb[0].mxu0
      %v1353 = vadd.f32 0.0, %v1352
      %v1354 = vpop.f32.mrb[0].mxu0
      %v1355 = vpop.f32.mrb[0].mxu0
      %1356 = vdwg.mxu0
      %v1357 = vadd.f32 %v1190, %v1341
      %v1358 = vadd.f32 %v1191, %v1343
      %v1359 = vadd.f32 %v1192, %v1345
      %v1360 = vadd.f32 %v1193, %v1347
      %v1361 = vadd.f32 %v1194, %v1351
      %v1362 = vadd.f32 %v1195, %v1353
      %v1363 = vld [vmem:[%s165 + $0xc] sm:$0xf]
      %s1364 = scalar_lea.vmem %s1, 896
      %v1365 = vld [vmem:[%s1364] sm:$0xff]
      %v1366 = vld [vmem:[%s1364 + $0x8] sm:$0xff]
      %v1367 = vld [vmem:[%s1364 + $0x10] sm:$0xff]
      %v1368 = vld [vmem:[%s1364 + $0x18] sm:$0xff]
      %v1369 = vld [vmem:[%s1364 + $0x20] sm:$0xff]
      %v1370 = vld [vmem:[%s1364 + $0x28] sm:$0xff]
      %v1371 = vld [vmem:[%s1364 + $0x30] sm:$0xff]
      %v1372 = vld [vmem:[%s1364 + $0x38] sm:$0xff]
      %v1373 = vld [vmem:[%s1364 + $0x40] sm:$0xff]
      %v1374 = vld [vmem:[%s1364 + $0x48] sm:$0xff]
      %v1375 = vld [vmem:[%s1364 + $0x50] sm:$0xff]
      %v1376 = vld [vmem:[%s1364 + $0x58] sm:$0xff]
      %v1377 = vld [vmem:[%s1364 + $0x60] sm:$0xff]
      %v1378 = vld [vmem:[%s1364 + $0x68] sm:$0xff]
      %v1379 = vld [vmem:[%s1364 + $0x70] sm:$0xff]
      %v1380 = vld [vmem:[%s1364 + $0x78] sm:$0xff]
      %v1382 = vunpack.c.l.b16 %v1363
      %v1383 = vpack.c.b16 %v1382, %v1382
      %vm1384 = vsmask.f32 6400
      %v1386 = vshrl.u32 %v1219, 16
      %v1388 = vrot.slane %v1386, 1
      %v1389 = vshll.u32 %v1219, 16
      %v1391 = vrot.slane %v1389, 2
      %v1392 = vor.u32 %v1388, %v1391
      %v1394 = vshrl.u32 %v1383, 16
      %v1396 = vrot.slane %v1394, 1
      %v1397 = vshll.u32 %v1383, 16
      %v1399 = vrot.slane %v1397, 2
      %v1400 = vor.u32 %v1396, %v1399
      %v1401 = vsel %vm1384, %v1392, %v1400
      %v1420 = vunpack.c.l.b16 %v1365
      %v1421 = vunpack.c.h.b16 %v1365
      %v1422 = vunpack.c.l.b16 %v1366
      %v1423 = vunpack.c.h.b16 %v1366
      %v1424 = vunpack.c.l.b16 %v1367
      %v1425 = vunpack.c.h.b16 %v1367
      %v1426 = vunpack.c.l.b16 %v1368
      %v1427 = vunpack.c.h.b16 %v1368
      %v1428 = vunpack.c.l.b16 %v1369
      %v1429 = vunpack.c.h.b16 %v1369
      %v1430 = vunpack.c.l.b16 %v1370
      %v1431 = vunpack.c.h.b16 %v1370
      %v1432 = vunpack.c.l.b16 %v1371
      %v1433 = vunpack.c.h.b16 %v1371
      %v1434 = vunpack.c.l.b16 %v1372
      %v1435 = vunpack.c.h.b16 %v1372
      %v1436 = vunpack.c.l.b16 %v1373
      %v1437 = vunpack.c.h.b16 %v1373
      %v1438 = vunpack.c.l.b16 %v1374
      %v1439 = vunpack.c.h.b16 %v1374
      %v1440 = vunpack.c.l.b16 %v1375
      %v1441 = vunpack.c.h.b16 %v1375
      %v1442 = vunpack.c.l.b16 %v1376
      %v1443 = vunpack.c.h.b16 %v1376
      %v1444 = vunpack.c.l.b16 %v1377
      %v1445 = vunpack.c.h.b16 %v1377
      %v1446 = vunpack.c.l.b16 %v1378
      %v1447 = vunpack.c.h.b16 %v1378
      %v1448 = vunpack.c.l.b16 %v1379
      %v1449 = vunpack.c.h.b16 %v1379
      %v1450 = vunpack.c.l.b16 %v1380
      %v1451 = vunpack.c.h.b16 %v1380
      %v1452 = vpack.c.b16 %v1422, %v1420
      %v1453 = vpack.c.b16 %v1423, %v1421
      %v1454 = vpack.c.b16 %v1426, %v1424
      %v1455 = vpack.c.b16 %v1427, %v1425
      %v1456 = vpack.c.b16 %v1430, %v1428
      %v1457 = vpack.c.b16 %v1431, %v1429
      %v1458 = vpack.c.b16 %v1434, %v1432
      %v1459 = vpack.c.b16 %v1435, %v1433
      %v1460 = vpack.c.b16 %v1438, %v1436
      %v1461 = vpack.c.b16 %v1439, %v1437
      %v1462 = vpack.c.b16 %v1442, %v1440
      %v1463 = vpack.c.b16 %v1443, %v1441
      %v1464 = vpack.c.b16 %v1446, %v1444
      %v1465 = vpack.c.b16 %v1447, %v1445
      %v1466 = vpack.c.b16 %v1450, %v1448
      %v1467 = vpack.c.b16 %v1451, %v1449
      %1484 = vmatprep.subr.bf16.mxu0 %v1453
      %1485 = vmatpush1.bf16.msra.mxu0 %v1452
      %1486 = vmatprep.subr.bf16.mxu0 %v1455
      %1487 = vmatpush1.bf16.msra.mxu0 %v1454
      %1488 = vmatprep.subr.bf16.mxu0 %v1457
      %1489 = vmatpush1.bf16.msra.mxu0 %v1456
      %1490 = vmatprep.subr.bf16.mxu0 %v1459
      %1491 = vmatpush1.bf16.msra.mxu0 %v1458
      %1492 = vmatprep.subr.bf16.mxu0 %v1461
      %1493 = vmatpush1.bf16.msra.mxu0 %v1460
      %1494 = vmatprep.subr.bf16.mxu0 %v1463
      %1495 = vmatpush1.bf16.msra.mxu0 %v1462
      %1496 = vmatprep.subr.bf16.mxu0 %v1465
      %1497 = vmatpush1.bf16.msra.mxu0 %v1464
      %1498 = vmatprep.subr.bf16.mxu0 %v1467
      %1499 = vmatpush1.bf16.msra.mxu0 %v1466
      %1500 = vmatprep.subr.bf16.mxu0 0
      %1501 = vmatpush1.bf16.msra.mxu0 0
      %1502 = vmatprep.subr.bf16.mxu0 0
      %1503 = vmatpush1.bf16.msra.mxu0 0
      %1504 = vmatprep.subr.bf16.mxu0 0
      %1505 = vmatpush1.bf16.msra.mxu0 0
      %1506 = vmatprep.subr.bf16.mxu0 0
      %1507 = vmatpush1.bf16.msra.mxu0 0
      %1508 = vmatprep.subr.bf16.mxu0 0
      %1509 = vmatpush1.bf16.msra.mxu0 0
      %1510 = vmatprep.subr.bf16.mxu0 0
      %1511 = vmatpush1.bf16.msra.mxu0 0
      %1512 = vmatprep.subr.bf16.mxu0 0
      %1513 = vmatpush1.bf16.msra.mxu0 0
      %1514 = vmatprep.subr.bf16.mxu0 0
      %1515 = vmatpush1.bf16.msra.mxu0 0
      %1516 = vmatprep.mubr.bf16.mxu0 0
      %1517 = vmatmul.mubr.bf16.gmra.mrb[0].mxu0 %v1401
      %v1518 = vpop.f32.mrb[0].mxu0
      %v1519 = vadd.f32 0.0, %v1518
      %v1520 = vpop.f32.mrb[0].mxu0
      %v1521 = vadd.f32 0.0, %v1520
      %v1522 = vpop.f32.mrb[0].mxu0
      %v1523 = vadd.f32 0.0, %v1522
      %v1524 = vpop.f32.mrb[0].mxu0
      %v1525 = vadd.f32 0.0, %v1524
      %1526 = vmatprep.mubr.bf16.mxu0 0
      %1527 = vmatmul.mubr.bf16.gmra.mrb[0].mxu0 %v1400
      %v1528 = vpop.f32.mrb[0].mxu0
      %v1529 = vadd.f32 0.0, %v1528
      %v1530 = vpop.f32.mrb[0].mxu0
      %v1531 = vadd.f32 0.0, %v1530
      %v1532 = vpop.f32.mrb[0].mxu0
      %v1533 = vpop.f32.mrb[0].mxu0
      %1534 = vdwg.mxu0
      %v1535 = vadd.f32 %v1357, %v1519
      %v1536 = vadd.f32 %v1358, %v1521
      %v1537 = vadd.f32 %v1359, %v1523
      %v1538 = vadd.f32 %v1360, %v1525
      %v1539 = vadd.f32 %v1361, %v1529
      %v1540 = vadd.f32 %v1362, %v1531
      %v1541 = vld [vmem:[%s165 + $0x4] sm:$0xc]
      %s1542 = scalar_lea.vmem %s1, 1024
      %v1543 = vld [vmem:[%s1542] sm:$0xff]
      %v1544 = vld [vmem:[%s1542 + $0x8] sm:$0xff]
      %v1545 = vld [vmem:[%s1542 + $0x10] sm:$0xff]
      %v1546 = vld [vmem:[%s1542 + $0x18] sm:$0xff]
      %v1547 = vld [vmem:[%s1542 + $0x20] sm:$0xff]
      %v1548 = vld [vmem:[%s1542 + $0x28] sm:$0xff]
      %v1549 = vld [vmem:[%s1542 + $0x30] sm:$0xff]
      %v1550 = vld [vmem:[%s1542 + $0x38] sm:$0xff]
      %v1551 = vld [vmem:[%s1542 + $0x40] sm:$0xff]
      %v1552 = vld [vmem:[%s1542 + $0x48] sm:$0xff]
      %v1553 = vld [vmem:[%s1542 + $0x50] sm:$0xff]
      %v1554 = vld [vmem:[%s1542 + $0x58] sm:$0xff]
      %v1555 = vld [vmem:[%s1542 + $0x60] sm:$0xff]
      %v1556 = vld [vmem:[%s1542 + $0x68] sm:$0xff]
      %v1557 = vld [vmem:[%s1542 + $0x70] sm:$0xff]
      %v1558 = vld [vmem:[%s1542 + $0x78] sm:$0xff]
      %v1560 = vunpack.c.l.b16 %v1541
      %v1561 = vpack.c.b16 %v693, %v1560
      %vm1562 = vcmask 1045504
      %v1563 = vrot.slane %v1561, 2
      %v1564 = vrot.slane %v1383, 2
      %v1565 = vsel %vm1562, %v1563, %v1564
      %v1584 = vunpack.c.l.b16 %v1543
      %v1585 = vunpack.c.h.b16 %v1543
      %v1586 = vunpack.c.l.b16 %v1544
      %v1587 = vunpack.c.h.b16 %v1544
      %v1588 = vunpack.c.l.b16 %v1545
      %v1589 = vunpack.c.h.b16 %v1545
      %v1590 = vunpack.c.l.b16 %v1546
      %v1591 = vunpack.c.h.b16 %v1546
      %v1592 = vunpack.c.l.b16 %v1547
      %v1593 = vunpack.c.h.b16 %v1547
      %v1594 = vunpack.c.l.b16 %v1548
      %v1595 = vunpack.c.h.b16 %v1548
      %v1596 = vunpack.c.l.b16 %v1549
      %v1597 = vunpack.c.h.b16 %v1549
      %v1598 = vunpack.c.l.b16 %v1550
      %v1599 = vunpack.c.h.b16 %v1550
      %v1600 = vunpack.c.l.b16 %v1551
      %v1601 = vunpack.c.h.b16 %v1551
      %v1602 = vunpack.c.l.b16 %v1552
      %v1603 = vunpack.c.h.b16 %v1552
      %v1604 = vunpack.c.l.b16 %v1553
      %v1605 = vunpack.c.h.b16 %v1553
      %v1606 = vunpack.c.l.b16 %v1554
      %v1607 = vunpack.c.h.b16 %v1554
      %v1608 = vunpack.c.l.b16 %v1555
      %v1609 = vunpack.c.h.b16 %v1555
      %v1610 = vunpack.c.l.b16 %v1556
      %v1611 = vunpack.c.h.b16 %v1556
      %v1612 = vunpack.c.l.b16 %v1557
      %v1613 = vunpack.c.h.b16 %v1557
      %v1614 = vunpack.c.l.b16 %v1558
      %v1615 = vunpack.c.h.b16 %v1558
      %v1616 = vpack.c.b16 %v1586, %v1584
      %v1617 = vpack.c.b16 %v1587, %v1585
      %v1618 = vpack.c.b16 %v1590, %v1588
      %v1619 = vpack.c.b16 %v1591, %v1589
      %v1620 = vpack.c.b16 %v1594, %v1592
      %v1621 = vpack.c.b16 %v1595, %v1593
      %v1622 = vpack.c.b16 %v1598, %v1596
      %v1623 = vpack.c.b16 %v1599, %v1597
      %v1624 = vpack.c.b16 %v1602, %v1600
      %v1625 = vpack.c.b16 %v1603, %v1601
      %v1626 = vpack.c.b16 %v1606, %v1604
      %v1627 = vpack.c.b16 %v1607, %v1605
      %v1628 = vpack.c.b16 %v1610, %v1608
      %v1629 = vpack.c.b16 %v1611, %v1609
      %v1630 = vpack.c.b16 %v1614, %v1612
      %v1631 = vpack.c.b16 %v1615, %v1613
      %1648 = vmatprep.subr.bf16.mxu0 %v1617
      %1649 = vmatpush1.bf16.msra.mxu0 %v1616
      %1650 = vmatprep.subr.bf16.mxu0 %v1619
      %1651 = vmatpush1.bf16.msra.mxu0 %v1618
      %1652 = vmatprep.subr.bf16.mxu0 %v1621
      %1653 = vmatpush1.bf16.msra.mxu0 %v1620
      %1654 = vmatprep.subr.bf16.mxu0 %v1623
      %1655 = vmatpush1.bf16.msra.mxu0 %v1622
      %1656 = vmatprep.subr.bf16.mxu0 %v1625
      %1657 = vmatpush1.bf16.msra.mxu0 %v1624
      %1658 = vmatprep.subr.bf16.mxu0 %v1627
      %1659 = vmatpush1.bf16.msra.mxu0 %v1626
      %1660 = vmatprep.subr.bf16.mxu0 %v1629
      %1661 = vmatpush1.bf16.msra.mxu0 %v1628
      %1662 = vmatprep.subr.bf16.mxu0 %v1631
      %1663 = vmatpush1.bf16.msra.mxu0 %v1630
      %1664 = vmatprep.subr.bf16.mxu0 0
      %1665 = vmatpush1.bf16.msra.mxu0 0
      %1666 = vmatprep.subr.bf16.mxu0 0
      %1667 = vmatpush1.bf16.msra.mxu0 0
      %1668 = vmatprep.subr.bf16.mxu0 0
      %1669 = vmatpush1.bf16.msra.mxu0 0
      %1670 = vmatprep.subr.bf16.mxu0 0
      %1671 = vmatpush1.bf16.msra.mxu0 0
      %1672 = vmatprep.subr.bf16.mxu0 0
      %1673 = vmatpush1.bf16.msra.mxu0 0
      %1674 = vmatprep.subr.bf16.mxu0 0
      %1675 = vmatpush1.bf16.msra.mxu0 0
      %1676 = vmatprep.subr.bf16.mxu0 0
      %1677 = vmatpush1.bf16.msra.mxu0 0
      %1678 = vmatprep.subr.bf16.mxu0 0
      %1679 = vmatpush1.bf16.msra.mxu0 0
      %1680 = vmatprep.mubr.bf16.mxu0 0
      %1681 = vmatmul.mubr.bf16.gmra.mrb[0].mxu0 %v1565
      %v1682 = vpop.f32.mrb[0].mxu0
      %v1683 = vadd.f32 0.0, %v1682
      %v1684 = vpop.f32.mrb[0].mxu0
      %v1685 = vadd.f32 0.0, %v1684
      %v1686 = vpop.f32.mrb[0].mxu0
      %v1687 = vadd.f32 0.0, %v1686
      %v1688 = vpop.f32.mrb[0].mxu0
      %v1689 = vadd.f32 0.0, %v1688
      %1690 = vmatprep.mubr.bf16.mxu0 0
      %1691 = vmatmul.mubr.bf16.gmra.mrb[0].mxu0 %v1564
      %v1692 = vpop.f32.mrb[0].mxu0
      %v1693 = vadd.f32 0.0, %v1692
      %v1694 = vpop.f32.mrb[0].mxu0
      %v1695 = vadd.f32 0.0, %v1694
      %v1696 = vpop.f32.mrb[0].mxu0
      %v1697 = vpop.f32.mrb[0].mxu0
      %1698 = vdwg.mxu0
      %v1699 = vadd.f32 %v1535, %v1683
      %v1700 = vadd.f32 %v1536, %v1685
      %v1701 = vadd.f32 %v1537, %v1687
      %v1702 = vadd.f32 %v1538, %v1689
      %v1703 = vadd.f32 %v1539, %v1693
      %v1704 = vadd.f32 %v1540, %v1695
      %v1705 = vld [vmem:[%s2] sm:$0x3]
      %v1707 = vlaneseq
      %v1708 = vshrl.u32 %v1707, 7
      %v1709 = vsub.s32 0, %v1708
      %v1710 = vrot.slane %v1705, %v1709
      %v1711 = vlaneseq
      %v1712 = vshrl.u32 %v1711, 7
      %v1713 = vsub.s32 1, %v1712
      %v1714 = vrot.slane %v1705, %v1713
      %v1717 = vadd.f32 %v1699, %v1710
      %v1718 = vadd.f32 %v1700, %v1714
      %v1719 = vadd.f32 %v1701, %v1710
      %v1720 = vadd.f32 %v1702, %v1714
      %v1721 = vadd.f32 %v1703, %v1710
      %v1722 = vadd.f32 %v1704, %v1714
      %v1723 = vmax.f32 %v1717, 0.0
      %v1724 = vmax.f32 %v1718, 0.0
      %v1725 = vmax.f32 %v1719, 0.0
      %v1726 = vmax.f32 %v1720, 0.0
      %v1727 = vmax.f32 %v1721, 0.0
      %v1728 = vmax.f32 %v1722, 0.0
      %v1729 = vpack.c.bf16 %v1725, %v1723
      %v1730 = vpack.c.bf16 %v1726, %v1724
      %v1731 = vpack.c.bf16 %v1727, %v1727
      %v1732 = vpack.c.bf16 %v1728, %v1728
      %v1737 = vunpack.c.l.b16 %v1729
      %v1738 = vunpack.c.l.b16 %v1730
      %v1739 = vunpack.c.h.b16 %v1729
      %v1740 = vunpack.c.h.b16 %v1730
      %v1741 = vunpack.c.l.b16 %v1731
      %v1742 = vunpack.c.l.b16 %v1732
      %v1743 = vpack.c.b16 %v1738, %v1737
      %v1744 = vpack.c.b16 %v1740, %v1739
      %v1745 = vpack.c.b16 %v1742, %v1741
      %1749 = vst [vmem:[%s170] sm:$0xff] %v1743
      %1750 = vst [vmem:[%s170 + $0x8] sm:$0xff] %v1744
      %1751 = vst [vmem:[%s170 + $0x10] sm:$0x33] %v1745
      %p1752 = scmp.lt.s32.totalorder %s14, 1
      %s1753 = scalar_select %p1752, %s14, 1
      %s1754 = smul.addr %s1753, 6
      %s1755 = smul.addr %s1754, 4
      %s1756 = scalar_lea.vmem %s3, %s1755
      // Predicated region
      $region33: #{test_et_al_forward.6} parent=31 // pred_check
        %p1757 = pneg %p100
      $region34: #{test_et_al_forward.6} parent=31 // pred_check_branch
        %1759 = sbr.rel (%p1757) target = $region36
      $region35: #{test_et_al_forward.6} parent=31 // pred_region
        _
      $region36: #{test_et_al_forward.6} parent=31 // pred_fallthru
        _
    $region32: #{test_et_al_forward.6} parent=5 // pred_fallthru
      _
    %p1760 = scmp.le.s32.totalorder 2, %s9
    // Predicated region
    $region37: #{test_et_al_forward.6} parent=5 // pred_check
      %p1761 = pneg %p1760
    $region38: #{test_et_al_forward.6} parent=5 // pred_check_branch
      %1763 = sbr.rel (%p1761) target = $region40
    $region39: #{test_et_al_forward.6} parent=5 // pred_region
      %s1764 = ssub.s32 %s9, 2
      // Predicated region
      $region41: #{test_et_al_forward.6} parent=39 // pred_check
        %p1765 = pneg %p106
      $region42: #{test_et_al_forward.6} parent=39 // pred_check_branch
        %1767 = sbr.rel (%p1765) target = $region44
      $region43: #{test_et_al_forward.6} parent=39 // pred_region
        %p1768 = scmp.lt.s32.totalorder %s15, 1
        %s1769 = scalar_select %p1768, %s15, 1
        %s1770 = smul.addr %s1769, 6
        %s1771 = smul.addr %s1770, 4
        %s1772 = scalar_lea.vmem %s3, %s1771
      $region44: #{test_et_al_forward.6} parent=39 // pred_fallthru
        _
    $region40: #{test_et_al_forward.6} parent=5 // pred_fallthru
      _
  $region6: #{test_et_al_forward.6} parent=0 // loop_footer
    %s13 = sadd.s32 1, %s9
  $region7: #{test_et_al_forward.6} parent=0 // loop_footer_branch
    %8 = sbr.rel target = $region3
  $region8: #{test_et_al_forward.6} parent=0 // loop_exit
    _

// kernel: test_et_al_forward.7
$region0: #{test_et_al_forward.7}
  #allocation0 [shape = 'u32[]', space=smem, size = 0x4, offset = 0x4, fixed_abs, tag = 'smem constant byte address 0x4 - core index']
  #allocation1 [shape = 'u32[144,128]{1,0:T(1,128)}', space=vmem, size = 0x12000, scoped, tag = 'internal scratch']
  %s0 = inlined_call_operand.vmem [shape: bf16[2,1024], index: 0, kind: input, shape index: {}]
  %s1 = inlined_call_operand.vmem [shape: bf16[1024,128], index: 1, kind: input, shape index: {}]
  %s2 = inlined_call_operand.vmem [shape: f32[1,128], index: 2, kind: input, shape index: {}]
  %s3 = inlined_call_operand.hbm [shape: f32[2,128], index: 3, kind: output, shape index: {}]
  %s4 = sld [smem:[#allocation0]]
  $region22: #{test_et_al_forward.7} parent=0
    _
  %s6 = ssub.s32 1, %s4
  %s7 = scalar_select 0, %s6, %s4
  $region1: #{test_et_al_forward.7} parent=0
    #allocation2 [shape = 'u8[1024]{0}', space=vmem, size = 0x400, scoped, tag = 'output window, operand 0, single buffered']
    #allocation3 [shape = 's32[1]{0}', space=sflag, size = 0x4, scoped, tag = 'scoped memory for test_et_al_forward.7']
    %8 = vsyncpa [#allocation3], 0
    // Predicated region
    $region2: #{test_et_al_forward.7} parent=1 // pred_check
      _
    $region3: #{test_et_al_forward.7} parent=1 // pred_check_branch
      %10 = sbr.rel (0) target = $region5
    $region4: #{test_et_al_forward.7} parent=1 // pred_region
      _
    $region5: #{test_et_al_forward.7} parent=1 // pred_fallthru
      _
    // Predicated region
    $region6: #{test_et_al_forward.7} parent=1 // pred_check
      _
    $region7: #{test_et_al_forward.7} parent=1 // pred_check_branch
      %12 = sbr.rel (0) target = $region9
    $region8: #{test_et_al_forward.7} parent=1 // pred_region
      _
    $region9: #{test_et_al_forward.7} parent=1 // pred_fallthru
      _
    // Predicated region
    $region10: #{test_et_al_forward.7} parent=1 // pred_check
      _
    $region11: #{test_et_al_forward.7} parent=1 // pred_check_branch
      %14 = sbr.rel (0) target = $region13
    $region12: #{test_et_al_forward.7} parent=1 // pred_region
      _
    $region13: #{test_et_al_forward.7} parent=1 // pred_fallthru
      _
    %v16 = vld [vmem:[%s0] sm:$0xff]
    %v17 = vld [vmem:[%s1] sm:$0xf]
    %v18 = vld [vmem:[%s1 + $0x4] sm:$0xf]
    %v19 = vld [vmem:[%s1 + $0x8] sm:$0xf]
    %v20 = vld [vmem:[%s1 + $0xc] sm:$0xf]
    %v21 = vld [vmem:[%s1 + $0x10] sm:$0xf]
    %v22 = vld [vmem:[%s1 + $0x14] sm:$0xf]
    %v23 = vld [vmem:[%s1 + $0x18] sm:$0xf]
    %v24 = vld [vmem:[%s1 + $0x1c] sm:$0xf]
    %v25 = vld [vmem:[%s1 + $0x20] sm:$0xf]
    %v26 = vld [vmem:[%s1 + $0x24] sm:$0xf]
    %v27 = vld [vmem:[%s1 + $0x28] sm:$0xf]
    %v28 = vld [vmem:[%s1 + $0x2c] sm:$0xf]
    %v29 = vld [vmem:[%s1 + $0x30] sm:$0xf]
    %v30 = vld [vmem:[%s1 + $0x34] sm:$0xf]
    %v31 = vld [vmem:[%s1 + $0x38] sm:$0xf]
    %v32 = vld [vmem:[%s1 + $0x3c] sm:$0xf]
    %v33 = vld [vmem:[%s1 + $0x40] sm:$0xf]
    %v34 = vld [vmem:[%s1 + $0x44] sm:$0xf]
    %v35 = vld [vmem:[%s1 + $0x48] sm:$0xf]
    %v36 = vld [vmem:[%s1 + $0x4c] sm:$0xf]
    %v37 = vld [vmem:[%s1 + $0x50] sm:$0xf]
    %v38 = vld [vmem:[%s1 + $0x54] sm:$0xf]
    %v39 = vld [vmem:[%s1 + $0x58] sm:$0xf]
    %v40 = vld [vmem:[%s1 + $0x5c] sm:$0xf]
    %v41 = vld [vmem:[%s1 + $0x60] sm:$0xf]
    %v42 = vld [vmem:[%s1 + $0x64] sm:$0xf]
    %v43 = vld [vmem:[%s1 + $0x68] sm:$0xf]
    %v44 = vld [vmem:[%s1 + $0x6c] sm:$0xf]
    %v45 = vld [vmem:[%s1 + $0x70] sm:$0xf]
    %v46 = vld [vmem:[%s1 + $0x74] sm:$0xf]
    %v47 = vld [vmem:[%s1 + $0x78] sm:$0xf]
    %v48 = vld [vmem:[%s1 + $0x7c] sm:$0xf]
    %v49 = vld [vmem:[%s1 + $0x80] sm:$0xf]
    %v50 = vld [vmem:[%s1 + $0x84] sm:$0xf]
    %v51 = vld [vmem:[%s1 + $0x88] sm:$0xf]
    %v52 = vld [vmem:[%s1 + $0x8c] sm:$0xf]
    %v53 = vld [vmem:[%s1 + $0x90] sm:$0xf]
    %v54 = vld [vmem:[%s1 + $0x94] sm:$0xf]
    %v55 = vld [vmem:[%s1 + $0x98] sm:$0xf]
    %v56 = vld [vmem:[%s1 + $0x9c] sm:$0xf]
    %v57 = vld [vmem:[%s1 + $0xa0] sm:$0xf]
    %v58 = vld [vmem:[%s1 + $0xa4] sm:$0xf]
    %v59 = vld [vmem:[%s1 + $0xa8] sm:$0xf]
    %v60 = vld [vmem:[%s1 + $0xac] sm:$0xf]
    %v61 = vld [vmem:[%s1 + $0xb0] sm:$0xf]
    %v62 = vld [vmem:[%s1 + $0xb4] sm:$0xf]
    %v63 = vld [vmem:[%s1 + $0xb8] sm:$0xf]
    %v64 = vld [vmem:[%s1 + $0xbc] sm:$0xf]
    %v65 = vld [vmem:[%s1 + $0xc0] sm:$0xf]
    %v66 = vld [vmem:[%s1 + $0xc4] sm:$0xf]
    %v67 = vld [vmem:[%s1 + $0xc8] sm:$0xf]
    %v68 = vld [vmem:[%s1 + $0xcc] sm:$0xf]
    %v69 = vld [vmem:[%s1 + $0xd0] sm:$0xf]
    %v70 = vld [vmem:[%s1 + $0xd4] sm:$0xf]
    %v71 = vld [vmem:[%s1 + $0xd8] sm:$0xf]
    %v72 = vld [vmem:[%s1 + $0xdc] sm:$0xf]
    %v73 = vld [vmem:[%s1 + $0xe0] sm:$0xf]
    %v74 = vld [vmem:[%s1 + $0xe4] sm:$0xf]
    %v75 = vld [vmem:[%s1 + $0xe8] sm:$0xf]
    %v76 = vld [vmem:[%s1 + $0xec] sm:$0xf]
    %v77 = vld [vmem:[%s1 + $0xf0] sm:$0xf]
    %v78 = vld [vmem:[%s1 + $0xf4] sm:$0xf]
    %v79 = vld [vmem:[%s1 + $0xf8] sm:$0xf]
    %v80 = vld [vmem:[%s1 + $0xfc] sm:$0xf]
    %v81 = vld [vmem:[%s1 + $0x100] sm:$0xf]
    %v82 = vld [vmem:[%s1 + $0x104] sm:$0xf]
    %v83 = vld [vmem:[%s1 + $0x108] sm:$0xf]
    %v84 = vld [vmem:[%s1 + $0x10c] sm:$0xf]
    %v85 = vld [vmem:[%s1 + $0x110] sm:$0xf]
    %v86 = vld [vmem:[%s1 + $0x114] sm:$0xf]
    %v87 = vld [vmem:[%s1 + $0x118] sm:$0xf]
    %v88 = vld [vmem:[%s1 + $0x11c] sm:$0xf]
    %v89 = vld [vmem:[%s1 + $0x120] sm:$0xf]
    %v90 = vld [vmem:[%s1 + $0x124] sm:$0xf]
    %v91 = vld [vmem:[%s1 + $0x128] sm:$0xf]
    %v92 = vld [vmem:[%s1 + $0x12c] sm:$0xf]
    %v93 = vld [vmem:[%s1 + $0x130] sm:$0xf]
    %v94 = vld [vmem:[%s1 + $0x134] sm:$0xf]
    %v95 = vld [vmem:[%s1 + $0x138] sm:$0xf]
    %v96 = vld [vmem:[%s1 + $0x13c] sm:$0xf]
    %v97 = vld [vmem:[%s1 + $0x140] sm:$0xf]
    %v98 = vld [vmem:[%s1 + $0x144] sm:$0xf]
    %v99 = vld [vmem:[%s1 + $0x148] sm:$0xf]
    %v100 = vld [vmem:[%s1 + $0x14c] sm:$0xf]
    %v101 = vld [vmem:[%s1 + $0x150] sm:$0xf]
    %v102 = vld [vmem:[%s1 + $0x154] sm:$0xf]
    %v103 = vld [vmem:[%s1 + $0x158] sm:$0xf]
    %v104 = vld [vmem:[%s1 + $0x15c] sm:$0xf]
    %v105 = vld [vmem:[%s1 + $0x160] sm:$0xf]
    %v106 = vld [vmem:[%s1 + $0x164] sm:$0xf]
    %v107 = vld [vmem:[%s1 + $0x168] sm:$0xf]
    %v108 = vld [vmem:[%s1 + $0x16c] sm:$0xf]
    %v109 = vld [vmem:[%s1 + $0x170] sm:$0xf]
    %v110 = vld [vmem:[%s1 + $0x174] sm:$0xf]
    %v111 = vld [vmem:[%s1 + $0x178] sm:$0xf]
    %v112 = vld [vmem:[%s1 + $0x17c] sm:$0xf]
    %v113 = vld [vmem:[%s1 + $0x180] sm:$0xf]
    %v114 = vld [vmem:[%s1 + $0x184] sm:$0xf]
    %v115 = vld [vmem:[%s1 + $0x188] sm:$0xf]
    %v116 = vld [vmem:[%s1 + $0x18c] sm:$0xf]
    %v117 = vld [vmem:[%s1 + $0x190] sm:$0xf]
    %v118 = vld [vmem:[%s1 + $0x194] sm:$0xf]
    %v119 = vld [vmem:[%s1 + $0x198] sm:$0xf]
    %v120 = vld [vmem:[%s1 + $0x19c] sm:$0xf]
    %v121 = vld [vmem:[%s1 + $0x1a0] sm:$0xf]
    %v122 = vld [vmem:[%s1 + $0x1a4] sm:$0xf]
    %v123 = vld [vmem:[%s1 + $0x1a8] sm:$0xf]
    %v124 = vld [vmem:[%s1 + $0x1ac] sm:$0xf]
    %v125 = vld [vmem:[%s1 + $0x1b0] sm:$0xf]
    %v126 = vld [vmem:[%s1 + $0x1b4] sm:$0xf]
    %v127 = vld [vmem:[%s1 + $0x1b8] sm:$0xf]
    %v128 = vld [vmem:[%s1 + $0x1bc] sm:$0xf]
    %v129 = vld [vmem:[%s1 + $0x1c0] sm:$0xf]
    %v130 = vld [vmem:[%s1 + $0x1c4] sm:$0xf]
    %v131 = vld [vmem:[%s1 + $0x1c8] sm:$0xf]
    %v132 = vld [vmem:[%s1 + $0x1cc] sm:$0xf]
    %v133 = vld [vmem:[%s1 + $0x1d0] sm:$0xf]
    %v134 = vld [vmem:[%s1 + $0x1d4] sm:$0xf]
    %v135 = vld [vmem:[%s1 + $0x1d8] sm:$0xf]
    %v136 = vld [vmem:[%s1 + $0x1dc] sm:$0xf]
    %v137 = vld [vmem:[%s1 + $0x1e0] sm:$0xf]
    %v138 = vld [vmem:[%s1 + $0x1e4] sm:$0xf]
    %v139 = vld [vmem:[%s1 + $0x1e8] sm:$0xf]
    %v140 = vld [vmem:[%s1 + $0x1ec] sm:$0xf]
    %v141 = vld [vmem:[%s1 + $0x1f0] sm:$0xf]
    %v142 = vld [vmem:[%s1 + $0x1f4] sm:$0xf]
    %v143 = vld [vmem:[%s1 + $0x1f8] sm:$0xf]
    %v144 = vld [vmem:[%s1 + $0x1fc] sm:$0xf]
    %v145 = vld [vmem:[%s2] sm:$0x1]
    %v147 = vlaneseq
    %v148 = vshrl.u32 %v147, 7
    %v149 = vsub.s32 0, %v148
    %v150 = vrot.slane %v145, %v149
    %v153 = vcombine.high %v16, %v16
    %v155 = vunpack.c.l.s4 1966171168
    %v156 = vunpack.c.0.s8 %v155
    %v157 = vlaneseq
    %v158 = vshrl.u32 %v157, 7
    %v159 = vsub.s32 %v156, %v158
    %v160 = vrot.slane %v16, %v159
    %v162 = vunpack.c.l.s4 1966171168
    %v163 = vunpack.c.0.s8 %v162
    %v164 = vlaneseq
    %v165 = vshrl.u32 %v164, 7
    %v166 = vsub.s32 %v163, %v165
    %v167 = vrot.slane %v153, %v166
    %v168 = vcombine.high %v160, %v160
    %v169 = vcombine.high %v167, %v167
    %v171 = vunpack.c.l.s4 1966171168
    %v172 = vunpack.c.0.s8 %v171
    %v173 = vlaneseq
    %v174 = vshrl.u32 %v173, 7
    %v175 = vsub.s32 %v172, %v174
    %v176 = vrot.slane %v160, %v175
    %v178 = vunpack.c.l.s4 1966171168
    %v179 = vunpack.c.0.s8 %v178
    %v180 = vlaneseq
    %v181 = vshrl.u32 %v180, 7
    %v182 = vsub.s32 %v179, %v181
    %v183 = vrot.slane %v167, %v182
    %v185 = vunpack.c.l.s4 1966171168
    %v186 = vunpack.c.0.s8 %v185
    %v187 = vlaneseq
    %v188 = vshrl.u32 %v187, 7
    %v189 = vsub.s32 %v186, %v188
    %v190 = vrot.slane %v168, %v189
    %v192 = vunpack.c.l.s4 1966171168
    %v193 = vunpack.c.0.s8 %v192
    %v194 = vlaneseq
    %v195 = vshrl.u32 %v194, 7
    %v196 = vsub.s32 %v193, %v195
    %v197 = vrot.slane %v169, %v196
    %v198 = vcombine.high %v176, %v176
    %v199 = vcombine.high %v183, %v183
    %v200 = vcombine.high %v190, %v190
    %v201 = vcombine.high %v197, %v197
    %v338 = vunpack.c.l.b16 %v17
    %v339 = vunpack.c.l.b16 %v18
    %v340 = vunpack.c.l.b16 %v19
    %v341 = vunpack.c.l.b16 %v20
    %v342 = vunpack.c.l.b16 %v21
    %v343 = vunpack.c.l.b16 %v22
    %v344 = vunpack.c.l.b16 %v23
    %v345 = vunpack.c.l.b16 %v24
    %v346 = vunpack.c.l.b16 %v25
    %v347 = vunpack.c.l.b16 %v26
    %v348 = vunpack.c.l.b16 %v27
    %v349 = vunpack.c.l.b16 %v28
    %v350 = vunpack.c.l.b16 %v29
    %v351 = vunpack.c.l.b16 %v30
    %v352 = vunpack.c.l.b16 %v31
    %v353 = vunpack.c.l.b16 %v32
    %v354 = vunpack.c.l.b16 %v33
    %v355 = vunpack.c.l.b16 %v34
    %v356 = vunpack.c.l.b16 %v35
    %v357 = vunpack.c.l.b16 %v36
    %v358 = vunpack.c.l.b16 %v37
    %v359 = vunpack.c.l.b16 %v38
    %v360 = vunpack.c.l.b16 %v39
    %v361 = vunpack.c.l.b16 %v40
    %v362 = vunpack.c.l.b16 %v41
    %v363 = vunpack.c.l.b16 %v42
    %v364 = vunpack.c.l.b16 %v43
    %v365 = vunpack.c.l.b16 %v44
    %v366 = vunpack.c.l.b16 %v45
    %v367 = vunpack.c.l.b16 %v46
    %v368 = vunpack.c.l.b16 %v47
    %v369 = vunpack.c.l.b16 %v48
    %v370 = vunpack.c.l.b16 %v49
    %v371 = vunpack.c.l.b16 %v50
    %v372 = vunpack.c.l.b16 %v51
    %v373 = vunpack.c.l.b16 %v52
    %v374 = vunpack.c.l.b16 %v53
    %v375 = vunpack.c.l.b16 %v54
    %v376 = vunpack.c.l.b16 %v55
    %v377 = vunpack.c.l.b16 %v56
    %v378 = vunpack.c.l.b16 %v57
    %v379 = vunpack.c.l.b16 %v58
    %v380 = vunpack.c.l.b16 %v59
    %v381 = vunpack.c.l.b16 %v60
    %v382 = vunpack.c.l.b16 %v61
    %v383 = vunpack.c.l.b16 %v62
    %v384 = vunpack.c.l.b16 %v63
    %v385 = vunpack.c.l.b16 %v64
    %v386 = vunpack.c.l.b16 %v65
    %v387 = vunpack.c.l.b16 %v66
    %v388 = vunpack.c.l.b16 %v67
    %v389 = vunpack.c.l.b16 %v68
    %v390 = vunpack.c.l.b16 %v69
    %v391 = vunpack.c.l.b16 %v70
    %v392 = vunpack.c.l.b16 %v71
    %v393 = vunpack.c.l.b16 %v72
    %v394 = vunpack.c.l.b16 %v73
    %v395 = vunpack.c.l.b16 %v74
    %v396 = vunpack.c.l.b16 %v75
    %v397 = vunpack.c.l.b16 %v76
    %v398 = vunpack.c.l.b16 %v77
    %v399 = vunpack.c.l.b16 %v78
    %v400 = vunpack.c.l.b16 %v79
    %v401 = vunpack.c.l.b16 %v80
    %v402 = vunpack.c.l.b16 %v81
    %v403 = vunpack.c.l.b16 %v82
    %v404 = vunpack.c.l.b16 %v83
    %v405 = vunpack.c.l.b16 %v84
    %v406 = vunpack.c.l.b16 %v85
    %v407 = vunpack.c.l.b16 %v86
    %v408 = vunpack.c.l.b16 %v87
    %v409 = vunpack.c.l.b16 %v88
    %v410 = vunpack.c.l.b16 %v89
    %v411 = vunpack.c.l.b16 %v90
    %v412 = vunpack.c.l.b16 %v91
    %v413 = vunpack.c.l.b16 %v92
    %v414 = vunpack.c.l.b16 %v93
    %v415 = vunpack.c.l.b16 %v94
    %v416 = vunpack.c.l.b16 %v95
    %v417 = vunpack.c.l.b16 %v96
    %v418 = vunpack.c.l.b16 %v97
    %v419 = vunpack.c.l.b16 %v98
    %v420 = vunpack.c.l.b16 %v99
    %v421 = vunpack.c.l.b16 %v100
    %v422 = vunpack.c.l.b16 %v101
    %v423 = vunpack.c.l.b16 %v102
    %v424 = vunpack.c.l.b16 %v103
    %v425 = vunpack.c.l.b16 %v104
    %v426 = vunpack.c.l.b16 %v105
    %v427 = vunpack.c.l.b16 %v106
    %v428 = vunpack.c.l.b16 %v107
    %v429 = vunpack.c.l.b16 %v108
    %v430 = vunpack.c.l.b16 %v109
    %v431 = vunpack.c.l.b16 %v110
    %v432 = vunpack.c.l.b16 %v111
    %v433 = vunpack.c.l.b16 %v112
    %v434 = vunpack.c.l.b16 %v113
    %v435 = vunpack.c.l.b16 %v114
    %v436 = vunpack.c.l.b16 %v115
    %v437 = vunpack.c.l.b16 %v116
    %v438 = vunpack.c.l.b16 %v117
    %v439 = vunpack.c.l.b16 %v118
    %v440 = vunpack.c.l.b16 %v119
    %v441 = vunpack.c.l.b16 %v120
    %v442 = vunpack.c.l.b16 %v121
    %v443 = vunpack.c.l.b16 %v122
    %v444 = vunpack.c.l.b16 %v123
    %v445 = vunpack.c.l.b16 %v124
    %v446 = vunpack.c.l.b16 %v125
    %v447 = vunpack.c.l.b16 %v126
    %v448 = vunpack.c.l.b16 %v127
    %v449 = vunpack.c.l.b16 %v128
    %v450 = vunpack.c.l.b16 %v129
    %v451 = vunpack.c.l.b16 %v130
    %v452 = vunpack.c.l.b16 %v131
    %v453 = vunpack.c.l.b16 %v132
    %v454 = vunpack.c.l.b16 %v133
    %v455 = vunpack.c.l.b16 %v134
    %v456 = vunpack.c.l.b16 %v135
    %v457 = vunpack.c.l.b16 %v136
    %v458 = vunpack.c.l.b16 %v137
    %v459 = vunpack.c.l.b16 %v138
    %v460 = vunpack.c.l.b16 %v139
    %v461 = vunpack.c.l.b16 %v140
    %v462 = vunpack.c.l.b16 %v141
    %v463 = vunpack.c.l.b16 %v142
    %v464 = vunpack.c.l.b16 %v143
    %v465 = vunpack.c.l.b16 %v144
    %v466 = vpack.c.b16 %v339, %v338
    %v467 = vpack.c.b16 %v341, %v340
    %v468 = vpack.c.b16 %v343, %v342
    %v469 = vpack.c.b16 %v345, %v344
    %v470 = vpack.c.b16 %v347, %v346
    %v471 = vpack.c.b16 %v349, %v348
    %v472 = vpack.c.b16 %v351, %v350
    %v473 = vpack.c.b16 %v353, %v352
    %v474 = vpack.c.b16 %v355, %v354
    %v475 = vpack.c.b16 %v357, %v356
    %v476 = vpack.c.b16 %v359, %v358
    %v477 = vpack.c.b16 %v361, %v360
    %v478 = vpack.c.b16 %v363, %v362
    %v479 = vpack.c.b16 %v365, %v364
    %v480 = vpack.c.b16 %v367, %v366
    %v481 = vpack.c.b16 %v369, %v368
    %v482 = vpack.c.b16 %v371, %v370
    %v483 = vpack.c.b16 %v373, %v372
    %v484 = vpack.c.b16 %v375, %v374
    %v485 = vpack.c.b16 %v377, %v376
    %v486 = vpack.c.b16 %v379, %v378
    %v487 = vpack.c.b16 %v381, %v380
    %v488 = vpack.c.b16 %v383, %v382
    %v489 = vpack.c.b16 %v385, %v384
    %v490 = vpack.c.b16 %v387, %v386
    %v491 = vpack.c.b16 %v389, %v388
    %v492 = vpack.c.b16 %v391, %v390
    %v493 = vpack.c.b16 %v393, %v392
    %v494 = vpack.c.b16 %v395, %v394
    %v495 = vpack.c.b16 %v397, %v396
    %v496 = vpack.c.b16 %v399, %v398
    %v497 = vpack.c.b16 %v401, %v400
    %v498 = vpack.c.b16 %v403, %v402
    %v499 = vpack.c.b16 %v405, %v404
    %v500 = vpack.c.b16 %v407, %v406
    %v501 = vpack.c.b16 %v409, %v408
    %v502 = vpack.c.b16 %v411, %v410
    %v503 = vpack.c.b16 %v413, %v412
    %v504 = vpack.c.b16 %v415, %v414
    %v505 = vpack.c.b16 %v417, %v416
    %v506 = vpack.c.b16 %v419, %v418
    %v507 = vpack.c.b16 %v421, %v420
    %v508 = vpack.c.b16 %v423, %v422
    %v509 = vpack.c.b16 %v425, %v424
    %v510 = vpack.c.b16 %v427, %v426
    %v511 = vpack.c.b16 %v429, %v428
    %v512 = vpack.c.b16 %v431, %v430
    %v513 = vpack.c.b16 %v433, %v432
    %v514 = vpack.c.b16 %v435, %v434
    %v515 = vpack.c.b16 %v437, %v436
    %v516 = vpack.c.b16 %v439, %v438
    %v517 = vpack.c.b16 %v441, %v440
    %v518 = vpack.c.b16 %v443, %v442
    %v519 = vpack.c.b16 %v445, %v444
    %v520 = vpack.c.b16 %v447, %v446
    %v521 = vpack.c.b16 %v449, %v448
    %v522 = vpack.c.b16 %v451, %v450
    %v523 = vpack.c.b16 %v453, %v452
    %v524 = vpack.c.b16 %v455, %v454
    %v525 = vpack.c.b16 %v457, %v456
    %v526 = vpack.c.b16 %v459, %v458
    %v527 = vpack.c.b16 %v461, %v460
    %v528 = vpack.c.b16 %v463, %v462
    %v529 = vpack.c.b16 %v465, %v464
    %594 = vmatprep.subr.bf16.mxu0 0
    %595 = vmatpush1.bf16.msra.mxu0 %v466
    %596 = vmatprep.subr.bf16.mxu0 0
    %597 = vmatpush1.bf16.msra.mxu0 %v467
    %598 = vmatprep.subr.bf16.mxu0 0
    %599 = vmatpush1.bf16.msra.mxu0 %v468
    %600 = vmatprep.subr.bf16.mxu0 0
    %601 = vmatpush1.bf16.msra.mxu0 %v469
    %602 = vmatprep.subr.bf16.mxu0 0
    %603 = vmatpush1.bf16.msra.mxu0 %v470
    %604 = vmatprep.subr.bf16.mxu0 0
    %605 = vmatpush1.bf16.msra.mxu0 %v471
    %606 = vmatprep.subr.bf16.mxu0 0
    %607 = vmatpush1.bf16.msra.mxu0 %v472
    %608 = vmatprep.subr.bf16.mxu0 0
    %609 = vmatpush1.bf16.msra.mxu0 %v473
    %610 = vmatprep.subr.bf16.mxu0 0
    %611 = vmatpush1.bf16.msra.mxu0 %v474
    %612 = vmatprep.subr.bf16.mxu0 0
    %613 = vmatpush1.bf16.msra.mxu0 %v475
    %614 = vmatprep.subr.bf16.mxu0 0
    %615 = vmatpush1.bf16.msra.mxu0 %v476
    %616 = vmatprep.subr.bf16.mxu0 0
    %617 = vmatpush1.bf16.msra.mxu0 %v477
    %618 = vmatprep.subr.bf16.mxu0 0
    %619 = vmatpush1.bf16.msra.mxu0 %v478
    %620 = vmatprep.subr.bf16.mxu0 0
    %621 = vmatpush1.bf16.msra.mxu0 %v479
    %622 = vmatprep.subr.bf16.mxu0 0
    %623 = vmatpush1.bf16.msra.mxu0 %v480
    %624 = vmatprep.subr.bf16.mxu0 0
    %625 = vmatpush1.bf16.msra.mxu0 %v481
    %626 = vmatprep.mubr.bf16.mxu0 %v190
    %627 = vmatmul.mubr.bf16.gmra.mrb[0].mxu0 %v176
    %v628 = vpop.f32.mrb[0].mxu0
    %v629 = vadd.f32 %v150, %v628
    %v630 = vpop.f32.mrb[0].mxu0
    %v631 = vpop.f32.mrb[0].mxu0
    %v632 = vpop.f32.mrb[0].mxu0
    %633 = vdwg.mxu0
    %634 = vmatprep.subr.bf16.mxu0 0
    %635 = vmatpush1.bf16.msra.mxu0 %v482
    %636 = vmatprep.subr.bf16.mxu0 0
    %637 = vmatpush1.bf16.msra.mxu0 %v483
    %638 = vmatprep.subr.bf16.mxu0 0
    %639 = vmatpush1.bf16.msra.mxu0 %v484
    %640 = vmatprep.subr.bf16.mxu0 0
    %641 = vmatpush1.bf16.msra.mxu0 %v485
    %642 = vmatprep.subr.bf16.mxu0 0
    %643 = vmatpush1.bf16.msra.mxu0 %v486
    %644 = vmatprep.subr.bf16.mxu0 0
    %645 = vmatpush1.bf16.msra.mxu0 %v487
    %646 = vmatprep.subr.bf16.mxu0 0
    %647 = vmatpush1.bf16.msra.mxu0 %v488
    %648 = vmatprep.subr.bf16.mxu0 0
    %649 = vmatpush1.bf16.msra.mxu0 %v489
    %650 = vmatprep.subr.bf16.mxu0 0
    %651 = vmatpush1.bf16.msra.mxu0 %v490
    %652 = vmatprep.subr.bf16.mxu0 0
    %653 = vmatpush1.bf16.msra.mxu0 %v491
    %654 = vmatprep.subr.bf16.mxu0 0
    %655 = vmatpush1.bf16.msra.mxu0 %v492
    %656 = vmatprep.subr.bf16.mxu0 0
    %657 = vmatpush1.bf16.msra.mxu0 %v493
    %658 = vmatprep.subr.bf16.mxu0 0
    %659 = vmatpush1.bf16.msra.mxu0 %v494
    %660 = vmatprep.subr.bf16.mxu0 0
    %661 = vmatpush1.bf16.msra.mxu0 %v495
    %662 = vmatprep.subr.bf16.mxu0 0
    %663 = vmatpush1.bf16.msra.mxu0 %v496
    %664 = vmatprep.subr.bf16.mxu0 0
    %665 = vmatpush1.bf16.msra.mxu0 %v497
    %666 = vmatprep.mubr.bf16.mxu0 %v200
    %667 = vmatmul.mubr.bf16.gmra.mrb[0].mxu0 %v198
    %v668 = vpop.f32.mrb[0].mxu0
    %v669 = vadd.f32 %v629, %v668
    %v670 = vpop.f32.mrb[0].mxu0
    %v671 = vpop.f32.mrb[0].mxu0
    %v672 = vpop.f32.mrb[0].mxu0
    %673 = vdwg.mxu0
    %674 = vmatprep.subr.bf16.mxu0 0
    %675 = vmatpush1.bf16.msra.mxu0 %v498
    %676 = vmatprep.subr.bf16.mxu0 0
    %677 = vmatpush1.bf16.msra.mxu0 %v499
    %678 = vmatprep.subr.bf16.mxu0 0
    %679 = vmatpush1.bf16.msra.mxu0 %v500
    %680 = vmatprep.subr.bf16.mxu0 0
    %681 = vmatpush1.bf16.msra.mxu0 %v501
    %682 = vmatprep.subr.bf16.mxu0 0
    %683 = vmatpush1.bf16.msra.mxu0 %v502
    %684 = vmatprep.subr.bf16.mxu0 0
    %685 = vmatpush1.bf16.msra.mxu0 %v503
    %686 = vmatprep.subr.bf16.mxu0 0
    %687 = vmatpush1.bf16.msra.mxu0 %v504
    %688 = vmatprep.subr.bf16.mxu0 0
    %689 = vmatpush1.bf16.msra.mxu0 %v505
    %690 = vmatprep.subr.bf16.mxu0 0
    %691 = vmatpush1.bf16.msra.mxu0 %v506
    %692 = vmatprep.subr.bf16.mxu0 0
    %693 = vmatpush1.bf16.msra.mxu0 %v507
    %694 = vmatprep.subr.bf16.mxu0 0
    %695 = vmatpush1.bf16.msra.mxu0 %v508
    %696 = vmatprep.subr.bf16.mxu0 0
    %697 = vmatpush1.bf16.msra.mxu0 %v509
    %698 = vmatprep.subr.bf16.mxu0 0
    %699 = vmatpush1.bf16.msra.mxu0 %v510
    %700 = vmatprep.subr.bf16.mxu0 0
    %701 = vmatpush1.bf16.msra.mxu0 %v511
    %702 = vmatprep.subr.bf16.mxu0 0
    %703 = vmatpush1.bf16.msra.mxu0 %v512
    %704 = vmatprep.subr.bf16.mxu0 0
    %705 = vmatpush1.bf16.msra.mxu0 %v513
    %706 = vmatprep.mubr.bf16.mxu0 %v197
    %707 = vmatmul.mubr.bf16.gmra.mrb[0].mxu0 %v183
    %v708 = vpop.f32.mrb[0].mxu0
    %v709 = vadd.f32 %v669, %v708
    %v710 = vpop.f32.mrb[0].mxu0
    %v711 = vpop.f32.mrb[0].mxu0
    %v712 = vpop.f32.mrb[0].mxu0
    %713 = vdwg.mxu0
    %714 = vmatprep.subr.bf16.mxu0 0
    %715 = vmatpush1.bf16.msra.mxu0 %v514
    %716 = vmatprep.subr.bf16.mxu0 0
    %717 = vmatpush1.bf16.msra.mxu0 %v515
    %718 = vmatprep.subr.bf16.mxu0 0
    %719 = vmatpush1.bf16.msra.mxu0 %v516
    %720 = vmatprep.subr.bf16.mxu0 0
    %721 = vmatpush1.bf16.msra.mxu0 %v517
    %722 = vmatprep.subr.bf16.mxu0 0
    %723 = vmatpush1.bf16.msra.mxu0 %v518
    %724 = vmatprep.subr.bf16.mxu0 0
    %725 = vmatpush1.bf16.msra.mxu0 %v519
    %726 = vmatprep.subr.bf16.mxu0 0
    %727 = vmatpush1.bf16.msra.mxu0 %v520
    %728 = vmatprep.subr.bf16.mxu0 0
    %729 = vmatpush1.bf16.msra.mxu0 %v521
    %730 = vmatprep.subr.bf16.mxu0 0
    %731 = vmatpush1.bf16.msra.mxu0 %v522
    %732 = vmatprep.subr.bf16.mxu0 0
    %733 = vmatpush1.bf16.msra.mxu0 %v523
    %734 = vmatprep.subr.bf16.mxu0 0
    %735 = vmatpush1.bf16.msra.mxu0 %v524
    %736 = vmatprep.subr.bf16.mxu0 0
    %737 = vmatpush1.bf16.msra.mxu0 %v525
    %738 = vmatprep.subr.bf16.mxu0 0
    %739 = vmatpush1.bf16.msra.mxu0 %v526
    %740 = vmatprep.subr.bf16.mxu0 0
    %741 = vmatpush1.bf16.msra.mxu0 %v527
    %742 = vmatprep.subr.bf16.mxu0 0
    %743 = vmatpush1.bf16.msra.mxu0 %v528
    %744 = vmatprep.subr.bf16.mxu0 0
    %745 = vmatpush1.bf16.msra.mxu0 %v529
    %746 = vmatprep.mubr.bf16.mxu0 %v201
    %747 = vmatmul.mubr.bf16.gmra.mrb[0].mxu0 %v199
    %v748 = vpop.f32.mrb[0].mxu0
    %v749 = vadd.f32 %v709, %v748
    %v750 = vpop.f32.mrb[0].mxu0
    %v751 = vpop.f32.mrb[0].mxu0
    %v752 = vpop.f32.mrb[0].mxu0
    %753 = vdwg.mxu0
    %754 = vst [vmem:[#allocation2] sm:$0x3] %v749
    // Predicated region
    $region14: #{test_et_al_forward.7} parent=1 // pred_check
      _
    $region15: #{test_et_al_forward.7} parent=1 // pred_check_branch
      %756 = sbr.rel (0) target = $region17
    $region16: #{test_et_al_forward.7} parent=1 // pred_region
      %s758 = ssub.s32 32, 32
      %759 = vsyncadd [#allocation3], %s758
      %s761 = sshll.u32 [#allocation2], 4
      %s762 = int_to_ptr.vmem [resolvable:$true] %s761
      %764 = dma.vmem_to_hbm [thread:$0]  %s762, 32, %s3, [#allocation3]
    $region17: #{test_et_al_forward.7} parent=1 // pred_fallthru
      _
    // Predicated region
    $region18: #{test_et_al_forward.7} parent=1 // pred_check
      _
    $region19: #{test_et_al_forward.7} parent=1 // pred_check_branch
      %766 = sbr.rel (0) target = $region21
    $region20: #{test_et_al_forward.7} parent=1 // pred_region
      %767 = dma.done [#allocation3], 32
    $region21: #{test_et_al_forward.7} parent=1 // pred_fallthru
      _
    %768 = vsyncpa [#allocation3], 1

</llo_original>
